<compile_context>
chip_gen: v5e
topology: v5e:2x2
jax: 0.10.0
libtpu: 0.0.40
codegen_flags: <defaults>
</compile_context>

<pallas_src>
import functools
import math

import jax
import jax.numpy as jnp
from jax.experimental import pallas as pl
from jax.experimental.pallas import tpu as pltpu


def _max_pool_3x3_s2(v, h, wp, wo, wop):
    """F.max_pool2d(kernel_size=3, stride=2, padding=0) on a row-major (h*wp, C) value.

    `wp` / `wop` are the input / output widths padded to multiples of 8 so every reshape
    here is a free (retile-less) view.  Valid input columns are 0..(2*wo); output columns
    >= wo are written as exact zeros.  The stride-2 column down-selection is a tiny 0/1
    batched matmul (MXU) instead of a sublane-retiling (N, 2, C) reshape.
    """
    c = v.shape[-1]
    ho = (h - 3) // 2 + 1
    x = v.reshape(h, wp, c)                                        # free view (wp % 8 == 0)
    # Rows (major dim): r[i] = max(x[2i], x[2i+1], x[2i+2]).
    t = jnp.maximum(x[0:2 * ho], x[1:2 * ho + 1]).reshape(ho, 2, wp, c)
    y = jnp.maximum(t[:, 0], t[:, 1])                              # (ho, wp, c)
    # Cols (sublane dim): sliding window-3 max via unit-stride shifted slices ...
    m = jnp.maximum(jnp.maximum(y[:, 0:wp - 2], y[:, 1:wp - 1]), y[:, 2:wp])   # (ho, wp-2, c)
    # ... then stride-2 selection as a one-hot batched matmul (keeps the lane-dense layout).
    wm = wp - 2
    jj = jax.lax.broadcasted_iota(jnp.int32, (wop, wm), 0)
    kk = jax.lax.broadcasted_iota(jnp.int32, (wop, wm), 1)
    sel = jnp.where((kk == 2 * jj) & (jj < wo), 1.0, 0.0).astype(jnp.bfloat16)
    sel = jnp.broadcast_to(sel[None], (ho, wop, wm))
    out = jnp.einsum('bjk,bkc->bjc', sel, m.astype(jnp.bfloat16),
                     preferred_element_type=jnp.float32)
    return out.reshape(ho * wop, c)                                # free view (wop % 8 == 0)


def _fused_forward_kernel(x_ref, w0_ref, b0_ref, w1_ref, b1_ref, w2_ref, b2_ref,
                          w3_ref, b3_ref, fcw_ref, fcb_ref, o_ref, *, h, w, wp):
    def affine(v, wr, br, relu=True):
        y = jnp.dot(v.astype(wr.dtype), wr[...],
                    preferred_element_type=jnp.float32) + br[...]
        return jnp.maximum(y, 0.0) if relu else y

    ho1, wo1 = (h - 3) // 2 + 1, (w - 3) // 2 + 1
    wo1p = ((wo1 + 7) // 8) * 8
    ho2, wo2 = (ho1 - 3) // 2 + 1, (wo1 - 3) // 2 + 1
    wo2p = ((wo2 + 7) // 8) * 8

    v = affine(x_ref[0], w0_ref, b0_ref)               # base_model0 stand-in   (h*wp, 128)
    v = _max_pool_3x3_s2(v, h, wp, wo1, wo1p)          # F.max_pool2d(x, 3, 2)  (ho1*wo1p, 128)
    v = affine(v, w1_ref, b1_ref)                      # base_model1 stand-in
    v = _max_pool_3x3_s2(v, ho1, wo1p, wo2, wo2p)      # F.max_pool2d(x, 3, 2)  (64, 128)
    v = affine(v, w2_ref, b2_ref)                      # base_model2 stand-in   (64, 256)
    v = affine(v, w3_ref, b3_ref)                      # base_model3 stand-in   (64, 2048)
    # F.avg_pool2d(kernel_size=8) + F.dropout (eval: identity) + x.view(N, -1)
    feat = jnp.mean(v, axis=0, keepdims=True)          # (1, 2048)
    # self.fc = Linear(2048, 2): logits in lanes 0..1 of the 8-lane output block.
    o_ref[0] = affine(feat, fcw_ref, fcb_ref, relu=False)


@jax.jit
def testcls_forward(x_nchw, params):
    n, c, h, w = x_nchw.shape
    assert c <= 8
    wp = ((w + 7) // 8) * 8
    ho1, wo1 = (h - 3) // 2 + 1, (w - 3) // 2 + 1
    ho2, wo2 = (ho1 - 3) // 2 + 1, (wo1 - 3) // 2 + 1
    assert ho2 == 8 and wo2 == 8, "avg_pool2d(8) + Linear(2048, 2) need an 8x8x2048 feature map"

    # NCHW -> NHWC, pad channels 3->8 and width to a multiple of 8, flatten spatial.
    x = jnp.transpose(x_nchw, (0, 2, 3, 1)).astype(jnp.float32)
    x = jnp.pad(x, ((0, 0), (0, 0), (0, wp - w), (0, 8 - c))).reshape(n, h * wp, 8)

    const = lambda i: (0, 0)
    out = pl.pallas_call(
        functools.partial(_fused_forward_kernel, h=h, w=w, wp=wp),
        grid=(n,),
        in_specs=[
            pl.BlockSpec((1, h * wp, 8), lambda i: (i, 0, 0)),  # per-image activations (~45 KB)
            pl.BlockSpec((8, 128), const),                      # w0  (3->16,    bf16)
            pl.BlockSpec((1, 128), const),                      # b0
            pl.BlockSpec((128, 128), const),                    # w1  (16->64,   bf16)
            pl.BlockSpec((1, 128), const),                      # b1
            pl.BlockSpec((128, 256), const),                    # w2  (64->256,  bf16)
            pl.BlockSpec((1, 256), const),                      # b2
            pl.BlockSpec((256, 2048), const),                   # w3  (256->2048, bf16)
            pl.BlockSpec((1, 2048), const),                     # b3
            pl.BlockSpec((2048, 8), const),                     # fc_w (2048->2, f32, 8 lanes)
            pl.BlockSpec((1, 8), const),                        # fc_b
        ],
        out_specs=pl.BlockSpec((1, 1, 8), lambda i: (i, 0, 0)),
        out_shape=jax.ShapeDtypeStruct((n, 1, 8), jnp.float32),
        compiler_params=pltpu.CompilerParams(
            dimension_semantics=("parallel",),      # batch splits across TCs where available
            vmem_limit_bytes=32 * 1024 * 1024,      # ~6 MiB actually used; safe on v5e/v6e/v7x
        ),
    )(x, params["w0"], params["b0"], params["w1"], params["b1"],
      params["w2"], params["b2"], params["w3"], params["b3"],
      params["fc_w"], params["fc_b"])
    return out[:, 0, :2]


# ----------------------------------------------------------------------------
# Parameters (deterministic, following initial_cls_weights conventions).
# Stand-in backbone stages: 3 -> 16 -> 64 -> 256 -> 2048 (1x1 conv + bias + ReLU).
# Padding-zeros invariant: padded input channels / output lanes carry zero weights and
# zero bias, so ReLU keeps them at exactly 0 and they never leak into real outputs.
# ----------------------------------------------------------------------------
def init_params(key):
    ks = jax.random.split(key, 5)

    def conv_w(k, cin, cout):
        # Conv2d init: normal(0, sqrt(2 / (kh*kw*out_channels))), bias = 0   (torch (out,in))
        std = math.sqrt(2.0 / (1 * 1 * cout))
        return std * jax.random.normal(k, (cout, cin), jnp.float32)

    def pad_to(a, shape):
        return jnp.zeros(shape, a.dtype).at[: a.shape[0], : a.shape[1]].set(a)

    w0 = conv_w(ks[0], 3, 16)
    w1 = conv_w(ks[1], 16, 64)
    w2 = conv_w(ks[2], 64, 256)
    w3 = conv_w(ks[3], 256, 2048)
    fc_w = 0.01 * jax.random.normal(ks[4], (2, 2048), jnp.float32)   # Linear(2048, 2) init

    return {
        "w0": pad_to(w0.T, (8, 128)).astype(jnp.bfloat16),
        "b0": jnp.zeros((1, 128), jnp.float32),
        "w1": pad_to(w1.T, (128, 128)).astype(jnp.bfloat16),
        "b1": jnp.zeros((1, 128), jnp.float32),
        "w2": pad_to(w2.T, (128, 256)).astype(jnp.bfloat16),
        "b2": jnp.zeros((1, 256), jnp.float32),
        "w3": w3.T.astype(jnp.bfloat16),                  # (256, 2048), f32 accumulation
        "b3": jnp.zeros((1, 2048), jnp.float32),
        "fc_w": pad_to(fc_w.T, (2048, 8)),                # f32, only first 2 lanes real
        "fc_b": jnp.zeros((1, 8), jnp.float32),
    }


def _reference_forward(x_nchw, params):
    """Pure-JAX f32 reference of the same stand-in forward (tolerance check)."""
    p = {k: a.astype(jnp.float32) for k, a in params.items()}
    v = jnp.transpose(x_nchw, (0, 2, 3, 1)).astype(jnp.float32)

    def conv_relu(v, w, b):
        return jnp.maximum(jnp.einsum('nhwc,cd->nhwd', v, w[: v.shape[-1]]) + b[0], 0.0)

    def max_pool_3x3_s2(v):
        return jax.lax.reduce_window(v, -jnp.inf, jax.lax.max,
                                     (1, 3, 3, 1), (1, 2, 2, 1), 'VALID')

    v = conv_relu(v, p["w0"], p["b0"])
    v = max_pool_3x3_s2(v)
    v = conv_relu(v, p["w1"], p["b1"])
    v = max_pool_3x3_s2(v)
    v = conv_relu(v, p["w2"], p["b2"])
    v = conv_relu(v, p["w3"], p["b3"])
    feat = jnp.mean(v, axis=(1, 2))                       # avg_pool2d(8) on the 8x8 map
    return feat @ p["fc_w"][:, :2] + p["fc_b"][0, :2]


if __name__ == "__main__":
    key = jax.random.PRNGKey(0)
    pkey, xkey = jax.random.split(key)
    params = init_params(pkey)

    # 35x35 input -> maxpool(3,2) -> 17 -> maxpool(3,2) -> 8: the smallest spatial size
    # that yields the 8x8x2048 feature map avg_pool2d(8) + Linear(2048, 2) expect.
    x = jax.random.normal(xkey, (2, 3, 35, 35), jnp.float32)

    logits = jax.block_until_ready(testcls_forward(x, params))
    assert logits.shape == (2, 2) and logits.dtype == jnp.float32
    assert bool(jnp.all(jnp.isfinite(logits)))

    # Tolerance check vs the f32 reference (kernel matmuls use bf16 inputs, f32 accumulate).
    ref = jax.block_until_ready(jax.jit(_reference_forward)(x, params))
    rel_err = float(jnp.max(jnp.abs(logits - ref)) / (jnp.max(jnp.abs(ref)) + 1e-6))
    assert rel_err < 0.05, f"kernel vs reference mismatch: rel_err={rel_err}"

    print("KERNEL_OK")
</pallas_src>

<mosaic_0001>
module attributes {stable_mosaic.version = 11 : i64} {
  func.func @_fused_forward_kernel(%arg0: i32, %arg1: memref<1x1400x8xf32, #tpu.memory_space<vmem>>, %arg2: memref<8x128xbf16, #tpu.memory_space<vmem>>, %arg3: memref<1x128xf32, #tpu.memory_space<vmem>>, %arg4: memref<128x128xbf16, #tpu.memory_space<vmem>>, %arg5: memref<1x128xf32, #tpu.memory_space<vmem>>, %arg6: memref<128x256xbf16, #tpu.memory_space<vmem>>, %arg7: memref<1x256xf32, #tpu.memory_space<vmem>>, %arg8: memref<256x2048xbf16, #tpu.memory_space<vmem>>, %arg9: memref<1x2048xf32, #tpu.memory_space<vmem>>, %arg10: memref<2048x8xf32, #tpu.memory_space<vmem>>, %arg11: memref<1x8xf32, #tpu.memory_space<vmem>>, %arg12: memref<1x1x8xf32, #tpu.memory_space<vmem>>) attributes {dimension_semantics = [#tpu.dimension_semantics<parallel>], iteration_bounds = array<i64: 2>, scalar_prefetch = 0 : i64, scratch_operands = 0 : i64, tpu.core_type = #tpu.core_type<tc>, window_params = [{transform_indices = @transform_0, window_bounds = array<i64: 1, 1400, 8>}, {pipeline_mode = #tpu.pipeline_mode<synchronous>, transform_indices = @transform_1, window_bounds = array<i64: 8, 128>}, {pipeline_mode = #tpu.pipeline_mode<synchronous>, transform_indices = @transform_2, window_bounds = array<i64: 1, 128>}, {pipeline_mode = #tpu.pipeline_mode<synchronous>, transform_indices = @transform_3, window_bounds = array<i64: 128, 128>}, {pipeline_mode = #tpu.pipeline_mode<synchronous>, transform_indices = @transform_4, window_bounds = array<i64: 1, 128>}, {pipeline_mode = #tpu.pipeline_mode<synchronous>, transform_indices = @transform_5, window_bounds = array<i64: 128, 256>}, {pipeline_mode = #tpu.pipeline_mode<synchronous>, transform_indices = @transform_6, window_bounds = array<i64: 1, 256>}, {pipeline_mode = #tpu.pipeline_mode<synchronous>, transform_indices = @transform_7, window_bounds = array<i64: 256, 2048>}, {pipeline_mode = #tpu.pipeline_mode<synchronous>, transform_indices = @transform_8, window_bounds = array<i64: 1, 2048>}, {pipeline_mode = #tpu.pipeline_mode<synchronous>, transform_indices = @transform_9, window_bounds = array<i64: 2048, 8>}, {pipeline_mode = #tpu.pipeline_mode<synchronous>, transform_indices = @transform_10, window_bounds = array<i64: 1, 8>}, {transform_indices = @transform_11, window_bounds = array<i64: 1, 1, 8>}]} {
    %c0 = arith.constant 0 : index
    %c0_0 = arith.constant 0 : index
    %c0_1 = arith.constant 0 : index
    %0 = vector.load %arg1[%c0, %c0_0, %c0_1] : memref<1x1400x8xf32, #tpu.memory_space<vmem>>, vector<1x1400x8xf32>
    %1 = vector.shape_cast %0 : vector<1x1400x8xf32> to vector<1400x8xf32>
    %2 = arith.truncf %1 : vector<1400x8xf32> to vector<1400x8xbf16>
    %c0_2 = arith.constant 0 : index
    %c0_3 = arith.constant 0 : index
    %3 = vector.load %arg2[%c0_2, %c0_3] : memref<8x128xbf16, #tpu.memory_space<vmem>>, vector<8x128xbf16>
    %cst = arith.constant dense<0.000000e+00> : vector<1400x128xf32>
    %4 = tpu.matmul %2, %3, %cst {dimension_numbers = #tpu.dot_dimension_numbers<[1], [0], [0], [1], [0, 0, 1, 1], [], []>} : vector<1400x8xbf16>, vector<8x128xbf16>, vector<1400x128xf32> -> vector<1400x128xf32>
    %c0_4 = arith.constant 0 : index
    %c0_5 = arith.constant 0 : index
    %5 = vector.load %arg3[%c0_4, %c0_5] : memref<1x128xf32, #tpu.memory_space<vmem>>, vector<1x128xf32>
    %6 = vector.broadcast %5 : vector<1x128xf32> to vector<1400x128xf32>
    %7 = arith.addf %4, %6 : vector<1400x128xf32>
    %cst_6 = arith.constant 0.000000e+00 : f32
    %8 = vector.broadcast %cst_6 : f32 to vector<1400x128xf32>
    %9 = arith.maximumf %7, %8 : vector<1400x128xf32>
    %10 = vector.shape_cast %9 : vector<1400x128xf32> to vector<35x40x128xf32>
    %11 = vector.extract_strided_slice %10 {offsets = [0, 0, 0], sizes = [34, 40, 128], strides = [1, 1, 1]} : vector<35x40x128xf32> to vector<34x40x128xf32>
    %12 = vector.extract_strided_slice %10 {offsets = [1, 0, 0], sizes = [34, 40, 128], strides = [1, 1, 1]} : vector<35x40x128xf32> to vector<34x40x128xf32>
    %13 = arith.maximumf %11, %12 : vector<34x40x128xf32>
    %14 = vector.shape_cast %13 : vector<34x40x128xf32> to vector<17x2x40x128xf32>
    %15 = vector.extract_strided_slice %14 {offsets = [0, 0, 0, 0], sizes = [17, 1, 40, 128], strides = [1, 1, 1, 1]} : vector<17x2x40x128xf32> to vector<17x1x40x128xf32>
    %16 = vector.shape_cast %15 : vector<17x1x40x128xf32> to vector<17x40x128xf32>
    %17 = vector.extract_strided_slice %14 {offsets = [0, 1, 0, 0], sizes = [17, 1, 40, 128], strides = [1, 1, 1, 1]} : vector<17x2x40x128xf32> to vector<17x1x40x128xf32>
    %18 = vector.shape_cast %17 : vector<17x1x40x128xf32> to vector<17x40x128xf32>
    %19 = arith.maximumf %16, %18 : vector<17x40x128xf32>
    %20 = vector.extract_strided_slice %19 {offsets = [0, 0, 0], sizes = [17, 38, 128], strides = [1, 1, 1]} : vector<17x40x128xf32> to vector<17x38x128xf32>
    %21 = vector.extract_strided_slice %19 {offsets = [0, 1, 0], sizes = [17, 38, 128], strides = [1, 1, 1]} : vector<17x40x128xf32> to vector<17x38x128xf32>
    %22 = arith.maximumf %20, %21 : vector<17x38x128xf32>
    %23 = vector.extract_strided_slice %19 {offsets = [0, 2, 0], sizes = [17, 38, 128], strides = [1, 1, 1]} : vector<17x40x128xf32> to vector<17x38x128xf32>
    %24 = arith.maximumf %22, %23 : vector<17x38x128xf32>
    %25 = tpu.iota {dimensions = array<i32: 0>} : vector<24x38xi32>
    %26 = tpu.iota {dimensions = array<i32: 1>} : vector<24x38xi32>
    %c2_i32 = arith.constant 2 : i32
    %27 = vector.broadcast %c2_i32 : i32 to vector<24x38xi32>
    %28 = arith.muli %27, %25 : vector<24x38xi32>
    %29 = arith.cmpi eq, %26, %28 : vector<24x38xi32>
    %c17_i32 = arith.constant 17 : i32
    %30 = vector.broadcast %c17_i32 : i32 to vector<24x38xi32>
    %31 = arith.cmpi slt, %25, %30 : vector<24x38xi32>
    %32 = arith.andi %29, %31 : vector<24x38xi1>
    %cst_7 = arith.constant 1.000000e+00 : f32
    %cst_8 = arith.constant 0.000000e+00 : f32
    %33 = vector.broadcast %cst_7 : f32 to vector<24x38xf32>
    %34 = vector.broadcast %cst_8 : f32 to vector<24x38xf32>
    %35 = arith.select %32, %33, %34 : vector<24x38xi1>, vector<24x38xf32>
    %36 = arith.truncf %35 : vector<24x38xf32> to vector<24x38xbf16>
    %37 = vector.shape_cast %36 : vector<24x38xbf16> to vector<1x24x38xbf16>
    %38 = vector.shape_cast %37 : vector<1x24x38xbf16> to vector<1x24x38xbf16>
    %39 = vector.broadcast %38 : vector<1x24x38xbf16> to vector<17x24x38xbf16>
    %40 = arith.truncf %24 : vector<17x38x128xf32> to vector<17x38x128xbf16>
    "tpu.trace_start"() <{level = 10 : i32, message = "bjk,bkc->bjc"}> : () -> ()
    %cst_9 = arith.constant dense<0.000000e+00> : vector<17x24x128xf32>
    %41 = tpu.matmul %39, %40, %cst_9 {dimension_numbers = #tpu.dot_dimension_numbers<[2], [1], [1], [2], [0, 0, 0, 1, 1, 2], [0], [0]>} : vector<17x24x38xbf16>, vector<17x38x128xbf16>, vector<17x24x128xf32> -> vector<17x24x128xf32>
    "tpu.trace_stop"() : () -> ()
    %42 = vector.shape_cast %41 : vector<17x24x128xf32> to vector<408x128xf32>
    %43 = arith.truncf %42 : vector<408x128xf32> to vector<408x128xbf16>
    %c0_10 = arith.constant 0 : index
    %c0_11 = arith.constant 0 : index
    %44 = vector.load %arg4[%c0_10, %c0_11] : memref<128x128xbf16, #tpu.memory_space<vmem>>, vector<128x128xbf16>
    %cst_12 = arith.constant dense<0.000000e+00> : vector<408x128xf32>
    %45 = tpu.matmul %43, %44, %cst_12 {dimension_numbers = #tpu.dot_dimension_numbers<[1], [0], [0], [1], [0, 0, 1, 1], [], []>} : vector<408x128xbf16>, vector<128x128xbf16>, vector<408x128xf32> -> vector<408x128xf32>
    %c0_13 = arith.constant 0 : index
    %c0_14 = arith.constant 0 : index
    %46 = vector.load %arg5[%c0_13, %c0_14] : memref<1x128xf32, #tpu.memory_space<vmem>>, vector<1x128xf32>
    %47 = vector.broadcast %46 : vector<1x128xf32> to vector<408x128xf32>
    %48 = arith.addf %45, %47 : vector<408x128xf32>
    %cst_15 = arith.constant 0.000000e+00 : f32
    %49 = vector.broadcast %cst_15 : f32 to vector<408x128xf32>
    %50 = arith.maximumf %48, %49 : vector<408x128xf32>
    %51 = vector.shape_cast %50 : vector<408x128xf32> to vector<17x24x128xf32>
    %52 = vector.extract_strided_slice %51 {offsets = [0, 0, 0], sizes = [16, 24, 128], strides = [1, 1, 1]} : vector<17x24x128xf32> to vector<16x24x128xf32>
    %53 = vector.extract_strided_slice %51 {offsets = [1, 0, 0], sizes = [16, 24, 128], strides = [1, 1, 1]} : vector<17x24x128xf32> to vector<16x24x128xf32>
    %54 = arith.maximumf %52, %53 : vector<16x24x128xf32>
    %55 = vector.shape_cast %54 : vector<16x24x128xf32> to vector<8x2x24x128xf32>
    %56 = vector.extract_strided_slice %55 {offsets = [0, 0, 0, 0], sizes = [8, 1, 24, 128], strides = [1, 1, 1, 1]} : vector<8x2x24x128xf32> to vector<8x1x24x128xf32>
    %57 = vector.shape_cast %56 : vector<8x1x24x128xf32> to vector<8x24x128xf32>
    %58 = vector.extract_strided_slice %55 {offsets = [0, 1, 0, 0], sizes = [8, 1, 24, 128], strides = [1, 1, 1, 1]} : vector<8x2x24x128xf32> to vector<8x1x24x128xf32>
    %59 = vector.shape_cast %58 : vector<8x1x24x128xf32> to vector<8x24x128xf32>
    %60 = arith.maximumf %57, %59 : vector<8x24x128xf32>
    %61 = vector.extract_strided_slice %60 {offsets = [0, 0, 0], sizes = [8, 22, 128], strides = [1, 1, 1]} : vector<8x24x128xf32> to vector<8x22x128xf32>
    %62 = vector.extract_strided_slice %60 {offsets = [0, 1, 0], sizes = [8, 22, 128], strides = [1, 1, 1]} : vector<8x24x128xf32> to vector<8x22x128xf32>
    %63 = arith.maximumf %61, %62 : vector<8x22x128xf32>
    %64 = vector.extract_strided_slice %60 {offsets = [0, 2, 0], sizes = [8, 22, 128], strides = [1, 1, 1]} : vector<8x24x128xf32> to vector<8x22x128xf32>
    %65 = arith.maximumf %63, %64 : vector<8x22x128xf32>
    %66 = tpu.iota {dimensions = array<i32: 0>} : vector<8x22xi32>
    %67 = tpu.iota {dimensions = array<i32: 1>} : vector<8x22xi32>
    %c2_i32_16 = arith.constant 2 : i32
    %68 = vector.broadcast %c2_i32_16 : i32 to vector<8x22xi32>
    %69 = arith.muli %68, %66 : vector<8x22xi32>
    %70 = arith.cmpi eq, %67, %69 : vector<8x22xi32>
    %c8_i32 = arith.constant 8 : i32
    %71 = vector.broadcast %c8_i32 : i32 to vector<8x22xi32>
    %72 = arith.cmpi slt, %66, %71 : vector<8x22xi32>
    %73 = arith.andi %70, %72 : vector<8x22xi1>
    %cst_17 = arith.constant 1.000000e+00 : f32
    %cst_18 = arith.constant 0.000000e+00 : f32
    %74 = vector.broadcast %cst_17 : f32 to vector<8x22xf32>
    %75 = vector.broadcast %cst_18 : f32 to vector<8x22xf32>
    %76 = arith.select %73, %74, %75 : vector<8x22xi1>, vector<8x22xf32>
    %77 = arith.truncf %76 : vector<8x22xf32> to vector<8x22xbf16>
    %78 = vector.shape_cast %77 : vector<8x22xbf16> to vector<1x8x22xbf16>
    %79 = vector.shape_cast %78 : vector<1x8x22xbf16> to vector<1x8x22xbf16>
    %80 = vector.broadcast %79 : vector<1x8x22xbf16> to vector<8x8x22xbf16>
    %81 = arith.truncf %65 : vector<8x22x128xf32> to vector<8x22x128xbf16>
    "tpu.trace_start"() <{level = 10 : i32, message = "bjk,bkc->bjc"}> : () -> ()
    %cst_19 = arith.constant dense<0.000000e+00> : vector<8x8x128xf32>
    %82 = tpu.matmul %80, %81, %cst_19 {dimension_numbers = #tpu.dot_dimension_numbers<[2], [1], [1], [2], [0, 0, 0, 1, 1, 2], [0], [0]>} : vector<8x8x22xbf16>, vector<8x22x128xbf16>, vector<8x8x128xf32> -> vector<8x8x128xf32>
    "tpu.trace_stop"() : () -> ()
    %83 = vector.shape_cast %82 : vector<8x8x128xf32> to vector<64x128xf32>
    %84 = arith.truncf %83 : vector<64x128xf32> to vector<64x128xbf16>
    %c0_20 = arith.constant 0 : index
    %c0_21 = arith.constant 0 : index
    %85 = vector.load %arg6[%c0_20, %c0_21] : memref<128x256xbf16, #tpu.memory_space<vmem>>, vector<128x256xbf16>
    %cst_22 = arith.constant dense<0.000000e+00> : vector<64x256xf32>
    %86 = tpu.matmul %84, %85, %cst_22 {dimension_numbers = #tpu.dot_dimension_numbers<[1], [0], [0], [1], [0, 0, 1, 1], [], []>} : vector<64x128xbf16>, vector<128x256xbf16>, vector<64x256xf32> -> vector<64x256xf32>
    %c0_23 = arith.constant 0 : index
    %c0_24 = arith.constant 0 : index
    %87 = vector.load %arg7[%c0_23, %c0_24] : memref<1x256xf32, #tpu.memory_space<vmem>>, vector<1x256xf32>
    %88 = vector.broadcast %87 : vector<1x256xf32> to vector<64x256xf32>
    %89 = arith.addf %86, %88 : vector<64x256xf32>
    %cst_25 = arith.constant 0.000000e+00 : f32
    %90 = vector.broadcast %cst_25 : f32 to vector<64x256xf32>
    %91 = arith.maximumf %89, %90 : vector<64x256xf32>
    %92 = arith.truncf %91 : vector<64x256xf32> to vector<64x256xbf16>
    %c0_26 = arith.constant 0 : index
    %c0_27 = arith.constant 0 : index
    %93 = vector.load %arg8[%c0_26, %c0_27] : memref<256x2048xbf16, #tpu.memory_space<vmem>>, vector<256x2048xbf16>
    %cst_28 = arith.constant dense<0.000000e+00> : vector<64x2048xf32>
    %94 = tpu.matmul %92, %93, %cst_28 {dimension_numbers = #tpu.dot_dimension_numbers<[1], [0], [0], [1], [0, 0, 1, 1], [], []>} : vector<64x256xbf16>, vector<256x2048xbf16>, vector<64x2048xf32> -> vector<64x2048xf32>
    %c0_29 = arith.constant 0 : index
    %c0_30 = arith.constant 0 : index
    %95 = vector.load %arg9[%c0_29, %c0_30] : memref<1x2048xf32, #tpu.memory_space<vmem>>, vector<1x2048xf32>
    %96 = vector.broadcast %95 : vector<1x2048xf32> to vector<64x2048xf32>
    %97 = arith.addf %94, %96 : vector<64x2048xf32>
    %cst_31 = arith.constant 0.000000e+00 : f32
    %98 = vector.broadcast %cst_31 : f32 to vector<64x2048xf32>
    %99 = arith.maximumf %97, %98 : vector<64x2048xf32>
    %cst_32 = arith.constant dense<0.000000e+00> : vector<2048xf32>
    %100 = vector.multi_reduction <add>, %99, %cst_32 [0] : vector<64x2048xf32> to vector<2048xf32>
    %101 = vector.shape_cast %100 : vector<2048xf32> to vector<1x2048xf32>
    %cst_33 = arith.constant 6.400000e+01 : f32
    %102 = vector.broadcast %cst_33 : f32 to vector<1x2048xf32>
    %103 = arith.divf %101, %102 : vector<1x2048xf32>
    %c0_34 = arith.constant 0 : index
    %c0_35 = arith.constant 0 : index
    %104 = vector.load %arg10[%c0_34, %c0_35] : memref<2048x8xf32, #tpu.memory_space<vmem>>, vector<2048x8xf32>
    %cst_36 = arith.constant dense<0.000000e+00> : vector<1x8xf32>
    %105 = tpu.matmul %103, %104, %cst_36 {dimension_numbers = #tpu.dot_dimension_numbers<[1], [0], [0], [1], [0, 0, 1, 1], [], []>} : vector<1x2048xf32>, vector<2048x8xf32>, vector<1x8xf32> -> vector<1x8xf32>
    %c0_37 = arith.constant 0 : index
    %c0_38 = arith.constant 0 : index
    %106 = vector.load %arg11[%c0_37, %c0_38] : memref<1x8xf32, #tpu.memory_space<vmem>>, vector<1x8xf32>
    %107 = arith.addf %105, %106 : vector<1x8xf32>
    %c0_39 = arith.constant 0 : index
    %c0_40 = arith.constant 0 : index
    %c0_41 = arith.constant 0 : index
    %108 = vector.load %arg12[%c0_39, %c0_40, %c0_41] : memref<1x1x8xf32, #tpu.memory_space<vmem>>, vector<1x1x8xf32>
    %109 = vector.shape_cast %108 : vector<1x1x8xf32> to vector<1x8xf32>
    %110 = vector.shape_cast %107 : vector<1x8xf32> to vector<1x1x8xf32>
    tpu.vector_store %arg12[%c0_39, %c0_40, %c0_41], %110 {strides = array<i32>} : memref<1x1x8xf32, #tpu.memory_space<vmem>>, vector<1x1x8xf32>,
    return
  }
  func.func @transform_0(%arg0: i32) -> (i32, i32, i32) {
    %c0_i32 = arith.constant 0 : i32
    %c0_i32_0 = arith.constant 0 : i32
    %c0_i32_1 = arith.constant 0 : i32
    return %arg0, %c0_i32, %c0_i32_0 : i32, i32, i32
  }
  func.func @transform_1(%arg0: i32) -> (i32, i32) {
    %c0_i32 = arith.constant 0 : i32
    %c0_i32_0 = arith.constant 0 : i32
    %c0_i32_1 = arith.constant 0 : i32
    return %c0_i32, %c0_i32_0 : i32, i32
  }
  func.func @transform_2(%arg0: i32) -> (i32, i32) {
    %c0_i32 = arith.constant 0 : i32
    %c0_i32_0 = arith.constant 0 : i32
    %c0_i32_1 = arith.constant 0 : i32
    return %c0_i32, %c0_i32_0 : i32, i32
  }
  func.func @transform_3(%arg0: i32) -> (i32, i32) {
    %c0_i32 = arith.constant 0 : i32
    %c0_i32_0 = arith.constant 0 : i32
    %c0_i32_1 = arith.constant 0 : i32
    return %c0_i32, %c0_i32_0 : i32, i32
  }
  func.func @transform_4(%arg0: i32) -> (i32, i32) {
    %c0_i32 = arith.constant 0 : i32
    %c0_i32_0 = arith.constant 0 : i32
    %c0_i32_1 = arith.constant 0 : i32
    return %c0_i32, %c0_i32_0 : i32, i32
  }
  func.func @transform_5(%arg0: i32) -> (i32, i32) {
    %c0_i32 = arith.constant 0 : i32
    %c0_i32_0 = arith.constant 0 : i32
    %c0_i32_1 = arith.constant 0 : i32
    return %c0_i32, %c0_i32_0 : i32, i32
  }
  func.func @transform_6(%arg0: i32) -> (i32, i32) {
    %c0_i32 = arith.constant 0 : i32
    %c0_i32_0 = arith.constant 0 : i32
    %c0_i32_1 = arith.constant 0 : i32
    return %c0_i32, %c0_i32_0 : i32, i32
  }
  func.func @transform_7(%arg0: i32) -> (i32, i32) {
    %c0_i32 = arith.constant 0 : i32
    %c0_i32_0 = arith.constant 0 : i32
    %c0_i32_1 = arith.constant 0 : i32
    return %c0_i32, %c0_i32_0 : i32, i32
  }
  func.func @transform_8(%arg0: i32) -> (i32, i32) {
    %c0_i32 = arith.constant 0 : i32
    %c0_i32_0 = arith.constant 0 : i32
    %c0_i32_1 = arith.constant 0 : i32
    return %c0_i32, %c0_i32_0 : i32, i32
  }
  func.func @transform_9(%arg0: i32) -> (i32, i32) {
    %c0_i32 = arith.constant 0 : i32
    %c0_i32_0 = arith.constant 0 : i32
    %c0_i32_1 = arith.constant 0 : i32
    return %c0_i32, %c0_i32_0 : i32, i32
  }
  func.func @transform_10(%arg0: i32) -> (i32, i32) {
    %c0_i32 = arith.constant 0 : i32
    %c0_i32_0 = arith.constant 0 : i32
    %c0_i32_1 = arith.constant 0 : i32
    return %c0_i32, %c0_i32_0 : i32, i32
  }
  func.func @transform_11(%arg0: i32) -> (i32, i32, i32) {
    %c0_i32 = arith.constant 0 : i32
    %c0_i32_0 = arith.constant 0 : i32
    %c0_i32_1 = arith.constant 0 : i32
    return %arg0, %c0_i32, %c0_i32_0 : i32, i32, i32
  }
}

</mosaic_0001>

<llo_original>
// kernel: testcls_forward.1
$region0: #{testcls_forward.1}
  #allocation0 [shape = 'u32[]', space=smem, size = 0x4, offset = 0x4, fixed_abs, tag = 'smem constant byte address 0x4 - core index']
  #allocation1 [shape = 'u32[72,128]{1,0:T(1,128)}', space=vmem, size = 0x9000, scoped, tag = 'internal scratch']
  %s0 = inlined_call_operand.vmem [shape: f32[2,1400,8], index: 0, kind: input, shape index: {}]
  %s1 = inlined_call_operand.vmem [shape: bf16[8,128], index: 1, kind: input, shape index: {}]
  %s2 = inlined_call_operand.vmem [shape: f32[1,128], index: 2, kind: input, shape index: {}]
  %s3 = inlined_call_operand.vmem [shape: bf16[128,128], index: 3, kind: input, shape index: {}]
  %s4 = inlined_call_operand.vmem [shape: f32[1,128], index: 4, kind: input, shape index: {}]
  %s5 = inlined_call_operand.vmem [shape: bf16[128,256], index: 5, kind: input, shape index: {}]
  %s6 = inlined_call_operand.vmem [shape: f32[1,256], index: 6, kind: input, shape index: {}]
  %s7 = inlined_call_operand.vmem [shape: bf16[256,2048], index: 7, kind: input, shape index: {}]
  %s8 = inlined_call_operand.vmem [shape: f32[1,2048], index: 8, kind: input, shape index: {}]
  %s9 = inlined_call_operand.vmem [shape: f32[2048,8], index: 9, kind: input, shape index: {}]
  %s10 = inlined_call_operand.vmem [shape: f32[1,8], index: 10, kind: input, shape index: {}]
  %s11 = inlined_call_operand.hbm [shape: f32[2,1,8], index: 11, kind: output, shape index: {}]
  %s12 = sld [smem:[#allocation0]]
  $region77: #{testcls_forward.1} parent=0
    _
  %s14 = ssub.s32 1, %s12
  %s15 = scalar_select 0, %s14, %s12
  $region1: #{testcls_forward.1} parent=0
    #allocation2 [shape = 'u8[1024]{0}', space=vmem, size = 0x400, scoped, tag = 'output window, operand 0']
    #allocation3 [shape = 's32[2]{0}', space=sflag, size = 0x8, scoped, tag = 'scoped memory for testcls_forward.1']
    %16 = vsyncpa [#allocation3], 0
    %s17 = scalar_lea.sflag [#allocation3], 1
    %18 = vsyncpa %s17, 0
    loop: start=0, step=1, limit=4
    $region2: #{testcls_forward.1} parent=1 // loop_pre_header
      _
    $region3: #{testcls_forward.1} parent=1 // loop_header
      %s20 = sphi 0, %s24
      %p21 = scmp.ge.s32.totalorder %s20, 4
      %s30 = sphi 0, %s32
      %s33 = sphi 0, %s30
      %s34 = sphi 0, %s33
      %s50 = sphi 0, %s34
      %s54 = sphi 0, %s54
      %s56 = sphi 0, %s54
      %s57 = sphi 0, %s56
      %s71 = sphi 0, %s57
      %s75 = sphi 0, %s75
      %s77 = sphi 0, %s75
      %s78 = sphi 0, %s77
      %s92 = sphi 0, %s78
      %s96 = sphi 0, %s96
      %s98 = sphi 0, %s96
      %s99 = sphi 0, %s98
      %s113 = sphi 0, %s99
      %s117 = sphi 0, %s117
      %s119 = sphi 0, %s117
      %s120 = sphi 0, %s119
      %s134 = sphi 0, %s120
      %s138 = sphi 0, %s138
      %s140 = sphi 0, %s138
      %s141 = sphi 0, %s140
      %s155 = sphi 0, %s141
      %s159 = sphi 0, %s159
      %s161 = sphi 0, %s159
      %s162 = sphi 0, %s161
      %s176 = sphi 0, %s162
      %s180 = sphi 0, %s180
      %s182 = sphi 0, %s180
      %s183 = sphi 0, %s182
      %s197 = sphi 0, %s183
      %s201 = sphi 0, %s201
      %s203 = sphi 0, %s201
      %s204 = sphi 0, %s203
      %s218 = sphi 0, %s204
      %s222 = sphi 0, %s222
      %s224 = sphi 0, %s222
      %s225 = sphi 0, %s224
      %s239 = sphi 0, %s225
      %s243 = sphi 0, %s243
      %s245 = sphi 0, %s243
      %s246 = sphi 0, %s245
      %s260 = sphi 0, %s246
      %s266 = sphi 0, %s268
      %s269 = sphi 0, %s266
      %s270 = sphi 0, %s269
      %s286 = sphi 0, %s270
    $region4: #{testcls_forward.1} parent=1 // loop_header_branch
      %23 = sbr.rel (%p21) target = $region8
    $region5: #{testcls_forward.1} parent=1 // loop_body
      %s25 = ssub.s32 %s20, 1
      %s26 = ssub.s32 %s20, 2
      %s27 = sadd.s32 %s20, 1
      %s28 = ssub.s32 %s20, %s27
      %p29 = scmp.eq.s32.totalorder %s28, 0
      %s31 = sadd.s32 %s30, 1
      %s32 = scalar_select %p29, %s30, %s31
      %p35 = pneg %p29
      %p36 = scmp.eq.s32.totalorder %s20, 1
      %p37 = por %p35, %p36
      %p38 = scmp.ne.s32.totalorder %s30, %s33
      %p39 = scmp.eq.s32.totalorder %s20, 0
      %p40 = por %p38, %p39
      %p41 = scmp.ne.s32.totalorder %s30, %s33
      %p42 = scmp.eq.s32.totalorder %s25, 1
      %p43 = por %p41, %p42
      %p44 = scmp.ne.s32.totalorder %s33, %s34
      %p45 = scmp.eq.s32.totalorder %s25, 0
      %p46 = por %p44, %p45
      %p47 = scmp.ne.s32.totalorder %s33, %s34
      %p48 = scmp.eq.s32.totalorder %s26, 1
      %p49 = por %p47, %p48
      %p51 = scmp.ne.s32.totalorder %s34, %s50
      %p52 = scmp.eq.s32.totalorder %s26, 0
      %p53 = por %p51, %p52
      %s55 = sadd.s32 %s54, 1
      %p58 = scmp.eq.s32.totalorder %s20, 1
      %p59 = scmp.ne.s32.totalorder %s54, %s56
      %p60 = scmp.eq.s32.totalorder %s20, 0
      %p61 = por %p59, %p60
      %p62 = scmp.ne.s32.totalorder %s54, %s56
      %p63 = scmp.eq.s32.totalorder %s25, 1
      %p64 = por %p62, %p63
      %p65 = scmp.ne.s32.totalorder %s56, %s57
      %p66 = scmp.eq.s32.totalorder %s25, 0
      %p67 = por %p65, %p66
      %p68 = scmp.ne.s32.totalorder %s56, %s57
      %p69 = scmp.eq.s32.totalorder %s26, 1
      %p70 = por %p68, %p69
      %p72 = scmp.ne.s32.totalorder %s57, %s71
      %p73 = scmp.eq.s32.totalorder %s26, 0
      %p74 = por %p72, %p73
      %s76 = sadd.s32 %s75, 1
      %p79 = scmp.eq.s32.totalorder %s20, 1
      %p80 = scmp.ne.s32.totalorder %s75, %s77
      %p81 = scmp.eq.s32.totalorder %s20, 0
      %p82 = por %p80, %p81
      %p83 = scmp.ne.s32.totalorder %s75, %s77
      %p84 = scmp.eq.s32.totalorder %s25, 1
      %p85 = por %p83, %p84
      %p86 = scmp.ne.s32.totalorder %s77, %s78
      %p87 = scmp.eq.s32.totalorder %s25, 0
      %p88 = por %p86, %p87
      %p89 = scmp.ne.s32.totalorder %s77, %s78
      %p90 = scmp.eq.s32.totalorder %s26, 1
      %p91 = por %p89, %p90
      %p93 = scmp.ne.s32.totalorder %s78, %s92
      %p94 = scmp.eq.s32.totalorder %s26, 0
      %p95 = por %p93, %p94
      %s97 = sadd.s32 %s96, 1
      %p100 = scmp.eq.s32.totalorder %s20, 1
      %p101 = scmp.ne.s32.totalorder %s96, %s98
      %p102 = scmp.eq.s32.totalorder %s20, 0
      %p103 = por %p101, %p102
      %p104 = scmp.ne.s32.totalorder %s96, %s98
      %p105 = scmp.eq.s32.totalorder %s25, 1
      %p106 = por %p104, %p105
      %p107 = scmp.ne.s32.totalorder %s98, %s99
      %p108 = scmp.eq.s32.totalorder %s25, 0
      %p109 = por %p107, %p108
      %p110 = scmp.ne.s32.totalorder %s98, %s99
      %p111 = scmp.eq.s32.totalorder %s26, 1
      %p112 = por %p110, %p111
      %p114 = scmp.ne.s32.totalorder %s99, %s113
      %p115 = scmp.eq.s32.totalorder %s26, 0
      %p116 = por %p114, %p115
      %s118 = sadd.s32 %s117, 1
      %p121 = scmp.eq.s32.totalorder %s20, 1
      %p122 = scmp.ne.s32.totalorder %s117, %s119
      %p123 = scmp.eq.s32.totalorder %s20, 0
      %p124 = por %p122, %p123
      %p125 = scmp.ne.s32.totalorder %s117, %s119
      %p126 = scmp.eq.s32.totalorder %s25, 1
      %p127 = por %p125, %p126
      %p128 = scmp.ne.s32.totalorder %s119, %s120
      %p129 = scmp.eq.s32.totalorder %s25, 0
      %p130 = por %p128, %p129
      %p131 = scmp.ne.s32.totalorder %s119, %s120
      %p132 = scmp.eq.s32.totalorder %s26, 1
      %p133 = por %p131, %p132
      %p135 = scmp.ne.s32.totalorder %s120, %s134
      %p136 = scmp.eq.s32.totalorder %s26, 0
      %p137 = por %p135, %p136
      %s139 = sadd.s32 %s138, 1
      %p142 = scmp.eq.s32.totalorder %s20, 1
      %p143 = scmp.ne.s32.totalorder %s138, %s140
      %p144 = scmp.eq.s32.totalorder %s20, 0
      %p145 = por %p143, %p144
      %p146 = scmp.ne.s32.totalorder %s138, %s140
      %p147 = scmp.eq.s32.totalorder %s25, 1
      %p148 = por %p146, %p147
      %p149 = scmp.ne.s32.totalorder %s140, %s141
      %p150 = scmp.eq.s32.totalorder %s25, 0
      %p151 = por %p149, %p150
      %p152 = scmp.ne.s32.totalorder %s140, %s141
      %p153 = scmp.eq.s32.totalorder %s26, 1
      %p154 = por %p152, %p153
      %p156 = scmp.ne.s32.totalorder %s141, %s155
      %p157 = scmp.eq.s32.totalorder %s26, 0
      %p158 = por %p156, %p157
      %s160 = sadd.s32 %s159, 1
      %p163 = scmp.eq.s32.totalorder %s20, 1
      %p164 = scmp.ne.s32.totalorder %s159, %s161
      %p165 = scmp.eq.s32.totalorder %s20, 0
      %p166 = por %p164, %p165
      %p167 = scmp.ne.s32.totalorder %s159, %s161
      %p168 = scmp.eq.s32.totalorder %s25, 1
      %p169 = por %p167, %p168
      %p170 = scmp.ne.s32.totalorder %s161, %s162
      %p171 = scmp.eq.s32.totalorder %s25, 0
      %p172 = por %p170, %p171
      %p173 = scmp.ne.s32.totalorder %s161, %s162
      %p174 = scmp.eq.s32.totalorder %s26, 1
      %p175 = por %p173, %p174
      %p177 = scmp.ne.s32.totalorder %s162, %s176
      %p178 = scmp.eq.s32.totalorder %s26, 0
      %p179 = por %p177, %p178
      %s181 = sadd.s32 %s180, 1
      %p184 = scmp.eq.s32.totalorder %s20, 1
      %p185 = scmp.ne.s32.totalorder %s180, %s182
      %p186 = scmp.eq.s32.totalorder %s20, 0
      %p187 = por %p185, %p186
      %p188 = scmp.ne.s32.totalorder %s180, %s182
      %p189 = scmp.eq.s32.totalorder %s25, 1
      %p190 = por %p188, %p189
      %p191 = scmp.ne.s32.totalorder %s182, %s183
      %p192 = scmp.eq.s32.totalorder %s25, 0
      %p193 = por %p191, %p192
      %p194 = scmp.ne.s32.totalorder %s182, %s183
      %p195 = scmp.eq.s32.totalorder %s26, 1
      %p196 = por %p194, %p195
      %p198 = scmp.ne.s32.totalorder %s183, %s197
      %p199 = scmp.eq.s32.totalorder %s26, 0
      %p200 = por %p198, %p199
      %s202 = sadd.s32 %s201, 1
      %p205 = scmp.eq.s32.totalorder %s20, 1
      %p206 = scmp.ne.s32.totalorder %s201, %s203
      %p207 = scmp.eq.s32.totalorder %s20, 0
      %p208 = por %p206, %p207
      %p209 = scmp.ne.s32.totalorder %s201, %s203
      %p210 = scmp.eq.s32.totalorder %s25, 1
      %p211 = por %p209, %p210
      %p212 = scmp.ne.s32.totalorder %s203, %s204
      %p213 = scmp.eq.s32.totalorder %s25, 0
      %p214 = por %p212, %p213
      %p215 = scmp.ne.s32.totalorder %s203, %s204
      %p216 = scmp.eq.s32.totalorder %s26, 1
      %p217 = por %p215, %p216
      %p219 = scmp.ne.s32.totalorder %s204, %s218
      %p220 = scmp.eq.s32.totalorder %s26, 0
      %p221 = por %p219, %p220
      %s223 = sadd.s32 %s222, 1
      %p226 = scmp.eq.s32.totalorder %s20, 1
      %p227 = scmp.ne.s32.totalorder %s222, %s224
      %p228 = scmp.eq.s32.totalorder %s20, 0
      %p229 = por %p227, %p228
      %p230 = scmp.ne.s32.totalorder %s222, %s224
      %p231 = scmp.eq.s32.totalorder %s25, 1
      %p232 = por %p230, %p231
      %p233 = scmp.ne.s32.totalorder %s224, %s225
      %p234 = scmp.eq.s32.totalorder %s25, 0
      %p235 = por %p233, %p234
      %p236 = scmp.ne.s32.totalorder %s224, %s225
      %p237 = scmp.eq.s32.totalorder %s26, 1
      %p238 = por %p236, %p237
      %p240 = scmp.ne.s32.totalorder %s225, %s239
      %p241 = scmp.eq.s32.totalorder %s26, 0
      %p242 = por %p240, %p241
      %s244 = sadd.s32 %s243, 1
      %p247 = scmp.eq.s32.totalorder %s20, 1
      %p248 = scmp.ne.s32.totalorder %s243, %s245
      %p249 = scmp.eq.s32.totalorder %s20, 0
      %p250 = por %p248, %p249
      %p251 = scmp.ne.s32.totalorder %s243, %s245
      %p252 = scmp.eq.s32.totalorder %s25, 1
      %p253 = por %p251, %p252
      %p254 = scmp.ne.s32.totalorder %s245, %s246
      %p255 = scmp.eq.s32.totalorder %s25, 0
      %p256 = por %p254, %p255
      %p257 = scmp.ne.s32.totalorder %s245, %s246
      %p258 = scmp.eq.s32.totalorder %s26, 1
      %p259 = por %p257, %p258
      %p261 = scmp.ne.s32.totalorder %s246, %s260
      %p262 = scmp.eq.s32.totalorder %s26, 0
      %p263 = por %p261, %p262
      %s264 = ssub.s32 %s20, %s27
      %p265 = scmp.eq.s32.totalorder %s264, 0
      %s267 = sadd.s32 %s266, 1
      %s268 = scalar_select %p265, %s266, %s267
      %p271 = pneg %p265
      %p272 = scmp.eq.s32.totalorder %s20, 1
      %p273 = por %p271, %p272
      %p274 = scmp.ne.s32.totalorder %s266, %s269
      %p275 = scmp.eq.s32.totalorder %s20, 0
      %p276 = por %p274, %p275
      %p277 = scmp.ne.s32.totalorder %s266, %s269
      %p278 = scmp.eq.s32.totalorder %s25, 1
      %p279 = por %p277, %p278
      %p280 = scmp.ne.s32.totalorder %s269, %s270
      %p281 = scmp.eq.s32.totalorder %s25, 0
      %p282 = por %p280, %p281
      %p283 = scmp.ne.s32.totalorder %s269, %s270
      %p284 = scmp.eq.s32.totalorder %s26, 1
      %p285 = por %p283, %p284
      %p287 = scmp.ne.s32.totalorder %s270, %s286
      %p288 = scmp.eq.s32.totalorder %s26, 0
      %p289 = por %p287, %p288
      %p290 = scmp.le.s32.totalorder 1, %s20
      %p291 = scmp.lt.s32.totalorder %s20, 3
      %p292 = pnand %p290, %p291
      %p293 = pneg %p292
      // Predicated region
      $region9: #{testcls_forward.1} parent=5 // pred_check
        _
      $region10: #{testcls_forward.1} parent=5 // pred_check_branch
        %295 = sbr.rel (%p292) target = $region12
      $region11: #{testcls_forward.1} parent=5 // pred_region
        %s296 = ssub.s32 %s20, 1
        // Predicated region
        $region13: #{testcls_forward.1} parent=11 // pred_check
          %p297 = pneg %p67
        $region14: #{testcls_forward.1} parent=11 // pred_check_branch
          %299 = sbr.rel (%p297) target = $region16
        $region15: #{testcls_forward.1} parent=11 // pred_region
          _
        $region16: #{testcls_forward.1} parent=11 // pred_fallthru
          _
        // Predicated region
        $region17: #{testcls_forward.1} parent=11 // pred_check
          %p300 = pneg %p88
        $region18: #{testcls_forward.1} parent=11 // pred_check_branch
          %302 = sbr.rel (%p300) target = $region20
        $region19: #{testcls_forward.1} parent=11 // pred_region
          _
        $region20: #{testcls_forward.1} parent=11 // pred_fallthru
          _
        // Predicated region
        $region21: #{testcls_forward.1} parent=11 // pred_check
          %p303 = pneg %p109
        $region22: #{testcls_forward.1} parent=11 // pred_check_branch
          %305 = sbr.rel (%p303) target = $region24
        $region23: #{testcls_forward.1} parent=11 // pred_region
          _
        $region24: #{testcls_forward.1} parent=11 // pred_fallthru
          _
        // Predicated region
        $region25: #{testcls_forward.1} parent=11 // pred_check
          %p306 = pneg %p130
        $region26: #{testcls_forward.1} parent=11 // pred_check_branch
          %308 = sbr.rel (%p306) target = $region28
        $region27: #{testcls_forward.1} parent=11 // pred_region
          _
        $region28: #{testcls_forward.1} parent=11 // pred_fallthru
          _
        // Predicated region
        $region29: #{testcls_forward.1} parent=11 // pred_check
          %p309 = pneg %p151
        $region30: #{testcls_forward.1} parent=11 // pred_check_branch
          %311 = sbr.rel (%p309) target = $region32
        $region31: #{testcls_forward.1} parent=11 // pred_region
          _
        $region32: #{testcls_forward.1} parent=11 // pred_fallthru
          _
        // Predicated region
        $region33: #{testcls_forward.1} parent=11 // pred_check
          %p312 = pneg %p172
        $region34: #{testcls_forward.1} parent=11 // pred_check_branch
          %314 = sbr.rel (%p312) target = $region36
        $region35: #{testcls_forward.1} parent=11 // pred_region
          _
        $region36: #{testcls_forward.1} parent=11 // pred_fallthru
          _
        // Predicated region
        $region37: #{testcls_forward.1} parent=11 // pred_check
          %p315 = pneg %p193
        $region38: #{testcls_forward.1} parent=11 // pred_check_branch
          %317 = sbr.rel (%p315) target = $region40
        $region39: #{testcls_forward.1} parent=11 // pred_region
          _
        $region40: #{testcls_forward.1} parent=11 // pred_fallthru
          _
        // Predicated region
        $region41: #{testcls_forward.1} parent=11 // pred_check
          %p318 = pneg %p214
        $region42: #{testcls_forward.1} parent=11 // pred_check_branch
          %320 = sbr.rel (%p318) target = $region44
        $region43: #{testcls_forward.1} parent=11 // pred_region
          _
        $region44: #{testcls_forward.1} parent=11 // pred_fallthru
          _
        // Predicated region
        $region45: #{testcls_forward.1} parent=11 // pred_check
          %p321 = pneg %p235
        $region46: #{testcls_forward.1} parent=11 // pred_check_branch
          %323 = sbr.rel (%p321) target = $region48
        $region47: #{testcls_forward.1} parent=11 // pred_region
          _
        $region48: #{testcls_forward.1} parent=11 // pred_fallthru
          _
        // Predicated region
        $region49: #{testcls_forward.1} parent=11 // pred_check
          %p324 = pneg %p256
        $region50: #{testcls_forward.1} parent=11 // pred_check_branch
          %326 = sbr.rel (%p324) target = $region52
        $region51: #{testcls_forward.1} parent=11 // pred_region
          _
        $region52: #{testcls_forward.1} parent=11 // pred_fallthru
          _
      $region12: #{testcls_forward.1} parent=5 // pred_fallthru
        _
      %p327 = scmp.lt.s32.totalorder %s20, 2
      // Predicated region
      $region53: #{testcls_forward.1} parent=5 // pred_check
        %p328 = pneg %p327
      $region54: #{testcls_forward.1} parent=5 // pred_check_branch
        %330 = sbr.rel (%p328) target = $region56
      $region55: #{testcls_forward.1} parent=5 // pred_region
        // Predicated region
        $region57: #{testcls_forward.1} parent=55 // pred_check
          %p331 = pneg %p40
        $region58: #{testcls_forward.1} parent=55 // pred_check_branch
          %333 = sbr.rel (%p331) target = $region60
        $region59: #{testcls_forward.1} parent=55 // pred_region
          %p334 = scmp.lt.s32.totalorder %s20, 1
          %s335 = scalar_select %p334, %s20, 1
          %s336 = smul.addr %s335, 175
          %s337 = smul.addr %s336, 8
          %s338 = scalar_lea.vmem %s0, %s337
        $region60: #{testcls_forward.1} parent=55 // pred_fallthru
          _
      $region56: #{testcls_forward.1} parent=5 // pred_fallthru
        _
      %p339 = scmp.le.s32.totalorder 1, %s20
      %p340 = scmp.lt.s32.totalorder %s20, 3
      %p341 = pnand %p339, %p340
      %p342 = pneg %p341
      // Predicated region
      $region61: #{testcls_forward.1} parent=5 // pred_check
        _
      $region62: #{testcls_forward.1} parent=5 // pred_check_branch
        %344 = sbr.rel (%p341) target = $region64
      $region63: #{testcls_forward.1} parent=5 // pred_region
        %s345 = ssub.s32 %s20, 1
        %p346 = scmp.lt.s32.totalorder %s25, 1
        %s347 = scalar_select %p346, %s25, 1
        %s348 = smul.addr %s347, 175
        %s349 = smul.addr %s348, 8
        %s350 = scalar_lea.vmem %s0, %s349
        %p351 = pneg %p46
        %p352 = pneg %p43
        %p353 = pneg %p67
        %p354 = pneg %p64
        %p355 = pneg %p88
        %p356 = pneg %p85
        %p357 = pneg %p109
        %p358 = pneg %p106
        %p359 = pneg %p130
        %p360 = pneg %p127
        %p361 = pneg %p151
        %p362 = pneg %p148
        %p363 = pneg %p172
        %p364 = pneg %p169
        %p365 = pneg %p193
        %p366 = pneg %p190
        %p367 = pneg %p214
        %p368 = pneg %p211
        %p369 = pneg %p235
        %p370 = pneg %p232
        %p371 = pneg %p256
        %p372 = pneg %p253
        %p373 = pneg %p282
        %p374 = pneg %p279
        %s375 = sand.u32 %s269, 1
        %s376 = scalar_lea.sflag [#allocation3], %s375
        %s377 = sand.u32 %s269, 1
        %s378 = scalar_lea.vmem [#allocation2], %s377
        %p379 = scmp.lt.s32.totalorder %s25, 1
        %s380 = scalar_select %p379, %s25, 1
        %s381 = smul.addr %s380, 175
        %s382 = smul.addr %s381, 8
        %s383 = scalar_lea.vmem %s0, %s382
        %v385 = vld [vmem:[%s383] sm:$0xff]
        %v386 = vld [vmem:[%s383 + $0x8] sm:$0xff]
        %v387 = vld [vmem:[%s383 + $0x10] sm:$0xff]
        %v388 = vld [vmem:[%s383 + $0x18] sm:$0xff]
        %v389 = vld [vmem:[%s383 + $0x20] sm:$0xff]
        %v390 = vld [vmem:[%s383 + $0x28] sm:$0xff]
        %v391 = vld [vmem:[%s383 + $0x30] sm:$0xff]
        %v392 = vld [vmem:[%s383 + $0x38] sm:$0xff]
        %v393 = vld [vmem:[%s383 + $0x40] sm:$0xff]
        %v394 = vld [vmem:[%s383 + $0x48] sm:$0xff]
        %v395 = vld [vmem:[%s383 + $0x50] sm:$0xff]
        %v396 = vld [vmem:[%s383 + $0x58] sm:$0xff]
        %v397 = vld [vmem:[%s383 + $0x60] sm:$0xff]
        %v398 = vld [vmem:[%s383 + $0x68] sm:$0xff]
        %v399 = vld [vmem:[%s383 + $0x70] sm:$0xff]
        %v400 = vld [vmem:[%s383 + $0x78] sm:$0xff]
        %v401 = vld [vmem:[%s383 + $0x80] sm:$0xff]
        %v402 = vld [vmem:[%s383 + $0x88] sm:$0xff]
        %v403 = vld [vmem:[%s383 + $0x90] sm:$0xff]
        %v404 = vld [vmem:[%s383 + $0x98] sm:$0xff]
        %v405 = vld [vmem:[%s383 + $0xa0] sm:$0xff]
        %v406 = vld [vmem:[%s383 + $0xa8] sm:$0xff]
        %v407 = vld [vmem:[%s383 + $0xb0] sm:$0xff]
        %v408 = vld [vmem:[%s383 + $0xb8] sm:$0xff]
        %v409 = vld [vmem:[%s383 + $0xc0] sm:$0xff]
        %v410 = vld [vmem:[%s383 + $0xc8] sm:$0xff]
        %v411 = vld [vmem:[%s383 + $0xd0] sm:$0xff]
        %v412 = vld [vmem:[%s383 + $0xd8] sm:$0xff]
        %v413 = vld [vmem:[%s383 + $0xe0] sm:$0xff]
        %v414 = vld [vmem:[%s383 + $0xe8] sm:$0xff]
        %v415 = vld [vmem:[%s383 + $0xf0] sm:$0xff]
        %v416 = vld [vmem:[%s383 + $0xf8] sm:$0xff]
        %v417 = vld [vmem:[%s383 + $0x100] sm:$0xff]
        %v418 = vld [vmem:[%s383 + $0x108] sm:$0xff]
        %v419 = vld [vmem:[%s383 + $0x110] sm:$0xff]
        %v420 = vld [vmem:[%s383 + $0x118] sm:$0xff]
        %v421 = vld [vmem:[%s383 + $0x120] sm:$0xff]
        %v422 = vld [vmem:[%s383 + $0x128] sm:$0xff]
        %v423 = vld [vmem:[%s383 + $0x130] sm:$0xff]
        %v424 = vld [vmem:[%s383 + $0x138] sm:$0xff]
        %v425 = vld [vmem:[%s383 + $0x140] sm:$0xff]
        %v426 = vld [vmem:[%s383 + $0x148] sm:$0xff]
        %v427 = vld [vmem:[%s383 + $0x150] sm:$0xff]
        %v428 = vld [vmem:[%s383 + $0x158] sm:$0xff]
        %v429 = vld [vmem:[%s383 + $0x160] sm:$0xff]
        %v430 = vld [vmem:[%s383 + $0x168] sm:$0xff]
        %v431 = vld [vmem:[%s383 + $0x170] sm:$0xff]
        %v432 = vld [vmem:[%s383 + $0x178] sm:$0xff]
        %v433 = vld [vmem:[%s383 + $0x180] sm:$0xff]
        %v434 = vld [vmem:[%s383 + $0x188] sm:$0xff]
        %v435 = vld [vmem:[%s383 + $0x190] sm:$0xff]
        %v436 = vld [vmem:[%s383 + $0x198] sm:$0xff]
        %v437 = vld [vmem:[%s383 + $0x1a0] sm:$0xff]
        %v438 = vld [vmem:[%s383 + $0x1a8] sm:$0xff]
        %v439 = vld [vmem:[%s383 + $0x1b0] sm:$0xff]
        %v440 = vld [vmem:[%s383 + $0x1b8] sm:$0xff]
        %v441 = vld [vmem:[%s383 + $0x1c0] sm:$0xff]
        %v442 = vld [vmem:[%s383 + $0x1c8] sm:$0xff]
        %v443 = vld [vmem:[%s383 + $0x1d0] sm:$0xff]
        %v444 = vld [vmem:[%s383 + $0x1d8] sm:$0xff]
        %v445 = vld [vmem:[%s383 + $0x1e0] sm:$0xff]
        %v446 = vld [vmem:[%s383 + $0x1e8] sm:$0xff]
        %v447 = vld [vmem:[%s383 + $0x1f0] sm:$0xff]
        %v448 = vld [vmem:[%s383 + $0x1f8] sm:$0xff]
        %v449 = vld [vmem:[%s383 + $0x200] sm:$0xff]
        %v450 = vld [vmem:[%s383 + $0x208] sm:$0xff]
        %v451 = vld [vmem:[%s383 + $0x210] sm:$0xff]
        %v452 = vld [vmem:[%s383 + $0x218] sm:$0xff]
        %v453 = vld [vmem:[%s383 + $0x220] sm:$0xff]
        %v454 = vld [vmem:[%s383 + $0x228] sm:$0xff]
        %v455 = vld [vmem:[%s383 + $0x230] sm:$0xff]
        %v456 = vld [vmem:[%s383 + $0x238] sm:$0xff]
        %v457 = vld [vmem:[%s383 + $0x240] sm:$0xff]
        %v458 = vld [vmem:[%s383 + $0x248] sm:$0xff]
        %v459 = vld [vmem:[%s383 + $0x250] sm:$0xff]
        %v460 = vld [vmem:[%s383 + $0x258] sm:$0xff]
        %v461 = vld [vmem:[%s383 + $0x260] sm:$0xff]
        %v462 = vld [vmem:[%s383 + $0x268] sm:$0xff]
        %v463 = vld [vmem:[%s383 + $0x270] sm:$0xff]
        %v464 = vld [vmem:[%s383 + $0x278] sm:$0xff]
        %v465 = vld [vmem:[%s383 + $0x280] sm:$0xff]
        %v466 = vld [vmem:[%s383 + $0x288] sm:$0xff]
        %v467 = vld [vmem:[%s383 + $0x290] sm:$0xff]
        %v468 = vld [vmem:[%s383 + $0x298] sm:$0xff]
        %v469 = vld [vmem:[%s383 + $0x2a0] sm:$0xff]
        %v470 = vld [vmem:[%s383 + $0x2a8] sm:$0xff]
        %v471 = vld [vmem:[%s383 + $0x2b0] sm:$0xff]
        %v472 = vld [vmem:[%s383 + $0x2b8] sm:$0xff]
        %v473 = vld [vmem:[%s383 + $0x2c0] sm:$0xff]
        %v474 = vld [vmem:[%s383 + $0x2c8] sm:$0xff]
        %v475 = vld [vmem:[%s383 + $0x2d0] sm:$0xff]
        %v476 = vld [vmem:[%s383 + $0x2d8] sm:$0xff]
        %v477 = vld [vmem:[%s383 + $0x2e0] sm:$0xff]
        %v478 = vld [vmem:[%s383 + $0x2e8] sm:$0xff]
        %v479 = vld [vmem:[%s383 + $0x2f0] sm:$0xff]
        %v480 = vld [vmem:[%s383 + $0x2f8] sm:$0xff]
        %v481 = vld [vmem:[%s383 + $0x300] sm:$0xff]
        %v482 = vld [vmem:[%s383 + $0x308] sm:$0xff]
        %v483 = vld [vmem:[%s383 + $0x310] sm:$0xff]
        %v484 = vld [vmem:[%s383 + $0x318] sm:$0xff]
        %v485 = vld [vmem:[%s383 + $0x320] sm:$0xff]
        %v486 = vld [vmem:[%s383 + $0x328] sm:$0xff]
        %v487 = vld [vmem:[%s383 + $0x330] sm:$0xff]
        %v488 = vld [vmem:[%s383 + $0x338] sm:$0xff]
        %v489 = vld [vmem:[%s383 + $0x340] sm:$0xff]
        %v490 = vld [vmem:[%s383 + $0x348] sm:$0xff]
        %v491 = vld [vmem:[%s383 + $0x350] sm:$0xff]
        %v492 = vld [vmem:[%s383 + $0x358] sm:$0xff]
        %v493 = vld [vmem:[%s383 + $0x360] sm:$0xff]
        %v494 = vld [vmem:[%s383 + $0x368] sm:$0xff]
        %v495 = vld [vmem:[%s383 + $0x370] sm:$0xff]
        %v496 = vld [vmem:[%s383 + $0x378] sm:$0xff]
        %v497 = vld [vmem:[%s383 + $0x380] sm:$0xff]
        %v498 = vld [vmem:[%s383 + $0x388] sm:$0xff]
        %v499 = vld [vmem:[%s383 + $0x390] sm:$0xff]
        %v500 = vld [vmem:[%s383 + $0x398] sm:$0xff]
        %v501 = vld [vmem:[%s383 + $0x3a0] sm:$0xff]
        %v502 = vld [vmem:[%s383 + $0x3a8] sm:$0xff]
        %v503 = vld [vmem:[%s383 + $0x3b0] sm:$0xff]
        %v504 = vld [vmem:[%s383 + $0x3b8] sm:$0xff]
        %v505 = vld [vmem:[%s383 + $0x3c0] sm:$0xff]
        %v506 = vld [vmem:[%s383 + $0x3c8] sm:$0xff]
        %v507 = vld [vmem:[%s383 + $0x3d0] sm:$0xff]
        %v508 = vld [vmem:[%s383 + $0x3d8] sm:$0xff]
        %v509 = vld [vmem:[%s383 + $0x3e0] sm:$0xff]
        %v510 = vld [vmem:[%s383 + $0x3e8] sm:$0xff]
        %v511 = vld [vmem:[%s383 + $0x3f0] sm:$0xff]
        %v512 = vld [vmem:[%s383 + $0x3f8] sm:$0xff]
        %v513 = vld [vmem:[%s383 + $0x400] sm:$0xff]
        %v514 = vld [vmem:[%s383 + $0x408] sm:$0xff]
        %v515 = vld [vmem:[%s383 + $0x410] sm:$0xff]
        %v516 = vld [vmem:[%s383 + $0x418] sm:$0xff]
        %v517 = vld [vmem:[%s383 + $0x420] sm:$0xff]
        %v518 = vld [vmem:[%s383 + $0x428] sm:$0xff]
        %v519 = vld [vmem:[%s383 + $0x430] sm:$0xff]
        %v520 = vld [vmem:[%s383 + $0x438] sm:$0xff]
        %v521 = vld [vmem:[%s383 + $0x440] sm:$0xff]
        %v522 = vld [vmem:[%s383 + $0x448] sm:$0xff]
        %v523 = vld [vmem:[%s383 + $0x450] sm:$0xff]
        %v524 = vld [vmem:[%s383 + $0x458] sm:$0xff]
        %v525 = vld [vmem:[%s383 + $0x460] sm:$0xff]
        %v526 = vld [vmem:[%s383 + $0x468] sm:$0xff]
        %v527 = vld [vmem:[%s383 + $0x470] sm:$0xff]
        %v528 = vld [vmem:[%s383 + $0x478] sm:$0xff]
        %v529 = vld [vmem:[%s383 + $0x480] sm:$0xff]
        %v530 = vld [vmem:[%s383 + $0x488] sm:$0xff]
        %v531 = vld [vmem:[%s383 + $0x490] sm:$0xff]
        %v532 = vld [vmem:[%s383 + $0x498] sm:$0xff]
        %v533 = vld [vmem:[%s383 + $0x4a0] sm:$0xff]
        %v534 = vld [vmem:[%s383 + $0x4a8] sm:$0xff]
        %v535 = vld [vmem:[%s383 + $0x4b0] sm:$0xff]
        %v536 = vld [vmem:[%s383 + $0x4b8] sm:$0xff]
        %v537 = vld [vmem:[%s383 + $0x4c0] sm:$0xff]
        %v538 = vld [vmem:[%s383 + $0x4c8] sm:$0xff]
        %v539 = vld [vmem:[%s383 + $0x4d0] sm:$0xff]
        %v540 = vld [vmem:[%s383 + $0x4d8] sm:$0xff]
        %v541 = vld [vmem:[%s383 + $0x4e0] sm:$0xff]
        %v542 = vld [vmem:[%s383 + $0x4e8] sm:$0xff]
        %v543 = vld [vmem:[%s383 + $0x4f0] sm:$0xff]
        %v544 = vld [vmem:[%s383 + $0x4f8] sm:$0xff]
        %v545 = vld [vmem:[%s383 + $0x500] sm:$0xff]
        %v546 = vld [vmem:[%s383 + $0x508] sm:$0xff]
        %v547 = vld [vmem:[%s383 + $0x510] sm:$0xff]
        %v548 = vld [vmem:[%s383 + $0x518] sm:$0xff]
        %v549 = vld [vmem:[%s383 + $0x520] sm:$0xff]
        %v550 = vld [vmem:[%s383 + $0x528] sm:$0xff]
        %v551 = vld [vmem:[%s383 + $0x530] sm:$0xff]
        %v552 = vld [vmem:[%s383 + $0x538] sm:$0xff]
        %v553 = vld [vmem:[%s383 + $0x540] sm:$0xff]
        %v554 = vld [vmem:[%s383 + $0x548] sm:$0xff]
        %v555 = vld [vmem:[%s383 + $0x550] sm:$0xff]
        %v556 = vld [vmem:[%s383 + $0x558] sm:$0xff]
        %v557 = vld [vmem:[%s383 + $0x560] sm:$0xff]
        %v558 = vld [vmem:[%s383 + $0x568] sm:$0xff]
        %v559 = vld [vmem:[%s383 + $0x570] sm:$0xff]
        %v560 = vpack.c.bf16 %v386, %v385
        %v561 = vpack.c.bf16 %v388, %v387
        %v562 = vpack.c.bf16 %v390, %v389
        %v563 = vpack.c.bf16 %v392, %v391
        %v564 = vpack.c.bf16 %v394, %v393
        %v565 = vpack.c.bf16 %v396, %v395
        %v566 = vpack.c.bf16 %v398, %v397
        %v567 = vpack.c.bf16 %v400, %v399
        %v568 = vpack.c.bf16 %v402, %v401
        %v569 = vpack.c.bf16 %v404, %v403
        %v570 = vpack.c.bf16 %v406, %v405
        %v571 = vpack.c.bf16 %v408, %v407
        %v572 = vpack.c.bf16 %v410, %v409
        %v573 = vpack.c.bf16 %v412, %v411
        %v574 = vpack.c.bf16 %v414, %v413
        %v575 = vpack.c.bf16 %v416, %v415
        %v576 = vpack.c.bf16 %v418, %v417
        %v577 = vpack.c.bf16 %v420, %v419
        %v578 = vpack.c.bf16 %v422, %v421
        %v579 = vpack.c.bf16 %v424, %v423
        %v580 = vpack.c.bf16 %v426, %v425
        %v581 = vpack.c.bf16 %v428, %v427
        %v582 = vpack.c.bf16 %v430, %v429
        %v583 = vpack.c.bf16 %v432, %v431
        %v584 = vpack.c.bf16 %v434, %v433
        %v585 = vpack.c.bf16 %v436, %v435
        %v586 = vpack.c.bf16 %v438, %v437
        %v587 = vpack.c.bf16 %v440, %v439
        %v588 = vpack.c.bf16 %v442, %v441
        %v589 = vpack.c.bf16 %v444, %v443
        %v590 = vpack.c.bf16 %v446, %v445
        %v591 = vpack.c.bf16 %v448, %v447
        %v592 = vpack.c.bf16 %v450, %v449
        %v593 = vpack.c.bf16 %v452, %v451
        %v594 = vpack.c.bf16 %v454, %v453
        %v595 = vpack.c.bf16 %v456, %v455
        %v596 = vpack.c.bf16 %v458, %v457
        %v597 = vpack.c.bf16 %v460, %v459
        %v598 = vpack.c.bf16 %v462, %v461
        %v599 = vpack.c.bf16 %v464, %v463
        %v600 = vpack.c.bf16 %v466, %v465
        %v601 = vpack.c.bf16 %v468, %v467
        %v602 = vpack.c.bf16 %v470, %v469
        %v603 = vpack.c.bf16 %v472, %v471
        %v604 = vpack.c.bf16 %v474, %v473
        %v605 = vpack.c.bf16 %v476, %v475
        %v606 = vpack.c.bf16 %v478, %v477
        %v607 = vpack.c.bf16 %v480, %v479
        %v608 = vpack.c.bf16 %v482, %v481
        %v609 = vpack.c.bf16 %v484, %v483
        %v610 = vpack.c.bf16 %v486, %v485
        %v611 = vpack.c.bf16 %v488, %v487
        %v612 = vpack.c.bf16 %v490, %v489
        %v613 = vpack.c.bf16 %v492, %v491
        %v614 = vpack.c.bf16 %v494, %v493
        %v615 = vpack.c.bf16 %v496, %v495
        %v616 = vpack.c.bf16 %v498, %v497
        %v617 = vpack.c.bf16 %v500, %v499
        %v618 = vpack.c.bf16 %v502, %v501
        %v619 = vpack.c.bf16 %v504, %v503
        %v620 = vpack.c.bf16 %v506, %v505
        %v621 = vpack.c.bf16 %v508, %v507
        %v622 = vpack.c.bf16 %v510, %v509
        %v623 = vpack.c.bf16 %v512, %v511
        %v624 = vpack.c.bf16 %v514, %v513
        %v625 = vpack.c.bf16 %v516, %v515
        %v626 = vpack.c.bf16 %v518, %v517
        %v627 = vpack.c.bf16 %v520, %v519
        %v628 = vpack.c.bf16 %v522, %v521
        %v629 = vpack.c.bf16 %v524, %v523
        %v630 = vpack.c.bf16 %v526, %v525
        %v631 = vpack.c.bf16 %v528, %v527
        %v632 = vpack.c.bf16 %v530, %v529
        %v633 = vpack.c.bf16 %v532, %v531
        %v634 = vpack.c.bf16 %v534, %v533
        %v635 = vpack.c.bf16 %v536, %v535
        %v636 = vpack.c.bf16 %v538, %v537
        %v637 = vpack.c.bf16 %v540, %v539
        %v638 = vpack.c.bf16 %v542, %v541
        %v639 = vpack.c.bf16 %v544, %v543
        %v640 = vpack.c.bf16 %v546, %v545
        %v641 = vpack.c.bf16 %v548, %v547
        %v642 = vpack.c.bf16 %v550, %v549
        %v643 = vpack.c.bf16 %v552, %v551
        %v644 = vpack.c.bf16 %v554, %v553
        %v645 = vpack.c.bf16 %v556, %v555
        %v646 = vpack.c.bf16 %v558, %v557
        %v647 = vpack.c.bf16 %v559, %v559
        %v648 = vld [vmem:[%s1] sm:$0xf]
        %v649 = vld [vmem:[%s2] sm:$0x1]
        %v651 = vperm.slane %v649, 0
        %vm653 = vcmask 64512
        %v655 = vsel %vm653, %v560, 0
        %v658 = vsel %vm653, %v561, 0
        %v661 = vsel %vm653, %v562, 0
        %v664 = vsel %vm653, %v563, 0
        %v667 = vsel %vm653, %v564, 0
        %v670 = vsel %vm653, %v565, 0
        %v673 = vsel %vm653, %v566, 0
        %v676 = vsel %vm653, %v567, 0
        %v679 = vsel %vm653, %v568, 0
        %v682 = vsel %vm653, %v569, 0
        %v685 = vsel %vm653, %v570, 0
        %v688 = vsel %vm653, %v571, 0
        %v691 = vsel %vm653, %v572, 0
        %v694 = vsel %vm653, %v573, 0
        %v697 = vsel %vm653, %v574, 0
        %v700 = vsel %vm653, %v575, 0
        %v703 = vsel %vm653, %v576, 0
        %v706 = vsel %vm653, %v577, 0
        %v709 = vsel %vm653, %v578, 0
        %v712 = vsel %vm653, %v579, 0
        %v715 = vsel %vm653, %v580, 0
        %v718 = vsel %vm653, %v581, 0
        %v721 = vsel %vm653, %v582, 0
        %v724 = vsel %vm653, %v583, 0
        %v727 = vsel %vm653, %v584, 0
        %v730 = vsel %vm653, %v585, 0
        %v733 = vsel %vm653, %v586, 0
        %v736 = vsel %vm653, %v587, 0
        %v739 = vsel %vm653, %v588, 0
        %v742 = vsel %vm653, %v589, 0
        %v745 = vsel %vm653, %v590, 0
        %v748 = vsel %vm653, %v591, 0
        %v751 = vsel %vm653, %v592, 0
        %v754 = vsel %vm653, %v593, 0
        %v757 = vsel %vm653, %v594, 0
        %v760 = vsel %vm653, %v595, 0
        %v763 = vsel %vm653, %v596, 0
        %v766 = vsel %vm653, %v597, 0
        %v769 = vsel %vm653, %v598, 0
        %v772 = vsel %vm653, %v599, 0
        %v775 = vsel %vm653, %v600, 0
        %v778 = vsel %vm653, %v601, 0
        %v781 = vsel %vm653, %v602, 0
        %v784 = vsel %vm653, %v603, 0
        %v787 = vsel %vm653, %v604, 0
        %v790 = vsel %vm653, %v605, 0
        %v793 = vsel %vm653, %v606, 0
        %v796 = vsel %vm653, %v607, 0
        %v799 = vsel %vm653, %v608, 0
        %v802 = vsel %vm653, %v609, 0
        %v805 = vsel %vm653, %v610, 0
        %v808 = vsel %vm653, %v611, 0
        %v811 = vsel %vm653, %v612, 0
        %v814 = vsel %vm653, %v613, 0
        %v817 = vsel %vm653, %v614, 0
        %v820 = vsel %vm653, %v615, 0
        %v823 = vsel %vm653, %v616, 0
        %v826 = vsel %vm653, %v617, 0
        %v829 = vsel %vm653, %v618, 0
        %v832 = vsel %vm653, %v619, 0
        %v835 = vsel %vm653, %v620, 0
        %v838 = vsel %vm653, %v621, 0
        %v841 = vsel %vm653, %v622, 0
        %v844 = vsel %vm653, %v623, 0
        %v847 = vsel %vm653, %v624, 0
        %v850 = vsel %vm653, %v625, 0
        %v853 = vsel %vm653, %v626, 0
        %v856 = vsel %vm653, %v627, 0
        %v859 = vsel %vm653, %v628, 0
        %v862 = vsel %vm653, %v629, 0
        %v865 = vsel %vm653, %v630, 0
        %v868 = vsel %vm653, %v631, 0
        %v871 = vsel %vm653, %v632, 0
        %v874 = vsel %vm653, %v633, 0
        %v877 = vsel %vm653, %v634, 0
        %v880 = vsel %vm653, %v635, 0
        %v883 = vsel %vm653, %v636, 0
        %v886 = vsel %vm653, %v637, 0
        %v889 = vsel %vm653, %v638, 0
        %v892 = vsel %vm653, %v639, 0
        %v895 = vsel %vm653, %v640, 0
        %v898 = vsel %vm653, %v641, 0
        %v901 = vsel %vm653, %v642, 0
        %v904 = vsel %vm653, %v643, 0
        %v907 = vsel %vm653, %v644, 0
        %v910 = vsel %vm653, %v645, 0
        %v913 = vsel %vm653, %v646, 0
        %v916 = vsel %vm653, %v647, 0
        %vm918 = vcmask 1043456
        %v920 = vsel %vm918, %v648, 0
        %922 = vmatpush.bf16.msra.mxu0 0
        %923 = vmatpush.bf16.msra.mxu0 0
        %924 = vmatpush.bf16.msra.mxu0 0
        %925 = vmatpush.bf16.msra.mxu0 0
        %926 = vmatpush.bf16.msra.mxu0 0
        %927 = vmatpush.bf16.msra.mxu0 0
        %928 = vmatpush.bf16.msra.mxu0 0
        %929 = vmatpush.bf16.msra.mxu0 %v920
        %930 = vmatmul.bf16.gmra.mxu0 %v655
        %v931 = vpop.f32.mrf.mxu0
        %v932 = vadd.f32 %v651, %v931
        %v933 = vpop.f32.mrf.mxu0
        %v934 = vadd.f32 %v651, %v933
        %935 = vmatmul.bf16.gmra.mxu0 %v658
        %v936 = vpop.f32.mrf.mxu0
        %v937 = vadd.f32 %v651, %v936
        %v938 = vpop.f32.mrf.mxu0
        %v939 = vadd.f32 %v651, %v938
        %940 = vmatmul.bf16.gmra.mxu0 %v661
        %v941 = vpop.f32.mrf.mxu0
        %v942 = vadd.f32 %v651, %v941
        %v943 = vpop.f32.mrf.mxu0
        %v944 = vadd.f32 %v651, %v943
        %945 = vmatmul.bf16.gmra.mxu0 %v664
        %v946 = vpop.f32.mrf.mxu0
        %v947 = vadd.f32 %v651, %v946
        %v948 = vpop.f32.mrf.mxu0
        %v949 = vadd.f32 %v651, %v948
        %950 = vmatmul.bf16.gmra.mxu0 %v667
        %v951 = vpop.f32.mrf.mxu0
        %v952 = vadd.f32 %v651, %v951
        %v953 = vpop.f32.mrf.mxu0
        %v954 = vadd.f32 %v651, %v953
        %955 = vmatmul.bf16.gmra.mxu0 %v670
        %v956 = vpop.f32.mrf.mxu0
        %v957 = vadd.f32 %v651, %v956
        %v958 = vpop.f32.mrf.mxu0
        %v959 = vadd.f32 %v651, %v958
        %960 = vmatmul.bf16.gmra.mxu0 %v673
        %v961 = vpop.f32.mrf.mxu0
        %v962 = vadd.f32 %v651, %v961
        %v963 = vpop.f32.mrf.mxu0
        %v964 = vadd.f32 %v651, %v963
        %965 = vmatmul.bf16.gmra.mxu0 %v676
        %v966 = vpop.f32.mrf.mxu0
        %v967 = vadd.f32 %v651, %v966
        %v968 = vpop.f32.mrf.mxu0
        %v969 = vadd.f32 %v651, %v968
        %970 = vmatmul.bf16.gmra.mxu0 %v679
        %v971 = vpop.f32.mrf.mxu0
        %v972 = vadd.f32 %v651, %v971
        %v973 = vpop.f32.mrf.mxu0
        %v974 = vadd.f32 %v651, %v973
        %975 = vmatmul.bf16.gmra.mxu0 %v682
        %v976 = vpop.f32.mrf.mxu0
        %v977 = vadd.f32 %v651, %v976
        %v978 = vpop.f32.mrf.mxu0
        %v979 = vadd.f32 %v651, %v978
        %980 = vmatmul.bf16.gmra.mxu0 %v685
        %v981 = vpop.f32.mrf.mxu0
        %v982 = vadd.f32 %v651, %v981
        %v983 = vpop.f32.mrf.mxu0
        %v984 = vadd.f32 %v651, %v983
        %985 = vmatmul.bf16.gmra.mxu0 %v688
        %v986 = vpop.f32.mrf.mxu0
        %v987 = vadd.f32 %v651, %v986
        %v988 = vpop.f32.mrf.mxu0
        %v989 = vadd.f32 %v651, %v988
        %990 = vmatmul.bf16.gmra.mxu0 %v691
        %v991 = vpop.f32.mrf.mxu0
        %v992 = vadd.f32 %v651, %v991
        %v993 = vpop.f32.mrf.mxu0
        %v994 = vadd.f32 %v651, %v993
        %995 = vmatmul.bf16.gmra.mxu0 %v694
        %v996 = vpop.f32.mrf.mxu0
        %v997 = vadd.f32 %v651, %v996
        %v998 = vpop.f32.mrf.mxu0
        %v999 = vadd.f32 %v651, %v998
        %1000 = vmatmul.bf16.gmra.mxu0 %v697
        %v1001 = vpop.f32.mrf.mxu0
        %v1002 = vadd.f32 %v651, %v1001
        %v1003 = vpop.f32.mrf.mxu0
        %v1004 = vadd.f32 %v651, %v1003
        %1005 = vmatmul.bf16.gmra.mxu0 %v700
        %v1006 = vpop.f32.mrf.mxu0
        %v1007 = vadd.f32 %v651, %v1006
        %v1008 = vpop.f32.mrf.mxu0
        %v1009 = vadd.f32 %v651, %v1008
        %1010 = vmatmul.bf16.gmra.mxu0 %v703
        %v1011 = vpop.f32.mrf.mxu0
        %v1012 = vadd.f32 %v651, %v1011
        %v1013 = vpop.f32.mrf.mxu0
        %v1014 = vadd.f32 %v651, %v1013
        %1015 = vmatmul.bf16.gmra.mxu0 %v706
        %v1016 = vpop.f32.mrf.mxu0
        %v1017 = vadd.f32 %v651, %v1016
        %v1018 = vpop.f32.mrf.mxu0
        %v1019 = vadd.f32 %v651, %v1018
        %1020 = vmatmul.bf16.gmra.mxu0 %v709
        %v1021 = vpop.f32.mrf.mxu0
        %v1022 = vadd.f32 %v651, %v1021
        %v1023 = vpop.f32.mrf.mxu0
        %v1024 = vadd.f32 %v651, %v1023
        %1025 = vmatmul.bf16.gmra.mxu0 %v712
        %v1026 = vpop.f32.mrf.mxu0
        %v1027 = vadd.f32 %v651, %v1026
        %v1028 = vpop.f32.mrf.mxu0
        %v1029 = vadd.f32 %v651, %v1028
        %1030 = vmatmul.bf16.gmra.mxu0 %v715
        %v1031 = vpop.f32.mrf.mxu0
        %v1032 = vadd.f32 %v651, %v1031
        %v1033 = vpop.f32.mrf.mxu0
        %v1034 = vadd.f32 %v651, %v1033
        %1035 = vmatmul.bf16.gmra.mxu0 %v718
        %v1036 = vpop.f32.mrf.mxu0
        %v1037 = vadd.f32 %v651, %v1036
        %v1038 = vpop.f32.mrf.mxu0
        %v1039 = vadd.f32 %v651, %v1038
        %1040 = vmatmul.bf16.gmra.mxu0 %v721
        %v1041 = vpop.f32.mrf.mxu0
        %v1042 = vadd.f32 %v651, %v1041
        %v1043 = vpop.f32.mrf.mxu0
        %v1044 = vadd.f32 %v651, %v1043
        %1045 = vmatmul.bf16.gmra.mxu0 %v724
        %v1046 = vpop.f32.mrf.mxu0
        %v1047 = vadd.f32 %v651, %v1046
        %v1048 = vpop.f32.mrf.mxu0
        %v1049 = vadd.f32 %v651, %v1048
        %1050 = vmatmul.bf16.gmra.mxu0 %v727
        %v1051 = vpop.f32.mrf.mxu0
        %v1052 = vadd.f32 %v651, %v1051
        %v1053 = vpop.f32.mrf.mxu0
        %v1054 = vadd.f32 %v651, %v1053
        %1055 = vmatmul.bf16.gmra.mxu0 %v730
        %v1056 = vpop.f32.mrf.mxu0
        %v1057 = vadd.f32 %v651, %v1056
        %v1058 = vpop.f32.mrf.mxu0
        %v1059 = vadd.f32 %v651, %v1058
        %1060 = vmatmul.bf16.gmra.mxu0 %v733
        %v1061 = vpop.f32.mrf.mxu0
        %v1062 = vadd.f32 %v651, %v1061
        %v1063 = vpop.f32.mrf.mxu0
        %v1064 = vadd.f32 %v651, %v1063
        %1065 = vmatmul.bf16.gmra.mxu0 %v736
        %v1066 = vpop.f32.mrf.mxu0
        %v1067 = vadd.f32 %v651, %v1066
        %v1068 = vpop.f32.mrf.mxu0
        %v1069 = vadd.f32 %v651, %v1068
        %1070 = vmatmul.bf16.gmra.mxu0 %v739
        %v1071 = vpop.f32.mrf.mxu0
        %v1072 = vadd.f32 %v651, %v1071
        %v1073 = vpop.f32.mrf.mxu0
        %v1074 = vadd.f32 %v651, %v1073
        %1075 = vmatmul.bf16.gmra.mxu0 %v742
        %v1076 = vpop.f32.mrf.mxu0
        %v1077 = vadd.f32 %v651, %v1076
        %v1078 = vpop.f32.mrf.mxu0
        %v1079 = vadd.f32 %v651, %v1078
        %1080 = vmatmul.bf16.gmra.mxu0 %v745
        %v1081 = vpop.f32.mrf.mxu0
        %v1082 = vadd.f32 %v651, %v1081
        %v1083 = vpop.f32.mrf.mxu0
        %v1084 = vadd.f32 %v651, %v1083
        %1085 = vmatmul.bf16.gmra.mxu0 %v748
        %v1086 = vpop.f32.mrf.mxu0
        %v1087 = vadd.f32 %v651, %v1086
        %v1088 = vpop.f32.mrf.mxu0
        %v1089 = vadd.f32 %v651, %v1088
        %1090 = vmatmul.bf16.gmra.mxu0 %v751
        %v1091 = vpop.f32.mrf.mxu0
        %v1092 = vadd.f32 %v651, %v1091
        %v1093 = vpop.f32.mrf.mxu0
        %v1094 = vadd.f32 %v651, %v1093
        %1095 = vmatmul.bf16.gmra.mxu0 %v754
        %v1096 = vpop.f32.mrf.mxu0
        %v1097 = vadd.f32 %v651, %v1096
        %v1098 = vpop.f32.mrf.mxu0
        %v1099 = vadd.f32 %v651, %v1098
        %1100 = vmatmul.bf16.gmra.mxu0 %v757
        %v1101 = vpop.f32.mrf.mxu0
        %v1102 = vadd.f32 %v651, %v1101
        %v1103 = vpop.f32.mrf.mxu0
        %v1104 = vadd.f32 %v651, %v1103
        %1105 = vmatmul.bf16.gmra.mxu0 %v760
        %v1106 = vpop.f32.mrf.mxu0
        %v1107 = vadd.f32 %v651, %v1106
        %v1108 = vpop.f32.mrf.mxu0
        %v1109 = vadd.f32 %v651, %v1108
        %1110 = vmatmul.bf16.gmra.mxu0 %v763
        %v1111 = vpop.f32.mrf.mxu0
        %v1112 = vadd.f32 %v651, %v1111
        %v1113 = vpop.f32.mrf.mxu0
        %v1114 = vadd.f32 %v651, %v1113
        %1115 = vmatmul.bf16.gmra.mxu0 %v766
        %v1116 = vpop.f32.mrf.mxu0
        %v1117 = vadd.f32 %v651, %v1116
        %v1118 = vpop.f32.mrf.mxu0
        %v1119 = vadd.f32 %v651, %v1118
        %1120 = vmatmul.bf16.gmra.mxu0 %v769
        %v1121 = vpop.f32.mrf.mxu0
        %v1122 = vadd.f32 %v651, %v1121
        %v1123 = vpop.f32.mrf.mxu0
        %v1124 = vadd.f32 %v651, %v1123
        %1125 = vmatmul.bf16.gmra.mxu0 %v772
        %v1126 = vpop.f32.mrf.mxu0
        %v1127 = vadd.f32 %v651, %v1126
        %v1128 = vpop.f32.mrf.mxu0
        %v1129 = vadd.f32 %v651, %v1128
        %1130 = vmatmul.bf16.gmra.mxu0 %v775
        %v1131 = vpop.f32.mrf.mxu0
        %v1132 = vadd.f32 %v651, %v1131
        %v1133 = vpop.f32.mrf.mxu0
        %v1134 = vadd.f32 %v651, %v1133
        %1135 = vmatmul.bf16.gmra.mxu0 %v778
        %v1136 = vpop.f32.mrf.mxu0
        %v1137 = vadd.f32 %v651, %v1136
        %v1138 = vpop.f32.mrf.mxu0
        %v1139 = vadd.f32 %v651, %v1138
        %1140 = vmatmul.bf16.gmra.mxu0 %v781
        %v1141 = vpop.f32.mrf.mxu0
        %v1142 = vadd.f32 %v651, %v1141
        %v1143 = vpop.f32.mrf.mxu0
        %v1144 = vadd.f32 %v651, %v1143
        %1145 = vmatmul.bf16.gmra.mxu0 %v784
        %v1146 = vpop.f32.mrf.mxu0
        %v1147 = vadd.f32 %v651, %v1146
        %v1148 = vpop.f32.mrf.mxu0
        %v1149 = vadd.f32 %v651, %v1148
        %1150 = vmatmul.bf16.gmra.mxu0 %v787
        %v1151 = vpop.f32.mrf.mxu0
        %v1152 = vadd.f32 %v651, %v1151
        %v1153 = vpop.f32.mrf.mxu0
        %v1154 = vadd.f32 %v651, %v1153
        %1155 = vmatmul.bf16.gmra.mxu0 %v790
        %v1156 = vpop.f32.mrf.mxu0
        %v1157 = vadd.f32 %v651, %v1156
        %v1158 = vpop.f32.mrf.mxu0
        %v1159 = vadd.f32 %v651, %v1158
        %1160 = vmatmul.bf16.gmra.mxu0 %v793
        %v1161 = vpop.f32.mrf.mxu0
        %v1162 = vadd.f32 %v651, %v1161
        %v1163 = vpop.f32.mrf.mxu0
        %v1164 = vadd.f32 %v651, %v1163
        %1165 = vmatmul.bf16.gmra.mxu0 %v796
        %v1166 = vpop.f32.mrf.mxu0
        %v1167 = vadd.f32 %v651, %v1166
        %v1168 = vpop.f32.mrf.mxu0
        %v1169 = vadd.f32 %v651, %v1168
        %1170 = vmatmul.bf16.gmra.mxu0 %v799
        %v1171 = vpop.f32.mrf.mxu0
        %v1172 = vadd.f32 %v651, %v1171
        %v1173 = vpop.f32.mrf.mxu0
        %v1174 = vadd.f32 %v651, %v1173
        %1175 = vmatmul.bf16.gmra.mxu0 %v802
        %v1176 = vpop.f32.mrf.mxu0
        %v1177 = vadd.f32 %v651, %v1176
        %v1178 = vpop.f32.mrf.mxu0
        %v1179 = vadd.f32 %v651, %v1178
        %1180 = vmatmul.bf16.gmra.mxu0 %v805
        %v1181 = vpop.f32.mrf.mxu0
        %v1182 = vadd.f32 %v651, %v1181
        %v1183 = vpop.f32.mrf.mxu0
        %v1184 = vadd.f32 %v651, %v1183
        %1185 = vmatmul.bf16.gmra.mxu0 %v808
        %v1186 = vpop.f32.mrf.mxu0
        %v1187 = vadd.f32 %v651, %v1186
        %v1188 = vpop.f32.mrf.mxu0
        %v1189 = vadd.f32 %v651, %v1188
        %1190 = vmatmul.bf16.gmra.mxu0 %v811
        %v1191 = vpop.f32.mrf.mxu0
        %v1192 = vadd.f32 %v651, %v1191
        %v1193 = vpop.f32.mrf.mxu0
        %v1194 = vadd.f32 %v651, %v1193
        %1195 = vmatmul.bf16.gmra.mxu0 %v814
        %v1196 = vpop.f32.mrf.mxu0
        %v1197 = vadd.f32 %v651, %v1196
        %v1198 = vpop.f32.mrf.mxu0
        %v1199 = vadd.f32 %v651, %v1198
        %1200 = vmatmul.bf16.gmra.mxu0 %v817
        %v1201 = vpop.f32.mrf.mxu0
        %v1202 = vadd.f32 %v651, %v1201
        %v1203 = vpop.f32.mrf.mxu0
        %v1204 = vadd.f32 %v651, %v1203
        %1205 = vmatmul.bf16.gmra.mxu0 %v820
        %v1206 = vpop.f32.mrf.mxu0
        %v1207 = vadd.f32 %v651, %v1206
        %v1208 = vpop.f32.mrf.mxu0
        %v1209 = vadd.f32 %v651, %v1208
        %1210 = vmatmul.bf16.gmra.mxu0 %v823
        %v1211 = vpop.f32.mrf.mxu0
        %v1212 = vadd.f32 %v651, %v1211
        %v1213 = vpop.f32.mrf.mxu0
        %v1214 = vadd.f32 %v651, %v1213
        %1215 = vmatmul.bf16.gmra.mxu0 %v826
        %v1216 = vpop.f32.mrf.mxu0
        %v1217 = vadd.f32 %v651, %v1216
        %v1218 = vpop.f32.mrf.mxu0
        %v1219 = vadd.f32 %v651, %v1218
        %1220 = vmatmul.bf16.gmra.mxu0 %v829
        %v1221 = vpop.f32.mrf.mxu0
        %v1222 = vadd.f32 %v651, %v1221
        %v1223 = vpop.f32.mrf.mxu0
        %v1224 = vadd.f32 %v651, %v1223
        %1225 = vmatmul.bf16.gmra.mxu0 %v832
        %v1226 = vpop.f32.mrf.mxu0
        %v1227 = vadd.f32 %v651, %v1226
        %v1228 = vpop.f32.mrf.mxu0
        %v1229 = vadd.f32 %v651, %v1228
        %1230 = vmatmul.bf16.gmra.mxu0 %v835
        %v1231 = vpop.f32.mrf.mxu0
        %v1232 = vadd.f32 %v651, %v1231
        %v1233 = vpop.f32.mrf.mxu0
        %v1234 = vadd.f32 %v651, %v1233
        %1235 = vmatmul.bf16.gmra.mxu0 %v838
        %v1236 = vpop.f32.mrf.mxu0
        %v1237 = vadd.f32 %v651, %v1236
        %v1238 = vpop.f32.mrf.mxu0
        %v1239 = vadd.f32 %v651, %v1238
        %1240 = vmatmul.bf16.gmra.mxu0 %v841
        %v1241 = vpop.f32.mrf.mxu0
        %v1242 = vadd.f32 %v651, %v1241
        %v1243 = vpop.f32.mrf.mxu0
        %v1244 = vadd.f32 %v651, %v1243
        %1245 = vmatmul.bf16.gmra.mxu0 %v844
        %v1246 = vpop.f32.mrf.mxu0
        %v1247 = vadd.f32 %v651, %v1246
        %v1248 = vpop.f32.mrf.mxu0
        %v1249 = vadd.f32 %v651, %v1248
        %1250 = vmatmul.bf16.gmra.mxu0 %v847
        %v1251 = vpop.f32.mrf.mxu0
        %v1252 = vadd.f32 %v651, %v1251
        %v1253 = vpop.f32.mrf.mxu0
        %v1254 = vadd.f32 %v651, %v1253
        %1255 = vmatmul.bf16.gmra.mxu0 %v850
        %v1256 = vpop.f32.mrf.mxu0
        %v1257 = vadd.f32 %v651, %v1256
        %v1258 = vpop.f32.mrf.mxu0
        %v1259 = vadd.f32 %v651, %v1258
        %1260 = vmatmul.bf16.gmra.mxu0 %v853
        %v1261 = vpop.f32.mrf.mxu0
        %v1262 = vadd.f32 %v651, %v1261
        %v1263 = vpop.f32.mrf.mxu0
        %v1264 = vadd.f32 %v651, %v1263
        %1265 = vmatmul.bf16.gmra.mxu0 %v856
        %v1266 = vpop.f32.mrf.mxu0
        %v1267 = vadd.f32 %v651, %v1266
        %v1268 = vpop.f32.mrf.mxu0
        %v1269 = vadd.f32 %v651, %v1268
        %1270 = vmatmul.bf16.gmra.mxu0 %v859
        %v1271 = vpop.f32.mrf.mxu0
        %v1272 = vadd.f32 %v651, %v1271
        %v1273 = vpop.f32.mrf.mxu0
        %v1274 = vadd.f32 %v651, %v1273
        %1275 = vmatmul.bf16.gmra.mxu0 %v862
        %v1276 = vpop.f32.mrf.mxu0
        %v1277 = vadd.f32 %v651, %v1276
        %v1278 = vpop.f32.mrf.mxu0
        %v1279 = vadd.f32 %v651, %v1278
        %1280 = vmatmul.bf16.gmra.mxu0 %v865
        %v1281 = vpop.f32.mrf.mxu0
        %v1282 = vadd.f32 %v651, %v1281
        %v1283 = vpop.f32.mrf.mxu0
        %v1284 = vadd.f32 %v651, %v1283
        %1285 = vmatmul.bf16.gmra.mxu0 %v868
        %v1286 = vpop.f32.mrf.mxu0
        %v1287 = vadd.f32 %v651, %v1286
        %v1288 = vpop.f32.mrf.mxu0
        %v1289 = vadd.f32 %v651, %v1288
        %1290 = vmatmul.bf16.gmra.mxu0 %v871
        %v1291 = vpop.f32.mrf.mxu0
        %v1292 = vadd.f32 %v651, %v1291
        %v1293 = vpop.f32.mrf.mxu0
        %v1294 = vadd.f32 %v651, %v1293
        %1295 = vmatmul.bf16.gmra.mxu0 %v874
        %v1296 = vpop.f32.mrf.mxu0
        %v1297 = vadd.f32 %v651, %v1296
        %v1298 = vpop.f32.mrf.mxu0
        %v1299 = vadd.f32 %v651, %v1298
        %1300 = vmatmul.bf16.gmra.mxu0 %v877
        %v1301 = vpop.f32.mrf.mxu0
        %v1302 = vadd.f32 %v651, %v1301
        %v1303 = vpop.f32.mrf.mxu0
        %v1304 = vadd.f32 %v651, %v1303
        %1305 = vmatmul.bf16.gmra.mxu0 %v880
        %v1306 = vpop.f32.mrf.mxu0
        %v1307 = vadd.f32 %v651, %v1306
        %v1308 = vpop.f32.mrf.mxu0
        %v1309 = vadd.f32 %v651, %v1308
        %1310 = vmatmul.bf16.gmra.mxu0 %v883
        %v1311 = vpop.f32.mrf.mxu0
        %v1312 = vadd.f32 %v651, %v1311
        %v1313 = vpop.f32.mrf.mxu0
        %v1314 = vadd.f32 %v651, %v1313
        %1315 = vmatmul.bf16.gmra.mxu0 %v886
        %v1316 = vpop.f32.mrf.mxu0
        %v1317 = vadd.f32 %v651, %v1316
        %v1318 = vpop.f32.mrf.mxu0
        %v1319 = vadd.f32 %v651, %v1318
        %1320 = vmatmul.bf16.gmra.mxu0 %v889
        %v1321 = vpop.f32.mrf.mxu0
        %v1322 = vadd.f32 %v651, %v1321
        %v1323 = vpop.f32.mrf.mxu0
        %v1324 = vadd.f32 %v651, %v1323
        %1325 = vmatmul.bf16.gmra.mxu0 %v892
        %v1326 = vpop.f32.mrf.mxu0
        %v1327 = vadd.f32 %v651, %v1326
        %v1328 = vpop.f32.mrf.mxu0
        %v1329 = vadd.f32 %v651, %v1328
        %1330 = vmatmul.bf16.gmra.mxu0 %v895
        %v1331 = vpop.f32.mrf.mxu0
        %v1332 = vadd.f32 %v651, %v1331
        %v1333 = vpop.f32.mrf.mxu0
        %v1334 = vadd.f32 %v651, %v1333
        %1335 = vmatmul.bf16.gmra.mxu0 %v898
        %v1336 = vpop.f32.mrf.mxu0
        %v1337 = vadd.f32 %v651, %v1336
        %v1338 = vpop.f32.mrf.mxu0
        %v1339 = vadd.f32 %v651, %v1338
        %1340 = vmatmul.bf16.gmra.mxu0 %v901
        %v1341 = vpop.f32.mrf.mxu0
        %v1342 = vadd.f32 %v651, %v1341
        %v1343 = vpop.f32.mrf.mxu0
        %v1344 = vadd.f32 %v651, %v1343
        %1345 = vmatmul.bf16.gmra.mxu0 %v904
        %v1346 = vpop.f32.mrf.mxu0
        %v1347 = vadd.f32 %v651, %v1346
        %v1348 = vpop.f32.mrf.mxu0
        %v1349 = vadd.f32 %v651, %v1348
        %1350 = vmatmul.bf16.gmra.mxu0 %v907
        %v1351 = vpop.f32.mrf.mxu0
        %v1352 = vadd.f32 %v651, %v1351
        %v1353 = vpop.f32.mrf.mxu0
        %v1354 = vadd.f32 %v651, %v1353
        %1355 = vmatmul.bf16.gmra.mxu0 %v910
        %v1356 = vpop.f32.mrf.mxu0
        %v1357 = vadd.f32 %v651, %v1356
        %v1358 = vpop.f32.mrf.mxu0
        %v1359 = vadd.f32 %v651, %v1358
        %1360 = vmatmul.bf16.gmra.mxu0 %v913
        %v1361 = vpop.f32.mrf.mxu0
        %v1362 = vadd.f32 %v651, %v1361
        %v1363 = vpop.f32.mrf.mxu0
        %v1364 = vadd.f32 %v651, %v1363
        %1365 = vmatmul.bf16.gmra.mxu0 %v916
        %v1366 = vpop.f32.mrf.mxu0
        %v1367 = vadd.f32 %v651, %v1366
        %v1368 = vpop.f32.mrf.mxu0
        %1369 = vdwg.mxu0
        %v1370 = vmax.f32 %v932, 0.0
        %v1371 = vmax.f32 %v934, 0.0
        %v1372 = vmax.f32 %v937, 0.0
        %v1373 = vmax.f32 %v939, 0.0
        %v1374 = vmax.f32 %v942, 0.0
        %v1375 = vmax.f32 %v944, 0.0
        %v1376 = vmax.f32 %v947, 0.0
        %v1377 = vmax.f32 %v949, 0.0
        %v1378 = vmax.f32 %v952, 0.0
        %v1379 = vmax.f32 %v954, 0.0
        %v1380 = vmax.f32 %v957, 0.0
        %v1381 = vmax.f32 %v959, 0.0
        %v1382 = vmax.f32 %v962, 0.0
        %v1383 = vmax.f32 %v964, 0.0
        %v1384 = vmax.f32 %v967, 0.0
        %v1385 = vmax.f32 %v969, 0.0
        %v1386 = vmax.f32 %v972, 0.0
        %v1387 = vmax.f32 %v974, 0.0
        %v1388 = vmax.f32 %v977, 0.0
        %v1389 = vmax.f32 %v979, 0.0
        %v1390 = vmax.f32 %v982, 0.0
        %v1391 = vmax.f32 %v984, 0.0
        %v1392 = vmax.f32 %v987, 0.0
        %v1393 = vmax.f32 %v989, 0.0
        %v1394 = vmax.f32 %v992, 0.0
        %v1395 = vmax.f32 %v994, 0.0
        %v1396 = vmax.f32 %v997, 0.0
        %v1397 = vmax.f32 %v999, 0.0
        %v1398 = vmax.f32 %v1002, 0.0
        %v1399 = vmax.f32 %v1004, 0.0
        %v1400 = vmax.f32 %v1007, 0.0
        %v1401 = vmax.f32 %v1009, 0.0
        %v1402 = vmax.f32 %v1012, 0.0
        %v1403 = vmax.f32 %v1014, 0.0
        %v1404 = vmax.f32 %v1017, 0.0
        %v1405 = vmax.f32 %v1019, 0.0
        %v1406 = vmax.f32 %v1022, 0.0
        %v1407 = vmax.f32 %v1024, 0.0
        %v1408 = vmax.f32 %v1027, 0.0
        %v1409 = vmax.f32 %v1029, 0.0
        %v1410 = vmax.f32 %v1032, 0.0
        %v1411 = vmax.f32 %v1034, 0.0
        %v1412 = vmax.f32 %v1037, 0.0
        %v1413 = vmax.f32 %v1039, 0.0
        %v1414 = vmax.f32 %v1042, 0.0
        %v1415 = vmax.f32 %v1044, 0.0
        %v1416 = vmax.f32 %v1047, 0.0
        %v1417 = vmax.f32 %v1049, 0.0
        %v1418 = vmax.f32 %v1052, 0.0
        %v1419 = vmax.f32 %v1054, 0.0
        %v1420 = vmax.f32 %v1057, 0.0
        %v1421 = vmax.f32 %v1059, 0.0
        %v1422 = vmax.f32 %v1062, 0.0
        %v1423 = vmax.f32 %v1064, 0.0
        %v1424 = vmax.f32 %v1067, 0.0
        %v1425 = vmax.f32 %v1069, 0.0
        %v1426 = vmax.f32 %v1072, 0.0
        %v1427 = vmax.f32 %v1074, 0.0
        %v1428 = vmax.f32 %v1077, 0.0
        %v1429 = vmax.f32 %v1079, 0.0
        %v1430 = vmax.f32 %v1082, 0.0
        %v1431 = vmax.f32 %v1084, 0.0
        %v1432 = vmax.f32 %v1087, 0.0
        %v1433 = vmax.f32 %v1089, 0.0
        %v1434 = vmax.f32 %v1092, 0.0
        %v1435 = vmax.f32 %v1094, 0.0
        %v1436 = vmax.f32 %v1097, 0.0
        %v1437 = vmax.f32 %v1099, 0.0
        %v1438 = vmax.f32 %v1102, 0.0
        %v1439 = vmax.f32 %v1104, 0.0
        %v1440 = vmax.f32 %v1107, 0.0
        %v1441 = vmax.f32 %v1109, 0.0
        %v1442 = vmax.f32 %v1112, 0.0
        %v1443 = vmax.f32 %v1114, 0.0
        %v1444 = vmax.f32 %v1117, 0.0
        %v1445 = vmax.f32 %v1119, 0.0
        %v1446 = vmax.f32 %v1122, 0.0
        %v1447 = vmax.f32 %v1124, 0.0
        %v1448 = vmax.f32 %v1127, 0.0
        %v1449 = vmax.f32 %v1129, 0.0
        %v1450 = vmax.f32 %v1132, 0.0
        %v1451 = vmax.f32 %v1134, 0.0
        %v1452 = vmax.f32 %v1137, 0.0
        %v1453 = vmax.f32 %v1139, 0.0
        %v1454 = vmax.f32 %v1142, 0.0
        %v1455 = vmax.f32 %v1144, 0.0
        %v1456 = vmax.f32 %v1147, 0.0
        %v1457 = vmax.f32 %v1149, 0.0
        %v1458 = vmax.f32 %v1152, 0.0
        %v1459 = vmax.f32 %v1154, 0.0
        %v1460 = vmax.f32 %v1157, 0.0
        %v1461 = vmax.f32 %v1159, 0.0
        %v1462 = vmax.f32 %v1162, 0.0
        %v1463 = vmax.f32 %v1164, 0.0
        %v1464 = vmax.f32 %v1167, 0.0
        %v1465 = vmax.f32 %v1169, 0.0
        %v1466 = vmax.f32 %v1172, 0.0
        %v1467 = vmax.f32 %v1174, 0.0
        %v1468 = vmax.f32 %v1177, 0.0
        %v1469 = vmax.f32 %v1179, 0.0
        %v1470 = vmax.f32 %v1182, 0.0
        %v1471 = vmax.f32 %v1184, 0.0
        %v1472 = vmax.f32 %v1187, 0.0
        %v1473 = vmax.f32 %v1189, 0.0
        %v1474 = vmax.f32 %v1192, 0.0
        %v1475 = vmax.f32 %v1194, 0.0
        %v1476 = vmax.f32 %v1197, 0.0
        %v1477 = vmax.f32 %v1199, 0.0
        %v1478 = vmax.f32 %v1202, 0.0
        %v1479 = vmax.f32 %v1204, 0.0
        %v1480 = vmax.f32 %v1207, 0.0
        %v1481 = vmax.f32 %v1209, 0.0
        %v1482 = vmax.f32 %v1212, 0.0
        %v1483 = vmax.f32 %v1214, 0.0
        %v1484 = vmax.f32 %v1217, 0.0
        %v1485 = vmax.f32 %v1219, 0.0
        %v1486 = vmax.f32 %v1222, 0.0
        %v1487 = vmax.f32 %v1224, 0.0
        %v1488 = vmax.f32 %v1227, 0.0
        %v1489 = vmax.f32 %v1229, 0.0
        %v1490 = vmax.f32 %v1232, 0.0
        %v1491 = vmax.f32 %v1234, 0.0
        %v1492 = vmax.f32 %v1237, 0.0
        %v1493 = vmax.f32 %v1239, 0.0
        %v1494 = vmax.f32 %v1242, 0.0
        %v1495 = vmax.f32 %v1244, 0.0
        %v1496 = vmax.f32 %v1247, 0.0
        %v1497 = vmax.f32 %v1249, 0.0
        %v1498 = vmax.f32 %v1252, 0.0
        %v1499 = vmax.f32 %v1254, 0.0
        %v1500 = vmax.f32 %v1257, 0.0
        %v1501 = vmax.f32 %v1259, 0.0
        %v1502 = vmax.f32 %v1262, 0.0
        %v1503 = vmax.f32 %v1264, 0.0
        %v1504 = vmax.f32 %v1267, 0.0
        %v1505 = vmax.f32 %v1269, 0.0
        %v1506 = vmax.f32 %v1272, 0.0
        %v1507 = vmax.f32 %v1274, 0.0
        %v1508 = vmax.f32 %v1277, 0.0
        %v1509 = vmax.f32 %v1279, 0.0
        %v1510 = vmax.f32 %v1282, 0.0
        %v1511 = vmax.f32 %v1284, 0.0
        %v1512 = vmax.f32 %v1287, 0.0
        %v1513 = vmax.f32 %v1289, 0.0
        %v1514 = vmax.f32 %v1292, 0.0
        %v1515 = vmax.f32 %v1294, 0.0
        %v1516 = vmax.f32 %v1297, 0.0
        %v1517 = vmax.f32 %v1299, 0.0
        %v1518 = vmax.f32 %v1302, 0.0
        %v1519 = vmax.f32 %v1304, 0.0
        %v1520 = vmax.f32 %v1307, 0.0
        %v1521 = vmax.f32 %v1309, 0.0
        %v1522 = vmax.f32 %v1312, 0.0
        %v1523 = vmax.f32 %v1314, 0.0
        %v1524 = vmax.f32 %v1317, 0.0
        %v1525 = vmax.f32 %v1319, 0.0
        %v1526 = vmax.f32 %v1322, 0.0
        %v1527 = vmax.f32 %v1324, 0.0
        %v1528 = vmax.f32 %v1327, 0.0
        %v1529 = vmax.f32 %v1329, 0.0
        %v1530 = vmax.f32 %v1332, 0.0
        %v1531 = vmax.f32 %v1334, 0.0
        %v1532 = vmax.f32 %v1337, 0.0
        %v1533 = vmax.f32 %v1339, 0.0
        %v1534 = vmax.f32 %v1342, 0.0
        %v1535 = vmax.f32 %v1344, 0.0
        %v1536 = vmax.f32 %v1347, 0.0
        %v1537 = vmax.f32 %v1349, 0.0
        %v1538 = vmax.f32 %v1352, 0.0
        %v1539 = vmax.f32 %v1354, 0.0
        %v1540 = vmax.f32 %v1357, 0.0
        %v1541 = vmax.f32 %v1359, 0.0
        %v1542 = vmax.f32 %v1362, 0.0
        %v1543 = vmax.f32 %v1364, 0.0
        %v1544 = vmax.f32 %v1367, 0.0
        %v1545 = vmax.f32 %v1370, %v1375
        %v1546 = vmax.f32 %v1371, %v1376
        %v1547 = vmax.f32 %v1372, %v1377
        %v1548 = vmax.f32 %v1373, %v1378
        %v1549 = vmax.f32 %v1374, %v1379
        %v1550 = vmax.f32 %v1375, %v1380
        %v1551 = vmax.f32 %v1376, %v1381
        %v1552 = vmax.f32 %v1377, %v1382
        %v1553 = vmax.f32 %v1378, %v1383
        %v1554 = vmax.f32 %v1379, %v1384
        %v1555 = vmax.f32 %v1380, %v1385
        %v1556 = vmax.f32 %v1381, %v1386
        %v1557 = vmax.f32 %v1382, %v1387
        %v1558 = vmax.f32 %v1383, %v1388
        %v1559 = vmax.f32 %v1384, %v1389
        %v1560 = vmax.f32 %v1385, %v1390
        %v1561 = vmax.f32 %v1386, %v1391
        %v1562 = vmax.f32 %v1387, %v1392
        %v1563 = vmax.f32 %v1388, %v1393
        %v1564 = vmax.f32 %v1389, %v1394
        %v1565 = vmax.f32 %v1390, %v1395
        %v1566 = vmax.f32 %v1391, %v1396
        %v1567 = vmax.f32 %v1392, %v1397
        %v1568 = vmax.f32 %v1393, %v1398
        %v1569 = vmax.f32 %v1394, %v1399
        %v1570 = vmax.f32 %v1395, %v1400
        %v1571 = vmax.f32 %v1396, %v1401
        %v1572 = vmax.f32 %v1397, %v1402
        %v1573 = vmax.f32 %v1398, %v1403
        %v1574 = vmax.f32 %v1399, %v1404
        %v1575 = vmax.f32 %v1400, %v1405
        %v1576 = vmax.f32 %v1401, %v1406
        %v1577 = vmax.f32 %v1402, %v1407
        %v1578 = vmax.f32 %v1403, %v1408
        %v1579 = vmax.f32 %v1404, %v1409
        %v1580 = vmax.f32 %v1405, %v1410
        %v1581 = vmax.f32 %v1406, %v1411
        %v1582 = vmax.f32 %v1407, %v1412
        %v1583 = vmax.f32 %v1408, %v1413
        %v1584 = vmax.f32 %v1409, %v1414
        %v1585 = vmax.f32 %v1410, %v1415
        %v1586 = vmax.f32 %v1411, %v1416
        %v1587 = vmax.f32 %v1412, %v1417
        %v1588 = vmax.f32 %v1413, %v1418
        %v1589 = vmax.f32 %v1414, %v1419
        %v1590 = vmax.f32 %v1415, %v1420
        %v1591 = vmax.f32 %v1416, %v1421
        %v1592 = vmax.f32 %v1417, %v1422
        %v1593 = vmax.f32 %v1418, %v1423
        %v1594 = vmax.f32 %v1419, %v1424
        %v1595 = vmax.f32 %v1420, %v1425
        %v1596 = vmax.f32 %v1421, %v1426
        %v1597 = vmax.f32 %v1422, %v1427
        %v1598 = vmax.f32 %v1423, %v1428
        %v1599 = vmax.f32 %v1424, %v1429
        %v1600 = vmax.f32 %v1425, %v1430
        %v1601 = vmax.f32 %v1426, %v1431
        %v1602 = vmax.f32 %v1427, %v1432
        %v1603 = vmax.f32 %v1428, %v1433
        %v1604 = vmax.f32 %v1429, %v1434
        %v1605 = vmax.f32 %v1430, %v1435
        %v1606 = vmax.f32 %v1431, %v1436
        %v1607 = vmax.f32 %v1432, %v1437
        %v1608 = vmax.f32 %v1433, %v1438
        %v1609 = vmax.f32 %v1434, %v1439
        %v1610 = vmax.f32 %v1435, %v1440
        %v1611 = vmax.f32 %v1436, %v1441
        %v1612 = vmax.f32 %v1437, %v1442
        %v1613 = vmax.f32 %v1438, %v1443
        %v1614 = vmax.f32 %v1439, %v1444
        %v1615 = vmax.f32 %v1440, %v1445
        %v1616 = vmax.f32 %v1441, %v1446
        %v1617 = vmax.f32 %v1442, %v1447
        %v1618 = vmax.f32 %v1443, %v1448
        %v1619 = vmax.f32 %v1444, %v1449
        %v1620 = vmax.f32 %v1445, %v1450
        %v1621 = vmax.f32 %v1446, %v1451
        %v1622 = vmax.f32 %v1447, %v1452
        %v1623 = vmax.f32 %v1448, %v1453
        %v1624 = vmax.f32 %v1449, %v1454
        %v1625 = vmax.f32 %v1450, %v1455
        %v1626 = vmax.f32 %v1451, %v1456
        %v1627 = vmax.f32 %v1452, %v1457
        %v1628 = vmax.f32 %v1453, %v1458
        %v1629 = vmax.f32 %v1454, %v1459
        %v1630 = vmax.f32 %v1455, %v1460
        %v1631 = vmax.f32 %v1456, %v1461
        %v1632 = vmax.f32 %v1457, %v1462
        %v1633 = vmax.f32 %v1458, %v1463
        %v1634 = vmax.f32 %v1459, %v1464
        %v1635 = vmax.f32 %v1460, %v1465
        %v1636 = vmax.f32 %v1461, %v1466
        %v1637 = vmax.f32 %v1462, %v1467
        %v1638 = vmax.f32 %v1463, %v1468
        %v1639 = vmax.f32 %v1464, %v1469
        %v1640 = vmax.f32 %v1465, %v1470
        %v1641 = vmax.f32 %v1466, %v1471
        %v1642 = vmax.f32 %v1467, %v1472
        %v1643 = vmax.f32 %v1468, %v1473
        %v1644 = vmax.f32 %v1469, %v1474
        %v1645 = vmax.f32 %v1470, %v1475
        %v1646 = vmax.f32 %v1471, %v1476
        %v1647 = vmax.f32 %v1472, %v1477
        %v1648 = vmax.f32 %v1473, %v1478
        %v1649 = vmax.f32 %v1474, %v1479
        %v1650 = vmax.f32 %v1475, %v1480
        %v1651 = vmax.f32 %v1476, %v1481
        %v1652 = vmax.f32 %v1477, %v1482
        %v1653 = vmax.f32 %v1478, %v1483
        %v1654 = vmax.f32 %v1479, %v1484
        %v1655 = vmax.f32 %v1480, %v1485
        %v1656 = vmax.f32 %v1481, %v1486
        %v1657 = vmax.f32 %v1482, %v1487
        %v1658 = vmax.f32 %v1483, %v1488
        %v1659 = vmax.f32 %v1484, %v1489
        %v1660 = vmax.f32 %v1485, %v1490
        %v1661 = vmax.f32 %v1486, %v1491
        %v1662 = vmax.f32 %v1487, %v1492
        %v1663 = vmax.f32 %v1488, %v1493
        %v1664 = vmax.f32 %v1489, %v1494
        %v1665 = vmax.f32 %v1490, %v1495
        %v1666 = vmax.f32 %v1491, %v1496
        %v1667 = vmax.f32 %v1492, %v1497
        %v1668 = vmax.f32 %v1493, %v1498
        %v1669 = vmax.f32 %v1494, %v1499
        %v1670 = vmax.f32 %v1495, %v1500
        %v1671 = vmax.f32 %v1496, %v1501
        %v1672 = vmax.f32 %v1497, %v1502
        %v1673 = vmax.f32 %v1498, %v1503
        %v1674 = vmax.f32 %v1499, %v1504
        %v1675 = vmax.f32 %v1500, %v1505
        %v1676 = vmax.f32 %v1501, %v1506
        %v1677 = vmax.f32 %v1502, %v1507
        %v1678 = vmax.f32 %v1503, %v1508
        %v1679 = vmax.f32 %v1504, %v1509
        %v1680 = vmax.f32 %v1505, %v1510
        %v1681 = vmax.f32 %v1506, %v1511
        %v1682 = vmax.f32 %v1507, %v1512
        %v1683 = vmax.f32 %v1508, %v1513
        %v1684 = vmax.f32 %v1509, %v1514
        %v1685 = vmax.f32 %v1510, %v1515
        %v1686 = vmax.f32 %v1511, %v1516
        %v1687 = vmax.f32 %v1512, %v1517
        %v1688 = vmax.f32 %v1513, %v1518
        %v1689 = vmax.f32 %v1514, %v1519
        %v1690 = vmax.f32 %v1515, %v1520
        %v1691 = vmax.f32 %v1516, %v1521
        %v1692 = vmax.f32 %v1517, %v1522
        %v1693 = vmax.f32 %v1518, %v1523
        %v1694 = vmax.f32 %v1519, %v1524
        %v1695 = vmax.f32 %v1520, %v1525
        %v1696 = vmax.f32 %v1521, %v1526
        %v1697 = vmax.f32 %v1522, %v1527
        %v1698 = vmax.f32 %v1523, %v1528
        %v1699 = vmax.f32 %v1524, %v1529
        %v1700 = vmax.f32 %v1525, %v1530
        %v1701 = vmax.f32 %v1526, %v1531
        %v1702 = vmax.f32 %v1527, %v1532
        %v1703 = vmax.f32 %v1528, %v1533
        %v1704 = vmax.f32 %v1529, %v1534
        %v1705 = vmax.f32 %v1530, %v1535
        %v1706 = vmax.f32 %v1531, %v1536
        %v1707 = vmax.f32 %v1532, %v1537
        %v1708 = vmax.f32 %v1533, %v1538
        %v1709 = vmax.f32 %v1534, %v1539
        %v1710 = vmax.f32 %v1535, %v1540
        %v1711 = vmax.f32 %v1536, %v1541
        %v1712 = vmax.f32 %v1537, %v1542
        %v1713 = vmax.f32 %v1538, %v1543
        %v1714 = vmax.f32 %v1539, %v1544
        %v1715 = vmax.f32 %v1545, %v1550
        %v1716 = vmax.f32 %v1546, %v1551
        %v1717 = vmax.f32 %v1547, %v1552
        %v1718 = vmax.f32 %v1548, %v1553
        %v1719 = vmax.f32 %v1549, %v1554
        %v1720 = vmax.f32 %v1555, %v1560
        %v1721 = vmax.f32 %v1556, %v1561
        %v1722 = vmax.f32 %v1557, %v1562
        %v1723 = vmax.f32 %v1558, %v1563
        %v1724 = vmax.f32 %v1559, %v1564
        %v1725 = vmax.f32 %v1565, %v1570
        %v1726 = vmax.f32 %v1566, %v1571
        %v1727 = vmax.f32 %v1567, %v1572
        %v1728 = vmax.f32 %v1568, %v1573
        %v1729 = vmax.f32 %v1569, %v1574
        %v1730 = vmax.f32 %v1575, %v1580
        %v1731 = vmax.f32 %v1576, %v1581
        %v1732 = vmax.f32 %v1577, %v1582
        %v1733 = vmax.f32 %v1578, %v1583
        %v1734 = vmax.f32 %v1579, %v1584
        %v1735 = vmax.f32 %v1585, %v1590
        %v1736 = vmax.f32 %v1586, %v1591
        %v1737 = vmax.f32 %v1587, %v1592
        %v1738 = vmax.f32 %v1588, %v1593
        %v1739 = vmax.f32 %v1589, %v1594
        %v1740 = vmax.f32 %v1595, %v1600
        %v1741 = vmax.f32 %v1596, %v1601
        %v1742 = vmax.f32 %v1597, %v1602
        %v1743 = vmax.f32 %v1598, %v1603
        %v1744 = vmax.f32 %v1599, %v1604
        %v1745 = vmax.f32 %v1605, %v1610
        %v1746 = vmax.f32 %v1606, %v1611
        %v1747 = vmax.f32 %v1607, %v1612
        %v1748 = vmax.f32 %v1608, %v1613
        %v1749 = vmax.f32 %v1609, %v1614
        %v1750 = vmax.f32 %v1615, %v1620
        %v1751 = vmax.f32 %v1616, %v1621
        %v1752 = vmax.f32 %v1617, %v1622
        %v1753 = vmax.f32 %v1618, %v1623
        %v1754 = vmax.f32 %v1619, %v1624
        %v1755 = vmax.f32 %v1625, %v1630
        %v1756 = vmax.f32 %v1626, %v1631
        %v1757 = vmax.f32 %v1627, %v1632
        %v1758 = vmax.f32 %v1628, %v1633
        %v1759 = vmax.f32 %v1629, %v1634
        %v1760 = vmax.f32 %v1635, %v1640
        %v1761 = vmax.f32 %v1636, %v1641
        %v1762 = vmax.f32 %v1637, %v1642
        %v1763 = vmax.f32 %v1638, %v1643
        %v1764 = vmax.f32 %v1639, %v1644
        %v1765 = vmax.f32 %v1645, %v1650
        %v1766 = vmax.f32 %v1646, %v1651
        %v1767 = vmax.f32 %v1647, %v1652
        %v1768 = vmax.f32 %v1648, %v1653
        %v1769 = vmax.f32 %v1649, %v1654
        %v1770 = vmax.f32 %v1655, %v1660
        %v1771 = vmax.f32 %v1656, %v1661
        %v1772 = vmax.f32 %v1657, %v1662
        %v1773 = vmax.f32 %v1658, %v1663
        %v1774 = vmax.f32 %v1659, %v1664
        %v1775 = vmax.f32 %v1665, %v1670
        %v1776 = vmax.f32 %v1666, %v1671
        %v1777 = vmax.f32 %v1667, %v1672
        %v1778 = vmax.f32 %v1668, %v1673
        %v1779 = vmax.f32 %v1669, %v1674
        %v1780 = vmax.f32 %v1675, %v1680
        %v1781 = vmax.f32 %v1676, %v1681
        %v1782 = vmax.f32 %v1677, %v1682
        %v1783 = vmax.f32 %v1678, %v1683
        %v1784 = vmax.f32 %v1679, %v1684
        %v1785 = vmax.f32 %v1685, %v1690
        %v1786 = vmax.f32 %v1686, %v1691
        %v1787 = vmax.f32 %v1687, %v1692
        %v1788 = vmax.f32 %v1688, %v1693
        %v1789 = vmax.f32 %v1689, %v1694
        %v1790 = vmax.f32 %v1695, %v1700
        %v1791 = vmax.f32 %v1696, %v1701
        %v1792 = vmax.f32 %v1697, %v1702
        %v1793 = vmax.f32 %v1698, %v1703
        %v1794 = vmax.f32 %v1699, %v1704
        %v1795 = vmax.f32 %v1705, %v1710
        %v1796 = vmax.f32 %v1706, %v1711
        %v1797 = vmax.f32 %v1707, %v1712
        %v1798 = vmax.f32 %v1708, %v1713
        %v1799 = vmax.f32 %v1709, %v1714
        %vm1885 = vcmask 1046528
        %v1886 = vrot.slane %v1715, 1
        %v1887 = vrot.slane %v1716, 1
        %v1888 = vsel %vm1885, %v1886, %v1887
        %v1889 = vrot.slane %v1717, 1
        %v1890 = vsel %vm1885, %v1887, %v1889
        %v1891 = vrot.slane %v1718, 1
        %v1892 = vsel %vm1885, %v1889, %v1891
        %v1893 = vrot.slane %v1719, 1
        %v1894 = vsel %vm1885, %v1891, %v1893
        %v1895 = vrot.slane %v1720, 1
        %v1896 = vrot.slane %v1721, 1
        %v1897 = vsel %vm1885, %v1895, %v1896
        %v1898 = vrot.slane %v1722, 1
        %v1899 = vsel %vm1885, %v1896, %v1898
        %v1900 = vrot.slane %v1723, 1
        %v1901 = vsel %vm1885, %v1898, %v1900
        %v1902 = vrot.slane %v1724, 1
        %v1903 = vsel %vm1885, %v1900, %v1902
        %v1904 = vrot.slane %v1725, 1
        %v1905 = vrot.slane %v1726, 1
        %v1906 = vsel %vm1885, %v1904, %v1905
        %v1907 = vrot.slane %v1727, 1
        %v1908 = vsel %vm1885, %v1905, %v1907
        %v1909 = vrot.slane %v1728, 1
        %v1910 = vsel %vm1885, %v1907, %v1909
        %v1911 = vrot.slane %v1729, 1
        %v1912 = vsel %vm1885, %v1909, %v1911
        %v1913 = vrot.slane %v1730, 1
        %v1914 = vrot.slane %v1731, 1
        %v1915 = vsel %vm1885, %v1913, %v1914
        %v1916 = vrot.slane %v1732, 1
        %v1917 = vsel %vm1885, %v1914, %v1916
        %v1918 = vrot.slane %v1733, 1
        %v1919 = vsel %vm1885, %v1916, %v1918
        %v1920 = vrot.slane %v1734, 1
        %v1921 = vsel %vm1885, %v1918, %v1920
        %v1922 = vrot.slane %v1735, 1
        %v1923 = vrot.slane %v1736, 1
        %v1924 = vsel %vm1885, %v1922, %v1923
        %v1925 = vrot.slane %v1737, 1
        %v1926 = vsel %vm1885, %v1923, %v1925
        %v1927 = vrot.slane %v1738, 1
        %v1928 = vsel %vm1885, %v1925, %v1927
        %v1929 = vrot.slane %v1739, 1
        %v1930 = vsel %vm1885, %v1927, %v1929
        %v1931 = vrot.slane %v1740, 1
        %v1932 = vrot.slane %v1741, 1
        %v1933 = vsel %vm1885, %v1931, %v1932
        %v1934 = vrot.slane %v1742, 1
        %v1935 = vsel %vm1885, %v1932, %v1934
        %v1936 = vrot.slane %v1743, 1
        %v1937 = vsel %vm1885, %v1934, %v1936
        %v1938 = vrot.slane %v1744, 1
        %v1939 = vsel %vm1885, %v1936, %v1938
        %v1940 = vrot.slane %v1745, 1
        %v1941 = vrot.slane %v1746, 1
        %v1942 = vsel %vm1885, %v1940, %v1941
        %v1943 = vrot.slane %v1747, 1
        %v1944 = vsel %vm1885, %v1941, %v1943
        %v1945 = vrot.slane %v1748, 1
        %v1946 = vsel %vm1885, %v1943, %v1945
        %v1947 = vrot.slane %v1749, 1
        %v1948 = vsel %vm1885, %v1945, %v1947
        %v1949 = vrot.slane %v1750, 1
        %v1950 = vrot.slane %v1751, 1
        %v1951 = vsel %vm1885, %v1949, %v1950
        %v1952 = vrot.slane %v1752, 1
        %v1953 = vsel %vm1885, %v1950, %v1952
        %v1954 = vrot.slane %v1753, 1
        %v1955 = vsel %vm1885, %v1952, %v1954
        %v1956 = vrot.slane %v1754, 1
        %v1957 = vsel %vm1885, %v1954, %v1956
        %v1958 = vrot.slane %v1755, 1
        %v1959 = vrot.slane %v1756, 1
        %v1960 = vsel %vm1885, %v1958, %v1959
        %v1961 = vrot.slane %v1757, 1
        %v1962 = vsel %vm1885, %v1959, %v1961
        %v1963 = vrot.slane %v1758, 1
        %v1964 = vsel %vm1885, %v1961, %v1963
        %v1965 = vrot.slane %v1759, 1
        %v1966 = vsel %vm1885, %v1963, %v1965
        %v1967 = vrot.slane %v1760, 1
        %v1968 = vrot.slane %v1761, 1
        %v1969 = vsel %vm1885, %v1967, %v1968
        %v1970 = vrot.slane %v1762, 1
        %v1971 = vsel %vm1885, %v1968, %v1970
        %v1972 = vrot.slane %v1763, 1
        %v1973 = vsel %vm1885, %v1970, %v1972
        %v1974 = vrot.slane %v1764, 1
        %v1975 = vsel %vm1885, %v1972, %v1974
        %v1976 = vrot.slane %v1765, 1
        %v1977 = vrot.slane %v1766, 1
        %v1978 = vsel %vm1885, %v1976, %v1977
        %v1979 = vrot.slane %v1767, 1
        %v1980 = vsel %vm1885, %v1977, %v1979
        %v1981 = vrot.slane %v1768, 1
        %v1982 = vsel %vm1885, %v1979, %v1981
        %v1983 = vrot.slane %v1769, 1
        %v1984 = vsel %vm1885, %v1981, %v1983
        %v1985 = vrot.slane %v1770, 1
        %v1986 = vrot.slane %v1771, 1
        %v1987 = vsel %vm1885, %v1985, %v1986
        %v1988 = vrot.slane %v1772, 1
        %v1989 = vsel %vm1885, %v1986, %v1988
        %v1990 = vrot.slane %v1773, 1
        %v1991 = vsel %vm1885, %v1988, %v1990
        %v1992 = vrot.slane %v1774, 1
        %v1993 = vsel %vm1885, %v1990, %v1992
        %v1994 = vrot.slane %v1775, 1
        %v1995 = vrot.slane %v1776, 1
        %v1996 = vsel %vm1885, %v1994, %v1995
        %v1997 = vrot.slane %v1777, 1
        %v1998 = vsel %vm1885, %v1995, %v1997
        %v1999 = vrot.slane %v1778, 1
        %v2000 = vsel %vm1885, %v1997, %v1999
        %v2001 = vrot.slane %v1779, 1
        %v2002 = vsel %vm1885, %v1999, %v2001
        %v2003 = vrot.slane %v1780, 1
        %v2004 = vrot.slane %v1781, 1
        %v2005 = vsel %vm1885, %v2003, %v2004
        %v2006 = vrot.slane %v1782, 1
        %v2007 = vsel %vm1885, %v2004, %v2006
        %v2008 = vrot.slane %v1783, 1
        %v2009 = vsel %vm1885, %v2006, %v2008
        %v2010 = vrot.slane %v1784, 1
        %v2011 = vsel %vm1885, %v2008, %v2010
        %v2012 = vrot.slane %v1785, 1
        %v2013 = vrot.slane %v1786, 1
        %v2014 = vsel %vm1885, %v2012, %v2013
        %v2015 = vrot.slane %v1787, 1
        %v2016 = vsel %vm1885, %v2013, %v2015
        %v2017 = vrot.slane %v1788, 1
        %v2018 = vsel %vm1885, %v2015, %v2017
        %v2019 = vrot.slane %v1789, 1
        %v2020 = vsel %vm1885, %v2017, %v2019
        %v2021 = vrot.slane %v1790, 1
        %v2022 = vrot.slane %v1791, 1
        %v2023 = vsel %vm1885, %v2021, %v2022
        %v2024 = vrot.slane %v1792, 1
        %v2025 = vsel %vm1885, %v2022, %v2024
        %v2026 = vrot.slane %v1793, 1
        %v2027 = vsel %vm1885, %v2024, %v2026
        %v2028 = vrot.slane %v1794, 1
        %v2029 = vsel %vm1885, %v2026, %v2028
        %v2030 = vrot.slane %v1795, 1
        %v2031 = vrot.slane %v1796, 1
        %v2032 = vsel %vm1885, %v2030, %v2031
        %v2033 = vrot.slane %v1797, 1
        %v2034 = vsel %vm1885, %v2031, %v2033
        %v2035 = vrot.slane %v1798, 1
        %v2036 = vsel %vm1885, %v2033, %v2035
        %v2037 = vrot.slane %v1799, 1
        %v2038 = vsel %vm1885, %v2035, %v2037
        %v2124 = vmax.f32 %v1715, %v1888
        %v2125 = vmax.f32 %v1716, %v1890
        %v2126 = vmax.f32 %v1717, %v1892
        %v2127 = vmax.f32 %v1718, %v1894
        %v2128 = vmax.f32 %v1719, %v1893
        %v2129 = vmax.f32 %v1720, %v1897
        %v2130 = vmax.f32 %v1721, %v1899
        %v2131 = vmax.f32 %v1722, %v1901
        %v2132 = vmax.f32 %v1723, %v1903
        %v2133 = vmax.f32 %v1724, %v1902
        %v2134 = vmax.f32 %v1725, %v1906
        %v2135 = vmax.f32 %v1726, %v1908
        %v2136 = vmax.f32 %v1727, %v1910
        %v2137 = vmax.f32 %v1728, %v1912
        %v2138 = vmax.f32 %v1729, %v1911
        %v2139 = vmax.f32 %v1730, %v1915
        %v2140 = vmax.f32 %v1731, %v1917
        %v2141 = vmax.f32 %v1732, %v1919
        %v2142 = vmax.f32 %v1733, %v1921
        %v2143 = vmax.f32 %v1734, %v1920
        %v2144 = vmax.f32 %v1735, %v1924
        %v2145 = vmax.f32 %v1736, %v1926
        %v2146 = vmax.f32 %v1737, %v1928
        %v2147 = vmax.f32 %v1738, %v1930
        %v2148 = vmax.f32 %v1739, %v1929
        %v2149 = vmax.f32 %v1740, %v1933
        %v2150 = vmax.f32 %v1741, %v1935
        %v2151 = vmax.f32 %v1742, %v1937
        %v2152 = vmax.f32 %v1743, %v1939
        %v2153 = vmax.f32 %v1744, %v1938
        %v2154 = vmax.f32 %v1745, %v1942
        %v2155 = vmax.f32 %v1746, %v1944
        %v2156 = vmax.f32 %v1747, %v1946
        %v2157 = vmax.f32 %v1748, %v1948
        %v2158 = vmax.f32 %v1749, %v1947
        %v2159 = vmax.f32 %v1750, %v1951
        %v2160 = vmax.f32 %v1751, %v1953
        %v2161 = vmax.f32 %v1752, %v1955
        %v2162 = vmax.f32 %v1753, %v1957
        %v2163 = vmax.f32 %v1754, %v1956
        %v2164 = vmax.f32 %v1755, %v1960
        %v2165 = vmax.f32 %v1756, %v1962
        %v2166 = vmax.f32 %v1757, %v1964
        %v2167 = vmax.f32 %v1758, %v1966
        %v2168 = vmax.f32 %v1759, %v1965
        %v2169 = vmax.f32 %v1760, %v1969
        %v2170 = vmax.f32 %v1761, %v1971
        %v2171 = vmax.f32 %v1762, %v1973
        %v2172 = vmax.f32 %v1763, %v1975
        %v2173 = vmax.f32 %v1764, %v1974
        %v2174 = vmax.f32 %v1765, %v1978
        %v2175 = vmax.f32 %v1766, %v1980
        %v2176 = vmax.f32 %v1767, %v1982
        %v2177 = vmax.f32 %v1768, %v1984
        %v2178 = vmax.f32 %v1769, %v1983
        %v2179 = vmax.f32 %v1770, %v1987
        %v2180 = vmax.f32 %v1771, %v1989
        %v2181 = vmax.f32 %v1772, %v1991
        %v2182 = vmax.f32 %v1773, %v1993
        %v2183 = vmax.f32 %v1774, %v1992
        %v2184 = vmax.f32 %v1775, %v1996
        %v2185 = vmax.f32 %v1776, %v1998
        %v2186 = vmax.f32 %v1777, %v2000
        %v2187 = vmax.f32 %v1778, %v2002
        %v2188 = vmax.f32 %v1779, %v2001
        %v2189 = vmax.f32 %v1780, %v2005
        %v2190 = vmax.f32 %v1781, %v2007
        %v2191 = vmax.f32 %v1782, %v2009
        %v2192 = vmax.f32 %v1783, %v2011
        %v2193 = vmax.f32 %v1784, %v2010
        %v2194 = vmax.f32 %v1785, %v2014
        %v2195 = vmax.f32 %v1786, %v2016
        %v2196 = vmax.f32 %v1787, %v2018
        %v2197 = vmax.f32 %v1788, %v2020
        %v2198 = vmax.f32 %v1789, %v2019
        %v2199 = vmax.f32 %v1790, %v2023
        %v2200 = vmax.f32 %v1791, %v2025
        %v2201 = vmax.f32 %v1792, %v2027
        %v2202 = vmax.f32 %v1793, %v2029
        %v2203 = vmax.f32 %v1794, %v2028
        %v2204 = vmax.f32 %v1795, %v2032
        %v2205 = vmax.f32 %v1796, %v2034
        %v2206 = vmax.f32 %v1797, %v2036
        %v2207 = vmax.f32 %v1798, %v2038
        %v2208 = vmax.f32 %v1799, %v2037
        %vm2209 = vcmask 1045504
        %v2210 = vrot.slane %v1715, 2
        %v2211 = vrot.slane %v1716, 2
        %v2212 = vsel %vm2209, %v2210, %v2211
        %v2213 = vrot.slane %v1717, 2
        %v2214 = vsel %vm2209, %v2211, %v2213
        %v2215 = vrot.slane %v1718, 2
        %v2216 = vsel %vm2209, %v2213, %v2215
        %v2217 = vrot.slane %v1719, 2
        %v2218 = vsel %vm2209, %v2215, %v2217
        %v2219 = vrot.slane %v1720, 2
        %v2220 = vrot.slane %v1721, 2
        %v2221 = vsel %vm2209, %v2219, %v2220
        %v2222 = vrot.slane %v1722, 2
        %v2223 = vsel %vm2209, %v2220, %v2222
        %v2224 = vrot.slane %v1723, 2
        %v2225 = vsel %vm2209, %v2222, %v2224
        %v2226 = vrot.slane %v1724, 2
        %v2227 = vsel %vm2209, %v2224, %v2226
        %v2228 = vrot.slane %v1725, 2
        %v2229 = vrot.slane %v1726, 2
        %v2230 = vsel %vm2209, %v2228, %v2229
        %v2231 = vrot.slane %v1727, 2
        %v2232 = vsel %vm2209, %v2229, %v2231
        %v2233 = vrot.slane %v1728, 2
        %v2234 = vsel %vm2209, %v2231, %v2233
        %v2235 = vrot.slane %v1729, 2
        %v2236 = vsel %vm2209, %v2233, %v2235
        %v2237 = vrot.slane %v1730, 2
        %v2238 = vrot.slane %v1731, 2
        %v2239 = vsel %vm2209, %v2237, %v2238
        %v2240 = vrot.slane %v1732, 2
        %v2241 = vsel %vm2209, %v2238, %v2240
        %v2242 = vrot.slane %v1733, 2
        %v2243 = vsel %vm2209, %v2240, %v2242
        %v2244 = vrot.slane %v1734, 2
        %v2245 = vsel %vm2209, %v2242, %v2244
        %v2246 = vrot.slane %v1735, 2
        %v2247 = vrot.slane %v1736, 2
        %v2248 = vsel %vm2209, %v2246, %v2247
        %v2249 = vrot.slane %v1737, 2
        %v2250 = vsel %vm2209, %v2247, %v2249
        %v2251 = vrot.slane %v1738, 2
        %v2252 = vsel %vm2209, %v2249, %v2251
        %v2253 = vrot.slane %v1739, 2
        %v2254 = vsel %vm2209, %v2251, %v2253
        %v2255 = vrot.slane %v1740, 2
        %v2256 = vrot.slane %v1741, 2
        %v2257 = vsel %vm2209, %v2255, %v2256
        %v2258 = vrot.slane %v1742, 2
        %v2259 = vsel %vm2209, %v2256, %v2258
        %v2260 = vrot.slane %v1743, 2
        %v2261 = vsel %vm2209, %v2258, %v2260
        %v2262 = vrot.slane %v1744, 2
        %v2263 = vsel %vm2209, %v2260, %v2262
        %v2264 = vrot.slane %v1745, 2
        %v2265 = vrot.slane %v1746, 2
        %v2266 = vsel %vm2209, %v2264, %v2265
        %v2267 = vrot.slane %v1747, 2
        %v2268 = vsel %vm2209, %v2265, %v2267
        %v2269 = vrot.slane %v1748, 2
        %v2270 = vsel %vm2209, %v2267, %v2269
        %v2271 = vrot.slane %v1749, 2
        %v2272 = vsel %vm2209, %v2269, %v2271
        %v2273 = vrot.slane %v1750, 2
        %v2274 = vrot.slane %v1751, 2
        %v2275 = vsel %vm2209, %v2273, %v2274
        %v2276 = vrot.slane %v1752, 2
        %v2277 = vsel %vm2209, %v2274, %v2276
        %v2278 = vrot.slane %v1753, 2
        %v2279 = vsel %vm2209, %v2276, %v2278
        %v2280 = vrot.slane %v1754, 2
        %v2281 = vsel %vm2209, %v2278, %v2280
        %v2282 = vrot.slane %v1755, 2
        %v2283 = vrot.slane %v1756, 2
        %v2284 = vsel %vm2209, %v2282, %v2283
        %v2285 = vrot.slane %v1757, 2
        %v2286 = vsel %vm2209, %v2283, %v2285
        %v2287 = vrot.slane %v1758, 2
        %v2288 = vsel %vm2209, %v2285, %v2287
        %v2289 = vrot.slane %v1759, 2
        %v2290 = vsel %vm2209, %v2287, %v2289
        %v2291 = vrot.slane %v1760, 2
        %v2292 = vrot.slane %v1761, 2
        %v2293 = vsel %vm2209, %v2291, %v2292
        %v2294 = vrot.slane %v1762, 2
        %v2295 = vsel %vm2209, %v2292, %v2294
        %v2296 = vrot.slane %v1763, 2
        %v2297 = vsel %vm2209, %v2294, %v2296
        %v2298 = vrot.slane %v1764, 2
        %v2299 = vsel %vm2209, %v2296, %v2298
        %v2300 = vrot.slane %v1765, 2
        %v2301 = vrot.slane %v1766, 2
        %v2302 = vsel %vm2209, %v2300, %v2301
        %v2303 = vrot.slane %v1767, 2
        %v2304 = vsel %vm2209, %v2301, %v2303
        %v2305 = vrot.slane %v1768, 2
        %v2306 = vsel %vm2209, %v2303, %v2305
        %v2307 = vrot.slane %v1769, 2
        %v2308 = vsel %vm2209, %v2305, %v2307
        %v2309 = vrot.slane %v1770, 2
        %v2310 = vrot.slane %v1771, 2
        %v2311 = vsel %vm2209, %v2309, %v2310
        %v2312 = vrot.slane %v1772, 2
        %v2313 = vsel %vm2209, %v2310, %v2312
        %v2314 = vrot.slane %v1773, 2
        %v2315 = vsel %vm2209, %v2312, %v2314
        %v2316 = vrot.slane %v1774, 2
        %v2317 = vsel %vm2209, %v2314, %v2316
        %v2318 = vrot.slane %v1775, 2
        %v2319 = vrot.slane %v1776, 2
        %v2320 = vsel %vm2209, %v2318, %v2319
        %v2321 = vrot.slane %v1777, 2
        %v2322 = vsel %vm2209, %v2319, %v2321
        %v2323 = vrot.slane %v1778, 2
        %v2324 = vsel %vm2209, %v2321, %v2323
        %v2325 = vrot.slane %v1779, 2
        %v2326 = vsel %vm2209, %v2323, %v2325
        %v2327 = vrot.slane %v1780, 2
        %v2328 = vrot.slane %v1781, 2
        %v2329 = vsel %vm2209, %v2327, %v2328
        %v2330 = vrot.slane %v1782, 2
        %v2331 = vsel %vm2209, %v2328, %v2330
        %v2332 = vrot.slane %v1783, 2
        %v2333 = vsel %vm2209, %v2330, %v2332
        %v2334 = vrot.slane %v1784, 2
        %v2335 = vsel %vm2209, %v2332, %v2334
        %v2336 = vrot.slane %v1785, 2
        %v2337 = vrot.slane %v1786, 2
        %v2338 = vsel %vm2209, %v2336, %v2337
        %v2339 = vrot.slane %v1787, 2
        %v2340 = vsel %vm2209, %v2337, %v2339
        %v2341 = vrot.slane %v1788, 2
        %v2342 = vsel %vm2209, %v2339, %v2341
        %v2343 = vrot.slane %v1789, 2
        %v2344 = vsel %vm2209, %v2341, %v2343
        %v2345 = vrot.slane %v1790, 2
        %v2346 = vrot.slane %v1791, 2
        %v2347 = vsel %vm2209, %v2345, %v2346
        %v2348 = vrot.slane %v1792, 2
        %v2349 = vsel %vm2209, %v2346, %v2348
        %v2350 = vrot.slane %v1793, 2
        %v2351 = vsel %vm2209, %v2348, %v2350
        %v2352 = vrot.slane %v1794, 2
        %v2353 = vsel %vm2209, %v2350, %v2352
        %v2354 = vrot.slane %v1795, 2
        %v2355 = vrot.slane %v1796, 2
        %v2356 = vsel %vm2209, %v2354, %v2355
        %v2357 = vrot.slane %v1797, 2
        %v2358 = vsel %vm2209, %v2355, %v2357
        %v2359 = vrot.slane %v1798, 2
        %v2360 = vsel %vm2209, %v2357, %v2359
        %v2361 = vrot.slane %v1799, 2
        %v2362 = vsel %vm2209, %v2359, %v2361
        %v2448 = vmax.f32 %v2124, %v2212
        %v2449 = vmax.f32 %v2125, %v2214
        %v2450 = vmax.f32 %v2126, %v2216
        %v2451 = vmax.f32 %v2127, %v2218
        %v2452 = vmax.f32 %v2128, %v2217
        %v2453 = vmax.f32 %v2129, %v2221
        %v2454 = vmax.f32 %v2130, %v2223
        %v2455 = vmax.f32 %v2131, %v2225
        %v2456 = vmax.f32 %v2132, %v2227
        %v2457 = vmax.f32 %v2133, %v2226
        %v2458 = vmax.f32 %v2134, %v2230
        %v2459 = vmax.f32 %v2135, %v2232
        %v2460 = vmax.f32 %v2136, %v2234
        %v2461 = vmax.f32 %v2137, %v2236
        %v2462 = vmax.f32 %v2138, %v2235
        %v2463 = vmax.f32 %v2139, %v2239
        %v2464 = vmax.f32 %v2140, %v2241
        %v2465 = vmax.f32 %v2141, %v2243
        %v2466 = vmax.f32 %v2142, %v2245
        %v2467 = vmax.f32 %v2143, %v2244
        %v2468 = vmax.f32 %v2144, %v2248
        %v2469 = vmax.f32 %v2145, %v2250
        %v2470 = vmax.f32 %v2146, %v2252
        %v2471 = vmax.f32 %v2147, %v2254
        %v2472 = vmax.f32 %v2148, %v2253
        %v2473 = vmax.f32 %v2149, %v2257
        %v2474 = vmax.f32 %v2150, %v2259
        %v2475 = vmax.f32 %v2151, %v2261
        %v2476 = vmax.f32 %v2152, %v2263
        %v2477 = vmax.f32 %v2153, %v2262
        %v2478 = vmax.f32 %v2154, %v2266
        %v2479 = vmax.f32 %v2155, %v2268
        %v2480 = vmax.f32 %v2156, %v2270
        %v2481 = vmax.f32 %v2157, %v2272
        %v2482 = vmax.f32 %v2158, %v2271
        %v2483 = vmax.f32 %v2159, %v2275
        %v2484 = vmax.f32 %v2160, %v2277
        %v2485 = vmax.f32 %v2161, %v2279
        %v2486 = vmax.f32 %v2162, %v2281
        %v2487 = vmax.f32 %v2163, %v2280
        %v2488 = vmax.f32 %v2164, %v2284
        %v2489 = vmax.f32 %v2165, %v2286
        %v2490 = vmax.f32 %v2166, %v2288
        %v2491 = vmax.f32 %v2167, %v2290
        %v2492 = vmax.f32 %v2168, %v2289
        %v2493 = vmax.f32 %v2169, %v2293
        %v2494 = vmax.f32 %v2170, %v2295
        %v2495 = vmax.f32 %v2171, %v2297
        %v2496 = vmax.f32 %v2172, %v2299
        %v2497 = vmax.f32 %v2173, %v2298
        %v2498 = vmax.f32 %v2174, %v2302
        %v2499 = vmax.f32 %v2175, %v2304
        %v2500 = vmax.f32 %v2176, %v2306
        %v2501 = vmax.f32 %v2177, %v2308
        %v2502 = vmax.f32 %v2178, %v2307
        %v2503 = vmax.f32 %v2179, %v2311
        %v2504 = vmax.f32 %v2180, %v2313
        %v2505 = vmax.f32 %v2181, %v2315
        %v2506 = vmax.f32 %v2182, %v2317
        %v2507 = vmax.f32 %v2183, %v2316
        %v2508 = vmax.f32 %v2184, %v2320
        %v2509 = vmax.f32 %v2185, %v2322
        %v2510 = vmax.f32 %v2186, %v2324
        %v2511 = vmax.f32 %v2187, %v2326
        %v2512 = vmax.f32 %v2188, %v2325
        %v2513 = vmax.f32 %v2189, %v2329
        %v2514 = vmax.f32 %v2190, %v2331
        %v2515 = vmax.f32 %v2191, %v2333
        %v2516 = vmax.f32 %v2192, %v2335
        %v2517 = vmax.f32 %v2193, %v2334
        %v2518 = vmax.f32 %v2194, %v2338
        %v2519 = vmax.f32 %v2195, %v2340
        %v2520 = vmax.f32 %v2196, %v2342
        %v2521 = vmax.f32 %v2197, %v2344
        %v2522 = vmax.f32 %v2198, %v2343
        %v2523 = vmax.f32 %v2199, %v2347
        %v2524 = vmax.f32 %v2200, %v2349
        %v2525 = vmax.f32 %v2201, %v2351
        %v2526 = vmax.f32 %v2202, %v2353
        %v2527 = vmax.f32 %v2203, %v2352
        %v2528 = vmax.f32 %v2204, %v2356
        %v2529 = vmax.f32 %v2205, %v2358
        %v2530 = vmax.f32 %v2206, %v2360
        %v2531 = vmax.f32 %v2207, %v2362
        %v2532 = vmax.f32 %v2208, %v2361
        %v2533 = vlaneseq
        %v2534 = vshrl.u32 %v2533, 7
        %v2535 = vadd.s32 %v2534, 8
        %v2536 = vadd.s32 %v2534, 16
        %v2537 = vlaneseq
        %v2538 = vand.u32 %v2537, 127
        %v2539 = vmul.u32 %v2534, 2
        %v2540 = vmul.u32 %v2535, 2
        %v2541 = vmul.u32 %v2536, 2
        %vm2542 = vcmp.eq.s32.totalorder %v2538, %v2539
        %vm2543 = vcmp.eq.s32.totalorder %v2538, %v2540
        %vm2544 = vcmp.eq.s32.totalorder %v2538, %v2541
        %vm2545 = vcmp.lt.s32.totalorder %v2534, 17
        %vm2546 = vcmp.lt.s32.totalorder %v2535, 17
        %vm2547 = vcmp.lt.s32.totalorder %v2536, 17
        %vm2548 = vmand %vm2542, %vm2545
        %vm2549 = vmand %vm2543, %vm2546
        %vm2550 = vmand %vm2544, %vm2547
        %v2551 = vsel %vm2548, 1.0, 0.0
        %v2552 = vsel %vm2549, 1.0, 0.0
        %v2553 = vsel %vm2550, 1.0, 0.0
        %v2554 = vpack.c.bf16 %v2551, %v2551
        %v2555 = vpack.c.bf16 %v2552, %v2552
        %v2556 = vpack.c.bf16 %v2553, %v2553
        %v2557 = vpack.c.bf16 %v2448, %v2448
        %v2558 = vpack.c.bf16 %v2449, %v2449
        %v2559 = vpack.c.bf16 %v2450, %v2450
        %v2560 = vpack.c.bf16 %v2451, %v2451
        %v2561 = vpack.c.bf16 %v2452, %v2452
        %v2562 = vpack.c.bf16 %v2453, %v2453
        %v2563 = vpack.c.bf16 %v2454, %v2454
        %v2564 = vpack.c.bf16 %v2455, %v2455
        %v2565 = vpack.c.bf16 %v2456, %v2456
        %v2566 = vpack.c.bf16 %v2457, %v2457
        %v2567 = vpack.c.bf16 %v2458, %v2458
        %v2568 = vpack.c.bf16 %v2459, %v2459
        %v2569 = vpack.c.bf16 %v2460, %v2460
        %v2570 = vpack.c.bf16 %v2461, %v2461
        %v2571 = vpack.c.bf16 %v2462, %v2462
        %v2572 = vpack.c.bf16 %v2463, %v2463
        %v2573 = vpack.c.bf16 %v2464, %v2464
        %v2574 = vpack.c.bf16 %v2465, %v2465
        %v2575 = vpack.c.bf16 %v2466, %v2466
        %v2576 = vpack.c.bf16 %v2467, %v2467
        %v2577 = vpack.c.bf16 %v2468, %v2468
        %v2578 = vpack.c.bf16 %v2469, %v2469
        %v2579 = vpack.c.bf16 %v2470, %v2470
        %v2580 = vpack.c.bf16 %v2471, %v2471
        %v2581 = vpack.c.bf16 %v2472, %v2472
        %v2582 = vpack.c.bf16 %v2473, %v2473
        %v2583 = vpack.c.bf16 %v2474, %v2474
        %v2584 = vpack.c.bf16 %v2475, %v2475
        %v2585 = vpack.c.bf16 %v2476, %v2476
        %v2586 = vpack.c.bf16 %v2477, %v2477
        %v2587 = vpack.c.bf16 %v2478, %v2478
        %v2588 = vpack.c.bf16 %v2479, %v2479
        %v2589 = vpack.c.bf16 %v2480, %v2480
        %v2590 = vpack.c.bf16 %v2481, %v2481
        %v2591 = vpack.c.bf16 %v2482, %v2482
        %v2592 = vpack.c.bf16 %v2483, %v2483
        %v2593 = vpack.c.bf16 %v2484, %v2484
        %v2594 = vpack.c.bf16 %v2485, %v2485
        %v2595 = vpack.c.bf16 %v2486, %v2486
        %v2596 = vpack.c.bf16 %v2487, %v2487
        %v2597 = vpack.c.bf16 %v2488, %v2488
        %v2598 = vpack.c.bf16 %v2489, %v2489
        %v2599 = vpack.c.bf16 %v2490, %v2490
        %v2600 = vpack.c.bf16 %v2491, %v2491
        %v2601 = vpack.c.bf16 %v2492, %v2492
        %v2602 = vpack.c.bf16 %v2493, %v2493
        %v2603 = vpack.c.bf16 %v2494, %v2494
        %v2604 = vpack.c.bf16 %v2495, %v2495
        %v2605 = vpack.c.bf16 %v2496, %v2496
        %v2606 = vpack.c.bf16 %v2497, %v2497
        %v2607 = vpack.c.bf16 %v2498, %v2498
        %v2608 = vpack.c.bf16 %v2499, %v2499
        %v2609 = vpack.c.bf16 %v2500, %v2500
        %v2610 = vpack.c.bf16 %v2501, %v2501
        %v2611 = vpack.c.bf16 %v2502, %v2502
        %v2612 = vpack.c.bf16 %v2503, %v2503
        %v2613 = vpack.c.bf16 %v2504, %v2504
        %v2614 = vpack.c.bf16 %v2505, %v2505
        %v2615 = vpack.c.bf16 %v2506, %v2506
        %v2616 = vpack.c.bf16 %v2507, %v2507
        %v2617 = vpack.c.bf16 %v2508, %v2508
        %v2618 = vpack.c.bf16 %v2509, %v2509
        %v2619 = vpack.c.bf16 %v2510, %v2510
        %v2620 = vpack.c.bf16 %v2511, %v2511
        %v2621 = vpack.c.bf16 %v2512, %v2512
        %v2622 = vpack.c.bf16 %v2513, %v2513
        %v2623 = vpack.c.bf16 %v2514, %v2514
        %v2624 = vpack.c.bf16 %v2515, %v2515
        %v2625 = vpack.c.bf16 %v2516, %v2516
        %v2626 = vpack.c.bf16 %v2517, %v2517
        %v2627 = vpack.c.bf16 %v2518, %v2518
        %v2628 = vpack.c.bf16 %v2519, %v2519
        %v2629 = vpack.c.bf16 %v2520, %v2520
        %v2630 = vpack.c.bf16 %v2521, %v2521
        %v2631 = vpack.c.bf16 %v2522, %v2522
        %v2632 = vpack.c.bf16 %v2523, %v2523
        %v2633 = vpack.c.bf16 %v2524, %v2524
        %v2634 = vpack.c.bf16 %v2525, %v2525
        %v2635 = vpack.c.bf16 %v2526, %v2526
        %v2636 = vpack.c.bf16 %v2527, %v2527
        %v2637 = vpack.c.bf16 %v2528, %v2528
        %v2638 = vpack.c.bf16 %v2529, %v2529
        %v2639 = vpack.c.bf16 %v2530, %v2530
        %v2640 = vpack.c.bf16 %v2531, %v2531
        %v2641 = vpack.c.bf16 %v2532, %v2532
        %v2645 = vunpack.c.l.b16 %v2554
        %v2646 = vunpack.c.l.b16 %v2555
        %v2647 = vunpack.c.l.b16 %v2556
        %v2648 = vpack.c.b16 %v2646, %v2645
        %v2649 = vpack.c.b16 %v2647, %v2647
        %v2655 = vunpack.c.l.b16 %v2557
        %v2656 = vunpack.c.l.b16 %v2558
        %v2657 = vunpack.c.l.b16 %v2559
        %v2658 = vunpack.c.l.b16 %v2560
        %v2659 = vunpack.c.l.b16 %v2561
        %v2660 = vpack.c.b16 %v2656, %v2655
        %v2661 = vpack.c.b16 %v2658, %v2657
        %v2662 = vpack.c.b16 %v2659, %v2659
        %vm2665 = vcmask 310272
        %v2667 = vsel %vm2665, %v2648, 0
        %v2670 = vsel %vm2665, %v2649, 0
        %vm2672 = vcmask 1042432
        %v2674 = vsel %vm2672, %v2662, 0
        %2676 = vmatpush.bf16.msra.mxu0 0
        %2677 = vmatpush.bf16.msra.mxu0 0
        %2678 = vmatpush.bf16.msra.mxu0 0
        %2679 = vmatpush.bf16.msra.mxu0 0
        %2680 = vmatpush.bf16.msra.mxu0 0
        %2681 = vmatpush.bf16.msra.mxu0 %v2674
        %2682 = vmatpush.bf16.msra.mxu0 %v2661
        %2683 = vmatpush.bf16.msra.mxu0 %v2660
        %2684 = vmatmul.bf16.gmra.mxu0 %v2667
        %v2685 = vpop.f32.mrf.mxu0
        %v2686 = vadd.f32 0.0, %v2685
        %v2687 = vpop.f32.mrf.mxu0
        %v2688 = vadd.f32 0.0, %v2687
        %2689 = vmatmul.bf16.gmra.mxu0 %v2670
        %v2690 = vpop.f32.mrf.mxu0
        %v2691 = vadd.f32 0.0, %v2690
        %v2692 = vpop.f32.mrf.mxu0
        %2693 = vdwg.mxu0
        %v2699 = vunpack.c.l.b16 %v2562
        %v2700 = vunpack.c.l.b16 %v2563
        %v2701 = vunpack.c.l.b16 %v2564
        %v2702 = vunpack.c.l.b16 %v2565
        %v2703 = vunpack.c.l.b16 %v2566
        %v2704 = vpack.c.b16 %v2700, %v2699
        %v2705 = vpack.c.b16 %v2702, %v2701
        %v2706 = vpack.c.b16 %v2703, %v2703
        %v2710 = vsel %vm2672, %v2706, 0
        %2712 = vmatpush.bf16.msra.mxu0 0
        %2713 = vmatpush.bf16.msra.mxu0 0
        %2714 = vmatpush.bf16.msra.mxu0 0
        %2715 = vmatpush.bf16.msra.mxu0 0
        %2716 = vmatpush.bf16.msra.mxu0 0
        %2717 = vmatpush.bf16.msra.mxu0 %v2710
        %2718 = vmatpush.bf16.msra.mxu0 %v2705
        %2719 = vmatpush.bf16.msra.mxu0 %v2704
        %2720 = vmatmul.bf16.gmra.mxu0 %v2667
        %v2721 = vpop.f32.mrf.mxu0
        %v2722 = vadd.f32 0.0, %v2721
        %v2723 = vpop.f32.mrf.mxu0
        %v2724 = vadd.f32 0.0, %v2723
        %2725 = vmatmul.bf16.gmra.mxu0 %v2670
        %v2726 = vpop.f32.mrf.mxu0
        %v2727 = vadd.f32 0.0, %v2726
        %v2728 = vpop.f32.mrf.mxu0
        %2729 = vdwg.mxu0
        %v2735 = vunpack.c.l.b16 %v2567
        %v2736 = vunpack.c.l.b16 %v2568
        %v2737 = vunpack.c.l.b16 %v2569
        %v2738 = vunpack.c.l.b16 %v2570
        %v2739 = vunpack.c.l.b16 %v2571
        %v2740 = vpack.c.b16 %v2736, %v2735
        %v2741 = vpack.c.b16 %v2738, %v2737
        %v2742 = vpack.c.b16 %v2739, %v2739
        %v2746 = vsel %vm2672, %v2742, 0
        %2748 = vmatpush.bf16.msra.mxu0 0
        %2749 = vmatpush.bf16.msra.mxu0 0
        %2750 = vmatpush.bf16.msra.mxu0 0
        %2751 = vmatpush.bf16.msra.mxu0 0
        %2752 = vmatpush.bf16.msra.mxu0 0
        %2753 = vmatpush.bf16.msra.mxu0 %v2746
        %2754 = vmatpush.bf16.msra.mxu0 %v2741
        %2755 = vmatpush.bf16.msra.mxu0 %v2740
        %2756 = vmatmul.bf16.gmra.mxu0 %v2667
        %v2757 = vpop.f32.mrf.mxu0
        %v2758 = vadd.f32 0.0, %v2757
        %v2759 = vpop.f32.mrf.mxu0
        %v2760 = vadd.f32 0.0, %v2759
        %2761 = vmatmul.bf16.gmra.mxu0 %v2670
        %v2762 = vpop.f32.mrf.mxu0
        %v2763 = vadd.f32 0.0, %v2762
        %v2764 = vpop.f32.mrf.mxu0
        %2765 = vdwg.mxu0
        %v2771 = vunpack.c.l.b16 %v2572
        %v2772 = vunpack.c.l.b16 %v2573
        %v2773 = vunpack.c.l.b16 %v2574
        %v2774 = vunpack.c.l.b16 %v2575
        %v2775 = vunpack.c.l.b16 %v2576
        %v2776 = vpack.c.b16 %v2772, %v2771
        %v2777 = vpack.c.b16 %v2774, %v2773
        %v2778 = vpack.c.b16 %v2775, %v2775
        %v2782 = vsel %vm2672, %v2778, 0
        %2784 = vmatpush.bf16.msra.mxu0 0
        %2785 = vmatpush.bf16.msra.mxu0 0
        %2786 = vmatpush.bf16.msra.mxu0 0
        %2787 = vmatpush.bf16.msra.mxu0 0
        %2788 = vmatpush.bf16.msra.mxu0 0
        %2789 = vmatpush.bf16.msra.mxu0 %v2782
        %2790 = vmatpush.bf16.msra.mxu0 %v2777
        %2791 = vmatpush.bf16.msra.mxu0 %v2776
        %2792 = vmatmul.bf16.gmra.mxu0 %v2667
        %v2793 = vpop.f32.mrf.mxu0
        %v2794 = vadd.f32 0.0, %v2793
        %v2795 = vpop.f32.mrf.mxu0
        %v2796 = vadd.f32 0.0, %v2795
        %2797 = vmatmul.bf16.gmra.mxu0 %v2670
        %v2798 = vpop.f32.mrf.mxu0
        %v2799 = vadd.f32 0.0, %v2798
        %v2800 = vpop.f32.mrf.mxu0
        %2801 = vdwg.mxu0
        %v2807 = vunpack.c.l.b16 %v2577
        %v2808 = vunpack.c.l.b16 %v2578
        %v2809 = vunpack.c.l.b16 %v2579
        %v2810 = vunpack.c.l.b16 %v2580
        %v2811 = vunpack.c.l.b16 %v2581
        %v2812 = vpack.c.b16 %v2808, %v2807
        %v2813 = vpack.c.b16 %v2810, %v2809
        %v2814 = vpack.c.b16 %v2811, %v2811
        %v2818 = vsel %vm2672, %v2814, 0
        %2820 = vmatpush.bf16.msra.mxu0 0
        %2821 = vmatpush.bf16.msra.mxu0 0
        %2822 = vmatpush.bf16.msra.mxu0 0
        %2823 = vmatpush.bf16.msra.mxu0 0
        %2824 = vmatpush.bf16.msra.mxu0 0
        %2825 = vmatpush.bf16.msra.mxu0 %v2818
        %2826 = vmatpush.bf16.msra.mxu0 %v2813
        %2827 = vmatpush.bf16.msra.mxu0 %v2812
        %2828 = vmatmul.bf16.gmra.mxu0 %v2667
        %v2829 = vpop.f32.mrf.mxu0
        %v2830 = vadd.f32 0.0, %v2829
        %v2831 = vpop.f32.mrf.mxu0
        %v2832 = vadd.f32 0.0, %v2831
        %2833 = vmatmul.bf16.gmra.mxu0 %v2670
        %v2834 = vpop.f32.mrf.mxu0
        %v2835 = vadd.f32 0.0, %v2834
        %v2836 = vpop.f32.mrf.mxu0
        %2837 = vdwg.mxu0
        %v2843 = vunpack.c.l.b16 %v2582
        %v2844 = vunpack.c.l.b16 %v2583
        %v2845 = vunpack.c.l.b16 %v2584
        %v2846 = vunpack.c.l.b16 %v2585
        %v2847 = vunpack.c.l.b16 %v2586
        %v2848 = vpack.c.b16 %v2844, %v2843
        %v2849 = vpack.c.b16 %v2846, %v2845
        %v2850 = vpack.c.b16 %v2847, %v2847
        %v2854 = vsel %vm2672, %v2850, 0
        %2856 = vmatpush.bf16.msra.mxu0 0
        %2857 = vmatpush.bf16.msra.mxu0 0
        %2858 = vmatpush.bf16.msra.mxu0 0
        %2859 = vmatpush.bf16.msra.mxu0 0
        %2860 = vmatpush.bf16.msra.mxu0 0
        %2861 = vmatpush.bf16.msra.mxu0 %v2854
        %2862 = vmatpush.bf16.msra.mxu0 %v2849
        %2863 = vmatpush.bf16.msra.mxu0 %v2848
        %2864 = vmatmul.bf16.gmra.mxu0 %v2667
        %v2865 = vpop.f32.mrf.mxu0
        %v2866 = vadd.f32 0.0, %v2865
        %v2867 = vpop.f32.mrf.mxu0
        %v2868 = vadd.f32 0.0, %v2867
        %2869 = vmatmul.bf16.gmra.mxu0 %v2670
        %v2870 = vpop.f32.mrf.mxu0
        %v2871 = vadd.f32 0.0, %v2870
        %v2872 = vpop.f32.mrf.mxu0
        %2873 = vdwg.mxu0
        %v2879 = vunpack.c.l.b16 %v2587
        %v2880 = vunpack.c.l.b16 %v2588
        %v2881 = vunpack.c.l.b16 %v2589
        %v2882 = vunpack.c.l.b16 %v2590
        %v2883 = vunpack.c.l.b16 %v2591
        %v2884 = vpack.c.b16 %v2880, %v2879
        %v2885 = vpack.c.b16 %v2882, %v2881
        %v2886 = vpack.c.b16 %v2883, %v2883
        %v2890 = vsel %vm2672, %v2886, 0
        %2892 = vmatpush.bf16.msra.mxu0 0
        %2893 = vmatpush.bf16.msra.mxu0 0
        %2894 = vmatpush.bf16.msra.mxu0 0
        %2895 = vmatpush.bf16.msra.mxu0 0
        %2896 = vmatpush.bf16.msra.mxu0 0
        %2897 = vmatpush.bf16.msra.mxu0 %v2890
        %2898 = vmatpush.bf16.msra.mxu0 %v2885
        %2899 = vmatpush.bf16.msra.mxu0 %v2884
        %2900 = vmatmul.bf16.gmra.mxu0 %v2667
        %v2901 = vpop.f32.mrf.mxu0
        %v2902 = vadd.f32 0.0, %v2901
        %v2903 = vpop.f32.mrf.mxu0
        %v2904 = vadd.f32 0.0, %v2903
        %2905 = vmatmul.bf16.gmra.mxu0 %v2670
        %v2906 = vpop.f32.mrf.mxu0
        %v2907 = vadd.f32 0.0, %v2906
        %v2908 = vpop.f32.mrf.mxu0
        %2909 = vdwg.mxu0
        %v2915 = vunpack.c.l.b16 %v2592
        %v2916 = vunpack.c.l.b16 %v2593
        %v2917 = vunpack.c.l.b16 %v2594
        %v2918 = vunpack.c.l.b16 %v2595
        %v2919 = vunpack.c.l.b16 %v2596
        %v2920 = vpack.c.b16 %v2916, %v2915
        %v2921 = vpack.c.b16 %v2918, %v2917
        %v2922 = vpack.c.b16 %v2919, %v2919
        %v2926 = vsel %vm2672, %v2922, 0
        %2928 = vmatpush.bf16.msra.mxu0 0
        %2929 = vmatpush.bf16.msra.mxu0 0
        %2930 = vmatpush.bf16.msra.mxu0 0
        %2931 = vmatpush.bf16.msra.mxu0 0
        %2932 = vmatpush.bf16.msra.mxu0 0
        %2933 = vmatpush.bf16.msra.mxu0 %v2926
        %2934 = vmatpush.bf16.msra.mxu0 %v2921
        %2935 = vmatpush.bf16.msra.mxu0 %v2920
        %2936 = vmatmul.bf16.gmra.mxu0 %v2667
        %v2937 = vpop.f32.mrf.mxu0
        %v2938 = vadd.f32 0.0, %v2937
        %v2939 = vpop.f32.mrf.mxu0
        %v2940 = vadd.f32 0.0, %v2939
        %2941 = vmatmul.bf16.gmra.mxu0 %v2670
        %v2942 = vpop.f32.mrf.mxu0
        %v2943 = vadd.f32 0.0, %v2942
        %v2944 = vpop.f32.mrf.mxu0
        %2945 = vdwg.mxu0
        %v2951 = vunpack.c.l.b16 %v2597
        %v2952 = vunpack.c.l.b16 %v2598
        %v2953 = vunpack.c.l.b16 %v2599
        %v2954 = vunpack.c.l.b16 %v2600
        %v2955 = vunpack.c.l.b16 %v2601
        %v2956 = vpack.c.b16 %v2952, %v2951
        %v2957 = vpack.c.b16 %v2954, %v2953
        %v2958 = vpack.c.b16 %v2955, %v2955
        %v2962 = vsel %vm2672, %v2958, 0
        %2964 = vmatpush.bf16.msra.mxu0 0
        %2965 = vmatpush.bf16.msra.mxu0 0
        %2966 = vmatpush.bf16.msra.mxu0 0
        %2967 = vmatpush.bf16.msra.mxu0 0
        %2968 = vmatpush.bf16.msra.mxu0 0
        %2969 = vmatpush.bf16.msra.mxu0 %v2962
        %2970 = vmatpush.bf16.msra.mxu0 %v2957
        %2971 = vmatpush.bf16.msra.mxu0 %v2956
        %2972 = vmatmul.bf16.gmra.mxu0 %v2667
        %v2973 = vpop.f32.mrf.mxu0
        %v2974 = vadd.f32 0.0, %v2973
        %v2975 = vpop.f32.mrf.mxu0
        %v2976 = vadd.f32 0.0, %v2975
        %2977 = vmatmul.bf16.gmra.mxu0 %v2670
        %v2978 = vpop.f32.mrf.mxu0
        %v2979 = vadd.f32 0.0, %v2978
        %v2980 = vpop.f32.mrf.mxu0
        %2981 = vdwg.mxu0
        %v2987 = vunpack.c.l.b16 %v2602
        %v2988 = vunpack.c.l.b16 %v2603
        %v2989 = vunpack.c.l.b16 %v2604
        %v2990 = vunpack.c.l.b16 %v2605
        %v2991 = vunpack.c.l.b16 %v2606
        %v2992 = vpack.c.b16 %v2988, %v2987
        %v2993 = vpack.c.b16 %v2990, %v2989
        %v2994 = vpack.c.b16 %v2991, %v2991
        %v2998 = vsel %vm2672, %v2994, 0
        %3000 = vmatpush.bf16.msra.mxu0 0
        %3001 = vmatpush.bf16.msra.mxu0 0
        %3002 = vmatpush.bf16.msra.mxu0 0
        %3003 = vmatpush.bf16.msra.mxu0 0
        %3004 = vmatpush.bf16.msra.mxu0 0
        %3005 = vmatpush.bf16.msra.mxu0 %v2998
        %3006 = vmatpush.bf16.msra.mxu0 %v2993
        %3007 = vmatpush.bf16.msra.mxu0 %v2992
        %3008 = vmatmul.bf16.gmra.mxu0 %v2667
        %v3009 = vpop.f32.mrf.mxu0
        %v3010 = vadd.f32 0.0, %v3009
        %v3011 = vpop.f32.mrf.mxu0
        %v3012 = vadd.f32 0.0, %v3011
        %3013 = vmatmul.bf16.gmra.mxu0 %v2670
        %v3014 = vpop.f32.mrf.mxu0
        %v3015 = vadd.f32 0.0, %v3014
        %v3016 = vpop.f32.mrf.mxu0
        %3017 = vdwg.mxu0
        %v3023 = vunpack.c.l.b16 %v2607
        %v3024 = vunpack.c.l.b16 %v2608
        %v3025 = vunpack.c.l.b16 %v2609
        %v3026 = vunpack.c.l.b16 %v2610
        %v3027 = vunpack.c.l.b16 %v2611
        %v3028 = vpack.c.b16 %v3024, %v3023
        %v3029 = vpack.c.b16 %v3026, %v3025
        %v3030 = vpack.c.b16 %v3027, %v3027
        %v3034 = vsel %vm2672, %v3030, 0
        %3036 = vmatpush.bf16.msra.mxu0 0
        %3037 = vmatpush.bf16.msra.mxu0 0
        %3038 = vmatpush.bf16.msra.mxu0 0
        %3039 = vmatpush.bf16.msra.mxu0 0
        %3040 = vmatpush.bf16.msra.mxu0 0
        %3041 = vmatpush.bf16.msra.mxu0 %v3034
        %3042 = vmatpush.bf16.msra.mxu0 %v3029
        %3043 = vmatpush.bf16.msra.mxu0 %v3028
        %3044 = vmatmul.bf16.gmra.mxu0 %v2667
        %v3045 = vpop.f32.mrf.mxu0
        %v3046 = vadd.f32 0.0, %v3045
        %v3047 = vpop.f32.mrf.mxu0
        %v3048 = vadd.f32 0.0, %v3047
        %3049 = vmatmul.bf16.gmra.mxu0 %v2670
        %v3050 = vpop.f32.mrf.mxu0
        %v3051 = vadd.f32 0.0, %v3050
        %v3052 = vpop.f32.mrf.mxu0
        %3053 = vdwg.mxu0
        %v3059 = vunpack.c.l.b16 %v2612
        %v3060 = vunpack.c.l.b16 %v2613
        %v3061 = vunpack.c.l.b16 %v2614
        %v3062 = vunpack.c.l.b16 %v2615
        %v3063 = vunpack.c.l.b16 %v2616
        %v3064 = vpack.c.b16 %v3060, %v3059
        %v3065 = vpack.c.b16 %v3062, %v3061
        %v3066 = vpack.c.b16 %v3063, %v3063
        %v3070 = vsel %vm2672, %v3066, 0
        %3072 = vmatpush.bf16.msra.mxu0 0
        %3073 = vmatpush.bf16.msra.mxu0 0
        %3074 = vmatpush.bf16.msra.mxu0 0
        %3075 = vmatpush.bf16.msra.mxu0 0
        %3076 = vmatpush.bf16.msra.mxu0 0
        %3077 = vmatpush.bf16.msra.mxu0 %v3070
        %3078 = vmatpush.bf16.msra.mxu0 %v3065
        %3079 = vmatpush.bf16.msra.mxu0 %v3064
        %3080 = vmatmul.bf16.gmra.mxu0 %v2667
        %v3081 = vpop.f32.mrf.mxu0
        %v3082 = vadd.f32 0.0, %v3081
        %v3083 = vpop.f32.mrf.mxu0
        %v3084 = vadd.f32 0.0, %v3083
        %3085 = vmatmul.bf16.gmra.mxu0 %v2670
        %v3086 = vpop.f32.mrf.mxu0
        %v3087 = vadd.f32 0.0, %v3086
        %v3088 = vpop.f32.mrf.mxu0
        %3089 = vdwg.mxu0
        %v3095 = vunpack.c.l.b16 %v2617
        %v3096 = vunpack.c.l.b16 %v2618
        %v3097 = vunpack.c.l.b16 %v2619
        %v3098 = vunpack.c.l.b16 %v2620
        %v3099 = vunpack.c.l.b16 %v2621
        %v3100 = vpack.c.b16 %v3096, %v3095
        %v3101 = vpack.c.b16 %v3098, %v3097
        %v3102 = vpack.c.b16 %v3099, %v3099
        %v3106 = vsel %vm2672, %v3102, 0
        %3108 = vmatpush.bf16.msra.mxu0 0
        %3109 = vmatpush.bf16.msra.mxu0 0
        %3110 = vmatpush.bf16.msra.mxu0 0
        %3111 = vmatpush.bf16.msra.mxu0 0
        %3112 = vmatpush.bf16.msra.mxu0 0
        %3113 = vmatpush.bf16.msra.mxu0 %v3106
        %3114 = vmatpush.bf16.msra.mxu0 %v3101
        %3115 = vmatpush.bf16.msra.mxu0 %v3100
        %3116 = vmatmul.bf16.gmra.mxu0 %v2667
        %v3117 = vpop.f32.mrf.mxu0
        %v3118 = vadd.f32 0.0, %v3117
        %v3119 = vpop.f32.mrf.mxu0
        %v3120 = vadd.f32 0.0, %v3119
        %3121 = vmatmul.bf16.gmra.mxu0 %v2670
        %v3122 = vpop.f32.mrf.mxu0
        %v3123 = vadd.f32 0.0, %v3122
        %v3124 = vpop.f32.mrf.mxu0
        %3125 = vdwg.mxu0
        %v3131 = vunpack.c.l.b16 %v2622
        %v3132 = vunpack.c.l.b16 %v2623
        %v3133 = vunpack.c.l.b16 %v2624
        %v3134 = vunpack.c.l.b16 %v2625
        %v3135 = vunpack.c.l.b16 %v2626
        %v3136 = vpack.c.b16 %v3132, %v3131
        %v3137 = vpack.c.b16 %v3134, %v3133
        %v3138 = vpack.c.b16 %v3135, %v3135
        %v3142 = vsel %vm2672, %v3138, 0
        %3144 = vmatpush.bf16.msra.mxu0 0
        %3145 = vmatpush.bf16.msra.mxu0 0
        %3146 = vmatpush.bf16.msra.mxu0 0
        %3147 = vmatpush.bf16.msra.mxu0 0
        %3148 = vmatpush.bf16.msra.mxu0 0
        %3149 = vmatpush.bf16.msra.mxu0 %v3142
        %3150 = vmatpush.bf16.msra.mxu0 %v3137
        %3151 = vmatpush.bf16.msra.mxu0 %v3136
        %3152 = vmatmul.bf16.gmra.mxu0 %v2667
        %v3153 = vpop.f32.mrf.mxu0
        %v3154 = vadd.f32 0.0, %v3153
        %v3155 = vpop.f32.mrf.mxu0
        %v3156 = vadd.f32 0.0, %v3155
        %3157 = vmatmul.bf16.gmra.mxu0 %v2670
        %v3158 = vpop.f32.mrf.mxu0
        %v3159 = vadd.f32 0.0, %v3158
        %v3160 = vpop.f32.mrf.mxu0
        %3161 = vdwg.mxu0
        %v3167 = vunpack.c.l.b16 %v2627
        %v3168 = vunpack.c.l.b16 %v2628
        %v3169 = vunpack.c.l.b16 %v2629
        %v3170 = vunpack.c.l.b16 %v2630
        %v3171 = vunpack.c.l.b16 %v2631
        %v3172 = vpack.c.b16 %v3168, %v3167
        %v3173 = vpack.c.b16 %v3170, %v3169
        %v3174 = vpack.c.b16 %v3171, %v3171
        %v3178 = vsel %vm2672, %v3174, 0
        %3180 = vmatpush.bf16.msra.mxu0 0
        %3181 = vmatpush.bf16.msra.mxu0 0
        %3182 = vmatpush.bf16.msra.mxu0 0
        %3183 = vmatpush.bf16.msra.mxu0 0
        %3184 = vmatpush.bf16.msra.mxu0 0
        %3185 = vmatpush.bf16.msra.mxu0 %v3178
        %3186 = vmatpush.bf16.msra.mxu0 %v3173
        %3187 = vmatpush.bf16.msra.mxu0 %v3172
        %3188 = vmatmul.bf16.gmra.mxu0 %v2667
        %v3189 = vpop.f32.mrf.mxu0
        %v3190 = vadd.f32 0.0, %v3189
        %v3191 = vpop.f32.mrf.mxu0
        %v3192 = vadd.f32 0.0, %v3191
        %3193 = vmatmul.bf16.gmra.mxu0 %v2670
        %v3194 = vpop.f32.mrf.mxu0
        %v3195 = vadd.f32 0.0, %v3194
        %v3196 = vpop.f32.mrf.mxu0
        %3197 = vdwg.mxu0
        %v3203 = vunpack.c.l.b16 %v2632
        %v3204 = vunpack.c.l.b16 %v2633
        %v3205 = vunpack.c.l.b16 %v2634
        %v3206 = vunpack.c.l.b16 %v2635
        %v3207 = vunpack.c.l.b16 %v2636
        %v3208 = vpack.c.b16 %v3204, %v3203
        %v3209 = vpack.c.b16 %v3206, %v3205
        %v3210 = vpack.c.b16 %v3207, %v3207
        %v3214 = vsel %vm2672, %v3210, 0
        %3216 = vmatpush.bf16.msra.mxu0 0
        %3217 = vmatpush.bf16.msra.mxu0 0
        %3218 = vmatpush.bf16.msra.mxu0 0
        %3219 = vmatpush.bf16.msra.mxu0 0
        %3220 = vmatpush.bf16.msra.mxu0 0
        %3221 = vmatpush.bf16.msra.mxu0 %v3214
        %3222 = vmatpush.bf16.msra.mxu0 %v3209
        %3223 = vmatpush.bf16.msra.mxu0 %v3208
        %3224 = vmatmul.bf16.gmra.mxu0 %v2667
        %v3225 = vpop.f32.mrf.mxu0
        %v3226 = vadd.f32 0.0, %v3225
        %v3227 = vpop.f32.mrf.mxu0
        %v3228 = vadd.f32 0.0, %v3227
        %3229 = vmatmul.bf16.gmra.mxu0 %v2670
        %v3230 = vpop.f32.mrf.mxu0
        %v3231 = vadd.f32 0.0, %v3230
        %v3232 = vpop.f32.mrf.mxu0
        %3233 = vdwg.mxu0
        %v3239 = vunpack.c.l.b16 %v2637
        %v3240 = vunpack.c.l.b16 %v2638
        %v3241 = vunpack.c.l.b16 %v2639
        %v3242 = vunpack.c.l.b16 %v2640
        %v3243 = vunpack.c.l.b16 %v2641
        %v3244 = vpack.c.b16 %v3240, %v3239
        %v3245 = vpack.c.b16 %v3242, %v3241
        %v3246 = vpack.c.b16 %v3243, %v3243
        %v3250 = vsel %vm2672, %v3246, 0
        %3252 = vmatpush.bf16.msra.mxu0 0
        %3253 = vmatpush.bf16.msra.mxu0 0
        %3254 = vmatpush.bf16.msra.mxu0 0
        %3255 = vmatpush.bf16.msra.mxu0 0
        %3256 = vmatpush.bf16.msra.mxu0 0
        %3257 = vmatpush.bf16.msra.mxu0 %v3250
        %3258 = vmatpush.bf16.msra.mxu0 %v3245
        %3259 = vmatpush.bf16.msra.mxu0 %v3244
        %3260 = vmatmul.bf16.gmra.mxu0 %v2667
        %v3261 = vpop.f32.mrf.mxu0
        %v3262 = vadd.f32 0.0, %v3261
        %v3263 = vpop.f32.mrf.mxu0
        %v3264 = vadd.f32 0.0, %v3263
        %3265 = vmatmul.bf16.gmra.mxu0 %v2670
        %v3266 = vpop.f32.mrf.mxu0
        %v3267 = vadd.f32 0.0, %v3266
        %v3268 = vpop.f32.mrf.mxu0
        %3269 = vdwg.mxu0
        %v3270 = vpack.c.bf16 %v2688, %v2686
        %v3271 = vpack.c.bf16 %v2722, %v2691
        %v3272 = vpack.c.bf16 %v2727, %v2724
        %v3273 = vpack.c.bf16 %v2760, %v2758
        %v3274 = vpack.c.bf16 %v2794, %v2763
        %v3275 = vpack.c.bf16 %v2799, %v2796
        %v3276 = vpack.c.bf16 %v2832, %v2830
        %v3277 = vpack.c.bf16 %v2866, %v2835
        %v3278 = vpack.c.bf16 %v2871, %v2868
        %v3279 = vpack.c.bf16 %v2904, %v2902
        %v3280 = vpack.c.bf16 %v2938, %v2907
        %v3281 = vpack.c.bf16 %v2943, %v2940
        %v3282 = vpack.c.bf16 %v2976, %v2974
        %v3283 = vpack.c.bf16 %v3010, %v2979
        %v3284 = vpack.c.bf16 %v3015, %v3012
        %v3285 = vpack.c.bf16 %v3048, %v3046
        %v3286 = vpack.c.bf16 %v3082, %v3051
        %v3287 = vpack.c.bf16 %v3087, %v3084
        %v3288 = vpack.c.bf16 %v3120, %v3118
        %v3289 = vpack.c.bf16 %v3154, %v3123
        %v3290 = vpack.c.bf16 %v3159, %v3156
        %v3291 = vpack.c.bf16 %v3192, %v3190
        %v3292 = vpack.c.bf16 %v3226, %v3195
        %v3293 = vpack.c.bf16 %v3231, %v3228
        %v3294 = vpack.c.bf16 %v3264, %v3262
        %v3295 = vpack.c.bf16 %v3267, %v3267
        %v3296 = vld [vmem:[%s3] sm:$0xf]
        %v3297 = vld [vmem:[%s3 + $0x4] sm:$0xf]
        %v3298 = vld [vmem:[%s3 + $0x8] sm:$0xf]
        %v3299 = vld [vmem:[%s3 + $0xc] sm:$0xf]
        %v3300 = vld [vmem:[%s3 + $0x10] sm:$0xf]
        %v3301 = vld [vmem:[%s3 + $0x14] sm:$0xf]
        %v3302 = vld [vmem:[%s3 + $0x18] sm:$0xf]
        %v3303 = vld [vmem:[%s3 + $0x1c] sm:$0xf]
        %v3304 = vld [vmem:[%s3 + $0x20] sm:$0xf]
        %v3305 = vld [vmem:[%s3 + $0x24] sm:$0xf]
        %v3306 = vld [vmem:[%s3 + $0x28] sm:$0xf]
        %v3307 = vld [vmem:[%s3 + $0x2c] sm:$0xf]
        %v3308 = vld [vmem:[%s3 + $0x30] sm:$0xf]
        %v3309 = vld [vmem:[%s3 + $0x34] sm:$0xf]
        %v3310 = vld [vmem:[%s3 + $0x38] sm:$0xf]
        %v3311 = vld [vmem:[%s3 + $0x3c] sm:$0xf]
        %v3312 = vld [vmem:[%s4] sm:$0x1]
        %v3314 = vperm.slane %v3312, 0
        %v3332 = vunpack.c.l.b16 %v3296
        %v3333 = vunpack.c.l.b16 %v3297
        %v3334 = vunpack.c.l.b16 %v3298
        %v3335 = vunpack.c.l.b16 %v3299
        %v3336 = vunpack.c.l.b16 %v3300
        %v3337 = vunpack.c.l.b16 %v3301
        %v3338 = vunpack.c.l.b16 %v3302
        %v3339 = vunpack.c.l.b16 %v3303
        %v3340 = vunpack.c.l.b16 %v3304
        %v3341 = vunpack.c.l.b16 %v3305
        %v3342 = vunpack.c.l.b16 %v3306
        %v3343 = vunpack.c.l.b16 %v3307
        %v3344 = vunpack.c.l.b16 %v3308
        %v3345 = vunpack.c.l.b16 %v3309
        %v3346 = vunpack.c.l.b16 %v3310
        %v3347 = vunpack.c.l.b16 %v3311
        %v3348 = vpack.c.b16 %v3333, %v3332
        %v3349 = vpack.c.b16 %v3335, %v3334
        %v3350 = vpack.c.b16 %v3337, %v3336
        %v3351 = vpack.c.b16 %v3339, %v3338
        %v3352 = vpack.c.b16 %v3341, %v3340
        %v3353 = vpack.c.b16 %v3343, %v3342
        %v3354 = vpack.c.b16 %v3345, %v3344
        %v3355 = vpack.c.b16 %v3347, %v3346
        %3364 = vmatpush.bf16.msra.mxu0 %v3355
        %3365 = vmatpush.bf16.msra.mxu0 %v3354
        %3366 = vmatpush.bf16.msra.mxu0 %v3353
        %3367 = vmatpush.bf16.msra.mxu0 %v3352
        %3368 = vmatpush.bf16.msra.mxu0 %v3351
        %3369 = vmatpush.bf16.msra.mxu0 %v3350
        %3370 = vmatpush.bf16.msra.mxu0 %v3349
        %3371 = vmatpush.bf16.msra.mxu0 %v3348
        %3372 = vmatmul.bf16.gmra.mxu0 %v3270
        %v3373 = vpop.f32.mrf.mxu0
        %v3374 = vadd.f32 %v3314, %v3373
        %v3375 = vpop.f32.mrf.mxu0
        %v3376 = vadd.f32 %v3314, %v3375
        %3377 = vmatmul.bf16.gmra.mxu0 %v3271
        %v3378 = vpop.f32.mrf.mxu0
        %v3379 = vadd.f32 %v3314, %v3378
        %v3380 = vpop.f32.mrf.mxu0
        %v3381 = vadd.f32 %v3314, %v3380
        %3382 = vmatmul.bf16.gmra.mxu0 %v3272
        %v3383 = vpop.f32.mrf.mxu0
        %v3384 = vadd.f32 %v3314, %v3383
        %v3385 = vpop.f32.mrf.mxu0
        %v3386 = vadd.f32 %v3314, %v3385
        %3387 = vmatmul.bf16.gmra.mxu0 %v3273
        %v3388 = vpop.f32.mrf.mxu0
        %v3389 = vadd.f32 %v3314, %v3388
        %v3390 = vpop.f32.mrf.mxu0
        %v3391 = vadd.f32 %v3314, %v3390
        %3392 = vmatmul.bf16.gmra.mxu0 %v3274
        %v3393 = vpop.f32.mrf.mxu0
        %v3394 = vadd.f32 %v3314, %v3393
        %v3395 = vpop.f32.mrf.mxu0
        %v3396 = vadd.f32 %v3314, %v3395
        %3397 = vmatmul.bf16.gmra.mxu0 %v3275
        %v3398 = vpop.f32.mrf.mxu0
        %v3399 = vadd.f32 %v3314, %v3398
        %v3400 = vpop.f32.mrf.mxu0
        %v3401 = vadd.f32 %v3314, %v3400
        %3402 = vmatmul.bf16.gmra.mxu0 %v3276
        %v3403 = vpop.f32.mrf.mxu0
        %v3404 = vadd.f32 %v3314, %v3403
        %v3405 = vpop.f32.mrf.mxu0
        %v3406 = vadd.f32 %v3314, %v3405
        %3407 = vmatmul.bf16.gmra.mxu0 %v3277
        %v3408 = vpop.f32.mrf.mxu0
        %v3409 = vadd.f32 %v3314, %v3408
        %v3410 = vpop.f32.mrf.mxu0
        %v3411 = vadd.f32 %v3314, %v3410
        %3412 = vmatmul.bf16.gmra.mxu0 %v3278
        %v3413 = vpop.f32.mrf.mxu0
        %v3414 = vadd.f32 %v3314, %v3413
        %v3415 = vpop.f32.mrf.mxu0
        %v3416 = vadd.f32 %v3314, %v3415
        %3417 = vmatmul.bf16.gmra.mxu0 %v3279
        %v3418 = vpop.f32.mrf.mxu0
        %v3419 = vadd.f32 %v3314, %v3418
        %v3420 = vpop.f32.mrf.mxu0
        %v3421 = vadd.f32 %v3314, %v3420
        %3422 = vmatmul.bf16.gmra.mxu0 %v3280
        %v3423 = vpop.f32.mrf.mxu0
        %v3424 = vadd.f32 %v3314, %v3423
        %v3425 = vpop.f32.mrf.mxu0
        %v3426 = vadd.f32 %v3314, %v3425
        %3427 = vmatmul.bf16.gmra.mxu0 %v3281
        %v3428 = vpop.f32.mrf.mxu0
        %v3429 = vadd.f32 %v3314, %v3428
        %v3430 = vpop.f32.mrf.mxu0
        %v3431 = vadd.f32 %v3314, %v3430
        %3432 = vmatmul.bf16.gmra.mxu0 %v3282
        %v3433 = vpop.f32.mrf.mxu0
        %v3434 = vadd.f32 %v3314, %v3433
        %v3435 = vpop.f32.mrf.mxu0
        %v3436 = vadd.f32 %v3314, %v3435
        %3437 = vmatmul.bf16.gmra.mxu0 %v3283
        %v3438 = vpop.f32.mrf.mxu0
        %v3439 = vadd.f32 %v3314, %v3438
        %v3440 = vpop.f32.mrf.mxu0
        %v3441 = vadd.f32 %v3314, %v3440
        %3442 = vmatmul.bf16.gmra.mxu0 %v3284
        %v3443 = vpop.f32.mrf.mxu0
        %v3444 = vadd.f32 %v3314, %v3443
        %v3445 = vpop.f32.mrf.mxu0
        %v3446 = vadd.f32 %v3314, %v3445
        %3447 = vmatmul.bf16.gmra.mxu0 %v3285
        %v3448 = vpop.f32.mrf.mxu0
        %v3449 = vadd.f32 %v3314, %v3448
        %v3450 = vpop.f32.mrf.mxu0
        %v3451 = vadd.f32 %v3314, %v3450
        %3452 = vmatmul.bf16.gmra.mxu0 %v3286
        %v3453 = vpop.f32.mrf.mxu0
        %v3454 = vadd.f32 %v3314, %v3453
        %v3455 = vpop.f32.mrf.mxu0
        %v3456 = vadd.f32 %v3314, %v3455
        %3457 = vmatmul.bf16.gmra.mxu0 %v3287
        %v3458 = vpop.f32.mrf.mxu0
        %v3459 = vadd.f32 %v3314, %v3458
        %v3460 = vpop.f32.mrf.mxu0
        %v3461 = vadd.f32 %v3314, %v3460
        %3462 = vmatmul.bf16.gmra.mxu0 %v3288
        %v3463 = vpop.f32.mrf.mxu0
        %v3464 = vadd.f32 %v3314, %v3463
        %v3465 = vpop.f32.mrf.mxu0
        %v3466 = vadd.f32 %v3314, %v3465
        %3467 = vmatmul.bf16.gmra.mxu0 %v3289
        %v3468 = vpop.f32.mrf.mxu0
        %v3469 = vadd.f32 %v3314, %v3468
        %v3470 = vpop.f32.mrf.mxu0
        %v3471 = vadd.f32 %v3314, %v3470
        %3472 = vmatmul.bf16.gmra.mxu0 %v3290
        %v3473 = vpop.f32.mrf.mxu0
        %v3474 = vadd.f32 %v3314, %v3473
        %v3475 = vpop.f32.mrf.mxu0
        %v3476 = vadd.f32 %v3314, %v3475
        %3477 = vmatmul.bf16.gmra.mxu0 %v3291
        %v3478 = vpop.f32.mrf.mxu0
        %v3479 = vadd.f32 %v3314, %v3478
        %v3480 = vpop.f32.mrf.mxu0
        %v3481 = vadd.f32 %v3314, %v3480
        %3482 = vmatmul.bf16.gmra.mxu0 %v3292
        %v3483 = vpop.f32.mrf.mxu0
        %v3484 = vadd.f32 %v3314, %v3483
        %v3485 = vpop.f32.mrf.mxu0
        %v3486 = vadd.f32 %v3314, %v3485
        %3487 = vmatmul.bf16.gmra.mxu0 %v3293
        %v3488 = vpop.f32.mrf.mxu0
        %v3489 = vadd.f32 %v3314, %v3488
        %v3490 = vpop.f32.mrf.mxu0
        %v3491 = vadd.f32 %v3314, %v3490
        %3492 = vmatmul.bf16.gmra.mxu0 %v3294
        %v3493 = vpop.f32.mrf.mxu0
        %v3494 = vadd.f32 %v3314, %v3493
        %v3495 = vpop.f32.mrf.mxu0
        %v3496 = vadd.f32 %v3314, %v3495
        %3497 = vmatmul.bf16.gmra.mxu0 %v3295
        %v3498 = vpop.f32.mrf.mxu0
        %v3499 = vadd.f32 %v3314, %v3498
        %v3500 = vpop.f32.mrf.mxu0
        %3501 = vdwg.mxu0
        %v3502 = vmax.f32 %v3374, 0.0
        %v3503 = vmax.f32 %v3376, 0.0
        %v3504 = vmax.f32 %v3379, 0.0
        %v3505 = vmax.f32 %v3381, 0.0
        %v3506 = vmax.f32 %v3384, 0.0
        %v3507 = vmax.f32 %v3386, 0.0
        %v3508 = vmax.f32 %v3389, 0.0
        %v3509 = vmax.f32 %v3391, 0.0
        %v3510 = vmax.f32 %v3394, 0.0
        %v3511 = vmax.f32 %v3396, 0.0
        %v3512 = vmax.f32 %v3399, 0.0
        %v3513 = vmax.f32 %v3401, 0.0
        %v3514 = vmax.f32 %v3404, 0.0
        %v3515 = vmax.f32 %v3406, 0.0
        %v3516 = vmax.f32 %v3409, 0.0
        %v3517 = vmax.f32 %v3411, 0.0
        %v3518 = vmax.f32 %v3414, 0.0
        %v3519 = vmax.f32 %v3416, 0.0
        %v3520 = vmax.f32 %v3419, 0.0
        %v3521 = vmax.f32 %v3421, 0.0
        %v3522 = vmax.f32 %v3424, 0.0
        %v3523 = vmax.f32 %v3426, 0.0
        %v3524 = vmax.f32 %v3429, 0.0
        %v3525 = vmax.f32 %v3431, 0.0
        %v3526 = vmax.f32 %v3434, 0.0
        %v3527 = vmax.f32 %v3436, 0.0
        %v3528 = vmax.f32 %v3439, 0.0
        %v3529 = vmax.f32 %v3441, 0.0
        %v3530 = vmax.f32 %v3444, 0.0
        %v3531 = vmax.f32 %v3446, 0.0
        %v3532 = vmax.f32 %v3449, 0.0
        %v3533 = vmax.f32 %v3451, 0.0
        %v3534 = vmax.f32 %v3454, 0.0
        %v3535 = vmax.f32 %v3456, 0.0
        %v3536 = vmax.f32 %v3459, 0.0
        %v3537 = vmax.f32 %v3461, 0.0
        %v3538 = vmax.f32 %v3464, 0.0
        %v3539 = vmax.f32 %v3466, 0.0
        %v3540 = vmax.f32 %v3469, 0.0
        %v3541 = vmax.f32 %v3471, 0.0
        %v3542 = vmax.f32 %v3474, 0.0
        %v3543 = vmax.f32 %v3476, 0.0
        %v3544 = vmax.f32 %v3479, 0.0
        %v3545 = vmax.f32 %v3481, 0.0
        %v3546 = vmax.f32 %v3484, 0.0
        %v3547 = vmax.f32 %v3486, 0.0
        %v3548 = vmax.f32 %v3489, 0.0
        %v3549 = vmax.f32 %v3491, 0.0
        %v3550 = vmax.f32 %v3494, 0.0
        %v3551 = vmax.f32 %v3496, 0.0
        %v3552 = vmax.f32 %v3499, 0.0
        %v3553 = vmax.f32 %v3502, %v3505
        %v3554 = vmax.f32 %v3503, %v3506
        %v3555 = vmax.f32 %v3504, %v3507
        %v3556 = vmax.f32 %v3505, %v3508
        %v3557 = vmax.f32 %v3506, %v3509
        %v3558 = vmax.f32 %v3507, %v3510
        %v3559 = vmax.f32 %v3508, %v3511
        %v3560 = vmax.f32 %v3509, %v3512
        %v3561 = vmax.f32 %v3510, %v3513
        %v3562 = vmax.f32 %v3511, %v3514
        %v3563 = vmax.f32 %v3512, %v3515
        %v3564 = vmax.f32 %v3513, %v3516
        %v3565 = vmax.f32 %v3514, %v3517
        %v3566 = vmax.f32 %v3515, %v3518
        %v3567 = vmax.f32 %v3516, %v3519
        %v3568 = vmax.f32 %v3517, %v3520
        %v3569 = vmax.f32 %v3518, %v3521
        %v3570 = vmax.f32 %v3519, %v3522
        %v3571 = vmax.f32 %v3520, %v3523
        %v3572 = vmax.f32 %v3521, %v3524
        %v3573 = vmax.f32 %v3522, %v3525
        %v3574 = vmax.f32 %v3523, %v3526
        %v3575 = vmax.f32 %v3524, %v3527
        %v3576 = vmax.f32 %v3525, %v3528
        %v3577 = vmax.f32 %v3526, %v3529
        %v3578 = vmax.f32 %v3527, %v3530
        %v3579 = vmax.f32 %v3528, %v3531
        %v3580 = vmax.f32 %v3529, %v3532
        %v3581 = vmax.f32 %v3530, %v3533
        %v3582 = vmax.f32 %v3531, %v3534
        %v3583 = vmax.f32 %v3532, %v3535
        %v3584 = vmax.f32 %v3533, %v3536
        %v3585 = vmax.f32 %v3534, %v3537
        %v3586 = vmax.f32 %v3535, %v3538
        %v3587 = vmax.f32 %v3536, %v3539
        %v3588 = vmax.f32 %v3537, %v3540
        %v3589 = vmax.f32 %v3538, %v3541
        %v3590 = vmax.f32 %v3539, %v3542
        %v3591 = vmax.f32 %v3540, %v3543
        %v3592 = vmax.f32 %v3541, %v3544
        %v3593 = vmax.f32 %v3542, %v3545
        %v3594 = vmax.f32 %v3543, %v3546
        %v3595 = vmax.f32 %v3544, %v3547
        %v3596 = vmax.f32 %v3545, %v3548
        %v3597 = vmax.f32 %v3546, %v3549
        %v3598 = vmax.f32 %v3547, %v3550
        %v3599 = vmax.f32 %v3548, %v3551
        %v3600 = vmax.f32 %v3549, %v3552
        %v3601 = vmax.f32 %v3553, %v3556
        %v3602 = vmax.f32 %v3554, %v3557
        %v3603 = vmax.f32 %v3555, %v3558
        %v3604 = vmax.f32 %v3559, %v3562
        %v3605 = vmax.f32 %v3560, %v3563
        %v3606 = vmax.f32 %v3561, %v3564
        %v3607 = vmax.f32 %v3565, %v3568
        %v3608 = vmax.f32 %v3566, %v3569
        %v3609 = vmax.f32 %v3567, %v3570
        %v3610 = vmax.f32 %v3571, %v3574
        %v3611 = vmax.f32 %v3572, %v3575
        %v3612 = vmax.f32 %v3573, %v3576
        %v3613 = vmax.f32 %v3577, %v3580
        %v3614 = vmax.f32 %v3578, %v3581
        %v3615 = vmax.f32 %v3579, %v3582
        %v3616 = vmax.f32 %v3583, %v3586
        %v3617 = vmax.f32 %v3584, %v3587
        %v3618 = vmax.f32 %v3585, %v3588
        %v3619 = vmax.f32 %v3589, %v3592
        %v3620 = vmax.f32 %v3590, %v3593
        %v3621 = vmax.f32 %v3591, %v3594
        %v3622 = vmax.f32 %v3595, %v3598
        %v3623 = vmax.f32 %v3596, %v3599
        %v3624 = vmax.f32 %v3597, %v3600
        %v3649 = vrot.slane %v3601, 1
        %v3650 = vrot.slane %v3602, 1
        %v3651 = vsel %vm1885, %v3649, %v3650
        %v3652 = vrot.slane %v3603, 1
        %v3653 = vsel %vm1885, %v3650, %v3652
        %v3654 = vrot.slane %v3604, 1
        %v3655 = vrot.slane %v3605, 1
        %v3656 = vsel %vm1885, %v3654, %v3655
        %v3657 = vrot.slane %v3606, 1
        %v3658 = vsel %vm1885, %v3655, %v3657
        %v3659 = vrot.slane %v3607, 1
        %v3660 = vrot.slane %v3608, 1
        %v3661 = vsel %vm1885, %v3659, %v3660
        %v3662 = vrot.slane %v3609, 1
        %v3663 = vsel %vm1885, %v3660, %v3662
        %v3664 = vrot.slane %v3610, 1
        %v3665 = vrot.slane %v3611, 1
        %v3666 = vsel %vm1885, %v3664, %v3665
        %v3667 = vrot.slane %v3612, 1
        %v3668 = vsel %vm1885, %v3665, %v3667
        %v3669 = vrot.slane %v3613, 1
        %v3670 = vrot.slane %v3614, 1
        %v3671 = vsel %vm1885, %v3669, %v3670
        %v3672 = vrot.slane %v3615, 1
        %v3673 = vsel %vm1885, %v3670, %v3672
        %v3674 = vrot.slane %v3616, 1
        %v3675 = vrot.slane %v3617, 1
        %v3676 = vsel %vm1885, %v3674, %v3675
        %v3677 = vrot.slane %v3618, 1
        %v3678 = vsel %vm1885, %v3675, %v3677
        %v3679 = vrot.slane %v3619, 1
        %v3680 = vrot.slane %v3620, 1
        %v3681 = vsel %vm1885, %v3679, %v3680
        %v3682 = vrot.slane %v3621, 1
        %v3683 = vsel %vm1885, %v3680, %v3682
        %v3684 = vrot.slane %v3622, 1
        %v3685 = vrot.slane %v3623, 1
        %v3686 = vsel %vm1885, %v3684, %v3685
        %v3687 = vrot.slane %v3624, 1
        %v3688 = vsel %vm1885, %v3685, %v3687
        %v3713 = vmax.f32 %v3601, %v3651
        %v3714 = vmax.f32 %v3602, %v3653
        %v3715 = vmax.f32 %v3603, %v3652
        %v3716 = vmax.f32 %v3604, %v3656
        %v3717 = vmax.f32 %v3605, %v3658
        %v3718 = vmax.f32 %v3606, %v3657
        %v3719 = vmax.f32 %v3607, %v3661
        %v3720 = vmax.f32 %v3608, %v3663
        %v3721 = vmax.f32 %v3609, %v3662
        %v3722 = vmax.f32 %v3610, %v3666
        %v3723 = vmax.f32 %v3611, %v3668
        %v3724 = vmax.f32 %v3612, %v3667
        %v3725 = vmax.f32 %v3613, %v3671
        %v3726 = vmax.f32 %v3614, %v3673
        %v3727 = vmax.f32 %v3615, %v3672
        %v3728 = vmax.f32 %v3616, %v3676
        %v3729 = vmax.f32 %v3617, %v3678
        %v3730 = vmax.f32 %v3618, %v3677
        %v3731 = vmax.f32 %v3619, %v3681
        %v3732 = vmax.f32 %v3620, %v3683
        %v3733 = vmax.f32 %v3621, %v3682
        %v3734 = vmax.f32 %v3622, %v3686
        %v3735 = vmax.f32 %v3623, %v3688
        %v3736 = vmax.f32 %v3624, %v3687
        %v3737 = vrot.slane %v3601, 2
        %v3738 = vrot.slane %v3602, 2
        %v3739 = vsel %vm2209, %v3737, %v3738
        %v3740 = vrot.slane %v3603, 2
        %v3741 = vsel %vm2209, %v3738, %v3740
        %v3742 = vrot.slane %v3604, 2
        %v3743 = vrot.slane %v3605, 2
        %v3744 = vsel %vm2209, %v3742, %v3743
        %v3745 = vrot.slane %v3606, 2
        %v3746 = vsel %vm2209, %v3743, %v3745
        %v3747 = vrot.slane %v3607, 2
        %v3748 = vrot.slane %v3608, 2
        %v3749 = vsel %vm2209, %v3747, %v3748
        %v3750 = vrot.slane %v3609, 2
        %v3751 = vsel %vm2209, %v3748, %v3750
        %v3752 = vrot.slane %v3610, 2
        %v3753 = vrot.slane %v3611, 2
        %v3754 = vsel %vm2209, %v3752, %v3753
        %v3755 = vrot.slane %v3612, 2
        %v3756 = vsel %vm2209, %v3753, %v3755
        %v3757 = vrot.slane %v3613, 2
        %v3758 = vrot.slane %v3614, 2
        %v3759 = vsel %vm2209, %v3757, %v3758
        %v3760 = vrot.slane %v3615, 2
        %v3761 = vsel %vm2209, %v3758, %v3760
        %v3762 = vrot.slane %v3616, 2
        %v3763 = vrot.slane %v3617, 2
        %v3764 = vsel %vm2209, %v3762, %v3763
        %v3765 = vrot.slane %v3618, 2
        %v3766 = vsel %vm2209, %v3763, %v3765
        %v3767 = vrot.slane %v3619, 2
        %v3768 = vrot.slane %v3620, 2
        %v3769 = vsel %vm2209, %v3767, %v3768
        %v3770 = vrot.slane %v3621, 2
        %v3771 = vsel %vm2209, %v3768, %v3770
        %v3772 = vrot.slane %v3622, 2
        %v3773 = vrot.slane %v3623, 2
        %v3774 = vsel %vm2209, %v3772, %v3773
        %v3775 = vrot.slane %v3624, 2
        %v3776 = vsel %vm2209, %v3773, %v3775
        %v3801 = vmax.f32 %v3713, %v3739
        %v3802 = vmax.f32 %v3714, %v3741
        %v3803 = vmax.f32 %v3715, %v3740
        %v3804 = vmax.f32 %v3716, %v3744
        %v3805 = vmax.f32 %v3717, %v3746
        %v3806 = vmax.f32 %v3718, %v3745
        %v3807 = vmax.f32 %v3719, %v3749
        %v3808 = vmax.f32 %v3720, %v3751
        %v3809 = vmax.f32 %v3721, %v3750
        %v3810 = vmax.f32 %v3722, %v3754
        %v3811 = vmax.f32 %v3723, %v3756
        %v3812 = vmax.f32 %v3724, %v3755
        %v3813 = vmax.f32 %v3725, %v3759
        %v3814 = vmax.f32 %v3726, %v3761
        %v3815 = vmax.f32 %v3727, %v3760
        %v3816 = vmax.f32 %v3728, %v3764
        %v3817 = vmax.f32 %v3729, %v3766
        %v3818 = vmax.f32 %v3730, %v3765
        %v3819 = vmax.f32 %v3731, %v3769
        %v3820 = vmax.f32 %v3732, %v3771
        %v3821 = vmax.f32 %v3733, %v3770
        %v3822 = vmax.f32 %v3734, %v3774
        %v3823 = vmax.f32 %v3735, %v3776
        %v3824 = vmax.f32 %v3736, %v3775
        %vm3825 = vcmp.lt.s32.totalorder %v2534, 8
        %vm3826 = vmand %vm2542, %vm3825
        %v3827 = vsel %vm3826, 1.0, 0.0
        %v3828 = vpack.c.bf16 %v3827, %v3827
        %v3829 = vpack.c.bf16 %v3801, %v3801
        %v3830 = vpack.c.bf16 %v3802, %v3802
        %v3831 = vpack.c.bf16 %v3803, %v3803
        %v3832 = vpack.c.bf16 %v3804, %v3804
        %v3833 = vpack.c.bf16 %v3805, %v3805
        %v3834 = vpack.c.bf16 %v3806, %v3806
        %v3835 = vpack.c.bf16 %v3807, %v3807
        %v3836 = vpack.c.bf16 %v3808, %v3808
        %v3837 = vpack.c.bf16 %v3809, %v3809
        %v3838 = vpack.c.bf16 %v3810, %v3810
        %v3839 = vpack.c.bf16 %v3811, %v3811
        %v3840 = vpack.c.bf16 %v3812, %v3812
        %v3841 = vpack.c.bf16 %v3813, %v3813
        %v3842 = vpack.c.bf16 %v3814, %v3814
        %v3843 = vpack.c.bf16 %v3815, %v3815
        %v3844 = vpack.c.bf16 %v3816, %v3816
        %v3845 = vpack.c.bf16 %v3817, %v3817
        %v3846 = vpack.c.bf16 %v3818, %v3818
        %v3847 = vpack.c.bf16 %v3819, %v3819
        %v3848 = vpack.c.bf16 %v3820, %v3820
        %v3849 = vpack.c.bf16 %v3821, %v3821
        %v3850 = vpack.c.bf16 %v3822, %v3822
        %v3851 = vpack.c.bf16 %v3823, %v3823
        %v3852 = vpack.c.bf16 %v3824, %v3824
        %v3856 = vunpack.c.l.b16 %v3829
        %v3857 = vunpack.c.l.b16 %v3830
        %v3858 = vunpack.c.l.b16 %v3831
        %v3859 = vpack.c.b16 %v3857, %v3856
        %v3860 = vpack.c.b16 %v3858, %v3858
        %vm3862 = vcmask 179200
        %v3864 = vsel %vm3862, %v3828, 0
        %v3867 = vsel %vm2672, %v3860, 0
        %3869 = vmatpush.bf16.msra.mxu0 0
        %3870 = vmatpush.bf16.msra.mxu0 0
        %3871 = vmatpush.bf16.msra.mxu0 0
        %3872 = vmatpush.bf16.msra.mxu0 0
        %3873 = vmatpush.bf16.msra.mxu0 0
        %3874 = vmatpush.bf16.msra.mxu0 0
        %3875 = vmatpush.bf16.msra.mxu0 %v3867
        %3876 = vmatpush.bf16.msra.mxu0 %v3859
        %3877 = vmatmul.bf16.gmra.mxu0 %v3864
        %v3878 = vpop.f32.mrf.mxu0
        %v3879 = vadd.f32 0.0, %v3878
        %v3880 = vpop.f32.mrf.mxu0
        %3881 = vdwg.mxu0
        %v3885 = vunpack.c.l.b16 %v3832
        %v3886 = vunpack.c.l.b16 %v3833
        %v3887 = vunpack.c.l.b16 %v3834
        %v3888 = vpack.c.b16 %v3886, %v3885
        %v3889 = vpack.c.b16 %v3887, %v3887
        %v3892 = vsel %vm2672, %v3889, 0
        %3894 = vmatpush.bf16.msra.mxu0 0
        %3895 = vmatpush.bf16.msra.mxu0 0
        %3896 = vmatpush.bf16.msra.mxu0 0
        %3897 = vmatpush.bf16.msra.mxu0 0
        %3898 = vmatpush.bf16.msra.mxu0 0
        %3899 = vmatpush.bf16.msra.mxu0 0
        %3900 = vmatpush.bf16.msra.mxu0 %v3892
        %3901 = vmatpush.bf16.msra.mxu0 %v3888
        %3902 = vmatmul.bf16.gmra.mxu0 %v3864
        %v3903 = vpop.f32.mrf.mxu0
        %v3904 = vadd.f32 0.0, %v3903
        %v3905 = vpop.f32.mrf.mxu0
        %3906 = vdwg.mxu0
        %v3910 = vunpack.c.l.b16 %v3835
        %v3911 = vunpack.c.l.b16 %v3836
        %v3912 = vunpack.c.l.b16 %v3837
        %v3913 = vpack.c.b16 %v3911, %v3910
        %v3914 = vpack.c.b16 %v3912, %v3912
        %v3917 = vsel %vm2672, %v3914, 0
        %3919 = vmatpush.bf16.msra.mxu0 0
        %3920 = vmatpush.bf16.msra.mxu0 0
        %3921 = vmatpush.bf16.msra.mxu0 0
        %3922 = vmatpush.bf16.msra.mxu0 0
        %3923 = vmatpush.bf16.msra.mxu0 0
        %3924 = vmatpush.bf16.msra.mxu0 0
        %3925 = vmatpush.bf16.msra.mxu0 %v3917
        %3926 = vmatpush.bf16.msra.mxu0 %v3913
        %3927 = vmatmul.bf16.gmra.mxu0 %v3864
        %v3928 = vpop.f32.mrf.mxu0
        %v3929 = vadd.f32 0.0, %v3928
        %v3930 = vpop.f32.mrf.mxu0
        %3931 = vdwg.mxu0
        %v3935 = vunpack.c.l.b16 %v3838
        %v3936 = vunpack.c.l.b16 %v3839
        %v3937 = vunpack.c.l.b16 %v3840
        %v3938 = vpack.c.b16 %v3936, %v3935
        %v3939 = vpack.c.b16 %v3937, %v3937
        %v3942 = vsel %vm2672, %v3939, 0
        %3944 = vmatpush.bf16.msra.mxu0 0
        %3945 = vmatpush.bf16.msra.mxu0 0
        %3946 = vmatpush.bf16.msra.mxu0 0
        %3947 = vmatpush.bf16.msra.mxu0 0
        %3948 = vmatpush.bf16.msra.mxu0 0
        %3949 = vmatpush.bf16.msra.mxu0 0
        %3950 = vmatpush.bf16.msra.mxu0 %v3942
        %3951 = vmatpush.bf16.msra.mxu0 %v3938
        %3952 = vmatmul.bf16.gmra.mxu0 %v3864
        %v3953 = vpop.f32.mrf.mxu0
        %v3954 = vadd.f32 0.0, %v3953
        %v3955 = vpop.f32.mrf.mxu0
        %3956 = vdwg.mxu0
        %v3960 = vunpack.c.l.b16 %v3841
        %v3961 = vunpack.c.l.b16 %v3842
        %v3962 = vunpack.c.l.b16 %v3843
        %v3963 = vpack.c.b16 %v3961, %v3960
        %v3964 = vpack.c.b16 %v3962, %v3962
        %v3967 = vsel %vm2672, %v3964, 0
        %3969 = vmatpush.bf16.msra.mxu0 0
        %3970 = vmatpush.bf16.msra.mxu0 0
        %3971 = vmatpush.bf16.msra.mxu0 0
        %3972 = vmatpush.bf16.msra.mxu0 0
        %3973 = vmatpush.bf16.msra.mxu0 0
        %3974 = vmatpush.bf16.msra.mxu0 0
        %3975 = vmatpush.bf16.msra.mxu0 %v3967
        %3976 = vmatpush.bf16.msra.mxu0 %v3963
        %3977 = vmatmul.bf16.gmra.mxu0 %v3864
        %v3978 = vpop.f32.mrf.mxu0
        %v3979 = vadd.f32 0.0, %v3978
        %v3980 = vpop.f32.mrf.mxu0
        %3981 = vdwg.mxu0
        %v3985 = vunpack.c.l.b16 %v3844
        %v3986 = vunpack.c.l.b16 %v3845
        %v3987 = vunpack.c.l.b16 %v3846
        %v3988 = vpack.c.b16 %v3986, %v3985
        %v3989 = vpack.c.b16 %v3987, %v3987
        %v3992 = vsel %vm2672, %v3989, 0
        %3994 = vmatpush.bf16.msra.mxu0 0
        %3995 = vmatpush.bf16.msra.mxu0 0
        %3996 = vmatpush.bf16.msra.mxu0 0
        %3997 = vmatpush.bf16.msra.mxu0 0
        %3998 = vmatpush.bf16.msra.mxu0 0
        %3999 = vmatpush.bf16.msra.mxu0 0
        %4000 = vmatpush.bf16.msra.mxu0 %v3992
        %4001 = vmatpush.bf16.msra.mxu0 %v3988
        %4002 = vmatmul.bf16.gmra.mxu0 %v3864
        %v4003 = vpop.f32.mrf.mxu0
        %v4004 = vadd.f32 0.0, %v4003
        %v4005 = vpop.f32.mrf.mxu0
        %4006 = vdwg.mxu0
        %v4010 = vunpack.c.l.b16 %v3847
        %v4011 = vunpack.c.l.b16 %v3848
        %v4012 = vunpack.c.l.b16 %v3849
        %v4013 = vpack.c.b16 %v4011, %v4010
        %v4014 = vpack.c.b16 %v4012, %v4012
        %v4017 = vsel %vm2672, %v4014, 0
        %4019 = vmatpush.bf16.msra.mxu0 0
        %4020 = vmatpush.bf16.msra.mxu0 0
        %4021 = vmatpush.bf16.msra.mxu0 0
        %4022 = vmatpush.bf16.msra.mxu0 0
        %4023 = vmatpush.bf16.msra.mxu0 0
        %4024 = vmatpush.bf16.msra.mxu0 0
        %4025 = vmatpush.bf16.msra.mxu0 %v4017
        %4026 = vmatpush.bf16.msra.mxu0 %v4013
        %4027 = vmatmul.bf16.gmra.mxu0 %v3864
        %v4028 = vpop.f32.mrf.mxu0
        %v4029 = vadd.f32 0.0, %v4028
        %v4030 = vpop.f32.mrf.mxu0
        %4031 = vdwg.mxu0
        %v4035 = vunpack.c.l.b16 %v3850
        %v4036 = vunpack.c.l.b16 %v3851
        %v4037 = vunpack.c.l.b16 %v3852
        %v4038 = vpack.c.b16 %v4036, %v4035
        %v4039 = vpack.c.b16 %v4037, %v4037
        %v4042 = vsel %vm2672, %v4039, 0
        %4044 = vmatpush.bf16.msra.mxu0 0
        %4045 = vmatpush.bf16.msra.mxu0 0
        %4046 = vmatpush.bf16.msra.mxu0 0
        %4047 = vmatpush.bf16.msra.mxu0 0
        %4048 = vmatpush.bf16.msra.mxu0 0
        %4049 = vmatpush.bf16.msra.mxu0 0
        %4050 = vmatpush.bf16.msra.mxu0 %v4042
        %4051 = vmatpush.bf16.msra.mxu0 %v4038
        %4052 = vmatmul.bf16.gmra.mxu0 %v3864
        %v4053 = vpop.f32.mrf.mxu0
        %v4054 = vadd.f32 0.0, %v4053
        %v4055 = vpop.f32.mrf.mxu0
        %4056 = vdwg.mxu0
        %v4057 = vpack.c.bf16 %v3904, %v3879
        %v4058 = vpack.c.bf16 %v3954, %v3929
        %v4059 = vpack.c.bf16 %v4004, %v3979
        %v4060 = vpack.c.bf16 %v4054, %v4029
        %v4061 = vld [vmem:[%s5] sm:$0xff]
        %v4062 = vld [vmem:[%s5 + $0x8] sm:$0xff]
        %v4063 = vld [vmem:[%s5 + $0x10] sm:$0xff]
        %v4064 = vld [vmem:[%s5 + $0x18] sm:$0xff]
        %v4065 = vld [vmem:[%s5 + $0x20] sm:$0xff]
        %v4066 = vld [vmem:[%s5 + $0x28] sm:$0xff]
        %v4067 = vld [vmem:[%s5 + $0x30] sm:$0xff]
        %v4068 = vld [vmem:[%s5 + $0x38] sm:$0xff]
        %v4069 = vld [vmem:[%s5 + $0x40] sm:$0xff]
        %v4070 = vld [vmem:[%s5 + $0x48] sm:$0xff]
        %v4071 = vld [vmem:[%s5 + $0x50] sm:$0xff]
        %v4072 = vld [vmem:[%s5 + $0x58] sm:$0xff]
        %v4073 = vld [vmem:[%s5 + $0x60] sm:$0xff]
        %v4074 = vld [vmem:[%s5 + $0x68] sm:$0xff]
        %v4075 = vld [vmem:[%s5 + $0x70] sm:$0xff]
        %v4076 = vld [vmem:[%s5 + $0x78] sm:$0xff]
        %v4077 = vld [vmem:[%s6] sm:$0x3]
        %v4079 = vperm.slane %v4077, 0
        %v4080 = vperm.slane %v4077, 1
        %v4099 = vunpack.c.l.b16 %v4061
        %v4100 = vunpack.c.h.b16 %v4061
        %v4101 = vunpack.c.l.b16 %v4062
        %v4102 = vunpack.c.h.b16 %v4062
        %v4103 = vunpack.c.l.b16 %v4063
        %v4104 = vunpack.c.h.b16 %v4063
        %v4105 = vunpack.c.l.b16 %v4064
        %v4106 = vunpack.c.h.b16 %v4064
        %v4107 = vunpack.c.l.b16 %v4065
        %v4108 = vunpack.c.h.b16 %v4065
        %v4109 = vunpack.c.l.b16 %v4066
        %v4110 = vunpack.c.h.b16 %v4066
        %v4111 = vunpack.c.l.b16 %v4067
        %v4112 = vunpack.c.h.b16 %v4067
        %v4113 = vunpack.c.l.b16 %v4068
        %v4114 = vunpack.c.h.b16 %v4068
        %v4115 = vunpack.c.l.b16 %v4069
        %v4116 = vunpack.c.h.b16 %v4069
        %v4117 = vunpack.c.l.b16 %v4070
        %v4118 = vunpack.c.h.b16 %v4070
        %v4119 = vunpack.c.l.b16 %v4071
        %v4120 = vunpack.c.h.b16 %v4071
        %v4121 = vunpack.c.l.b16 %v4072
        %v4122 = vunpack.c.h.b16 %v4072
        %v4123 = vunpack.c.l.b16 %v4073
        %v4124 = vunpack.c.h.b16 %v4073
        %v4125 = vunpack.c.l.b16 %v4074
        %v4126 = vunpack.c.h.b16 %v4074
        %v4127 = vunpack.c.l.b16 %v4075
        %v4128 = vunpack.c.h.b16 %v4075
        %v4129 = vunpack.c.l.b16 %v4076
        %v4130 = vunpack.c.h.b16 %v4076
        %v4131 = vpack.c.b16 %v4101, %v4099
        %v4132 = vpack.c.b16 %v4102, %v4100
        %v4133 = vpack.c.b16 %v4105, %v4103
        %v4134 = vpack.c.b16 %v4106, %v4104
        %v4135 = vpack.c.b16 %v4109, %v4107
        %v4136 = vpack.c.b16 %v4110, %v4108
        %v4137 = vpack.c.b16 %v4113, %v4111
        %v4138 = vpack.c.b16 %v4114, %v4112
        %v4139 = vpack.c.b16 %v4117, %v4115
        %v4140 = vpack.c.b16 %v4118, %v4116
        %v4141 = vpack.c.b16 %v4121, %v4119
        %v4142 = vpack.c.b16 %v4122, %v4120
        %v4143 = vpack.c.b16 %v4125, %v4123
        %v4144 = vpack.c.b16 %v4126, %v4124
        %v4145 = vpack.c.b16 %v4129, %v4127
        %v4146 = vpack.c.b16 %v4130, %v4128
        %4163 = vmatpush.bf16.msra.mxu0 %v4145
        %4164 = vmatpush.bf16.msra.mxu0 %v4143
        %4165 = vmatpush.bf16.msra.mxu0 %v4141
        %4166 = vmatpush.bf16.msra.mxu0 %v4139
        %4167 = vmatpush.bf16.msra.mxu0 %v4137
        %4168 = vmatpush.bf16.msra.mxu0 %v4135
        %4169 = vmatpush.bf16.msra.mxu0 %v4133
        %4170 = vmatpush.bf16.msra.mxu0 %v4131
        %4171 = vmatmul.bf16.gmra.mxu0 %v4057
        %v4172 = vpop.f32.mrf.mxu0
        %v4173 = vadd.f32 %v4079, %v4172
        %v4174 = vpop.f32.mrf.mxu0
        %v4175 = vadd.f32 %v4079, %v4174
        %4176 = vmatmul.bf16.gmra.mxu0 %v4058
        %v4177 = vpop.f32.mrf.mxu0
        %v4178 = vadd.f32 %v4079, %v4177
        %v4179 = vpop.f32.mrf.mxu0
        %v4180 = vadd.f32 %v4079, %v4179
        %4181 = vmatmul.bf16.gmra.mxu0 %v4059
        %v4182 = vpop.f32.mrf.mxu0
        %v4183 = vadd.f32 %v4079, %v4182
        %v4184 = vpop.f32.mrf.mxu0
        %v4185 = vadd.f32 %v4079, %v4184
        %4186 = vmatmul.bf16.gmra.mxu0 %v4060
        %v4187 = vpop.f32.mrf.mxu0
        %v4188 = vadd.f32 %v4079, %v4187
        %v4189 = vpop.f32.mrf.mxu0
        %v4190 = vadd.f32 %v4079, %v4189
        %4191 = vdwg.mxu0
        %4192 = vmatpush.bf16.msra.mxu0 %v4146
        %4193 = vmatpush.bf16.msra.mxu0 %v4144
        %4194 = vmatpush.bf16.msra.mxu0 %v4142
        %4195 = vmatpush.bf16.msra.mxu0 %v4140
        %4196 = vmatpush.bf16.msra.mxu0 %v4138
        %4197 = vmatpush.bf16.msra.mxu0 %v4136
        %4198 = vmatpush.bf16.msra.mxu0 %v4134
        %4199 = vmatpush.bf16.msra.mxu0 %v4132
        %4200 = vmatmul.bf16.gmra.mxu0 %v4057
        %v4201 = vpop.f32.mrf.mxu0
        %v4202 = vadd.f32 %v4080, %v4201
        %v4203 = vpop.f32.mrf.mxu0
        %v4204 = vadd.f32 %v4080, %v4203
        %4205 = vmatmul.bf16.gmra.mxu0 %v4058
        %v4206 = vpop.f32.mrf.mxu0
        %v4207 = vadd.f32 %v4080, %v4206
        %v4208 = vpop.f32.mrf.mxu0
        %v4209 = vadd.f32 %v4080, %v4208
        %4210 = vmatmul.bf16.gmra.mxu0 %v4059
        %v4211 = vpop.f32.mrf.mxu0
        %v4212 = vadd.f32 %v4080, %v4211
        %v4213 = vpop.f32.mrf.mxu0
        %v4214 = vadd.f32 %v4080, %v4213
        %4215 = vmatmul.bf16.gmra.mxu0 %v4060
        %v4216 = vpop.f32.mrf.mxu0
        %v4217 = vadd.f32 %v4080, %v4216
        %v4218 = vpop.f32.mrf.mxu0
        %v4219 = vadd.f32 %v4080, %v4218
        %4220 = vdwg.mxu0
        %v4221 = vmax.f32 %v4173, 0.0
        %v4222 = vmax.f32 %v4202, 0.0
        %v4223 = vmax.f32 %v4175, 0.0
        %v4224 = vmax.f32 %v4204, 0.0
        %v4225 = vmax.f32 %v4178, 0.0
        %v4226 = vmax.f32 %v4207, 0.0
        %v4227 = vmax.f32 %v4180, 0.0
        %v4228 = vmax.f32 %v4209, 0.0
        %v4229 = vmax.f32 %v4183, 0.0
        %v4230 = vmax.f32 %v4212, 0.0
        %v4231 = vmax.f32 %v4185, 0.0
        %v4232 = vmax.f32 %v4214, 0.0
        %v4233 = vmax.f32 %v4188, 0.0
        %v4234 = vmax.f32 %v4217, 0.0
        %v4235 = vmax.f32 %v4190, 0.0
        %v4236 = vmax.f32 %v4219, 0.0
        %v4237 = vpack.c.bf16 %v4223, %v4221
        %v4238 = vpack.c.bf16 %v4224, %v4222
        %v4239 = vpack.c.bf16 %v4227, %v4225
        %v4240 = vpack.c.bf16 %v4228, %v4226
        %v4241 = vpack.c.bf16 %v4231, %v4229
        %v4242 = vpack.c.bf16 %v4232, %v4230
        %v4243 = vpack.c.bf16 %v4235, %v4233
        %v4244 = vpack.c.bf16 %v4236, %v4234
        %v4245 = vld [vmem:[%s7] sm:$0xff]
        %v4246 = vld [vmem:[%s7 + $0x8] sm:$0xff]
        %v4247 = vld [vmem:[%s7 + $0x10] sm:$0xff]
        %v4248 = vld [vmem:[%s7 + $0x18] sm:$0xff]
        %v4249 = vld [vmem:[%s7 + $0x20] sm:$0xff]
        %v4250 = vld [vmem:[%s7 + $0x28] sm:$0xff]
        %v4251 = vld [vmem:[%s7 + $0x30] sm:$0xff]
        %v4252 = vld [vmem:[%s7 + $0x38] sm:$0xff]
        %v4253 = vld [vmem:[%s7 + $0x40] sm:$0xff]
        %v4254 = vld [vmem:[%s7 + $0x48] sm:$0xff]
        %v4255 = vld [vmem:[%s7 + $0x50] sm:$0xff]
        %v4256 = vld [vmem:[%s7 + $0x58] sm:$0xff]
        %v4257 = vld [vmem:[%s7 + $0x60] sm:$0xff]
        %v4258 = vld [vmem:[%s7 + $0x68] sm:$0xff]
        %v4259 = vld [vmem:[%s7 + $0x70] sm:$0xff]
        %v4260 = vld [vmem:[%s7 + $0x78] sm:$0xff]
        %v4261 = vld [vmem:[%s7 + $0x80] sm:$0xff]
        %v4262 = vld [vmem:[%s7 + $0x88] sm:$0xff]
        %v4263 = vld [vmem:[%s7 + $0x90] sm:$0xff]
        %v4264 = vld [vmem:[%s7 + $0x98] sm:$0xff]
        %v4265 = vld [vmem:[%s7 + $0xa0] sm:$0xff]
        %v4266 = vld [vmem:[%s7 + $0xa8] sm:$0xff]
        %v4267 = vld [vmem:[%s7 + $0xb0] sm:$0xff]
        %v4268 = vld [vmem:[%s7 + $0xb8] sm:$0xff]
        %v4269 = vld [vmem:[%s7 + $0xc0] sm:$0xff]
        %v4270 = vld [vmem:[%s7 + $0xc8] sm:$0xff]
        %v4271 = vld [vmem:[%s7 + $0xd0] sm:$0xff]
        %v4272 = vld [vmem:[%s7 + $0xd8] sm:$0xff]
        %v4273 = vld [vmem:[%s7 + $0xe0] sm:$0xff]
        %v4274 = vld [vmem:[%s7 + $0xe8] sm:$0xff]
        %v4275 = vld [vmem:[%s7 + $0xf0] sm:$0xff]
        %v4276 = vld [vmem:[%s7 + $0xf8] sm:$0xff]
        %v4277 = vld [vmem:[%s7 + $0x100] sm:$0xff]
        %v4278 = vld [vmem:[%s7 + $0x108] sm:$0xff]
        %v4279 = vld [vmem:[%s7 + $0x110] sm:$0xff]
        %v4280 = vld [vmem:[%s7 + $0x118] sm:$0xff]
        %v4281 = vld [vmem:[%s7 + $0x120] sm:$0xff]
        %v4282 = vld [vmem:[%s7 + $0x128] sm:$0xff]
        %v4283 = vld [vmem:[%s7 + $0x130] sm:$0xff]
        %v4284 = vld [vmem:[%s7 + $0x138] sm:$0xff]
        %v4285 = vld [vmem:[%s7 + $0x140] sm:$0xff]
        %v4286 = vld [vmem:[%s7 + $0x148] sm:$0xff]
        %v4287 = vld [vmem:[%s7 + $0x150] sm:$0xff]
        %v4288 = vld [vmem:[%s7 + $0x158] sm:$0xff]
        %v4289 = vld [vmem:[%s7 + $0x160] sm:$0xff]
        %v4290 = vld [vmem:[%s7 + $0x168] sm:$0xff]
        %v4291 = vld [vmem:[%s7 + $0x170] sm:$0xff]
        %v4292 = vld [vmem:[%s7 + $0x178] sm:$0xff]
        %v4293 = vld [vmem:[%s7 + $0x180] sm:$0xff]
        %v4294 = vld [vmem:[%s7 + $0x188] sm:$0xff]
        %v4295 = vld [vmem:[%s7 + $0x190] sm:$0xff]
        %v4296 = vld [vmem:[%s7 + $0x198] sm:$0xff]
        %v4297 = vld [vmem:[%s7 + $0x1a0] sm:$0xff]
        %v4298 = vld [vmem:[%s7 + $0x1a8] sm:$0xff]
        %v4299 = vld [vmem:[%s7 + $0x1b0] sm:$0xff]
        %v4300 = vld [vmem:[%s7 + $0x1b8] sm:$0xff]
        %v4301 = vld [vmem:[%s7 + $0x1c0] sm:$0xff]
        %v4302 = vld [vmem:[%s7 + $0x1c8] sm:$0xff]
        %v4303 = vld [vmem:[%s7 + $0x1d0] sm:$0xff]
        %v4304 = vld [vmem:[%s7 + $0x1d8] sm:$0xff]
        %v4305 = vld [vmem:[%s7 + $0x1e0] sm:$0xff]
        %v4306 = vld [vmem:[%s7 + $0x1e8] sm:$0xff]
        %v4307 = vld [vmem:[%s7 + $0x1f0] sm:$0xff]
        %v4308 = vld [vmem:[%s7 + $0x1f8] sm:$0xff]
        %v4309 = vld [vmem:[%s7 + $0x200] sm:$0xff]
        %v4310 = vld [vmem:[%s7 + $0x208] sm:$0xff]
        %v4311 = vld [vmem:[%s7 + $0x210] sm:$0xff]
        %v4312 = vld [vmem:[%s7 + $0x218] sm:$0xff]
        %v4313 = vld [vmem:[%s7 + $0x220] sm:$0xff]
        %v4314 = vld [vmem:[%s7 + $0x228] sm:$0xff]
        %v4315 = vld [vmem:[%s7 + $0x230] sm:$0xff]
        %v4316 = vld [vmem:[%s7 + $0x238] sm:$0xff]
        %v4317 = vld [vmem:[%s7 + $0x240] sm:$0xff]
        %v4318 = vld [vmem:[%s7 + $0x248] sm:$0xff]
        %v4319 = vld [vmem:[%s7 + $0x250] sm:$0xff]
        %v4320 = vld [vmem:[%s7 + $0x258] sm:$0xff]
        %v4321 = vld [vmem:[%s7 + $0x260] sm:$0xff]
        %v4322 = vld [vmem:[%s7 + $0x268] sm:$0xff]
        %v4323 = vld [vmem:[%s7 + $0x270] sm:$0xff]
        %v4324 = vld [vmem:[%s7 + $0x278] sm:$0xff]
        %v4325 = vld [vmem:[%s7 + $0x280] sm:$0xff]
        %v4326 = vld [vmem:[%s7 + $0x288] sm:$0xff]
        %v4327 = vld [vmem:[%s7 + $0x290] sm:$0xff]
        %v4328 = vld [vmem:[%s7 + $0x298] sm:$0xff]
        %v4329 = vld [vmem:[%s7 + $0x2a0] sm:$0xff]
        %v4330 = vld [vmem:[%s7 + $0x2a8] sm:$0xff]
        %v4331 = vld [vmem:[%s7 + $0x2b0] sm:$0xff]
        %v4332 = vld [vmem:[%s7 + $0x2b8] sm:$0xff]
        %v4333 = vld [vmem:[%s7 + $0x2c0] sm:$0xff]
        %v4334 = vld [vmem:[%s7 + $0x2c8] sm:$0xff]
        %v4335 = vld [vmem:[%s7 + $0x2d0] sm:$0xff]
        %v4336 = vld [vmem:[%s7 + $0x2d8] sm:$0xff]
        %v4337 = vld [vmem:[%s7 + $0x2e0] sm:$0xff]
        %v4338 = vld [vmem:[%s7 + $0x2e8] sm:$0xff]
        %v4339 = vld [vmem:[%s7 + $0x2f0] sm:$0xff]
        %v4340 = vld [vmem:[%s7 + $0x2f8] sm:$0xff]
        %v4341 = vld [vmem:[%s7 + $0x300] sm:$0xff]
        %v4342 = vld [vmem:[%s7 + $0x308] sm:$0xff]
        %v4343 = vld [vmem:[%s7 + $0x310] sm:$0xff]
        %v4344 = vld [vmem:[%s7 + $0x318] sm:$0xff]
        %v4345 = vld [vmem:[%s7 + $0x320] sm:$0xff]
        %v4346 = vld [vmem:[%s7 + $0x328] sm:$0xff]
        %v4347 = vld [vmem:[%s7 + $0x330] sm:$0xff]
        %v4348 = vld [vmem:[%s7 + $0x338] sm:$0xff]
        %v4349 = vld [vmem:[%s7 + $0x340] sm:$0xff]
        %v4350 = vld [vmem:[%s7 + $0x348] sm:$0xff]
        %v4351 = vld [vmem:[%s7 + $0x350] sm:$0xff]
        %v4352 = vld [vmem:[%s7 + $0x358] sm:$0xff]
        %v4353 = vld [vmem:[%s7 + $0x360] sm:$0xff]
        %v4354 = vld [vmem:[%s7 + $0x368] sm:$0xff]
        %v4355 = vld [vmem:[%s7 + $0x370] sm:$0xff]
        %v4356 = vld [vmem:[%s7 + $0x378] sm:$0xff]
        %v4357 = vld [vmem:[%s7 + $0x380] sm:$0xff]
        %v4358 = vld [vmem:[%s7 + $0x388] sm:$0xff]
        %v4359 = vld [vmem:[%s7 + $0x390] sm:$0xff]
        %v4360 = vld [vmem:[%s7 + $0x398] sm:$0xff]
        %v4361 = vld [vmem:[%s7 + $0x3a0] sm:$0xff]
        %v4362 = vld [vmem:[%s7 + $0x3a8] sm:$0xff]
        %v4363 = vld [vmem:[%s7 + $0x3b0] sm:$0xff]
        %v4364 = vld [vmem:[%s7 + $0x3b8] sm:$0xff]
        %v4365 = vld [vmem:[%s7 + $0x3c0] sm:$0xff]
        %v4366 = vld [vmem:[%s7 + $0x3c8] sm:$0xff]
        %v4367 = vld [vmem:[%s7 + $0x3d0] sm:$0xff]
        %v4368 = vld [vmem:[%s7 + $0x3d8] sm:$0xff]
        %v4369 = vld [vmem:[%s7 + $0x3e0] sm:$0xff]
        %v4370 = vld [vmem:[%s7 + $0x3e8] sm:$0xff]
        %v4371 = vld [vmem:[%s7 + $0x3f0] sm:$0xff]
        %v4372 = vld [vmem:[%s7 + $0x3f8] sm:$0xff]
        %v4373 = vld [vmem:[%s7 + $0x400] sm:$0xff]
        %v4374 = vld [vmem:[%s7 + $0x408] sm:$0xff]
        %v4375 = vld [vmem:[%s7 + $0x410] sm:$0xff]
        %v4376 = vld [vmem:[%s7 + $0x418] sm:$0xff]
        %v4377 = vld [vmem:[%s7 + $0x420] sm:$0xff]
        %v4378 = vld [vmem:[%s7 + $0x428] sm:$0xff]
        %v4379 = vld [vmem:[%s7 + $0x430] sm:$0xff]
        %v4380 = vld [vmem:[%s7 + $0x438] sm:$0xff]
        %v4381 = vld [vmem:[%s7 + $0x440] sm:$0xff]
        %v4382 = vld [vmem:[%s7 + $0x448] sm:$0xff]
        %v4383 = vld [vmem:[%s7 + $0x450] sm:$0xff]
        %v4384 = vld [vmem:[%s7 + $0x458] sm:$0xff]
        %v4385 = vld [vmem:[%s7 + $0x460] sm:$0xff]
        %v4386 = vld [vmem:[%s7 + $0x468] sm:$0xff]
        %v4387 = vld [vmem:[%s7 + $0x470] sm:$0xff]
        %v4388 = vld [vmem:[%s7 + $0x478] sm:$0xff]
        %v4389 = vld [vmem:[%s7 + $0x480] sm:$0xff]
        %v4390 = vld [vmem:[%s7 + $0x488] sm:$0xff]
        %v4391 = vld [vmem:[%s7 + $0x490] sm:$0xff]
        %v4392 = vld [vmem:[%s7 + $0x498] sm:$0xff]
        %v4393 = vld [vmem:[%s7 + $0x4a0] sm:$0xff]
        %v4394 = vld [vmem:[%s7 + $0x4a8] sm:$0xff]
        %v4395 = vld [vmem:[%s7 + $0x4b0] sm:$0xff]
        %v4396 = vld [vmem:[%s7 + $0x4b8] sm:$0xff]
        %v4397 = vld [vmem:[%s7 + $0x4c0] sm:$0xff]
        %v4398 = vld [vmem:[%s7 + $0x4c8] sm:$0xff]
        %v4399 = vld [vmem:[%s7 + $0x4d0] sm:$0xff]
        %v4400 = vld [vmem:[%s7 + $0x4d8] sm:$0xff]
        %v4401 = vld [vmem:[%s7 + $0x4e0] sm:$0xff]
        %v4402 = vld [vmem:[%s7 + $0x4e8] sm:$0xff]
        %v4403 = vld [vmem:[%s7 + $0x4f0] sm:$0xff]
        %v4404 = vld [vmem:[%s7 + $0x4f8] sm:$0xff]
        %v4405 = vld [vmem:[%s7 + $0x500] sm:$0xff]
        %v4406 = vld [vmem:[%s7 + $0x508] sm:$0xff]
        %v4407 = vld [vmem:[%s7 + $0x510] sm:$0xff]
        %v4408 = vld [vmem:[%s7 + $0x518] sm:$0xff]
        %v4409 = vld [vmem:[%s7 + $0x520] sm:$0xff]
        %v4410 = vld [vmem:[%s7 + $0x528] sm:$0xff]
        %v4411 = vld [vmem:[%s7 + $0x530] sm:$0xff]
        %v4412 = vld [vmem:[%s7 + $0x538] sm:$0xff]
        %v4413 = vld [vmem:[%s7 + $0x540] sm:$0xff]
        %v4414 = vld [vmem:[%s7 + $0x548] sm:$0xff]
        %v4415 = vld [vmem:[%s7 + $0x550] sm:$0xff]
        %v4416 = vld [vmem:[%s7 + $0x558] sm:$0xff]
        %v4417 = vld [vmem:[%s7 + $0x560] sm:$0xff]
        %v4418 = vld [vmem:[%s7 + $0x568] sm:$0xff]
        %v4419 = vld [vmem:[%s7 + $0x570] sm:$0xff]
        %v4420 = vld [vmem:[%s7 + $0x578] sm:$0xff]
        %v4421 = vld [vmem:[%s7 + $0x580] sm:$0xff]
        %v4422 = vld [vmem:[%s7 + $0x588] sm:$0xff]
        %v4423 = vld [vmem:[%s7 + $0x590] sm:$0xff]
        %v4424 = vld [vmem:[%s7 + $0x598] sm:$0xff]
        %v4425 = vld [vmem:[%s7 + $0x5a0] sm:$0xff]
        %v4426 = vld [vmem:[%s7 + $0x5a8] sm:$0xff]
        %v4427 = vld [vmem:[%s7 + $0x5b0] sm:$0xff]
        %v4428 = vld [vmem:[%s7 + $0x5b8] sm:$0xff]
        %v4429 = vld [vmem:[%s7 + $0x5c0] sm:$0xff]
        %v4430 = vld [vmem:[%s7 + $0x5c8] sm:$0xff]
        %v4431 = vld [vmem:[%s7 + $0x5d0] sm:$0xff]
        %v4432 = vld [vmem:[%s7 + $0x5d8] sm:$0xff]
        %v4433 = vld [vmem:[%s7 + $0x5e0] sm:$0xff]
        %v4434 = vld [vmem:[%s7 + $0x5e8] sm:$0xff]
        %v4435 = vld [vmem:[%s7 + $0x5f0] sm:$0xff]
        %v4436 = vld [vmem:[%s7 + $0x5f8] sm:$0xff]
        %v4437 = vld [vmem:[%s7 + $0x600] sm:$0xff]
        %v4438 = vld [vmem:[%s7 + $0x608] sm:$0xff]
        %v4439 = vld [vmem:[%s7 + $0x610] sm:$0xff]
        %v4440 = vld [vmem:[%s7 + $0x618] sm:$0xff]
        %v4441 = vld [vmem:[%s7 + $0x620] sm:$0xff]
        %v4442 = vld [vmem:[%s7 + $0x628] sm:$0xff]
        %v4443 = vld [vmem:[%s7 + $0x630] sm:$0xff]
        %v4444 = vld [vmem:[%s7 + $0x638] sm:$0xff]
        %v4445 = vld [vmem:[%s7 + $0x640] sm:$0xff]
        %v4446 = vld [vmem:[%s7 + $0x648] sm:$0xff]
        %v4447 = vld [vmem:[%s7 + $0x650] sm:$0xff]
        %v4448 = vld [vmem:[%s7 + $0x658] sm:$0xff]
        %v4449 = vld [vmem:[%s7 + $0x660] sm:$0xff]
        %v4450 = vld [vmem:[%s7 + $0x668] sm:$0xff]
        %v4451 = vld [vmem:[%s7 + $0x670] sm:$0xff]
        %v4452 = vld [vmem:[%s7 + $0x678] sm:$0xff]
        %v4453 = vld [vmem:[%s7 + $0x680] sm:$0xff]
        %v4454 = vld [vmem:[%s7 + $0x688] sm:$0xff]
        %v4455 = vld [vmem:[%s7 + $0x690] sm:$0xff]
        %v4456 = vld [vmem:[%s7 + $0x698] sm:$0xff]
        %v4457 = vld [vmem:[%s7 + $0x6a0] sm:$0xff]
        %v4458 = vld [vmem:[%s7 + $0x6a8] sm:$0xff]
        %v4459 = vld [vmem:[%s7 + $0x6b0] sm:$0xff]
        %v4460 = vld [vmem:[%s7 + $0x6b8] sm:$0xff]
        %v4461 = vld [vmem:[%s7 + $0x6c0] sm:$0xff]
        %v4462 = vld [vmem:[%s7 + $0x6c8] sm:$0xff]
        %v4463 = vld [vmem:[%s7 + $0x6d0] sm:$0xff]
        %v4464 = vld [vmem:[%s7 + $0x6d8] sm:$0xff]
        %v4465 = vld [vmem:[%s7 + $0x6e0] sm:$0xff]
        %v4466 = vld [vmem:[%s7 + $0x6e8] sm:$0xff]
        %v4467 = vld [vmem:[%s7 + $0x6f0] sm:$0xff]
        %v4468 = vld [vmem:[%s7 + $0x6f8] sm:$0xff]
        %v4469 = vld [vmem:[%s7 + $0x700] sm:$0xff]
        %v4470 = vld [vmem:[%s7 + $0x708] sm:$0xff]
        %v4471 = vld [vmem:[%s7 + $0x710] sm:$0xff]
        %v4472 = vld [vmem:[%s7 + $0x718] sm:$0xff]
        %v4473 = vld [vmem:[%s7 + $0x720] sm:$0xff]
        %v4474 = vld [vmem:[%s7 + $0x728] sm:$0xff]
        %v4475 = vld [vmem:[%s7 + $0x730] sm:$0xff]
        %v4476 = vld [vmem:[%s7 + $0x738] sm:$0xff]
        %v4477 = vld [vmem:[%s7 + $0x740] sm:$0xff]
        %v4478 = vld [vmem:[%s7 + $0x748] sm:$0xff]
        %v4479 = vld [vmem:[%s7 + $0x750] sm:$0xff]
        %v4480 = vld [vmem:[%s7 + $0x758] sm:$0xff]
        %v4481 = vld [vmem:[%s7 + $0x760] sm:$0xff]
        %v4482 = vld [vmem:[%s7 + $0x768] sm:$0xff]
        %v4483 = vld [vmem:[%s7 + $0x770] sm:$0xff]
        %v4484 = vld [vmem:[%s7 + $0x778] sm:$0xff]
        %v4485 = vld [vmem:[%s7 + $0x780] sm:$0xff]
        %v4486 = vld [vmem:[%s7 + $0x788] sm:$0xff]
        %v4487 = vld [vmem:[%s7 + $0x790] sm:$0xff]
        %v4488 = vld [vmem:[%s7 + $0x798] sm:$0xff]
        %v4489 = vld [vmem:[%s7 + $0x7a0] sm:$0xff]
        %v4490 = vld [vmem:[%s7 + $0x7a8] sm:$0xff]
        %v4491 = vld [vmem:[%s7 + $0x7b0] sm:$0xff]
        %v4492 = vld [vmem:[%s7 + $0x7b8] sm:$0xff]
        %v4493 = vld [vmem:[%s7 + $0x7c0] sm:$0xff]
        %v4494 = vld [vmem:[%s7 + $0x7c8] sm:$0xff]
        %v4495 = vld [vmem:[%s7 + $0x7d0] sm:$0xff]
        %v4496 = vld [vmem:[%s7 + $0x7d8] sm:$0xff]
        %v4497 = vld [vmem:[%s7 + $0x7e0] sm:$0xff]
        %v4498 = vld [vmem:[%s7 + $0x7e8] sm:$0xff]
        %v4499 = vld [vmem:[%s7 + $0x7f0] sm:$0xff]
        %v4500 = vld [vmem:[%s7 + $0x7f8] sm:$0xff]
        %v4501 = vld [vmem:[%s8] sm:$0xff]
        %v4502 = vld [vmem:[%s8 + $0x8] sm:$0xff]
        %v4505 = vperm.slane %v4501, 0
        %v4506 = vperm.slane %v4501, 1
        %v4507 = vperm.slane %v4501, 2
        %v4508 = vperm.slane %v4501, 3
        %v4509 = vperm.slane %v4501, 4
        %v4510 = vperm.slane %v4501, 5
        %v4511 = vperm.slane %v4501, 6
        %v4512 = vperm.slane %v4501, 7
        %v4513 = vperm.slane %v4502, 0
        %v4514 = vperm.slane %v4502, 1
        %v4515 = vperm.slane %v4502, 2
        %v4516 = vperm.slane %v4502, 3
        %v4517 = vperm.slane %v4502, 4
        %v4518 = vperm.slane %v4502, 5
        %v4519 = vperm.slane %v4502, 6
        %v4520 = vperm.slane %v4502, 7
        %v4793 = vunpack.c.l.b16 %v4245
        %v4794 = vunpack.c.h.b16 %v4245
        %v4795 = vunpack.c.l.b16 %v4246
        %v4796 = vunpack.c.h.b16 %v4246
        %v4797 = vunpack.c.l.b16 %v4247
        %v4798 = vunpack.c.h.b16 %v4247
        %v4799 = vunpack.c.l.b16 %v4248
        %v4800 = vunpack.c.h.b16 %v4248
        %v4801 = vunpack.c.l.b16 %v4249
        %v4802 = vunpack.c.h.b16 %v4249
        %v4803 = vunpack.c.l.b16 %v4250
        %v4804 = vunpack.c.h.b16 %v4250
        %v4805 = vunpack.c.l.b16 %v4251
        %v4806 = vunpack.c.h.b16 %v4251
        %v4807 = vunpack.c.l.b16 %v4252
        %v4808 = vunpack.c.h.b16 %v4252
        %v4809 = vunpack.c.l.b16 %v4253
        %v4810 = vunpack.c.h.b16 %v4253
        %v4811 = vunpack.c.l.b16 %v4254
        %v4812 = vunpack.c.h.b16 %v4254
        %v4813 = vunpack.c.l.b16 %v4255
        %v4814 = vunpack.c.h.b16 %v4255
        %v4815 = vunpack.c.l.b16 %v4256
        %v4816 = vunpack.c.h.b16 %v4256
        %v4817 = vunpack.c.l.b16 %v4257
        %v4818 = vunpack.c.h.b16 %v4257
        %v4819 = vunpack.c.l.b16 %v4258
        %v4820 = vunpack.c.h.b16 %v4258
        %v4821 = vunpack.c.l.b16 %v4259
        %v4822 = vunpack.c.h.b16 %v4259
        %v4823 = vunpack.c.l.b16 %v4260
        %v4824 = vunpack.c.h.b16 %v4260
        %v4825 = vunpack.c.l.b16 %v4261
        %v4826 = vunpack.c.h.b16 %v4261
        %v4827 = vunpack.c.l.b16 %v4262
        %v4828 = vunpack.c.h.b16 %v4262
        %v4829 = vunpack.c.l.b16 %v4263
        %v4830 = vunpack.c.h.b16 %v4263
        %v4831 = vunpack.c.l.b16 %v4264
        %v4832 = vunpack.c.h.b16 %v4264
        %v4833 = vunpack.c.l.b16 %v4265
        %v4834 = vunpack.c.h.b16 %v4265
        %v4835 = vunpack.c.l.b16 %v4266
        %v4836 = vunpack.c.h.b16 %v4266
        %v4837 = vunpack.c.l.b16 %v4267
        %v4838 = vunpack.c.h.b16 %v4267
        %v4839 = vunpack.c.l.b16 %v4268
        %v4840 = vunpack.c.h.b16 %v4268
        %v4841 = vunpack.c.l.b16 %v4269
        %v4842 = vunpack.c.h.b16 %v4269
        %v4843 = vunpack.c.l.b16 %v4270
        %v4844 = vunpack.c.h.b16 %v4270
        %v4845 = vunpack.c.l.b16 %v4271
        %v4846 = vunpack.c.h.b16 %v4271
        %v4847 = vunpack.c.l.b16 %v4272
        %v4848 = vunpack.c.h.b16 %v4272
        %v4849 = vunpack.c.l.b16 %v4273
        %v4850 = vunpack.c.h.b16 %v4273
        %v4851 = vunpack.c.l.b16 %v4274
        %v4852 = vunpack.c.h.b16 %v4274
        %v4853 = vunpack.c.l.b16 %v4275
        %v4854 = vunpack.c.h.b16 %v4275
        %v4855 = vunpack.c.l.b16 %v4276
        %v4856 = vunpack.c.h.b16 %v4276
        %v4857 = vunpack.c.l.b16 %v4277
        %v4858 = vunpack.c.h.b16 %v4277
        %v4859 = vunpack.c.l.b16 %v4278
        %v4860 = vunpack.c.h.b16 %v4278
        %v4861 = vunpack.c.l.b16 %v4279
        %v4862 = vunpack.c.h.b16 %v4279
        %v4863 = vunpack.c.l.b16 %v4280
        %v4864 = vunpack.c.h.b16 %v4280
        %v4865 = vunpack.c.l.b16 %v4281
        %v4866 = vunpack.c.h.b16 %v4281
        %v4867 = vunpack.c.l.b16 %v4282
        %v4868 = vunpack.c.h.b16 %v4282
        %v4869 = vunpack.c.l.b16 %v4283
        %v4870 = vunpack.c.h.b16 %v4283
        %v4871 = vunpack.c.l.b16 %v4284
        %v4872 = vunpack.c.h.b16 %v4284
        %v4873 = vunpack.c.l.b16 %v4285
        %v4874 = vunpack.c.h.b16 %v4285
        %v4875 = vunpack.c.l.b16 %v4286
        %v4876 = vunpack.c.h.b16 %v4286
        %v4877 = vunpack.c.l.b16 %v4287
        %v4878 = vunpack.c.h.b16 %v4287
        %v4879 = vunpack.c.l.b16 %v4288
        %v4880 = vunpack.c.h.b16 %v4288
        %v4881 = vunpack.c.l.b16 %v4289
        %v4882 = vunpack.c.h.b16 %v4289
        %v4883 = vunpack.c.l.b16 %v4290
        %v4884 = vunpack.c.h.b16 %v4290
        %v4885 = vunpack.c.l.b16 %v4291
        %v4886 = vunpack.c.h.b16 %v4291
        %v4887 = vunpack.c.l.b16 %v4292
        %v4888 = vunpack.c.h.b16 %v4292
        %v4889 = vunpack.c.l.b16 %v4293
        %v4890 = vunpack.c.h.b16 %v4293
        %v4891 = vunpack.c.l.b16 %v4294
        %v4892 = vunpack.c.h.b16 %v4294
        %v4893 = vunpack.c.l.b16 %v4295
        %v4894 = vunpack.c.h.b16 %v4295
        %v4895 = vunpack.c.l.b16 %v4296
        %v4896 = vunpack.c.h.b16 %v4296
        %v4897 = vunpack.c.l.b16 %v4297
        %v4898 = vunpack.c.h.b16 %v4297
        %v4899 = vunpack.c.l.b16 %v4298
        %v4900 = vunpack.c.h.b16 %v4298
        %v4901 = vunpack.c.l.b16 %v4299
        %v4902 = vunpack.c.h.b16 %v4299
        %v4903 = vunpack.c.l.b16 %v4300
        %v4904 = vunpack.c.h.b16 %v4300
        %v4905 = vunpack.c.l.b16 %v4301
        %v4906 = vunpack.c.h.b16 %v4301
        %v4907 = vunpack.c.l.b16 %v4302
        %v4908 = vunpack.c.h.b16 %v4302
        %v4909 = vunpack.c.l.b16 %v4303
        %v4910 = vunpack.c.h.b16 %v4303
        %v4911 = vunpack.c.l.b16 %v4304
        %v4912 = vunpack.c.h.b16 %v4304
        %v4913 = vunpack.c.l.b16 %v4305
        %v4914 = vunpack.c.h.b16 %v4305
        %v4915 = vunpack.c.l.b16 %v4306
        %v4916 = vunpack.c.h.b16 %v4306
        %v4917 = vunpack.c.l.b16 %v4307
        %v4918 = vunpack.c.h.b16 %v4307
        %v4919 = vunpack.c.l.b16 %v4308
        %v4920 = vunpack.c.h.b16 %v4308
        %v4921 = vunpack.c.l.b16 %v4309
        %v4922 = vunpack.c.h.b16 %v4309
        %v4923 = vunpack.c.l.b16 %v4310
        %v4924 = vunpack.c.h.b16 %v4310
        %v4925 = vunpack.c.l.b16 %v4311
        %v4926 = vunpack.c.h.b16 %v4311
        %v4927 = vunpack.c.l.b16 %v4312
        %v4928 = vunpack.c.h.b16 %v4312
        %v4929 = vunpack.c.l.b16 %v4313
        %v4930 = vunpack.c.h.b16 %v4313
        %v4931 = vunpack.c.l.b16 %v4314
        %v4932 = vunpack.c.h.b16 %v4314
        %v4933 = vunpack.c.l.b16 %v4315
        %v4934 = vunpack.c.h.b16 %v4315
        %v4935 = vunpack.c.l.b16 %v4316
        %v4936 = vunpack.c.h.b16 %v4316
        %v4937 = vunpack.c.l.b16 %v4317
        %v4938 = vunpack.c.h.b16 %v4317
        %v4939 = vunpack.c.l.b16 %v4318
        %v4940 = vunpack.c.h.b16 %v4318
        %v4941 = vunpack.c.l.b16 %v4319
        %v4942 = vunpack.c.h.b16 %v4319
        %v4943 = vunpack.c.l.b16 %v4320
        %v4944 = vunpack.c.h.b16 %v4320
        %v4945 = vunpack.c.l.b16 %v4321
        %v4946 = vunpack.c.h.b16 %v4321
        %v4947 = vunpack.c.l.b16 %v4322
        %v4948 = vunpack.c.h.b16 %v4322
        %v4949 = vunpack.c.l.b16 %v4323
        %v4950 = vunpack.c.h.b16 %v4323
        %v4951 = vunpack.c.l.b16 %v4324
        %v4952 = vunpack.c.h.b16 %v4324
        %v4953 = vunpack.c.l.b16 %v4325
        %v4954 = vunpack.c.h.b16 %v4325
        %v4955 = vunpack.c.l.b16 %v4326
        %v4956 = vunpack.c.h.b16 %v4326
        %v4957 = vunpack.c.l.b16 %v4327
        %v4958 = vunpack.c.h.b16 %v4327
        %v4959 = vunpack.c.l.b16 %v4328
        %v4960 = vunpack.c.h.b16 %v4328
        %v4961 = vunpack.c.l.b16 %v4329
        %v4962 = vunpack.c.h.b16 %v4329
        %v4963 = vunpack.c.l.b16 %v4330
        %v4964 = vunpack.c.h.b16 %v4330
        %v4965 = vunpack.c.l.b16 %v4331
        %v4966 = vunpack.c.h.b16 %v4331
        %v4967 = vunpack.c.l.b16 %v4332
        %v4968 = vunpack.c.h.b16 %v4332
        %v4969 = vunpack.c.l.b16 %v4333
        %v4970 = vunpack.c.h.b16 %v4333
        %v4971 = vunpack.c.l.b16 %v4334
        %v4972 = vunpack.c.h.b16 %v4334
        %v4973 = vunpack.c.l.b16 %v4335
        %v4974 = vunpack.c.h.b16 %v4335
        %v4975 = vunpack.c.l.b16 %v4336
        %v4976 = vunpack.c.h.b16 %v4336
        %v4977 = vunpack.c.l.b16 %v4337
        %v4978 = vunpack.c.h.b16 %v4337
        %v4979 = vunpack.c.l.b16 %v4338
        %v4980 = vunpack.c.h.b16 %v4338
        %v4981 = vunpack.c.l.b16 %v4339
        %v4982 = vunpack.c.h.b16 %v4339
        %v4983 = vunpack.c.l.b16 %v4340
        %v4984 = vunpack.c.h.b16 %v4340
        %v4985 = vunpack.c.l.b16 %v4341
        %v4986 = vunpack.c.h.b16 %v4341
        %v4987 = vunpack.c.l.b16 %v4342
        %v4988 = vunpack.c.h.b16 %v4342
        %v4989 = vunpack.c.l.b16 %v4343
        %v4990 = vunpack.c.h.b16 %v4343
        %v4991 = vunpack.c.l.b16 %v4344
        %v4992 = vunpack.c.h.b16 %v4344
        %v4993 = vunpack.c.l.b16 %v4345
        %v4994 = vunpack.c.h.b16 %v4345
        %v4995 = vunpack.c.l.b16 %v4346
        %v4996 = vunpack.c.h.b16 %v4346
        %v4997 = vunpack.c.l.b16 %v4347
        %v4998 = vunpack.c.h.b16 %v4347
        %v4999 = vunpack.c.l.b16 %v4348
        %v5000 = vunpack.c.h.b16 %v4348
        %v5001 = vunpack.c.l.b16 %v4349
        %v5002 = vunpack.c.h.b16 %v4349
        %v5003 = vunpack.c.l.b16 %v4350
        %v5004 = vunpack.c.h.b16 %v4350
        %v5005 = vunpack.c.l.b16 %v4351
        %v5006 = vunpack.c.h.b16 %v4351
        %v5007 = vunpack.c.l.b16 %v4352
        %v5008 = vunpack.c.h.b16 %v4352
        %v5009 = vunpack.c.l.b16 %v4353
        %v5010 = vunpack.c.h.b16 %v4353
        %v5011 = vunpack.c.l.b16 %v4354
        %v5012 = vunpack.c.h.b16 %v4354
        %v5013 = vunpack.c.l.b16 %v4355
        %v5014 = vunpack.c.h.b16 %v4355
        %v5015 = vunpack.c.l.b16 %v4356
        %v5016 = vunpack.c.h.b16 %v4356
        %v5017 = vunpack.c.l.b16 %v4357
        %v5018 = vunpack.c.h.b16 %v4357
        %v5019 = vunpack.c.l.b16 %v4358
        %v5020 = vunpack.c.h.b16 %v4358
        %v5021 = vunpack.c.l.b16 %v4359
        %v5022 = vunpack.c.h.b16 %v4359
        %v5023 = vunpack.c.l.b16 %v4360
        %v5024 = vunpack.c.h.b16 %v4360
        %v5025 = vunpack.c.l.b16 %v4361
        %v5026 = vunpack.c.h.b16 %v4361
        %v5027 = vunpack.c.l.b16 %v4362
        %v5028 = vunpack.c.h.b16 %v4362
        %v5029 = vunpack.c.l.b16 %v4363
        %v5030 = vunpack.c.h.b16 %v4363
        %v5031 = vunpack.c.l.b16 %v4364
        %v5032 = vunpack.c.h.b16 %v4364
        %v5033 = vunpack.c.l.b16 %v4365
        %v5034 = vunpack.c.h.b16 %v4365
        %v5035 = vunpack.c.l.b16 %v4366
        %v5036 = vunpack.c.h.b16 %v4366
        %v5037 = vunpack.c.l.b16 %v4367
        %v5038 = vunpack.c.h.b16 %v4367
        %v5039 = vunpack.c.l.b16 %v4368
        %v5040 = vunpack.c.h.b16 %v4368
        %v5041 = vunpack.c.l.b16 %v4369
        %v5042 = vunpack.c.h.b16 %v4369
        %v5043 = vunpack.c.l.b16 %v4370
        %v5044 = vunpack.c.h.b16 %v4370
        %v5045 = vunpack.c.l.b16 %v4371
        %v5046 = vunpack.c.h.b16 %v4371
        %v5047 = vunpack.c.l.b16 %v4372
        %v5048 = vunpack.c.h.b16 %v4372
        %v5049 = vunpack.c.l.b16 %v4373
        %v5050 = vunpack.c.h.b16 %v4373
        %v5051 = vunpack.c.l.b16 %v4374
        %v5052 = vunpack.c.h.b16 %v4374
        %v5053 = vunpack.c.l.b16 %v4375
        %v5054 = vunpack.c.h.b16 %v4375
        %v5055 = vunpack.c.l.b16 %v4376
        %v5056 = vunpack.c.h.b16 %v4376
        %v5057 = vunpack.c.l.b16 %v4377
        %v5058 = vunpack.c.h.b16 %v4377
        %v5059 = vunpack.c.l.b16 %v4378
        %v5060 = vunpack.c.h.b16 %v4378
        %v5061 = vunpack.c.l.b16 %v4379
        %v5062 = vunpack.c.h.b16 %v4379
        %v5063 = vunpack.c.l.b16 %v4380
        %v5064 = vunpack.c.h.b16 %v4380
        %v5065 = vunpack.c.l.b16 %v4381
        %v5066 = vunpack.c.h.b16 %v4381
        %v5067 = vunpack.c.l.b16 %v4382
        %v5068 = vunpack.c.h.b16 %v4382
        %v5069 = vunpack.c.l.b16 %v4383
        %v5070 = vunpack.c.h.b16 %v4383
        %v5071 = vunpack.c.l.b16 %v4384
        %v5072 = vunpack.c.h.b16 %v4384
        %v5073 = vunpack.c.l.b16 %v4385
        %v5074 = vunpack.c.h.b16 %v4385
        %v5075 = vunpack.c.l.b16 %v4386
        %v5076 = vunpack.c.h.b16 %v4386
        %v5077 = vunpack.c.l.b16 %v4387
        %v5078 = vunpack.c.h.b16 %v4387
        %v5079 = vunpack.c.l.b16 %v4388
        %v5080 = vunpack.c.h.b16 %v4388
        %v5081 = vunpack.c.l.b16 %v4389
        %v5082 = vunpack.c.h.b16 %v4389
        %v5083 = vunpack.c.l.b16 %v4390
        %v5084 = vunpack.c.h.b16 %v4390
        %v5085 = vunpack.c.l.b16 %v4391
        %v5086 = vunpack.c.h.b16 %v4391
        %v5087 = vunpack.c.l.b16 %v4392
        %v5088 = vunpack.c.h.b16 %v4392
        %v5089 = vunpack.c.l.b16 %v4393
        %v5090 = vunpack.c.h.b16 %v4393
        %v5091 = vunpack.c.l.b16 %v4394
        %v5092 = vunpack.c.h.b16 %v4394
        %v5093 = vunpack.c.l.b16 %v4395
        %v5094 = vunpack.c.h.b16 %v4395
        %v5095 = vunpack.c.l.b16 %v4396
        %v5096 = vunpack.c.h.b16 %v4396
        %v5097 = vunpack.c.l.b16 %v4397
        %v5098 = vunpack.c.h.b16 %v4397
        %v5099 = vunpack.c.l.b16 %v4398
        %v5100 = vunpack.c.h.b16 %v4398
        %v5101 = vunpack.c.l.b16 %v4399
        %v5102 = vunpack.c.h.b16 %v4399
        %v5103 = vunpack.c.l.b16 %v4400
        %v5104 = vunpack.c.h.b16 %v4400
        %v5105 = vunpack.c.l.b16 %v4401
        %v5106 = vunpack.c.h.b16 %v4401
        %v5107 = vunpack.c.l.b16 %v4402
        %v5108 = vunpack.c.h.b16 %v4402
        %v5109 = vunpack.c.l.b16 %v4403
        %v5110 = vunpack.c.h.b16 %v4403
        %v5111 = vunpack.c.l.b16 %v4404
        %v5112 = vunpack.c.h.b16 %v4404
        %v5113 = vunpack.c.l.b16 %v4405
        %v5114 = vunpack.c.h.b16 %v4405
        %v5115 = vunpack.c.l.b16 %v4406
        %v5116 = vunpack.c.h.b16 %v4406
        %v5117 = vunpack.c.l.b16 %v4407
        %v5118 = vunpack.c.h.b16 %v4407
        %v5119 = vunpack.c.l.b16 %v4408
        %v5120 = vunpack.c.h.b16 %v4408
        %v5121 = vunpack.c.l.b16 %v4409
        %v5122 = vunpack.c.h.b16 %v4409
        %v5123 = vunpack.c.l.b16 %v4410
        %v5124 = vunpack.c.h.b16 %v4410
        %v5125 = vunpack.c.l.b16 %v4411
        %v5126 = vunpack.c.h.b16 %v4411
        %v5127 = vunpack.c.l.b16 %v4412
        %v5128 = vunpack.c.h.b16 %v4412
        %v5129 = vunpack.c.l.b16 %v4413
        %v5130 = vunpack.c.h.b16 %v4413
        %v5131 = vunpack.c.l.b16 %v4414
        %v5132 = vunpack.c.h.b16 %v4414
        %v5133 = vunpack.c.l.b16 %v4415
        %v5134 = vunpack.c.h.b16 %v4415
        %v5135 = vunpack.c.l.b16 %v4416
        %v5136 = vunpack.c.h.b16 %v4416
        %v5137 = vunpack.c.l.b16 %v4417
        %v5138 = vunpack.c.h.b16 %v4417
        %v5139 = vunpack.c.l.b16 %v4418
        %v5140 = vunpack.c.h.b16 %v4418
        %v5141 = vunpack.c.l.b16 %v4419
        %v5142 = vunpack.c.h.b16 %v4419
        %v5143 = vunpack.c.l.b16 %v4420
        %v5144 = vunpack.c.h.b16 %v4420
        %v5145 = vunpack.c.l.b16 %v4421
        %v5146 = vunpack.c.h.b16 %v4421
        %v5147 = vunpack.c.l.b16 %v4422
        %v5148 = vunpack.c.h.b16 %v4422
        %v5149 = vunpack.c.l.b16 %v4423
        %v5150 = vunpack.c.h.b16 %v4423
        %v5151 = vunpack.c.l.b16 %v4424
        %v5152 = vunpack.c.h.b16 %v4424
        %v5153 = vunpack.c.l.b16 %v4425
        %v5154 = vunpack.c.h.b16 %v4425
        %v5155 = vunpack.c.l.b16 %v4426
        %v5156 = vunpack.c.h.b16 %v4426
        %v5157 = vunpack.c.l.b16 %v4427
        %v5158 = vunpack.c.h.b16 %v4427
        %v5159 = vunpack.c.l.b16 %v4428
        %v5160 = vunpack.c.h.b16 %v4428
        %v5161 = vunpack.c.l.b16 %v4429
        %v5162 = vunpack.c.h.b16 %v4429
        %v5163 = vunpack.c.l.b16 %v4430
        %v5164 = vunpack.c.h.b16 %v4430
        %v5165 = vunpack.c.l.b16 %v4431
        %v5166 = vunpack.c.h.b16 %v4431
        %v5167 = vunpack.c.l.b16 %v4432
        %v5168 = vunpack.c.h.b16 %v4432
        %v5169 = vunpack.c.l.b16 %v4433
        %v5170 = vunpack.c.h.b16 %v4433
        %v5171 = vunpack.c.l.b16 %v4434
        %v5172 = vunpack.c.h.b16 %v4434
        %v5173 = vunpack.c.l.b16 %v4435
        %v5174 = vunpack.c.h.b16 %v4435
        %v5175 = vunpack.c.l.b16 %v4436
        %v5176 = vunpack.c.h.b16 %v4436
        %v5177 = vunpack.c.l.b16 %v4437
        %v5178 = vunpack.c.h.b16 %v4437
        %v5179 = vunpack.c.l.b16 %v4438
        %v5180 = vunpack.c.h.b16 %v4438
        %v5181 = vunpack.c.l.b16 %v4439
        %v5182 = vunpack.c.h.b16 %v4439
        %v5183 = vunpack.c.l.b16 %v4440
        %v5184 = vunpack.c.h.b16 %v4440
        %v5185 = vunpack.c.l.b16 %v4441
        %v5186 = vunpack.c.h.b16 %v4441
        %v5187 = vunpack.c.l.b16 %v4442
        %v5188 = vunpack.c.h.b16 %v4442
        %v5189 = vunpack.c.l.b16 %v4443
        %v5190 = vunpack.c.h.b16 %v4443
        %v5191 = vunpack.c.l.b16 %v4444
        %v5192 = vunpack.c.h.b16 %v4444
        %v5193 = vunpack.c.l.b16 %v4445
        %v5194 = vunpack.c.h.b16 %v4445
        %v5195 = vunpack.c.l.b16 %v4446
        %v5196 = vunpack.c.h.b16 %v4446
        %v5197 = vunpack.c.l.b16 %v4447
        %v5198 = vunpack.c.h.b16 %v4447
        %v5199 = vunpack.c.l.b16 %v4448
        %v5200 = vunpack.c.h.b16 %v4448
        %v5201 = vunpack.c.l.b16 %v4449
        %v5202 = vunpack.c.h.b16 %v4449
        %v5203 = vunpack.c.l.b16 %v4450
        %v5204 = vunpack.c.h.b16 %v4450
        %v5205 = vunpack.c.l.b16 %v4451
        %v5206 = vunpack.c.h.b16 %v4451
        %v5207 = vunpack.c.l.b16 %v4452
        %v5208 = vunpack.c.h.b16 %v4452
        %v5209 = vunpack.c.l.b16 %v4453
        %v5210 = vunpack.c.h.b16 %v4453
        %v5211 = vunpack.c.l.b16 %v4454
        %v5212 = vunpack.c.h.b16 %v4454
        %v5213 = vunpack.c.l.b16 %v4455
        %v5214 = vunpack.c.h.b16 %v4455
        %v5215 = vunpack.c.l.b16 %v4456
        %v5216 = vunpack.c.h.b16 %v4456
        %v5217 = vunpack.c.l.b16 %v4457
        %v5218 = vunpack.c.h.b16 %v4457
        %v5219 = vunpack.c.l.b16 %v4458
        %v5220 = vunpack.c.h.b16 %v4458
        %v5221 = vunpack.c.l.b16 %v4459
        %v5222 = vunpack.c.h.b16 %v4459
        %v5223 = vunpack.c.l.b16 %v4460
        %v5224 = vunpack.c.h.b16 %v4460
        %v5225 = vunpack.c.l.b16 %v4461
        %v5226 = vunpack.c.h.b16 %v4461
        %v5227 = vunpack.c.l.b16 %v4462
        %v5228 = vunpack.c.h.b16 %v4462
        %v5229 = vunpack.c.l.b16 %v4463
        %v5230 = vunpack.c.h.b16 %v4463
        %v5231 = vunpack.c.l.b16 %v4464
        %v5232 = vunpack.c.h.b16 %v4464
        %v5233 = vunpack.c.l.b16 %v4465
        %v5234 = vunpack.c.h.b16 %v4465
        %v5235 = vunpack.c.l.b16 %v4466
        %v5236 = vunpack.c.h.b16 %v4466
        %v5237 = vunpack.c.l.b16 %v4467
        %v5238 = vunpack.c.h.b16 %v4467
        %v5239 = vunpack.c.l.b16 %v4468
        %v5240 = vunpack.c.h.b16 %v4468
        %v5241 = vunpack.c.l.b16 %v4469
        %v5242 = vunpack.c.h.b16 %v4469
        %v5243 = vunpack.c.l.b16 %v4470
        %v5244 = vunpack.c.h.b16 %v4470
        %v5245 = vunpack.c.l.b16 %v4471
        %v5246 = vunpack.c.h.b16 %v4471
        %v5247 = vunpack.c.l.b16 %v4472
        %v5248 = vunpack.c.h.b16 %v4472
        %v5249 = vunpack.c.l.b16 %v4473
        %v5250 = vunpack.c.h.b16 %v4473
        %v5251 = vunpack.c.l.b16 %v4474
        %v5252 = vunpack.c.h.b16 %v4474
        %v5253 = vunpack.c.l.b16 %v4475
        %v5254 = vunpack.c.h.b16 %v4475
        %v5255 = vunpack.c.l.b16 %v4476
        %v5256 = vunpack.c.h.b16 %v4476
        %v5257 = vunpack.c.l.b16 %v4477
        %v5258 = vunpack.c.h.b16 %v4477
        %v5259 = vunpack.c.l.b16 %v4478
        %v5260 = vunpack.c.h.b16 %v4478
        %v5261 = vunpack.c.l.b16 %v4479
        %v5262 = vunpack.c.h.b16 %v4479
        %v5263 = vunpack.c.l.b16 %v4480
        %v5264 = vunpack.c.h.b16 %v4480
        %v5265 = vunpack.c.l.b16 %v4481
        %v5266 = vunpack.c.h.b16 %v4481
        %v5267 = vunpack.c.l.b16 %v4482
        %v5268 = vunpack.c.h.b16 %v4482
        %v5269 = vunpack.c.l.b16 %v4483
        %v5270 = vunpack.c.h.b16 %v4483
        %v5271 = vunpack.c.l.b16 %v4484
        %v5272 = vunpack.c.h.b16 %v4484
        %v5273 = vunpack.c.l.b16 %v4485
        %v5274 = vunpack.c.h.b16 %v4485
        %v5275 = vunpack.c.l.b16 %v4486
        %v5276 = vunpack.c.h.b16 %v4486
        %v5277 = vunpack.c.l.b16 %v4487
        %v5278 = vunpack.c.h.b16 %v4487
        %v5279 = vunpack.c.l.b16 %v4488
        %v5280 = vunpack.c.h.b16 %v4488
        %v5281 = vunpack.c.l.b16 %v4489
        %v5282 = vunpack.c.h.b16 %v4489
        %v5283 = vunpack.c.l.b16 %v4490
        %v5284 = vunpack.c.h.b16 %v4490
        %v5285 = vunpack.c.l.b16 %v4491
        %v5286 = vunpack.c.h.b16 %v4491
        %v5287 = vunpack.c.l.b16 %v4492
        %v5288 = vunpack.c.h.b16 %v4492
        %v5289 = vunpack.c.l.b16 %v4493
        %v5290 = vunpack.c.h.b16 %v4493
        %v5291 = vunpack.c.l.b16 %v4494
        %v5292 = vunpack.c.h.b16 %v4494
        %v5293 = vunpack.c.l.b16 %v4495
        %v5294 = vunpack.c.h.b16 %v4495
        %v5295 = vunpack.c.l.b16 %v4496
        %v5296 = vunpack.c.h.b16 %v4496
        %v5297 = vunpack.c.l.b16 %v4497
        %v5298 = vunpack.c.h.b16 %v4497
        %v5299 = vunpack.c.l.b16 %v4498
        %v5300 = vunpack.c.h.b16 %v4498
        %v5301 = vunpack.c.l.b16 %v4499
        %v5302 = vunpack.c.h.b16 %v4499
        %v5303 = vunpack.c.l.b16 %v4500
        %v5304 = vunpack.c.h.b16 %v4500
        %v5305 = vpack.c.b16 %v4809, %v4793
        %v5306 = vpack.c.b16 %v4810, %v4794
        %v5307 = vpack.c.b16 %v4811, %v4795
        %v5308 = vpack.c.b16 %v4812, %v4796
        %v5309 = vpack.c.b16 %v4813, %v4797
        %v5310 = vpack.c.b16 %v4814, %v4798
        %v5311 = vpack.c.b16 %v4815, %v4799
        %v5312 = vpack.c.b16 %v4816, %v4800
        %v5313 = vpack.c.b16 %v4817, %v4801
        %v5314 = vpack.c.b16 %v4818, %v4802
        %v5315 = vpack.c.b16 %v4819, %v4803
        %v5316 = vpack.c.b16 %v4820, %v4804
        %v5317 = vpack.c.b16 %v4821, %v4805
        %v5318 = vpack.c.b16 %v4822, %v4806
        %v5319 = vpack.c.b16 %v4823, %v4807
        %v5320 = vpack.c.b16 %v4824, %v4808
        %v5321 = vpack.c.b16 %v4841, %v4825
        %v5322 = vpack.c.b16 %v4842, %v4826
        %v5323 = vpack.c.b16 %v4843, %v4827
        %v5324 = vpack.c.b16 %v4844, %v4828
        %v5325 = vpack.c.b16 %v4845, %v4829
        %v5326 = vpack.c.b16 %v4846, %v4830
        %v5327 = vpack.c.b16 %v4847, %v4831
        %v5328 = vpack.c.b16 %v4848, %v4832
        %v5329 = vpack.c.b16 %v4849, %v4833
        %v5330 = vpack.c.b16 %v4850, %v4834
        %v5331 = vpack.c.b16 %v4851, %v4835
        %v5332 = vpack.c.b16 %v4852, %v4836
        %v5333 = vpack.c.b16 %v4853, %v4837
        %v5334 = vpack.c.b16 %v4854, %v4838
        %v5335 = vpack.c.b16 %v4855, %v4839
        %v5336 = vpack.c.b16 %v4856, %v4840
        %v5337 = vpack.c.b16 %v4873, %v4857
        %v5338 = vpack.c.b16 %v4874, %v4858
        %v5339 = vpack.c.b16 %v4875, %v4859
        %v5340 = vpack.c.b16 %v4876, %v4860
        %v5341 = vpack.c.b16 %v4877, %v4861
        %v5342 = vpack.c.b16 %v4878, %v4862
        %v5343 = vpack.c.b16 %v4879, %v4863
        %v5344 = vpack.c.b16 %v4880, %v4864
        %v5345 = vpack.c.b16 %v4881, %v4865
        %v5346 = vpack.c.b16 %v4882, %v4866
        %v5347 = vpack.c.b16 %v4883, %v4867
        %v5348 = vpack.c.b16 %v4884, %v4868
        %v5349 = vpack.c.b16 %v4885, %v4869
        %v5350 = vpack.c.b16 %v4886, %v4870
        %v5351 = vpack.c.b16 %v4887, %v4871
        %v5352 = vpack.c.b16 %v4888, %v4872
        %v5353 = vpack.c.b16 %v4905, %v4889
        %v5354 = vpack.c.b16 %v4906, %v4890
        %v5355 = vpack.c.b16 %v4907, %v4891
        %v5356 = vpack.c.b16 %v4908, %v4892
        %v5357 = vpack.c.b16 %v4909, %v4893
        %v5358 = vpack.c.b16 %v4910, %v4894
        %v5359 = vpack.c.b16 %v4911, %v4895
        %v5360 = vpack.c.b16 %v4912, %v4896
        %v5361 = vpack.c.b16 %v4913, %v4897
        %v5362 = vpack.c.b16 %v4914, %v4898
        %v5363 = vpack.c.b16 %v4915, %v4899
        %v5364 = vpack.c.b16 %v4916, %v4900
        %v5365 = vpack.c.b16 %v4917, %v4901
        %v5366 = vpack.c.b16 %v4918, %v4902
        %v5367 = vpack.c.b16 %v4919, %v4903
        %v5368 = vpack.c.b16 %v4920, %v4904
        %v5369 = vpack.c.b16 %v4937, %v4921
        %v5370 = vpack.c.b16 %v4938, %v4922
        %v5371 = vpack.c.b16 %v4939, %v4923
        %v5372 = vpack.c.b16 %v4940, %v4924
        %v5373 = vpack.c.b16 %v4941, %v4925
        %v5374 = vpack.c.b16 %v4942, %v4926
        %v5375 = vpack.c.b16 %v4943, %v4927
        %v5376 = vpack.c.b16 %v4944, %v4928
        %v5377 = vpack.c.b16 %v4945, %v4929
        %v5378 = vpack.c.b16 %v4946, %v4930
        %v5379 = vpack.c.b16 %v4947, %v4931
        %v5380 = vpack.c.b16 %v4948, %v4932
        %v5381 = vpack.c.b16 %v4949, %v4933
        %v5382 = vpack.c.b16 %v4950, %v4934
        %v5383 = vpack.c.b16 %v4951, %v4935
        %v5384 = vpack.c.b16 %v4952, %v4936
        %v5385 = vpack.c.b16 %v4969, %v4953
        %v5386 = vpack.c.b16 %v4970, %v4954
        %v5387 = vpack.c.b16 %v4971, %v4955
        %v5388 = vpack.c.b16 %v4972, %v4956
        %v5389 = vpack.c.b16 %v4973, %v4957
        %v5390 = vpack.c.b16 %v4974, %v4958
        %v5391 = vpack.c.b16 %v4975, %v4959
        %v5392 = vpack.c.b16 %v4976, %v4960
        %v5393 = vpack.c.b16 %v4977, %v4961
        %v5394 = vpack.c.b16 %v4978, %v4962
        %v5395 = vpack.c.b16 %v4979, %v4963
        %v5396 = vpack.c.b16 %v4980, %v4964
        %v5397 = vpack.c.b16 %v4981, %v4965
        %v5398 = vpack.c.b16 %v4982, %v4966
        %v5399 = vpack.c.b16 %v4983, %v4967
        %v5400 = vpack.c.b16 %v4984, %v4968
        %v5401 = vpack.c.b16 %v5001, %v4985
        %v5402 = vpack.c.b16 %v5002, %v4986
        %v5403 = vpack.c.b16 %v5003, %v4987
        %v5404 = vpack.c.b16 %v5004, %v4988
        %v5405 = vpack.c.b16 %v5005, %v4989
        %v5406 = vpack.c.b16 %v5006, %v4990
        %v5407 = vpack.c.b16 %v5007, %v4991
        %v5408 = vpack.c.b16 %v5008, %v4992
        %v5409 = vpack.c.b16 %v5009, %v4993
        %v5410 = vpack.c.b16 %v5010, %v4994
        %v5411 = vpack.c.b16 %v5011, %v4995
        %v5412 = vpack.c.b16 %v5012, %v4996
        %v5413 = vpack.c.b16 %v5013, %v4997
        %v5414 = vpack.c.b16 %v5014, %v4998
        %v5415 = vpack.c.b16 %v5015, %v4999
        %v5416 = vpack.c.b16 %v5016, %v5000
        %v5417 = vpack.c.b16 %v5033, %v5017
        %v5418 = vpack.c.b16 %v5034, %v5018
        %v5419 = vpack.c.b16 %v5035, %v5019
        %v5420 = vpack.c.b16 %v5036, %v5020
        %v5421 = vpack.c.b16 %v5037, %v5021
        %v5422 = vpack.c.b16 %v5038, %v5022
        %v5423 = vpack.c.b16 %v5039, %v5023
        %v5424 = vpack.c.b16 %v5040, %v5024
        %v5425 = vpack.c.b16 %v5041, %v5025
        %v5426 = vpack.c.b16 %v5042, %v5026
        %v5427 = vpack.c.b16 %v5043, %v5027
        %v5428 = vpack.c.b16 %v5044, %v5028
        %v5429 = vpack.c.b16 %v5045, %v5029
        %v5430 = vpack.c.b16 %v5046, %v5030
        %v5431 = vpack.c.b16 %v5047, %v5031
        %v5432 = vpack.c.b16 %v5048, %v5032
        %v5433 = vpack.c.b16 %v5065, %v5049
        %v5434 = vpack.c.b16 %v5066, %v5050
        %v5435 = vpack.c.b16 %v5067, %v5051
        %v5436 = vpack.c.b16 %v5068, %v5052
        %v5437 = vpack.c.b16 %v5069, %v5053
        %v5438 = vpack.c.b16 %v5070, %v5054
        %v5439 = vpack.c.b16 %v5071, %v5055
        %v5440 = vpack.c.b16 %v5072, %v5056
        %v5441 = vpack.c.b16 %v5073, %v5057
        %v5442 = vpack.c.b16 %v5074, %v5058
        %v5443 = vpack.c.b16 %v5075, %v5059
        %v5444 = vpack.c.b16 %v5076, %v5060
        %v5445 = vpack.c.b16 %v5077, %v5061
        %v5446 = vpack.c.b16 %v5078, %v5062
        %v5447 = vpack.c.b16 %v5079, %v5063
        %v5448 = vpack.c.b16 %v5080, %v5064
        %v5449 = vpack.c.b16 %v5097, %v5081
        %v5450 = vpack.c.b16 %v5098, %v5082
        %v5451 = vpack.c.b16 %v5099, %v5083
        %v5452 = vpack.c.b16 %v5100, %v5084
        %v5453 = vpack.c.b16 %v5101, %v5085
        %v5454 = vpack.c.b16 %v5102, %v5086
        %v5455 = vpack.c.b16 %v5103, %v5087
        %v5456 = vpack.c.b16 %v5104, %v5088
        %v5457 = vpack.c.b16 %v5105, %v5089
        %v5458 = vpack.c.b16 %v5106, %v5090
        %v5459 = vpack.c.b16 %v5107, %v5091
        %v5460 = vpack.c.b16 %v5108, %v5092
        %v5461 = vpack.c.b16 %v5109, %v5093
        %v5462 = vpack.c.b16 %v5110, %v5094
        %v5463 = vpack.c.b16 %v5111, %v5095
        %v5464 = vpack.c.b16 %v5112, %v5096
        %v5465 = vpack.c.b16 %v5129, %v5113
        %v5466 = vpack.c.b16 %v5130, %v5114
        %v5467 = vpack.c.b16 %v5131, %v5115
        %v5468 = vpack.c.b16 %v5132, %v5116
        %v5469 = vpack.c.b16 %v5133, %v5117
        %v5470 = vpack.c.b16 %v5134, %v5118
        %v5471 = vpack.c.b16 %v5135, %v5119
        %v5472 = vpack.c.b16 %v5136, %v5120
        %v5473 = vpack.c.b16 %v5137, %v5121
        %v5474 = vpack.c.b16 %v5138, %v5122
        %v5475 = vpack.c.b16 %v5139, %v5123
        %v5476 = vpack.c.b16 %v5140, %v5124
        %v5477 = vpack.c.b16 %v5141, %v5125
        %v5478 = vpack.c.b16 %v5142, %v5126
        %v5479 = vpack.c.b16 %v5143, %v5127
        %v5480 = vpack.c.b16 %v5144, %v5128
        %v5481 = vpack.c.b16 %v5161, %v5145
        %v5482 = vpack.c.b16 %v5162, %v5146
        %v5483 = vpack.c.b16 %v5163, %v5147
        %v5484 = vpack.c.b16 %v5164, %v5148
        %v5485 = vpack.c.b16 %v5165, %v5149
        %v5486 = vpack.c.b16 %v5166, %v5150
        %v5487 = vpack.c.b16 %v5167, %v5151
        %v5488 = vpack.c.b16 %v5168, %v5152
        %v5489 = vpack.c.b16 %v5169, %v5153
        %v5490 = vpack.c.b16 %v5170, %v5154
        %v5491 = vpack.c.b16 %v5171, %v5155
        %v5492 = vpack.c.b16 %v5172, %v5156
        %v5493 = vpack.c.b16 %v5173, %v5157
        %v5494 = vpack.c.b16 %v5174, %v5158
        %v5495 = vpack.c.b16 %v5175, %v5159
        %v5496 = vpack.c.b16 %v5176, %v5160
        %v5497 = vpack.c.b16 %v5193, %v5177
        %v5498 = vpack.c.b16 %v5194, %v5178
        %v5499 = vpack.c.b16 %v5195, %v5179
        %v5500 = vpack.c.b16 %v5196, %v5180
        %v5501 = vpack.c.b16 %v5197, %v5181
        %v5502 = vpack.c.b16 %v5198, %v5182
        %v5503 = vpack.c.b16 %v5199, %v5183
        %v5504 = vpack.c.b16 %v5200, %v5184
        %v5505 = vpack.c.b16 %v5201, %v5185
        %v5506 = vpack.c.b16 %v5202, %v5186
        %v5507 = vpack.c.b16 %v5203, %v5187
        %v5508 = vpack.c.b16 %v5204, %v5188
        %v5509 = vpack.c.b16 %v5205, %v5189
        %v5510 = vpack.c.b16 %v5206, %v5190
        %v5511 = vpack.c.b16 %v5207, %v5191
        %v5512 = vpack.c.b16 %v5208, %v5192
        %v5513 = vpack.c.b16 %v5225, %v5209
        %v5514 = vpack.c.b16 %v5226, %v5210
        %v5515 = vpack.c.b16 %v5227, %v5211
        %v5516 = vpack.c.b16 %v5228, %v5212
        %v5517 = vpack.c.b16 %v5229, %v5213
        %v5518 = vpack.c.b16 %v5230, %v5214
        %v5519 = vpack.c.b16 %v5231, %v5215
        %v5520 = vpack.c.b16 %v5232, %v5216
        %v5521 = vpack.c.b16 %v5233, %v5217
        %v5522 = vpack.c.b16 %v5234, %v5218
        %v5523 = vpack.c.b16 %v5235, %v5219
        %v5524 = vpack.c.b16 %v5236, %v5220
        %v5525 = vpack.c.b16 %v5237, %v5221
        %v5526 = vpack.c.b16 %v5238, %v5222
        %v5527 = vpack.c.b16 %v5239, %v5223
        %v5528 = vpack.c.b16 %v5240, %v5224
        %v5529 = vpack.c.b16 %v5257, %v5241
        %v5530 = vpack.c.b16 %v5258, %v5242
        %v5531 = vpack.c.b16 %v5259, %v5243
        %v5532 = vpack.c.b16 %v5260, %v5244
        %v5533 = vpack.c.b16 %v5261, %v5245
        %v5534 = vpack.c.b16 %v5262, %v5246
        %v5535 = vpack.c.b16 %v5263, %v5247
        %v5536 = vpack.c.b16 %v5264, %v5248
        %v5537 = vpack.c.b16 %v5265, %v5249
        %v5538 = vpack.c.b16 %v5266, %v5250
        %v5539 = vpack.c.b16 %v5267, %v5251
        %v5540 = vpack.c.b16 %v5268, %v5252
        %v5541 = vpack.c.b16 %v5269, %v5253
        %v5542 = vpack.c.b16 %v5270, %v5254
        %v5543 = vpack.c.b16 %v5271, %v5255
        %v5544 = vpack.c.b16 %v5272, %v5256
        %v5545 = vpack.c.b16 %v5289, %v5273
        %v5546 = vpack.c.b16 %v5290, %v5274
        %v5547 = vpack.c.b16 %v5291, %v5275
        %v5548 = vpack.c.b16 %v5292, %v5276
        %v5549 = vpack.c.b16 %v5293, %v5277
        %v5550 = vpack.c.b16 %v5294, %v5278
        %v5551 = vpack.c.b16 %v5295, %v5279
        %v5552 = vpack.c.b16 %v5296, %v5280
        %v5553 = vpack.c.b16 %v5297, %v5281
        %v5554 = vpack.c.b16 %v5298, %v5282
        %v5555 = vpack.c.b16 %v5299, %v5283
        %v5556 = vpack.c.b16 %v5300, %v5284
        %v5557 = vpack.c.b16 %v5301, %v5285
        %v5558 = vpack.c.b16 %v5302, %v5286
        %v5559 = vpack.c.b16 %v5303, %v5287
        %v5560 = vpack.c.b16 %v5304, %v5288
        %5817 = vmatpush.bf16.msra.mxu0 %v5417
        %5818 = vmatpush.bf16.msra.mxu0 %v5401
        %5819 = vmatpush.bf16.msra.mxu0 %v5385
        %5820 = vmatpush.bf16.msra.mxu0 %v5369
        %5821 = vmatpush.bf16.msra.mxu0 %v5353
        %5822 = vmatpush.bf16.msra.mxu0 %v5337
        %5823 = vmatpush.bf16.msra.mxu0 %v5321
        %5824 = vmatpush.bf16.msra.mxu0 %v5305
        %5825 = vmatmul.bf16.gmra.mxu0 %v4237
        %v5826 = vpop.f32.mrf.mxu0
        %v5827 = vadd.f32 %v4505, %v5826
        %v5828 = vpop.f32.mrf.mxu0
        %v5829 = vadd.f32 %v4505, %v5828
        %5830 = vmatmul.bf16.gmra.mxu0 %v4239
        %v5831 = vpop.f32.mrf.mxu0
        %v5832 = vadd.f32 %v4505, %v5831
        %v5833 = vpop.f32.mrf.mxu0
        %v5834 = vadd.f32 %v4505, %v5833
        %5835 = vmatmul.bf16.gmra.mxu0 %v4241
        %v5836 = vpop.f32.mrf.mxu0
        %v5837 = vadd.f32 %v4505, %v5836
        %v5838 = vpop.f32.mrf.mxu0
        %v5839 = vadd.f32 %v4505, %v5838
        %5840 = vmatmul.bf16.gmra.mxu0 %v4243
        %v5841 = vpop.f32.mrf.mxu0
        %v5842 = vadd.f32 %v4505, %v5841
        %v5843 = vpop.f32.mrf.mxu0
        %v5844 = vadd.f32 %v4505, %v5843
        %5845 = vdwg.mxu0
        %5846 = vmatpush.bf16.msra.mxu0 %v5545
        %5847 = vmatpush.bf16.msra.mxu0 %v5529
        %5848 = vmatpush.bf16.msra.mxu0 %v5513
        %5849 = vmatpush.bf16.msra.mxu0 %v5497
        %5850 = vmatpush.bf16.msra.mxu0 %v5481
        %5851 = vmatpush.bf16.msra.mxu0 %v5465
        %5852 = vmatpush.bf16.msra.mxu0 %v5449
        %5853 = vmatpush.bf16.msra.mxu0 %v5433
        %5854 = vmatmul.bf16.gmra.mxu0 %v4238
        %v5855 = vpop.f32.mrf.mxu0
        %v5856 = vadd.f32 %v5827, %v5855
        %v5857 = vpop.f32.mrf.mxu0
        %v5858 = vadd.f32 %v5829, %v5857
        %5859 = vmatmul.bf16.gmra.mxu0 %v4240
        %v5860 = vpop.f32.mrf.mxu0
        %v5861 = vadd.f32 %v5832, %v5860
        %v5862 = vpop.f32.mrf.mxu0
        %v5863 = vadd.f32 %v5834, %v5862
        %5864 = vmatmul.bf16.gmra.mxu0 %v4242
        %v5865 = vpop.f32.mrf.mxu0
        %v5866 = vadd.f32 %v5837, %v5865
        %v5867 = vpop.f32.mrf.mxu0
        %v5868 = vadd.f32 %v5839, %v5867
        %5869 = vmatmul.bf16.gmra.mxu0 %v4244
        %v5870 = vpop.f32.mrf.mxu0
        %v5871 = vadd.f32 %v5842, %v5870
        %v5872 = vpop.f32.mrf.mxu0
        %v5873 = vadd.f32 %v5844, %v5872
        %5874 = vdwg.mxu0
        %5875 = vmatpush.bf16.msra.mxu0 %v5418
        %5876 = vmatpush.bf16.msra.mxu0 %v5402
        %5877 = vmatpush.bf16.msra.mxu0 %v5386
        %5878 = vmatpush.bf16.msra.mxu0 %v5370
        %5879 = vmatpush.bf16.msra.mxu0 %v5354
        %5880 = vmatpush.bf16.msra.mxu0 %v5338
        %5881 = vmatpush.bf16.msra.mxu0 %v5322
        %5882 = vmatpush.bf16.msra.mxu0 %v5306
        %5883 = vmatmul.bf16.gmra.mxu0 %v4237
        %v5884 = vpop.f32.mrf.mxu0
        %v5885 = vadd.f32 %v4506, %v5884
        %v5886 = vpop.f32.mrf.mxu0
        %v5887 = vadd.f32 %v4506, %v5886
        %5888 = vmatmul.bf16.gmra.mxu0 %v4239
        %v5889 = vpop.f32.mrf.mxu0
        %v5890 = vadd.f32 %v4506, %v5889
        %v5891 = vpop.f32.mrf.mxu0
        %v5892 = vadd.f32 %v4506, %v5891
        %5893 = vmatmul.bf16.gmra.mxu0 %v4241
        %v5894 = vpop.f32.mrf.mxu0
        %v5895 = vadd.f32 %v4506, %v5894
        %v5896 = vpop.f32.mrf.mxu0
        %v5897 = vadd.f32 %v4506, %v5896
        %5898 = vmatmul.bf16.gmra.mxu0 %v4243
        %v5899 = vpop.f32.mrf.mxu0
        %v5900 = vadd.f32 %v4506, %v5899
        %v5901 = vpop.f32.mrf.mxu0
        %v5902 = vadd.f32 %v4506, %v5901
        %5903 = vdwg.mxu0
        %5904 = vmatpush.bf16.msra.mxu0 %v5546
        %5905 = vmatpush.bf16.msra.mxu0 %v5530
        %5906 = vmatpush.bf16.msra.mxu0 %v5514
        %5907 = vmatpush.bf16.msra.mxu0 %v5498
        %5908 = vmatpush.bf16.msra.mxu0 %v5482
        %5909 = vmatpush.bf16.msra.mxu0 %v5466
        %5910 = vmatpush.bf16.msra.mxu0 %v5450
        %5911 = vmatpush.bf16.msra.mxu0 %v5434
        %5912 = vmatmul.bf16.gmra.mxu0 %v4238
        %v5913 = vpop.f32.mrf.mxu0
        %v5914 = vadd.f32 %v5885, %v5913
        %v5915 = vpop.f32.mrf.mxu0
        %v5916 = vadd.f32 %v5887, %v5915
        %5917 = vmatmul.bf16.gmra.mxu0 %v4240
        %v5918 = vpop.f32.mrf.mxu0
        %v5919 = vadd.f32 %v5890, %v5918
        %v5920 = vpop.f32.mrf.mxu0
        %v5921 = vadd.f32 %v5892, %v5920
        %5922 = vmatmul.bf16.gmra.mxu0 %v4242
        %v5923 = vpop.f32.mrf.mxu0
        %v5924 = vadd.f32 %v5895, %v5923
        %v5925 = vpop.f32.mrf.mxu0
        %v5926 = vadd.f32 %v5897, %v5925
        %5927 = vmatmul.bf16.gmra.mxu0 %v4244
        %v5928 = vpop.f32.mrf.mxu0
        %v5929 = vadd.f32 %v5900, %v5928
        %v5930 = vpop.f32.mrf.mxu0
        %v5931 = vadd.f32 %v5902, %v5930
        %5932 = vdwg.mxu0
        %5933 = vmatpush.bf16.msra.mxu0 %v5419
        %5934 = vmatpush.bf16.msra.mxu0 %v5403
        %5935 = vmatpush.bf16.msra.mxu0 %v5387
        %5936 = vmatpush.bf16.msra.mxu0 %v5371
        %5937 = vmatpush.bf16.msra.mxu0 %v5355
        %5938 = vmatpush.bf16.msra.mxu0 %v5339
        %5939 = vmatpush.bf16.msra.mxu0 %v5323
        %5940 = vmatpush.bf16.msra.mxu0 %v5307
        %5941 = vmatmul.bf16.gmra.mxu0 %v4237
        %v5942 = vpop.f32.mrf.mxu0
        %v5943 = vadd.f32 %v4507, %v5942
        %v5944 = vpop.f32.mrf.mxu0
        %v5945 = vadd.f32 %v4507, %v5944
        %5946 = vmatmul.bf16.gmra.mxu0 %v4239
        %v5947 = vpop.f32.mrf.mxu0
        %v5948 = vadd.f32 %v4507, %v5947
        %v5949 = vpop.f32.mrf.mxu0
        %v5950 = vadd.f32 %v4507, %v5949
        %5951 = vmatmul.bf16.gmra.mxu0 %v4241
        %v5952 = vpop.f32.mrf.mxu0
        %v5953 = vadd.f32 %v4507, %v5952
        %v5954 = vpop.f32.mrf.mxu0
        %v5955 = vadd.f32 %v4507, %v5954
        %5956 = vmatmul.bf16.gmra.mxu0 %v4243
        %v5957 = vpop.f32.mrf.mxu0
        %v5958 = vadd.f32 %v4507, %v5957
        %v5959 = vpop.f32.mrf.mxu0
        %v5960 = vadd.f32 %v4507, %v5959
        %5961 = vdwg.mxu0
        %5962 = vmatpush.bf16.msra.mxu0 %v5547
        %5963 = vmatpush.bf16.msra.mxu0 %v5531
        %5964 = vmatpush.bf16.msra.mxu0 %v5515
        %5965 = vmatpush.bf16.msra.mxu0 %v5499
        %5966 = vmatpush.bf16.msra.mxu0 %v5483
        %5967 = vmatpush.bf16.msra.mxu0 %v5467
        %5968 = vmatpush.bf16.msra.mxu0 %v5451
        %5969 = vmatpush.bf16.msra.mxu0 %v5435
        %5970 = vmatmul.bf16.gmra.mxu0 %v4238
        %v5971 = vpop.f32.mrf.mxu0
        %v5972 = vadd.f32 %v5943, %v5971
        %v5973 = vpop.f32.mrf.mxu0
        %v5974 = vadd.f32 %v5945, %v5973
        %5975 = vmatmul.bf16.gmra.mxu0 %v4240
        %v5976 = vpop.f32.mrf.mxu0
        %v5977 = vadd.f32 %v5948, %v5976
        %v5978 = vpop.f32.mrf.mxu0
        %v5979 = vadd.f32 %v5950, %v5978
        %5980 = vmatmul.bf16.gmra.mxu0 %v4242
        %v5981 = vpop.f32.mrf.mxu0
        %v5982 = vadd.f32 %v5953, %v5981
        %v5983 = vpop.f32.mrf.mxu0
        %v5984 = vadd.f32 %v5955, %v5983
        %5985 = vmatmul.bf16.gmra.mxu0 %v4244
        %v5986 = vpop.f32.mrf.mxu0
        %v5987 = vadd.f32 %v5958, %v5986
        %v5988 = vpop.f32.mrf.mxu0
        %v5989 = vadd.f32 %v5960, %v5988
        %5990 = vdwg.mxu0
        %5991 = vmatpush.bf16.msra.mxu0 %v5420
        %5992 = vmatpush.bf16.msra.mxu0 %v5404
        %5993 = vmatpush.bf16.msra.mxu0 %v5388
        %5994 = vmatpush.bf16.msra.mxu0 %v5372
        %5995 = vmatpush.bf16.msra.mxu0 %v5356
        %5996 = vmatpush.bf16.msra.mxu0 %v5340
        %5997 = vmatpush.bf16.msra.mxu0 %v5324
        %5998 = vmatpush.bf16.msra.mxu0 %v5308
        %5999 = vmatmul.bf16.gmra.mxu0 %v4237
        %v6000 = vpop.f32.mrf.mxu0
        %v6001 = vadd.f32 %v4508, %v6000
        %v6002 = vpop.f32.mrf.mxu0
        %v6003 = vadd.f32 %v4508, %v6002
        %6004 = vmatmul.bf16.gmra.mxu0 %v4239
        %v6005 = vpop.f32.mrf.mxu0
        %v6006 = vadd.f32 %v4508, %v6005
        %v6007 = vpop.f32.mrf.mxu0
        %v6008 = vadd.f32 %v4508, %v6007
        %6009 = vmatmul.bf16.gmra.mxu0 %v4241
        %v6010 = vpop.f32.mrf.mxu0
        %v6011 = vadd.f32 %v4508, %v6010
        %v6012 = vpop.f32.mrf.mxu0
        %v6013 = vadd.f32 %v4508, %v6012
        %6014 = vmatmul.bf16.gmra.mxu0 %v4243
        %v6015 = vpop.f32.mrf.mxu0
        %v6016 = vadd.f32 %v4508, %v6015
        %v6017 = vpop.f32.mrf.mxu0
        %v6018 = vadd.f32 %v4508, %v6017
        %6019 = vdwg.mxu0
        %6020 = vmatpush.bf16.msra.mxu0 %v5548
        %6021 = vmatpush.bf16.msra.mxu0 %v5532
        %6022 = vmatpush.bf16.msra.mxu0 %v5516
        %6023 = vmatpush.bf16.msra.mxu0 %v5500
        %6024 = vmatpush.bf16.msra.mxu0 %v5484
        %6025 = vmatpush.bf16.msra.mxu0 %v5468
        %6026 = vmatpush.bf16.msra.mxu0 %v5452
        %6027 = vmatpush.bf16.msra.mxu0 %v5436
        %6028 = vmatmul.bf16.gmra.mxu0 %v4238
        %v6029 = vpop.f32.mrf.mxu0
        %v6030 = vadd.f32 %v6001, %v6029
        %v6031 = vpop.f32.mrf.mxu0
        %v6032 = vadd.f32 %v6003, %v6031
        %6033 = vmatmul.bf16.gmra.mxu0 %v4240
        %v6034 = vpop.f32.mrf.mxu0
        %v6035 = vadd.f32 %v6006, %v6034
        %v6036 = vpop.f32.mrf.mxu0
        %v6037 = vadd.f32 %v6008, %v6036
        %6038 = vmatmul.bf16.gmra.mxu0 %v4242
        %v6039 = vpop.f32.mrf.mxu0
        %v6040 = vadd.f32 %v6011, %v6039
        %v6041 = vpop.f32.mrf.mxu0
        %v6042 = vadd.f32 %v6013, %v6041
        %6043 = vmatmul.bf16.gmra.mxu0 %v4244
        %v6044 = vpop.f32.mrf.mxu0
        %v6045 = vadd.f32 %v6016, %v6044
        %v6046 = vpop.f32.mrf.mxu0
        %v6047 = vadd.f32 %v6018, %v6046
        %6048 = vdwg.mxu0
        %6049 = vmatpush.bf16.msra.mxu0 %v5421
        %6050 = vmatpush.bf16.msra.mxu0 %v5405
        %6051 = vmatpush.bf16.msra.mxu0 %v5389
        %6052 = vmatpush.bf16.msra.mxu0 %v5373
        %6053 = vmatpush.bf16.msra.mxu0 %v5357
        %6054 = vmatpush.bf16.msra.mxu0 %v5341
        %6055 = vmatpush.bf16.msra.mxu0 %v5325
        %6056 = vmatpush.bf16.msra.mxu0 %v5309
        %6057 = vmatmul.bf16.gmra.mxu0 %v4237
        %v6058 = vpop.f32.mrf.mxu0
        %v6059 = vadd.f32 %v4509, %v6058
        %v6060 = vpop.f32.mrf.mxu0
        %v6061 = vadd.f32 %v4509, %v6060
        %6062 = vmatmul.bf16.gmra.mxu0 %v4239
        %v6063 = vpop.f32.mrf.mxu0
        %v6064 = vadd.f32 %v4509, %v6063
        %v6065 = vpop.f32.mrf.mxu0
        %v6066 = vadd.f32 %v4509, %v6065
        %6067 = vmatmul.bf16.gmra.mxu0 %v4241
        %v6068 = vpop.f32.mrf.mxu0
        %v6069 = vadd.f32 %v4509, %v6068
        %v6070 = vpop.f32.mrf.mxu0
        %v6071 = vadd.f32 %v4509, %v6070
        %6072 = vmatmul.bf16.gmra.mxu0 %v4243
        %v6073 = vpop.f32.mrf.mxu0
        %v6074 = vadd.f32 %v4509, %v6073
        %v6075 = vpop.f32.mrf.mxu0
        %v6076 = vadd.f32 %v4509, %v6075
        %6077 = vdwg.mxu0
        %6078 = vmatpush.bf16.msra.mxu0 %v5549
        %6079 = vmatpush.bf16.msra.mxu0 %v5533
        %6080 = vmatpush.bf16.msra.mxu0 %v5517
        %6081 = vmatpush.bf16.msra.mxu0 %v5501
        %6082 = vmatpush.bf16.msra.mxu0 %v5485
        %6083 = vmatpush.bf16.msra.mxu0 %v5469
        %6084 = vmatpush.bf16.msra.mxu0 %v5453
        %6085 = vmatpush.bf16.msra.mxu0 %v5437
        %6086 = vmatmul.bf16.gmra.mxu0 %v4238
        %v6087 = vpop.f32.mrf.mxu0
        %v6088 = vadd.f32 %v6059, %v6087
        %v6089 = vpop.f32.mrf.mxu0
        %v6090 = vadd.f32 %v6061, %v6089
        %6091 = vmatmul.bf16.gmra.mxu0 %v4240
        %v6092 = vpop.f32.mrf.mxu0
        %v6093 = vadd.f32 %v6064, %v6092
        %v6094 = vpop.f32.mrf.mxu0
        %v6095 = vadd.f32 %v6066, %v6094
        %6096 = vmatmul.bf16.gmra.mxu0 %v4242
        %v6097 = vpop.f32.mrf.mxu0
        %v6098 = vadd.f32 %v6069, %v6097
        %v6099 = vpop.f32.mrf.mxu0
        %v6100 = vadd.f32 %v6071, %v6099
        %6101 = vmatmul.bf16.gmra.mxu0 %v4244
        %v6102 = vpop.f32.mrf.mxu0
        %v6103 = vadd.f32 %v6074, %v6102
        %v6104 = vpop.f32.mrf.mxu0
        %v6105 = vadd.f32 %v6076, %v6104
        %6106 = vdwg.mxu0
        %6107 = vmatpush.bf16.msra.mxu0 %v5422
        %6108 = vmatpush.bf16.msra.mxu0 %v5406
        %6109 = vmatpush.bf16.msra.mxu0 %v5390
        %6110 = vmatpush.bf16.msra.mxu0 %v5374
        %6111 = vmatpush.bf16.msra.mxu0 %v5358
        %6112 = vmatpush.bf16.msra.mxu0 %v5342
        %6113 = vmatpush.bf16.msra.mxu0 %v5326
        %6114 = vmatpush.bf16.msra.mxu0 %v5310
        %6115 = vmatmul.bf16.gmra.mxu0 %v4237
        %v6116 = vpop.f32.mrf.mxu0
        %v6117 = vadd.f32 %v4510, %v6116
        %v6118 = vpop.f32.mrf.mxu0
        %v6119 = vadd.f32 %v4510, %v6118
        %6120 = vmatmul.bf16.gmra.mxu0 %v4239
        %v6121 = vpop.f32.mrf.mxu0
        %v6122 = vadd.f32 %v4510, %v6121
        %v6123 = vpop.f32.mrf.mxu0
        %v6124 = vadd.f32 %v4510, %v6123
        %6125 = vmatmul.bf16.gmra.mxu0 %v4241
        %v6126 = vpop.f32.mrf.mxu0
        %v6127 = vadd.f32 %v4510, %v6126
        %v6128 = vpop.f32.mrf.mxu0
        %v6129 = vadd.f32 %v4510, %v6128
        %6130 = vmatmul.bf16.gmra.mxu0 %v4243
        %v6131 = vpop.f32.mrf.mxu0
        %v6132 = vadd.f32 %v4510, %v6131
        %v6133 = vpop.f32.mrf.mxu0
        %v6134 = vadd.f32 %v4510, %v6133
        %6135 = vdwg.mxu0
        %6136 = vmatpush.bf16.msra.mxu0 %v5550
        %6137 = vmatpush.bf16.msra.mxu0 %v5534
        %6138 = vmatpush.bf16.msra.mxu0 %v5518
        %6139 = vmatpush.bf16.msra.mxu0 %v5502
        %6140 = vmatpush.bf16.msra.mxu0 %v5486
        %6141 = vmatpush.bf16.msra.mxu0 %v5470
        %6142 = vmatpush.bf16.msra.mxu0 %v5454
        %6143 = vmatpush.bf16.msra.mxu0 %v5438
        %6144 = vmatmul.bf16.gmra.mxu0 %v4238
        %v6145 = vpop.f32.mrf.mxu0
        %v6146 = vadd.f32 %v6117, %v6145
        %v6147 = vpop.f32.mrf.mxu0
        %v6148 = vadd.f32 %v6119, %v6147
        %6149 = vmatmul.bf16.gmra.mxu0 %v4240
        %v6150 = vpop.f32.mrf.mxu0
        %v6151 = vadd.f32 %v6122, %v6150
        %v6152 = vpop.f32.mrf.mxu0
        %v6153 = vadd.f32 %v6124, %v6152
        %6154 = vmatmul.bf16.gmra.mxu0 %v4242
        %v6155 = vpop.f32.mrf.mxu0
        %v6156 = vadd.f32 %v6127, %v6155
        %v6157 = vpop.f32.mrf.mxu0
        %v6158 = vadd.f32 %v6129, %v6157
        %6159 = vmatmul.bf16.gmra.mxu0 %v4244
        %v6160 = vpop.f32.mrf.mxu0
        %v6161 = vadd.f32 %v6132, %v6160
        %v6162 = vpop.f32.mrf.mxu0
        %v6163 = vadd.f32 %v6134, %v6162
        %6164 = vdwg.mxu0
        %6165 = vmatpush.bf16.msra.mxu0 %v5423
        %6166 = vmatpush.bf16.msra.mxu0 %v5407
        %6167 = vmatpush.bf16.msra.mxu0 %v5391
        %6168 = vmatpush.bf16.msra.mxu0 %v5375
        %6169 = vmatpush.bf16.msra.mxu0 %v5359
        %6170 = vmatpush.bf16.msra.mxu0 %v5343
        %6171 = vmatpush.bf16.msra.mxu0 %v5327
        %6172 = vmatpush.bf16.msra.mxu0 %v5311
        %6173 = vmatmul.bf16.gmra.mxu0 %v4237
        %v6174 = vpop.f32.mrf.mxu0
        %v6175 = vadd.f32 %v4511, %v6174
        %v6176 = vpop.f32.mrf.mxu0
        %v6177 = vadd.f32 %v4511, %v6176
        %6178 = vmatmul.bf16.gmra.mxu0 %v4239
        %v6179 = vpop.f32.mrf.mxu0
        %v6180 = vadd.f32 %v4511, %v6179
        %v6181 = vpop.f32.mrf.mxu0
        %v6182 = vadd.f32 %v4511, %v6181
        %6183 = vmatmul.bf16.gmra.mxu0 %v4241
        %v6184 = vpop.f32.mrf.mxu0
        %v6185 = vadd.f32 %v4511, %v6184
        %v6186 = vpop.f32.mrf.mxu0
        %v6187 = vadd.f32 %v4511, %v6186
        %6188 = vmatmul.bf16.gmra.mxu0 %v4243
        %v6189 = vpop.f32.mrf.mxu0
        %v6190 = vadd.f32 %v4511, %v6189
        %v6191 = vpop.f32.mrf.mxu0
        %v6192 = vadd.f32 %v4511, %v6191
        %6193 = vdwg.mxu0
        %6194 = vmatpush.bf16.msra.mxu0 %v5551
        %6195 = vmatpush.bf16.msra.mxu0 %v5535
        %6196 = vmatpush.bf16.msra.mxu0 %v5519
        %6197 = vmatpush.bf16.msra.mxu0 %v5503
        %6198 = vmatpush.bf16.msra.mxu0 %v5487
        %6199 = vmatpush.bf16.msra.mxu0 %v5471
        %6200 = vmatpush.bf16.msra.mxu0 %v5455
        %6201 = vmatpush.bf16.msra.mxu0 %v5439
        %6202 = vmatmul.bf16.gmra.mxu0 %v4238
        %v6203 = vpop.f32.mrf.mxu0
        %v6204 = vadd.f32 %v6175, %v6203
        %v6205 = vpop.f32.mrf.mxu0
        %v6206 = vadd.f32 %v6177, %v6205
        %6207 = vmatmul.bf16.gmra.mxu0 %v4240
        %v6208 = vpop.f32.mrf.mxu0
        %v6209 = vadd.f32 %v6180, %v6208
        %v6210 = vpop.f32.mrf.mxu0
        %v6211 = vadd.f32 %v6182, %v6210
        %6212 = vmatmul.bf16.gmra.mxu0 %v4242
        %v6213 = vpop.f32.mrf.mxu0
        %v6214 = vadd.f32 %v6185, %v6213
        %v6215 = vpop.f32.mrf.mxu0
        %v6216 = vadd.f32 %v6187, %v6215
        %6217 = vmatmul.bf16.gmra.mxu0 %v4244
        %v6218 = vpop.f32.mrf.mxu0
        %v6219 = vadd.f32 %v6190, %v6218
        %v6220 = vpop.f32.mrf.mxu0
        %v6221 = vadd.f32 %v6192, %v6220
        %6222 = vdwg.mxu0
        %6223 = vmatpush.bf16.msra.mxu0 %v5424
        %6224 = vmatpush.bf16.msra.mxu0 %v5408
        %6225 = vmatpush.bf16.msra.mxu0 %v5392
        %6226 = vmatpush.bf16.msra.mxu0 %v5376
        %6227 = vmatpush.bf16.msra.mxu0 %v5360
        %6228 = vmatpush.bf16.msra.mxu0 %v5344
        %6229 = vmatpush.bf16.msra.mxu0 %v5328
        %6230 = vmatpush.bf16.msra.mxu0 %v5312
        %6231 = vmatmul.bf16.gmra.mxu0 %v4237
        %v6232 = vpop.f32.mrf.mxu0
        %v6233 = vadd.f32 %v4512, %v6232
        %v6234 = vpop.f32.mrf.mxu0
        %v6235 = vadd.f32 %v4512, %v6234
        %6236 = vmatmul.bf16.gmra.mxu0 %v4239
        %v6237 = vpop.f32.mrf.mxu0
        %v6238 = vadd.f32 %v4512, %v6237
        %v6239 = vpop.f32.mrf.mxu0
        %v6240 = vadd.f32 %v4512, %v6239
        %6241 = vmatmul.bf16.gmra.mxu0 %v4241
        %v6242 = vpop.f32.mrf.mxu0
        %v6243 = vadd.f32 %v4512, %v6242
        %v6244 = vpop.f32.mrf.mxu0
        %v6245 = vadd.f32 %v4512, %v6244
        %6246 = vmatmul.bf16.gmra.mxu0 %v4243
        %v6247 = vpop.f32.mrf.mxu0
        %v6248 = vadd.f32 %v4512, %v6247
        %v6249 = vpop.f32.mrf.mxu0
        %v6250 = vadd.f32 %v4512, %v6249
        %6251 = vdwg.mxu0
        %6252 = vmatpush.bf16.msra.mxu0 %v5552
        %6253 = vmatpush.bf16.msra.mxu0 %v5536
        %6254 = vmatpush.bf16.msra.mxu0 %v5520
        %6255 = vmatpush.bf16.msra.mxu0 %v5504
        %6256 = vmatpush.bf16.msra.mxu0 %v5488
        %6257 = vmatpush.bf16.msra.mxu0 %v5472
        %6258 = vmatpush.bf16.msra.mxu0 %v5456
        %6259 = vmatpush.bf16.msra.mxu0 %v5440
        %6260 = vmatmul.bf16.gmra.mxu0 %v4238
        %v6261 = vpop.f32.mrf.mxu0
        %v6262 = vadd.f32 %v6233, %v6261
        %v6263 = vpop.f32.mrf.mxu0
        %v6264 = vadd.f32 %v6235, %v6263
        %6265 = vmatmul.bf16.gmra.mxu0 %v4240
        %v6266 = vpop.f32.mrf.mxu0
        %v6267 = vadd.f32 %v6238, %v6266
        %v6268 = vpop.f32.mrf.mxu0
        %v6269 = vadd.f32 %v6240, %v6268
        %6270 = vmatmul.bf16.gmra.mxu0 %v4242
        %v6271 = vpop.f32.mrf.mxu0
        %v6272 = vadd.f32 %v6243, %v6271
        %v6273 = vpop.f32.mrf.mxu0
        %v6274 = vadd.f32 %v6245, %v6273
        %6275 = vmatmul.bf16.gmra.mxu0 %v4244
        %v6276 = vpop.f32.mrf.mxu0
        %v6277 = vadd.f32 %v6248, %v6276
        %v6278 = vpop.f32.mrf.mxu0
        %v6279 = vadd.f32 %v6250, %v6278
        %6280 = vdwg.mxu0
        %6281 = vmatpush.bf16.msra.mxu0 %v5425
        %6282 = vmatpush.bf16.msra.mxu0 %v5409
        %6283 = vmatpush.bf16.msra.mxu0 %v5393
        %6284 = vmatpush.bf16.msra.mxu0 %v5377
        %6285 = vmatpush.bf16.msra.mxu0 %v5361
        %6286 = vmatpush.bf16.msra.mxu0 %v5345
        %6287 = vmatpush.bf16.msra.mxu0 %v5329
        %6288 = vmatpush.bf16.msra.mxu0 %v5313
        %6289 = vmatmul.bf16.gmra.mxu0 %v4237
        %v6290 = vpop.f32.mrf.mxu0
        %v6291 = vadd.f32 %v4513, %v6290
        %v6292 = vpop.f32.mrf.mxu0
        %v6293 = vadd.f32 %v4513, %v6292
        %6294 = vmatmul.bf16.gmra.mxu0 %v4239
        %v6295 = vpop.f32.mrf.mxu0
        %v6296 = vadd.f32 %v4513, %v6295
        %v6297 = vpop.f32.mrf.mxu0
        %v6298 = vadd.f32 %v4513, %v6297
        %6299 = vmatmul.bf16.gmra.mxu0 %v4241
        %v6300 = vpop.f32.mrf.mxu0
        %v6301 = vadd.f32 %v4513, %v6300
        %v6302 = vpop.f32.mrf.mxu0
        %v6303 = vadd.f32 %v4513, %v6302
        %6304 = vmatmul.bf16.gmra.mxu0 %v4243
        %v6305 = vpop.f32.mrf.mxu0
        %v6306 = vadd.f32 %v4513, %v6305
        %v6307 = vpop.f32.mrf.mxu0
        %v6308 = vadd.f32 %v4513, %v6307
        %6309 = vdwg.mxu0
        %6310 = vmatpush.bf16.msra.mxu0 %v5553
        %6311 = vmatpush.bf16.msra.mxu0 %v5537
        %6312 = vmatpush.bf16.msra.mxu0 %v5521
        %6313 = vmatpush.bf16.msra.mxu0 %v5505
        %6314 = vmatpush.bf16.msra.mxu0 %v5489
        %6315 = vmatpush.bf16.msra.mxu0 %v5473
        %6316 = vmatpush.bf16.msra.mxu0 %v5457
        %6317 = vmatpush.bf16.msra.mxu0 %v5441
        %6318 = vmatmul.bf16.gmra.mxu0 %v4238
        %v6319 = vpop.f32.mrf.mxu0
        %v6320 = vadd.f32 %v6291, %v6319
        %v6321 = vpop.f32.mrf.mxu0
        %v6322 = vadd.f32 %v6293, %v6321
        %6323 = vmatmul.bf16.gmra.mxu0 %v4240
        %v6324 = vpop.f32.mrf.mxu0
        %v6325 = vadd.f32 %v6296, %v6324
        %v6326 = vpop.f32.mrf.mxu0
        %v6327 = vadd.f32 %v6298, %v6326
        %6328 = vmatmul.bf16.gmra.mxu0 %v4242
        %v6329 = vpop.f32.mrf.mxu0
        %v6330 = vadd.f32 %v6301, %v6329
        %v6331 = vpop.f32.mrf.mxu0
        %v6332 = vadd.f32 %v6303, %v6331
        %6333 = vmatmul.bf16.gmra.mxu0 %v4244
        %v6334 = vpop.f32.mrf.mxu0
        %v6335 = vadd.f32 %v6306, %v6334
        %v6336 = vpop.f32.mrf.mxu0
        %v6337 = vadd.f32 %v6308, %v6336
        %6338 = vdwg.mxu0
        %6339 = vmatpush.bf16.msra.mxu0 %v5426
        %6340 = vmatpush.bf16.msra.mxu0 %v5410
        %6341 = vmatpush.bf16.msra.mxu0 %v5394
        %6342 = vmatpush.bf16.msra.mxu0 %v5378
        %6343 = vmatpush.bf16.msra.mxu0 %v5362
        %6344 = vmatpush.bf16.msra.mxu0 %v5346
        %6345 = vmatpush.bf16.msra.mxu0 %v5330
        %6346 = vmatpush.bf16.msra.mxu0 %v5314
        %6347 = vmatmul.bf16.gmra.mxu0 %v4237
        %v6348 = vpop.f32.mrf.mxu0
        %v6349 = vadd.f32 %v4514, %v6348
        %v6350 = vpop.f32.mrf.mxu0
        %v6351 = vadd.f32 %v4514, %v6350
        %6352 = vmatmul.bf16.gmra.mxu0 %v4239
        %v6353 = vpop.f32.mrf.mxu0
        %v6354 = vadd.f32 %v4514, %v6353
        %v6355 = vpop.f32.mrf.mxu0
        %v6356 = vadd.f32 %v4514, %v6355
        %6357 = vmatmul.bf16.gmra.mxu0 %v4241
        %v6358 = vpop.f32.mrf.mxu0
        %v6359 = vadd.f32 %v4514, %v6358
        %v6360 = vpop.f32.mrf.mxu0
        %v6361 = vadd.f32 %v4514, %v6360
        %6362 = vmatmul.bf16.gmra.mxu0 %v4243
        %v6363 = vpop.f32.mrf.mxu0
        %v6364 = vadd.f32 %v4514, %v6363
        %v6365 = vpop.f32.mrf.mxu0
        %v6366 = vadd.f32 %v4514, %v6365
        %6367 = vdwg.mxu0
        %6368 = vmatpush.bf16.msra.mxu0 %v5554
        %6369 = vmatpush.bf16.msra.mxu0 %v5538
        %6370 = vmatpush.bf16.msra.mxu0 %v5522
        %6371 = vmatpush.bf16.msra.mxu0 %v5506
        %6372 = vmatpush.bf16.msra.mxu0 %v5490
        %6373 = vmatpush.bf16.msra.mxu0 %v5474
        %6374 = vmatpush.bf16.msra.mxu0 %v5458
        %6375 = vmatpush.bf16.msra.mxu0 %v5442
        %6376 = vmatmul.bf16.gmra.mxu0 %v4238
        %v6377 = vpop.f32.mrf.mxu0
        %v6378 = vadd.f32 %v6349, %v6377
        %v6379 = vpop.f32.mrf.mxu0
        %v6380 = vadd.f32 %v6351, %v6379
        %6381 = vmatmul.bf16.gmra.mxu0 %v4240
        %v6382 = vpop.f32.mrf.mxu0
        %v6383 = vadd.f32 %v6354, %v6382
        %v6384 = vpop.f32.mrf.mxu0
        %v6385 = vadd.f32 %v6356, %v6384
        %6386 = vmatmul.bf16.gmra.mxu0 %v4242
        %v6387 = vpop.f32.mrf.mxu0
        %v6388 = vadd.f32 %v6359, %v6387
        %v6389 = vpop.f32.mrf.mxu0
        %v6390 = vadd.f32 %v6361, %v6389
        %6391 = vmatmul.bf16.gmra.mxu0 %v4244
        %v6392 = vpop.f32.mrf.mxu0
        %v6393 = vadd.f32 %v6364, %v6392
        %v6394 = vpop.f32.mrf.mxu0
        %v6395 = vadd.f32 %v6366, %v6394
        %6396 = vdwg.mxu0
        %6397 = vmatpush.bf16.msra.mxu0 %v5427
        %6398 = vmatpush.bf16.msra.mxu0 %v5411
        %6399 = vmatpush.bf16.msra.mxu0 %v5395
        %6400 = vmatpush.bf16.msra.mxu0 %v5379
        %6401 = vmatpush.bf16.msra.mxu0 %v5363
        %6402 = vmatpush.bf16.msra.mxu0 %v5347
        %6403 = vmatpush.bf16.msra.mxu0 %v5331
        %6404 = vmatpush.bf16.msra.mxu0 %v5315
        %6405 = vmatmul.bf16.gmra.mxu0 %v4237
        %v6406 = vpop.f32.mrf.mxu0
        %v6407 = vadd.f32 %v4515, %v6406
        %v6408 = vpop.f32.mrf.mxu0
        %v6409 = vadd.f32 %v4515, %v6408
        %6410 = vmatmul.bf16.gmra.mxu0 %v4239
        %v6411 = vpop.f32.mrf.mxu0
        %v6412 = vadd.f32 %v4515, %v6411
        %v6413 = vpop.f32.mrf.mxu0
        %v6414 = vadd.f32 %v4515, %v6413
        %6415 = vmatmul.bf16.gmra.mxu0 %v4241
        %v6416 = vpop.f32.mrf.mxu0
        %v6417 = vadd.f32 %v4515, %v6416
        %v6418 = vpop.f32.mrf.mxu0
        %v6419 = vadd.f32 %v4515, %v6418
        %6420 = vmatmul.bf16.gmra.mxu0 %v4243
        %v6421 = vpop.f32.mrf.mxu0
        %v6422 = vadd.f32 %v4515, %v6421
        %v6423 = vpop.f32.mrf.mxu0
        %v6424 = vadd.f32 %v4515, %v6423
        %6425 = vdwg.mxu0
        %6426 = vmatpush.bf16.msra.mxu0 %v5555
        %6427 = vmatpush.bf16.msra.mxu0 %v5539
        %6428 = vmatpush.bf16.msra.mxu0 %v5523
        %6429 = vmatpush.bf16.msra.mxu0 %v5507
        %6430 = vmatpush.bf16.msra.mxu0 %v5491
        %6431 = vmatpush.bf16.msra.mxu0 %v5475
        %6432 = vmatpush.bf16.msra.mxu0 %v5459
        %6433 = vmatpush.bf16.msra.mxu0 %v5443
        %6434 = vmatmul.bf16.gmra.mxu0 %v4238
        %v6435 = vpop.f32.mrf.mxu0
        %v6436 = vadd.f32 %v6407, %v6435
        %v6437 = vpop.f32.mrf.mxu0
        %v6438 = vadd.f32 %v6409, %v6437
        %6439 = vmatmul.bf16.gmra.mxu0 %v4240
        %v6440 = vpop.f32.mrf.mxu0
        %v6441 = vadd.f32 %v6412, %v6440
        %v6442 = vpop.f32.mrf.mxu0
        %v6443 = vadd.f32 %v6414, %v6442
        %6444 = vmatmul.bf16.gmra.mxu0 %v4242
        %v6445 = vpop.f32.mrf.mxu0
        %v6446 = vadd.f32 %v6417, %v6445
        %v6447 = vpop.f32.mrf.mxu0
        %v6448 = vadd.f32 %v6419, %v6447
        %6449 = vmatmul.bf16.gmra.mxu0 %v4244
        %v6450 = vpop.f32.mrf.mxu0
        %v6451 = vadd.f32 %v6422, %v6450
        %v6452 = vpop.f32.mrf.mxu0
        %v6453 = vadd.f32 %v6424, %v6452
        %6454 = vdwg.mxu0
        %6455 = vmatpush.bf16.msra.mxu0 %v5428
        %6456 = vmatpush.bf16.msra.mxu0 %v5412
        %6457 = vmatpush.bf16.msra.mxu0 %v5396
        %6458 = vmatpush.bf16.msra.mxu0 %v5380
        %6459 = vmatpush.bf16.msra.mxu0 %v5364
        %6460 = vmatpush.bf16.msra.mxu0 %v5348
        %6461 = vmatpush.bf16.msra.mxu0 %v5332
        %6462 = vmatpush.bf16.msra.mxu0 %v5316
        %6463 = vmatmul.bf16.gmra.mxu0 %v4237
        %v6464 = vpop.f32.mrf.mxu0
        %v6465 = vadd.f32 %v4516, %v6464
        %v6466 = vpop.f32.mrf.mxu0
        %v6467 = vadd.f32 %v4516, %v6466
        %6468 = vmatmul.bf16.gmra.mxu0 %v4239
        %v6469 = vpop.f32.mrf.mxu0
        %v6470 = vadd.f32 %v4516, %v6469
        %v6471 = vpop.f32.mrf.mxu0
        %v6472 = vadd.f32 %v4516, %v6471
        %6473 = vmatmul.bf16.gmra.mxu0 %v4241
        %v6474 = vpop.f32.mrf.mxu0
        %v6475 = vadd.f32 %v4516, %v6474
        %v6476 = vpop.f32.mrf.mxu0
        %v6477 = vadd.f32 %v4516, %v6476
        %6478 = vmatmul.bf16.gmra.mxu0 %v4243
        %v6479 = vpop.f32.mrf.mxu0
        %v6480 = vadd.f32 %v4516, %v6479
        %v6481 = vpop.f32.mrf.mxu0
        %v6482 = vadd.f32 %v4516, %v6481
        %6483 = vdwg.mxu0
        %6484 = vmatpush.bf16.msra.mxu0 %v5556
        %6485 = vmatpush.bf16.msra.mxu0 %v5540
        %6486 = vmatpush.bf16.msra.mxu0 %v5524
        %6487 = vmatpush.bf16.msra.mxu0 %v5508
        %6488 = vmatpush.bf16.msra.mxu0 %v5492
        %6489 = vmatpush.bf16.msra.mxu0 %v5476
        %6490 = vmatpush.bf16.msra.mxu0 %v5460
        %6491 = vmatpush.bf16.msra.mxu0 %v5444
        %6492 = vmatmul.bf16.gmra.mxu0 %v4238
        %v6493 = vpop.f32.mrf.mxu0
        %v6494 = vadd.f32 %v6465, %v6493
        %v6495 = vpop.f32.mrf.mxu0
        %v6496 = vadd.f32 %v6467, %v6495
        %6497 = vmatmul.bf16.gmra.mxu0 %v4240
        %v6498 = vpop.f32.mrf.mxu0
        %v6499 = vadd.f32 %v6470, %v6498
        %v6500 = vpop.f32.mrf.mxu0
        %v6501 = vadd.f32 %v6472, %v6500
        %6502 = vmatmul.bf16.gmra.mxu0 %v4242
        %v6503 = vpop.f32.mrf.mxu0
        %v6504 = vadd.f32 %v6475, %v6503
        %v6505 = vpop.f32.mrf.mxu0
        %v6506 = vadd.f32 %v6477, %v6505
        %6507 = vmatmul.bf16.gmra.mxu0 %v4244
        %v6508 = vpop.f32.mrf.mxu0
        %v6509 = vadd.f32 %v6480, %v6508
        %v6510 = vpop.f32.mrf.mxu0
        %v6511 = vadd.f32 %v6482, %v6510
        %6512 = vdwg.mxu0
        %6513 = vmatpush.bf16.msra.mxu0 %v5429
        %6514 = vmatpush.bf16.msra.mxu0 %v5413
        %6515 = vmatpush.bf16.msra.mxu0 %v5397
        %6516 = vmatpush.bf16.msra.mxu0 %v5381
        %6517 = vmatpush.bf16.msra.mxu0 %v5365
        %6518 = vmatpush.bf16.msra.mxu0 %v5349
        %6519 = vmatpush.bf16.msra.mxu0 %v5333
        %6520 = vmatpush.bf16.msra.mxu0 %v5317
        %6521 = vmatmul.bf16.gmra.mxu0 %v4237
        %v6522 = vpop.f32.mrf.mxu0
        %v6523 = vadd.f32 %v4517, %v6522
        %v6524 = vpop.f32.mrf.mxu0
        %v6525 = vadd.f32 %v4517, %v6524
        %6526 = vmatmul.bf16.gmra.mxu0 %v4239
        %v6527 = vpop.f32.mrf.mxu0
        %v6528 = vadd.f32 %v4517, %v6527
        %v6529 = vpop.f32.mrf.mxu0
        %v6530 = vadd.f32 %v4517, %v6529
        %6531 = vmatmul.bf16.gmra.mxu0 %v4241
        %v6532 = vpop.f32.mrf.mxu0
        %v6533 = vadd.f32 %v4517, %v6532
        %v6534 = vpop.f32.mrf.mxu0
        %v6535 = vadd.f32 %v4517, %v6534
        %6536 = vmatmul.bf16.gmra.mxu0 %v4243
        %v6537 = vpop.f32.mrf.mxu0
        %v6538 = vadd.f32 %v4517, %v6537
        %v6539 = vpop.f32.mrf.mxu0
        %v6540 = vadd.f32 %v4517, %v6539
        %6541 = vdwg.mxu0
        %6542 = vmatpush.bf16.msra.mxu0 %v5557
        %6543 = vmatpush.bf16.msra.mxu0 %v5541
        %6544 = vmatpush.bf16.msra.mxu0 %v5525
        %6545 = vmatpush.bf16.msra.mxu0 %v5509
        %6546 = vmatpush.bf16.msra.mxu0 %v5493
        %6547 = vmatpush.bf16.msra.mxu0 %v5477
        %6548 = vmatpush.bf16.msra.mxu0 %v5461
        %6549 = vmatpush.bf16.msra.mxu0 %v5445
        %6550 = vmatmul.bf16.gmra.mxu0 %v4238
        %v6551 = vpop.f32.mrf.mxu0
        %v6552 = vadd.f32 %v6523, %v6551
        %v6553 = vpop.f32.mrf.mxu0
        %v6554 = vadd.f32 %v6525, %v6553
        %6555 = vmatmul.bf16.gmra.mxu0 %v4240
        %v6556 = vpop.f32.mrf.mxu0
        %v6557 = vadd.f32 %v6528, %v6556
        %v6558 = vpop.f32.mrf.mxu0
        %v6559 = vadd.f32 %v6530, %v6558
        %6560 = vmatmul.bf16.gmra.mxu0 %v4242
        %v6561 = vpop.f32.mrf.mxu0
        %v6562 = vadd.f32 %v6533, %v6561
        %v6563 = vpop.f32.mrf.mxu0
        %v6564 = vadd.f32 %v6535, %v6563
        %6565 = vmatmul.bf16.gmra.mxu0 %v4244
        %v6566 = vpop.f32.mrf.mxu0
        %v6567 = vadd.f32 %v6538, %v6566
        %v6568 = vpop.f32.mrf.mxu0
        %v6569 = vadd.f32 %v6540, %v6568
        %6570 = vdwg.mxu0
        %6571 = vmatpush.bf16.msra.mxu0 %v5430
        %6572 = vmatpush.bf16.msra.mxu0 %v5414
        %6573 = vmatpush.bf16.msra.mxu0 %v5398
        %6574 = vmatpush.bf16.msra.mxu0 %v5382
        %6575 = vmatpush.bf16.msra.mxu0 %v5366
        %6576 = vmatpush.bf16.msra.mxu0 %v5350
        %6577 = vmatpush.bf16.msra.mxu0 %v5334
        %6578 = vmatpush.bf16.msra.mxu0 %v5318
        %6579 = vmatmul.bf16.gmra.mxu0 %v4237
        %v6580 = vpop.f32.mrf.mxu0
        %v6581 = vadd.f32 %v4518, %v6580
        %v6582 = vpop.f32.mrf.mxu0
        %v6583 = vadd.f32 %v4518, %v6582
        %6584 = vmatmul.bf16.gmra.mxu0 %v4239
        %v6585 = vpop.f32.mrf.mxu0
        %v6586 = vadd.f32 %v4518, %v6585
        %v6587 = vpop.f32.mrf.mxu0
        %v6588 = vadd.f32 %v4518, %v6587
        %6589 = vmatmul.bf16.gmra.mxu0 %v4241
        %v6590 = vpop.f32.mrf.mxu0
        %v6591 = vadd.f32 %v4518, %v6590
        %v6592 = vpop.f32.mrf.mxu0
        %v6593 = vadd.f32 %v4518, %v6592
        %6594 = vmatmul.bf16.gmra.mxu0 %v4243
        %v6595 = vpop.f32.mrf.mxu0
        %v6596 = vadd.f32 %v4518, %v6595
        %v6597 = vpop.f32.mrf.mxu0
        %v6598 = vadd.f32 %v4518, %v6597
        %6599 = vdwg.mxu0
        %6600 = vmatpush.bf16.msra.mxu0 %v5558
        %6601 = vmatpush.bf16.msra.mxu0 %v5542
        %6602 = vmatpush.bf16.msra.mxu0 %v5526
        %6603 = vmatpush.bf16.msra.mxu0 %v5510
        %6604 = vmatpush.bf16.msra.mxu0 %v5494
        %6605 = vmatpush.bf16.msra.mxu0 %v5478
        %6606 = vmatpush.bf16.msra.mxu0 %v5462
        %6607 = vmatpush.bf16.msra.mxu0 %v5446
        %6608 = vmatmul.bf16.gmra.mxu0 %v4238
        %v6609 = vpop.f32.mrf.mxu0
        %v6610 = vadd.f32 %v6581, %v6609
        %v6611 = vpop.f32.mrf.mxu0
        %v6612 = vadd.f32 %v6583, %v6611
        %6613 = vmatmul.bf16.gmra.mxu0 %v4240
        %v6614 = vpop.f32.mrf.mxu0
        %v6615 = vadd.f32 %v6586, %v6614
        %v6616 = vpop.f32.mrf.mxu0
        %v6617 = vadd.f32 %v6588, %v6616
        %6618 = vmatmul.bf16.gmra.mxu0 %v4242
        %v6619 = vpop.f32.mrf.mxu0
        %v6620 = vadd.f32 %v6591, %v6619
        %v6621 = vpop.f32.mrf.mxu0
        %v6622 = vadd.f32 %v6593, %v6621
        %6623 = vmatmul.bf16.gmra.mxu0 %v4244
        %v6624 = vpop.f32.mrf.mxu0
        %v6625 = vadd.f32 %v6596, %v6624
        %v6626 = vpop.f32.mrf.mxu0
        %v6627 = vadd.f32 %v6598, %v6626
        %6628 = vdwg.mxu0
        %6629 = vmatpush.bf16.msra.mxu0 %v5431
        %6630 = vmatpush.bf16.msra.mxu0 %v5415
        %6631 = vmatpush.bf16.msra.mxu0 %v5399
        %6632 = vmatpush.bf16.msra.mxu0 %v5383
        %6633 = vmatpush.bf16.msra.mxu0 %v5367
        %6634 = vmatpush.bf16.msra.mxu0 %v5351
        %6635 = vmatpush.bf16.msra.mxu0 %v5335
        %6636 = vmatpush.bf16.msra.mxu0 %v5319
        %6637 = vmatmul.bf16.gmra.mxu0 %v4237
        %v6638 = vpop.f32.mrf.mxu0
        %v6639 = vadd.f32 %v4519, %v6638
        %v6640 = vpop.f32.mrf.mxu0
        %v6641 = vadd.f32 %v4519, %v6640
        %6642 = vmatmul.bf16.gmra.mxu0 %v4239
        %v6643 = vpop.f32.mrf.mxu0
        %v6644 = vadd.f32 %v4519, %v6643
        %v6645 = vpop.f32.mrf.mxu0
        %v6646 = vadd.f32 %v4519, %v6645
        %6647 = vmatmul.bf16.gmra.mxu0 %v4241
        %v6648 = vpop.f32.mrf.mxu0
        %v6649 = vadd.f32 %v4519, %v6648
        %v6650 = vpop.f32.mrf.mxu0
        %v6651 = vadd.f32 %v4519, %v6650
        %6652 = vmatmul.bf16.gmra.mxu0 %v4243
        %v6653 = vpop.f32.mrf.mxu0
        %v6654 = vadd.f32 %v4519, %v6653
        %v6655 = vpop.f32.mrf.mxu0
        %v6656 = vadd.f32 %v4519, %v6655
        %6657 = vdwg.mxu0
        %6658 = vmatpush.bf16.msra.mxu0 %v5559
        %6659 = vmatpush.bf16.msra.mxu0 %v5543
        %6660 = vmatpush.bf16.msra.mxu0 %v5527
        %6661 = vmatpush.bf16.msra.mxu0 %v5511
        %6662 = vmatpush.bf16.msra.mxu0 %v5495
        %6663 = vmatpush.bf16.msra.mxu0 %v5479
        %6664 = vmatpush.bf16.msra.mxu0 %v5463
        %6665 = vmatpush.bf16.msra.mxu0 %v5447
        %6666 = vmatmul.bf16.gmra.mxu0 %v4238
        %v6667 = vpop.f32.mrf.mxu0
        %v6668 = vadd.f32 %v6639, %v6667
        %v6669 = vpop.f32.mrf.mxu0
        %v6670 = vadd.f32 %v6641, %v6669
        %6671 = vmatmul.bf16.gmra.mxu0 %v4240
        %v6672 = vpop.f32.mrf.mxu0
        %v6673 = vadd.f32 %v6644, %v6672
        %v6674 = vpop.f32.mrf.mxu0
        %v6675 = vadd.f32 %v6646, %v6674
        %6676 = vmatmul.bf16.gmra.mxu0 %v4242
        %v6677 = vpop.f32.mrf.mxu0
        %v6678 = vadd.f32 %v6649, %v6677
        %v6679 = vpop.f32.mrf.mxu0
        %v6680 = vadd.f32 %v6651, %v6679
        %6681 = vmatmul.bf16.gmra.mxu0 %v4244
        %v6682 = vpop.f32.mrf.mxu0
        %v6683 = vadd.f32 %v6654, %v6682
        %v6684 = vpop.f32.mrf.mxu0
        %v6685 = vadd.f32 %v6656, %v6684
        %6686 = vdwg.mxu0
        %6687 = vmatpush.bf16.msra.mxu0 %v5432
        %6688 = vmatpush.bf16.msra.mxu0 %v5416
        %6689 = vmatpush.bf16.msra.mxu0 %v5400
        %6690 = vmatpush.bf16.msra.mxu0 %v5384
        %6691 = vmatpush.bf16.msra.mxu0 %v5368
        %6692 = vmatpush.bf16.msra.mxu0 %v5352
        %6693 = vmatpush.bf16.msra.mxu0 %v5336
        %6694 = vmatpush.bf16.msra.mxu0 %v5320
        %6695 = vmatmul.bf16.gmra.mxu0 %v4237
        %v6696 = vpop.f32.mrf.mxu0
        %v6697 = vadd.f32 %v4520, %v6696
        %v6698 = vpop.f32.mrf.mxu0
        %v6699 = vadd.f32 %v4520, %v6698
        %6700 = vmatmul.bf16.gmra.mxu0 %v4239
        %v6701 = vpop.f32.mrf.mxu0
        %v6702 = vadd.f32 %v4520, %v6701
        %v6703 = vpop.f32.mrf.mxu0
        %v6704 = vadd.f32 %v4520, %v6703
        %6705 = vmatmul.bf16.gmra.mxu0 %v4241
        %v6706 = vpop.f32.mrf.mxu0
        %v6707 = vadd.f32 %v4520, %v6706
        %v6708 = vpop.f32.mrf.mxu0
        %v6709 = vadd.f32 %v4520, %v6708
        %6710 = vmatmul.bf16.gmra.mxu0 %v4243
        %v6711 = vpop.f32.mrf.mxu0
        %v6712 = vadd.f32 %v4520, %v6711
        %v6713 = vpop.f32.mrf.mxu0
        %v6714 = vadd.f32 %v4520, %v6713
        %6715 = vdwg.mxu0
        %6716 = vmatpush.bf16.msra.mxu0 %v5560
        %6717 = vmatpush.bf16.msra.mxu0 %v5544
        %6718 = vmatpush.bf16.msra.mxu0 %v5528
        %6719 = vmatpush.bf16.msra.mxu0 %v5512
        %6720 = vmatpush.bf16.msra.mxu0 %v5496
        %6721 = vmatpush.bf16.msra.mxu0 %v5480
        %6722 = vmatpush.bf16.msra.mxu0 %v5464
        %6723 = vmatpush.bf16.msra.mxu0 %v5448
        %6724 = vmatmul.bf16.gmra.mxu0 %v4238
        %v6725 = vpop.f32.mrf.mxu0
        %v6726 = vadd.f32 %v6697, %v6725
        %v6727 = vpop.f32.mrf.mxu0
        %v6728 = vadd.f32 %v6699, %v6727
        %6729 = vmatmul.bf16.gmra.mxu0 %v4240
        %v6730 = vpop.f32.mrf.mxu0
        %v6731 = vadd.f32 %v6702, %v6730
        %v6732 = vpop.f32.mrf.mxu0
        %v6733 = vadd.f32 %v6704, %v6732
        %6734 = vmatmul.bf16.gmra.mxu0 %v4242
        %v6735 = vpop.f32.mrf.mxu0
        %v6736 = vadd.f32 %v6707, %v6735
        %v6737 = vpop.f32.mrf.mxu0
        %v6738 = vadd.f32 %v6709, %v6737
        %6739 = vmatmul.bf16.gmra.mxu0 %v4244
        %v6740 = vpop.f32.mrf.mxu0
        %v6741 = vadd.f32 %v6712, %v6740
        %v6742 = vpop.f32.mrf.mxu0
        %v6743 = vadd.f32 %v6714, %v6742
        %6744 = vdwg.mxu0
        %v6745 = vmax.f32 %v5856, 0.0
        %v6746 = vmax.f32 %v5914, 0.0
        %v6747 = vmax.f32 %v5972, 0.0
        %v6748 = vmax.f32 %v6030, 0.0
        %v6749 = vmax.f32 %v6088, 0.0
        %v6750 = vmax.f32 %v6146, 0.0
        %v6751 = vmax.f32 %v6204, 0.0
        %v6752 = vmax.f32 %v6262, 0.0
        %v6753 = vmax.f32 %v6320, 0.0
        %v6754 = vmax.f32 %v6378, 0.0
        %v6755 = vmax.f32 %v6436, 0.0
        %v6756 = vmax.f32 %v6494, 0.0
        %v6757 = vmax.f32 %v6552, 0.0
        %v6758 = vmax.f32 %v6610, 0.0
        %v6759 = vmax.f32 %v6668, 0.0
        %v6760 = vmax.f32 %v6726, 0.0
        %v6761 = vmax.f32 %v5858, 0.0
        %v6762 = vmax.f32 %v5916, 0.0
        %v6763 = vmax.f32 %v5974, 0.0
        %v6764 = vmax.f32 %v6032, 0.0
        %v6765 = vmax.f32 %v6090, 0.0
        %v6766 = vmax.f32 %v6148, 0.0
        %v6767 = vmax.f32 %v6206, 0.0
        %v6768 = vmax.f32 %v6264, 0.0
        %v6769 = vmax.f32 %v6322, 0.0
        %v6770 = vmax.f32 %v6380, 0.0
        %v6771 = vmax.f32 %v6438, 0.0
        %v6772 = vmax.f32 %v6496, 0.0
        %v6773 = vmax.f32 %v6554, 0.0
        %v6774 = vmax.f32 %v6612, 0.0
        %v6775 = vmax.f32 %v6670, 0.0
        %v6776 = vmax.f32 %v6728, 0.0
        %v6777 = vmax.f32 %v5861, 0.0
        %v6778 = vmax.f32 %v5919, 0.0
        %v6779 = vmax.f32 %v5977, 0.0
        %v6780 = vmax.f32 %v6035, 0.0
        %v6781 = vmax.f32 %v6093, 0.0
        %v6782 = vmax.f32 %v6151, 0.0
        %v6783 = vmax.f32 %v6209, 0.0
        %v6784 = vmax.f32 %v6267, 0.0
        %v6785 = vmax.f32 %v6325, 0.0
        %v6786 = vmax.f32 %v6383, 0.0
        %v6787 = vmax.f32 %v6441, 0.0
        %v6788 = vmax.f32 %v6499, 0.0
        %v6789 = vmax.f32 %v6557, 0.0
        %v6790 = vmax.f32 %v6615, 0.0
        %v6791 = vmax.f32 %v6673, 0.0
        %v6792 = vmax.f32 %v6731, 0.0
        %v6793 = vmax.f32 %v5863, 0.0
        %v6794 = vmax.f32 %v5921, 0.0
        %v6795 = vmax.f32 %v5979, 0.0
        %v6796 = vmax.f32 %v6037, 0.0
        %v6797 = vmax.f32 %v6095, 0.0
        %v6798 = vmax.f32 %v6153, 0.0
        %v6799 = vmax.f32 %v6211, 0.0
        %v6800 = vmax.f32 %v6269, 0.0
        %v6801 = vmax.f32 %v6327, 0.0
        %v6802 = vmax.f32 %v6385, 0.0
        %v6803 = vmax.f32 %v6443, 0.0
        %v6804 = vmax.f32 %v6501, 0.0
        %v6805 = vmax.f32 %v6559, 0.0
        %v6806 = vmax.f32 %v6617, 0.0
        %v6807 = vmax.f32 %v6675, 0.0
        %v6808 = vmax.f32 %v6733, 0.0
        %v6809 = vmax.f32 %v5866, 0.0
        %v6810 = vmax.f32 %v5924, 0.0
        %v6811 = vmax.f32 %v5982, 0.0
        %v6812 = vmax.f32 %v6040, 0.0
        %v6813 = vmax.f32 %v6098, 0.0
        %v6814 = vmax.f32 %v6156, 0.0
        %v6815 = vmax.f32 %v6214, 0.0
        %v6816 = vmax.f32 %v6272, 0.0
        %v6817 = vmax.f32 %v6330, 0.0
        %v6818 = vmax.f32 %v6388, 0.0
        %v6819 = vmax.f32 %v6446, 0.0
        %v6820 = vmax.f32 %v6504, 0.0
        %v6821 = vmax.f32 %v6562, 0.0
        %v6822 = vmax.f32 %v6620, 0.0
        %v6823 = vmax.f32 %v6678, 0.0
        %v6824 = vmax.f32 %v6736, 0.0
        %v6825 = vmax.f32 %v5868, 0.0
        %v6826 = vmax.f32 %v5926, 0.0
        %v6827 = vmax.f32 %v5984, 0.0
        %v6828 = vmax.f32 %v6042, 0.0
        %v6829 = vmax.f32 %v6100, 0.0
        %v6830 = vmax.f32 %v6158, 0.0
        %v6831 = vmax.f32 %v6216, 0.0
        %v6832 = vmax.f32 %v6274, 0.0
        %v6833 = vmax.f32 %v6332, 0.0
        %v6834 = vmax.f32 %v6390, 0.0
        %v6835 = vmax.f32 %v6448, 0.0
        %v6836 = vmax.f32 %v6506, 0.0
        %v6837 = vmax.f32 %v6564, 0.0
        %v6838 = vmax.f32 %v6622, 0.0
        %v6839 = vmax.f32 %v6680, 0.0
        %v6840 = vmax.f32 %v6738, 0.0
        %v6841 = vmax.f32 %v5871, 0.0
        %v6842 = vmax.f32 %v5929, 0.0
        %v6843 = vmax.f32 %v5987, 0.0
        %v6844 = vmax.f32 %v6045, 0.0
        %v6845 = vmax.f32 %v6103, 0.0
        %v6846 = vmax.f32 %v6161, 0.0
        %v6847 = vmax.f32 %v6219, 0.0
        %v6848 = vmax.f32 %v6277, 0.0
        %v6849 = vmax.f32 %v6335, 0.0
        %v6850 = vmax.f32 %v6393, 0.0
        %v6851 = vmax.f32 %v6451, 0.0
        %v6852 = vmax.f32 %v6509, 0.0
        %v6853 = vmax.f32 %v6567, 0.0
        %v6854 = vmax.f32 %v6625, 0.0
        %v6855 = vmax.f32 %v6683, 0.0
        %v6856 = vmax.f32 %v6741, 0.0
        %v6857 = vmax.f32 %v5873, 0.0
        %v6858 = vmax.f32 %v5931, 0.0
        %v6859 = vmax.f32 %v5989, 0.0
        %v6860 = vmax.f32 %v6047, 0.0
        %v6861 = vmax.f32 %v6105, 0.0
        %v6862 = vmax.f32 %v6163, 0.0
        %v6863 = vmax.f32 %v6221, 0.0
        %v6864 = vmax.f32 %v6279, 0.0
        %v6865 = vmax.f32 %v6337, 0.0
        %v6866 = vmax.f32 %v6395, 0.0
        %v6867 = vmax.f32 %v6453, 0.0
        %v6868 = vmax.f32 %v6511, 0.0
        %v6869 = vmax.f32 %v6569, 0.0
        %v6870 = vmax.f32 %v6627, 0.0
        %v6871 = vmax.f32 %v6685, 0.0
        %v6872 = vmax.f32 %v6743, 0.0
        %v6873 = vadd.f32 %v6745, %v6761
        %v6874 = vadd.f32 %v6873, %v6777
        %v6875 = vadd.f32 %v6874, %v6793
        %v6876 = vadd.f32 %v6875, %v6809
        %v6877 = vadd.f32 %v6876, %v6825
        %v6878 = vadd.f32 %v6877, %v6841
        %v6879 = vadd.f32 %v6878, %v6857
        %v6880 = vrot.slane %v6879, 4
        %v6881 = vadd.f32 %v6879, %v6880
        %v6882 = vrot.slane %v6881, 2
        %v6883 = vadd.f32 %v6881, %v6882
        %v6884 = vrot.slane %v6883, 1
        %v6885 = vadd.f32 %v6883, %v6884
        %v6886 = vadd.f32 %v6746, %v6762
        %v6887 = vadd.f32 %v6886, %v6778
        %v6888 = vadd.f32 %v6887, %v6794
        %v6889 = vadd.f32 %v6888, %v6810
        %v6890 = vadd.f32 %v6889, %v6826
        %v6891 = vadd.f32 %v6890, %v6842
        %v6892 = vadd.f32 %v6891, %v6858
        %v6893 = vrot.slane %v6892, 4
        %v6894 = vadd.f32 %v6892, %v6893
        %v6895 = vrot.slane %v6894, 2
        %v6896 = vadd.f32 %v6894, %v6895
        %v6897 = vrot.slane %v6896, 1
        %v6898 = vadd.f32 %v6896, %v6897
        %v6899 = vadd.f32 %v6747, %v6763
        %v6900 = vadd.f32 %v6899, %v6779
        %v6901 = vadd.f32 %v6900, %v6795
        %v6902 = vadd.f32 %v6901, %v6811
        %v6903 = vadd.f32 %v6902, %v6827
        %v6904 = vadd.f32 %v6903, %v6843
        %v6905 = vadd.f32 %v6904, %v6859
        %v6906 = vrot.slane %v6905, 4
        %v6907 = vadd.f32 %v6905, %v6906
        %v6908 = vrot.slane %v6907, 2
        %v6909 = vadd.f32 %v6907, %v6908
        %v6910 = vrot.slane %v6909, 1
        %v6911 = vadd.f32 %v6909, %v6910
        %v6912 = vadd.f32 %v6748, %v6764
        %v6913 = vadd.f32 %v6912, %v6780
        %v6914 = vadd.f32 %v6913, %v6796
        %v6915 = vadd.f32 %v6914, %v6812
        %v6916 = vadd.f32 %v6915, %v6828
        %v6917 = vadd.f32 %v6916, %v6844
        %v6918 = vadd.f32 %v6917, %v6860
        %v6919 = vrot.slane %v6918, 4
        %v6920 = vadd.f32 %v6918, %v6919
        %v6921 = vrot.slane %v6920, 2
        %v6922 = vadd.f32 %v6920, %v6921
        %v6923 = vrot.slane %v6922, 1
        %v6924 = vadd.f32 %v6922, %v6923
        %v6925 = vadd.f32 %v6749, %v6765
        %v6926 = vadd.f32 %v6925, %v6781
        %v6927 = vadd.f32 %v6926, %v6797
        %v6928 = vadd.f32 %v6927, %v6813
        %v6929 = vadd.f32 %v6928, %v6829
        %v6930 = vadd.f32 %v6929, %v6845
        %v6931 = vadd.f32 %v6930, %v6861
        %v6932 = vrot.slane %v6931, 4
        %v6933 = vadd.f32 %v6931, %v6932
        %v6934 = vrot.slane %v6933, 2
        %v6935 = vadd.f32 %v6933, %v6934
        %v6936 = vrot.slane %v6935, 1
        %v6937 = vadd.f32 %v6935, %v6936
        %v6938 = vadd.f32 %v6750, %v6766
        %v6939 = vadd.f32 %v6938, %v6782
        %v6940 = vadd.f32 %v6939, %v6798
        %v6941 = vadd.f32 %v6940, %v6814
        %v6942 = vadd.f32 %v6941, %v6830
        %v6943 = vadd.f32 %v6942, %v6846
        %v6944 = vadd.f32 %v6943, %v6862
        %v6945 = vrot.slane %v6944, 4
        %v6946 = vadd.f32 %v6944, %v6945
        %v6947 = vrot.slane %v6946, 2
        %v6948 = vadd.f32 %v6946, %v6947
        %v6949 = vrot.slane %v6948, 1
        %v6950 = vadd.f32 %v6948, %v6949
        %v6951 = vadd.f32 %v6751, %v6767
        %v6952 = vadd.f32 %v6951, %v6783
        %v6953 = vadd.f32 %v6952, %v6799
        %v6954 = vadd.f32 %v6953, %v6815
        %v6955 = vadd.f32 %v6954, %v6831
        %v6956 = vadd.f32 %v6955, %v6847
        %v6957 = vadd.f32 %v6956, %v6863
        %v6958 = vrot.slane %v6957, 4
        %v6959 = vadd.f32 %v6957, %v6958
        %v6960 = vrot.slane %v6959, 2
        %v6961 = vadd.f32 %v6959, %v6960
        %v6962 = vrot.slane %v6961, 1
        %v6963 = vadd.f32 %v6961, %v6962
        %v6964 = vadd.f32 %v6752, %v6768
        %v6965 = vadd.f32 %v6964, %v6784
        %v6966 = vadd.f32 %v6965, %v6800
        %v6967 = vadd.f32 %v6966, %v6816
        %v6968 = vadd.f32 %v6967, %v6832
        %v6969 = vadd.f32 %v6968, %v6848
        %v6970 = vadd.f32 %v6969, %v6864
        %v6971 = vrot.slane %v6970, 4
        %v6972 = vadd.f32 %v6970, %v6971
        %v6973 = vrot.slane %v6972, 2
        %v6974 = vadd.f32 %v6972, %v6973
        %v6975 = vrot.slane %v6974, 1
        %v6976 = vadd.f32 %v6974, %v6975
        %v6977 = vadd.f32 %v6753, %v6769
        %v6978 = vadd.f32 %v6977, %v6785
        %v6979 = vadd.f32 %v6978, %v6801
        %v6980 = vadd.f32 %v6979, %v6817
        %v6981 = vadd.f32 %v6980, %v6833
        %v6982 = vadd.f32 %v6981, %v6849
        %v6983 = vadd.f32 %v6982, %v6865
        %v6984 = vrot.slane %v6983, 4
        %v6985 = vadd.f32 %v6983, %v6984
        %v6986 = vrot.slane %v6985, 2
        %v6987 = vadd.f32 %v6985, %v6986
        %v6988 = vrot.slane %v6987, 1
        %v6989 = vadd.f32 %v6987, %v6988
        %v6990 = vadd.f32 %v6754, %v6770
        %v6991 = vadd.f32 %v6990, %v6786
        %v6992 = vadd.f32 %v6991, %v6802
        %v6993 = vadd.f32 %v6992, %v6818
        %v6994 = vadd.f32 %v6993, %v6834
        %v6995 = vadd.f32 %v6994, %v6850
        %v6996 = vadd.f32 %v6995, %v6866
        %v6997 = vrot.slane %v6996, 4
        %v6998 = vadd.f32 %v6996, %v6997
        %v6999 = vrot.slane %v6998, 2
        %v7000 = vadd.f32 %v6998, %v6999
        %v7001 = vrot.slane %v7000, 1
        %v7002 = vadd.f32 %v7000, %v7001
        %v7003 = vadd.f32 %v6755, %v6771
        %v7004 = vadd.f32 %v7003, %v6787
        %v7005 = vadd.f32 %v7004, %v6803
        %v7006 = vadd.f32 %v7005, %v6819
        %v7007 = vadd.f32 %v7006, %v6835
        %v7008 = vadd.f32 %v7007, %v6851
        %v7009 = vadd.f32 %v7008, %v6867
        %v7010 = vrot.slane %v7009, 4
        %v7011 = vadd.f32 %v7009, %v7010
        %v7012 = vrot.slane %v7011, 2
        %v7013 = vadd.f32 %v7011, %v7012
        %v7014 = vrot.slane %v7013, 1
        %v7015 = vadd.f32 %v7013, %v7014
        %v7016 = vadd.f32 %v6756, %v6772
        %v7017 = vadd.f32 %v7016, %v6788
        %v7018 = vadd.f32 %v7017, %v6804
        %v7019 = vadd.f32 %v7018, %v6820
        %v7020 = vadd.f32 %v7019, %v6836
        %v7021 = vadd.f32 %v7020, %v6852
        %v7022 = vadd.f32 %v7021, %v6868
        %v7023 = vrot.slane %v7022, 4
        %v7024 = vadd.f32 %v7022, %v7023
        %v7025 = vrot.slane %v7024, 2
        %v7026 = vadd.f32 %v7024, %v7025
        %v7027 = vrot.slane %v7026, 1
        %v7028 = vadd.f32 %v7026, %v7027
        %v7029 = vadd.f32 %v6757, %v6773
        %v7030 = vadd.f32 %v7029, %v6789
        %v7031 = vadd.f32 %v7030, %v6805
        %v7032 = vadd.f32 %v7031, %v6821
        %v7033 = vadd.f32 %v7032, %v6837
        %v7034 = vadd.f32 %v7033, %v6853
        %v7035 = vadd.f32 %v7034, %v6869
        %v7036 = vrot.slane %v7035, 4
        %v7037 = vadd.f32 %v7035, %v7036
        %v7038 = vrot.slane %v7037, 2
        %v7039 = vadd.f32 %v7037, %v7038
        %v7040 = vrot.slane %v7039, 1
        %v7041 = vadd.f32 %v7039, %v7040
        %v7042 = vadd.f32 %v6758, %v6774
        %v7043 = vadd.f32 %v7042, %v6790
        %v7044 = vadd.f32 %v7043, %v6806
        %v7045 = vadd.f32 %v7044, %v6822
        %v7046 = vadd.f32 %v7045, %v6838
        %v7047 = vadd.f32 %v7046, %v6854
        %v7048 = vadd.f32 %v7047, %v6870
        %v7049 = vrot.slane %v7048, 4
        %v7050 = vadd.f32 %v7048, %v7049
        %v7051 = vrot.slane %v7050, 2
        %v7052 = vadd.f32 %v7050, %v7051
        %v7053 = vrot.slane %v7052, 1
        %v7054 = vadd.f32 %v7052, %v7053
        %v7055 = vadd.f32 %v6759, %v6775
        %v7056 = vadd.f32 %v7055, %v6791
        %v7057 = vadd.f32 %v7056, %v6807
        %v7058 = vadd.f32 %v7057, %v6823
        %v7059 = vadd.f32 %v7058, %v6839
        %v7060 = vadd.f32 %v7059, %v6855
        %v7061 = vadd.f32 %v7060, %v6871
        %v7062 = vrot.slane %v7061, 4
        %v7063 = vadd.f32 %v7061, %v7062
        %v7064 = vrot.slane %v7063, 2
        %v7065 = vadd.f32 %v7063, %v7064
        %v7066 = vrot.slane %v7065, 1
        %v7067 = vadd.f32 %v7065, %v7066
        %v7068 = vadd.f32 %v6760, %v6776
        %v7069 = vadd.f32 %v7068, %v6792
        %v7070 = vadd.f32 %v7069, %v6808
        %v7071 = vadd.f32 %v7070, %v6824
        %v7072 = vadd.f32 %v7071, %v6840
        %v7073 = vadd.f32 %v7072, %v6856
        %v7074 = vadd.f32 %v7073, %v6872
        %v7075 = vrot.slane %v7074, 4
        %v7076 = vadd.f32 %v7074, %v7075
        %v7077 = vrot.slane %v7076, 2
        %v7078 = vadd.f32 %v7076, %v7077
        %v7079 = vrot.slane %v7078, 1
        %v7080 = vadd.f32 %v7078, %v7079
        %v7081 = vrcp.pop 64.0
        %v7082 = vmul.f32 64.0, %v7081
        %v7083 = vsub.f32 1.0, %v7082
        %v7084 = vmul.f32 %v7081, %v7083
        %v7085 = vadd.f32 %v7081, %v7084
        %vm7086 = vweird.f32 %v7081
        %v7087 = vsel %vm7086, %v7081, %v7085
        %v7088 = vmul.f32 %v6885, %v7087
        %v7089 = vmul.f32 %v6898, %v7087
        %v7090 = vmul.f32 %v6911, %v7087
        %v7091 = vmul.f32 %v6924, %v7087
        %v7092 = vmul.f32 %v6937, %v7087
        %v7093 = vmul.f32 %v6950, %v7087
        %v7094 = vmul.f32 %v6963, %v7087
        %v7095 = vmul.f32 %v6976, %v7087
        %v7096 = vmul.f32 %v6989, %v7087
        %v7097 = vmul.f32 %v7002, %v7087
        %v7098 = vmul.f32 %v7015, %v7087
        %v7099 = vmul.f32 %v7028, %v7087
        %v7100 = vmul.f32 %v7041, %v7087
        %v7101 = vmul.f32 %v7054, %v7087
        %v7102 = vmul.f32 %v7067, %v7087
        %v7103 = vmul.f32 %v7080, %v7087
        %v7104 = vld [vmem:[%s9] sm:$0xff]
        %v7105 = vld [vmem:[%s9 + $0x8] sm:$0xff]
        %v7106 = vld [vmem:[%s9 + $0x10] sm:$0xff]
        %v7107 = vld [vmem:[%s9 + $0x18] sm:$0xff]
        %v7108 = vld [vmem:[%s9 + $0x20] sm:$0xff]
        %v7109 = vld [vmem:[%s9 + $0x28] sm:$0xff]
        %v7110 = vld [vmem:[%s9 + $0x30] sm:$0xff]
        %v7111 = vld [vmem:[%s9 + $0x38] sm:$0xff]
        %v7112 = vld [vmem:[%s9 + $0x40] sm:$0xff]
        %v7113 = vld [vmem:[%s9 + $0x48] sm:$0xff]
        %v7114 = vld [vmem:[%s9 + $0x50] sm:$0xff]
        %v7115 = vld [vmem:[%s9 + $0x58] sm:$0xff]
        %v7116 = vld [vmem:[%s9 + $0x60] sm:$0xff]
        %v7117 = vld [vmem:[%s9 + $0x68] sm:$0xff]
        %v7118 = vld [vmem:[%s9 + $0x70] sm:$0xff]
        %v7119 = vld [vmem:[%s9 + $0x78] sm:$0xff]
        %v7120 = vld [vmem:[%s9 + $0x80] sm:$0xff]
        %v7121 = vld [vmem:[%s9 + $0x88] sm:$0xff]
        %v7122 = vld [vmem:[%s9 + $0x90] sm:$0xff]
        %v7123 = vld [vmem:[%s9 + $0x98] sm:$0xff]
        %v7124 = vld [vmem:[%s9 + $0xa0] sm:$0xff]
        %v7125 = vld [vmem:[%s9 + $0xa8] sm:$0xff]
        %v7126 = vld [vmem:[%s9 + $0xb0] sm:$0xff]
        %v7127 = vld [vmem:[%s9 + $0xb8] sm:$0xff]
        %v7128 = vld [vmem:[%s9 + $0xc0] sm:$0xff]
        %v7129 = vld [vmem:[%s9 + $0xc8] sm:$0xff]
        %v7130 = vld [vmem:[%s9 + $0xd0] sm:$0xff]
        %v7131 = vld [vmem:[%s9 + $0xd8] sm:$0xff]
        %v7132 = vld [vmem:[%s9 + $0xe0] sm:$0xff]
        %v7133 = vld [vmem:[%s9 + $0xe8] sm:$0xff]
        %v7134 = vld [vmem:[%s9 + $0xf0] sm:$0xff]
        %v7135 = vld [vmem:[%s9 + $0xf8] sm:$0xff]
        %v7136 = vld [vmem:[%s9 + $0x100] sm:$0xff]
        %v7137 = vld [vmem:[%s9 + $0x108] sm:$0xff]
        %v7138 = vld [vmem:[%s9 + $0x110] sm:$0xff]
        %v7139 = vld [vmem:[%s9 + $0x118] sm:$0xff]
        %v7140 = vld [vmem:[%s9 + $0x120] sm:$0xff]
        %v7141 = vld [vmem:[%s9 + $0x128] sm:$0xff]
        %v7142 = vld [vmem:[%s9 + $0x130] sm:$0xff]
        %v7143 = vld [vmem:[%s9 + $0x138] sm:$0xff]
        %v7144 = vld [vmem:[%s9 + $0x140] sm:$0xff]
        %v7145 = vld [vmem:[%s9 + $0x148] sm:$0xff]
        %v7146 = vld [vmem:[%s9 + $0x150] sm:$0xff]
        %v7147 = vld [vmem:[%s9 + $0x158] sm:$0xff]
        %v7148 = vld [vmem:[%s9 + $0x160] sm:$0xff]
        %v7149 = vld [vmem:[%s9 + $0x168] sm:$0xff]
        %v7150 = vld [vmem:[%s9 + $0x170] sm:$0xff]
        %v7151 = vld [vmem:[%s9 + $0x178] sm:$0xff]
        %v7152 = vld [vmem:[%s9 + $0x180] sm:$0xff]
        %v7153 = vld [vmem:[%s9 + $0x188] sm:$0xff]
        %v7154 = vld [vmem:[%s9 + $0x190] sm:$0xff]
        %v7155 = vld [vmem:[%s9 + $0x198] sm:$0xff]
        %v7156 = vld [vmem:[%s9 + $0x1a0] sm:$0xff]
        %v7157 = vld [vmem:[%s9 + $0x1a8] sm:$0xff]
        %v7158 = vld [vmem:[%s9 + $0x1b0] sm:$0xff]
        %v7159 = vld [vmem:[%s9 + $0x1b8] sm:$0xff]
        %v7160 = vld [vmem:[%s9 + $0x1c0] sm:$0xff]
        %v7161 = vld [vmem:[%s9 + $0x1c8] sm:$0xff]
        %v7162 = vld [vmem:[%s9 + $0x1d0] sm:$0xff]
        %v7163 = vld [vmem:[%s9 + $0x1d8] sm:$0xff]
        %v7164 = vld [vmem:[%s9 + $0x1e0] sm:$0xff]
        %v7165 = vld [vmem:[%s9 + $0x1e8] sm:$0xff]
        %v7166 = vld [vmem:[%s9 + $0x1f0] sm:$0xff]
        %v7167 = vld [vmem:[%s9 + $0x1f8] sm:$0xff]
        %v7168 = vld [vmem:[%s9 + $0x200] sm:$0xff]
        %v7169 = vld [vmem:[%s9 + $0x208] sm:$0xff]
        %v7170 = vld [vmem:[%s9 + $0x210] sm:$0xff]
        %v7171 = vld [vmem:[%s9 + $0x218] sm:$0xff]
        %v7172 = vld [vmem:[%s9 + $0x220] sm:$0xff]
        %v7173 = vld [vmem:[%s9 + $0x228] sm:$0xff]
        %v7174 = vld [vmem:[%s9 + $0x230] sm:$0xff]
        %v7175 = vld [vmem:[%s9 + $0x238] sm:$0xff]
        %v7176 = vld [vmem:[%s9 + $0x240] sm:$0xff]
        %v7177 = vld [vmem:[%s9 + $0x248] sm:$0xff]
        %v7178 = vld [vmem:[%s9 + $0x250] sm:$0xff]
        %v7179 = vld [vmem:[%s9 + $0x258] sm:$0xff]
        %v7180 = vld [vmem:[%s9 + $0x260] sm:$0xff]
        %v7181 = vld [vmem:[%s9 + $0x268] sm:$0xff]
        %v7182 = vld [vmem:[%s9 + $0x270] sm:$0xff]
        %v7183 = vld [vmem:[%s9 + $0x278] sm:$0xff]
        %v7184 = vld [vmem:[%s9 + $0x280] sm:$0xff]
        %v7185 = vld [vmem:[%s9 + $0x288] sm:$0xff]
        %v7186 = vld [vmem:[%s9 + $0x290] sm:$0xff]
        %v7187 = vld [vmem:[%s9 + $0x298] sm:$0xff]
        %v7188 = vld [vmem:[%s9 + $0x2a0] sm:$0xff]
        %v7189 = vld [vmem:[%s9 + $0x2a8] sm:$0xff]
        %v7190 = vld [vmem:[%s9 + $0x2b0] sm:$0xff]
        %v7191 = vld [vmem:[%s9 + $0x2b8] sm:$0xff]
        %v7192 = vld [vmem:[%s9 + $0x2c0] sm:$0xff]
        %v7193 = vld [vmem:[%s9 + $0x2c8] sm:$0xff]
        %v7194 = vld [vmem:[%s9 + $0x2d0] sm:$0xff]
        %v7195 = vld [vmem:[%s9 + $0x2d8] sm:$0xff]
        %v7196 = vld [vmem:[%s9 + $0x2e0] sm:$0xff]
        %v7197 = vld [vmem:[%s9 + $0x2e8] sm:$0xff]
        %v7198 = vld [vmem:[%s9 + $0x2f0] sm:$0xff]
        %v7199 = vld [vmem:[%s9 + $0x2f8] sm:$0xff]
        %v7200 = vld [vmem:[%s9 + $0x300] sm:$0xff]
        %v7201 = vld [vmem:[%s9 + $0x308] sm:$0xff]
        %v7202 = vld [vmem:[%s9 + $0x310] sm:$0xff]
        %v7203 = vld [vmem:[%s9 + $0x318] sm:$0xff]
        %v7204 = vld [vmem:[%s9 + $0x320] sm:$0xff]
        %v7205 = vld [vmem:[%s9 + $0x328] sm:$0xff]
        %v7206 = vld [vmem:[%s9 + $0x330] sm:$0xff]
        %v7207 = vld [vmem:[%s9 + $0x338] sm:$0xff]
        %v7208 = vld [vmem:[%s9 + $0x340] sm:$0xff]
        %v7209 = vld [vmem:[%s9 + $0x348] sm:$0xff]
        %v7210 = vld [vmem:[%s9 + $0x350] sm:$0xff]
        %v7211 = vld [vmem:[%s9 + $0x358] sm:$0xff]
        %v7212 = vld [vmem:[%s9 + $0x360] sm:$0xff]
        %v7213 = vld [vmem:[%s9 + $0x368] sm:$0xff]
        %v7214 = vld [vmem:[%s9 + $0x370] sm:$0xff]
        %v7215 = vld [vmem:[%s9 + $0x378] sm:$0xff]
        %v7216 = vld [vmem:[%s9 + $0x380] sm:$0xff]
        %v7217 = vld [vmem:[%s9 + $0x388] sm:$0xff]
        %v7218 = vld [vmem:[%s9 + $0x390] sm:$0xff]
        %v7219 = vld [vmem:[%s9 + $0x398] sm:$0xff]
        %v7220 = vld [vmem:[%s9 + $0x3a0] sm:$0xff]
        %v7221 = vld [vmem:[%s9 + $0x3a8] sm:$0xff]
        %v7222 = vld [vmem:[%s9 + $0x3b0] sm:$0xff]
        %v7223 = vld [vmem:[%s9 + $0x3b8] sm:$0xff]
        %v7224 = vld [vmem:[%s9 + $0x3c0] sm:$0xff]
        %v7225 = vld [vmem:[%s9 + $0x3c8] sm:$0xff]
        %v7226 = vld [vmem:[%s9 + $0x3d0] sm:$0xff]
        %v7227 = vld [vmem:[%s9 + $0x3d8] sm:$0xff]
        %v7228 = vld [vmem:[%s9 + $0x3e0] sm:$0xff]
        %v7229 = vld [vmem:[%s9 + $0x3e8] sm:$0xff]
        %v7230 = vld [vmem:[%s9 + $0x3f0] sm:$0xff]
        %v7231 = vld [vmem:[%s9 + $0x3f8] sm:$0xff]
        %v7232 = vld [vmem:[%s9 + $0x400] sm:$0xff]
        %v7233 = vld [vmem:[%s9 + $0x408] sm:$0xff]
        %v7234 = vld [vmem:[%s9 + $0x410] sm:$0xff]
        %v7235 = vld [vmem:[%s9 + $0x418] sm:$0xff]
        %v7236 = vld [vmem:[%s9 + $0x420] sm:$0xff]
        %v7237 = vld [vmem:[%s9 + $0x428] sm:$0xff]
        %v7238 = vld [vmem:[%s9 + $0x430] sm:$0xff]
        %v7239 = vld [vmem:[%s9 + $0x438] sm:$0xff]
        %v7240 = vld [vmem:[%s9 + $0x440] sm:$0xff]
        %v7241 = vld [vmem:[%s9 + $0x448] sm:$0xff]
        %v7242 = vld [vmem:[%s9 + $0x450] sm:$0xff]
        %v7243 = vld [vmem:[%s9 + $0x458] sm:$0xff]
        %v7244 = vld [vmem:[%s9 + $0x460] sm:$0xff]
        %v7245 = vld [vmem:[%s9 + $0x468] sm:$0xff]
        %v7246 = vld [vmem:[%s9 + $0x470] sm:$0xff]
        %v7247 = vld [vmem:[%s9 + $0x478] sm:$0xff]
        %v7248 = vld [vmem:[%s9 + $0x480] sm:$0xff]
        %v7249 = vld [vmem:[%s9 + $0x488] sm:$0xff]
        %v7250 = vld [vmem:[%s9 + $0x490] sm:$0xff]
        %v7251 = vld [vmem:[%s9 + $0x498] sm:$0xff]
        %v7252 = vld [vmem:[%s9 + $0x4a0] sm:$0xff]
        %v7253 = vld [vmem:[%s9 + $0x4a8] sm:$0xff]
        %v7254 = vld [vmem:[%s9 + $0x4b0] sm:$0xff]
        %v7255 = vld [vmem:[%s9 + $0x4b8] sm:$0xff]
        %v7256 = vld [vmem:[%s9 + $0x4c0] sm:$0xff]
        %v7257 = vld [vmem:[%s9 + $0x4c8] sm:$0xff]
        %v7258 = vld [vmem:[%s9 + $0x4d0] sm:$0xff]
        %v7259 = vld [vmem:[%s9 + $0x4d8] sm:$0xff]
        %v7260 = vld [vmem:[%s9 + $0x4e0] sm:$0xff]
        %v7261 = vld [vmem:[%s9 + $0x4e8] sm:$0xff]
        %v7262 = vld [vmem:[%s9 + $0x4f0] sm:$0xff]
        %v7263 = vld [vmem:[%s9 + $0x4f8] sm:$0xff]
        %v7264 = vld [vmem:[%s9 + $0x500] sm:$0xff]
        %v7265 = vld [vmem:[%s9 + $0x508] sm:$0xff]
        %v7266 = vld [vmem:[%s9 + $0x510] sm:$0xff]
        %v7267 = vld [vmem:[%s9 + $0x518] sm:$0xff]
        %v7268 = vld [vmem:[%s9 + $0x520] sm:$0xff]
        %v7269 = vld [vmem:[%s9 + $0x528] sm:$0xff]
        %v7270 = vld [vmem:[%s9 + $0x530] sm:$0xff]
        %v7271 = vld [vmem:[%s9 + $0x538] sm:$0xff]
        %v7272 = vld [vmem:[%s9 + $0x540] sm:$0xff]
        %v7273 = vld [vmem:[%s9 + $0x548] sm:$0xff]
        %v7274 = vld [vmem:[%s9 + $0x550] sm:$0xff]
        %v7275 = vld [vmem:[%s9 + $0x558] sm:$0xff]
        %v7276 = vld [vmem:[%s9 + $0x560] sm:$0xff]
        %v7277 = vld [vmem:[%s9 + $0x568] sm:$0xff]
        %v7278 = vld [vmem:[%s9 + $0x570] sm:$0xff]
        %v7279 = vld [vmem:[%s9 + $0x578] sm:$0xff]
        %v7280 = vld [vmem:[%s9 + $0x580] sm:$0xff]
        %v7281 = vld [vmem:[%s9 + $0x588] sm:$0xff]
        %v7282 = vld [vmem:[%s9 + $0x590] sm:$0xff]
        %v7283 = vld [vmem:[%s9 + $0x598] sm:$0xff]
        %v7284 = vld [vmem:[%s9 + $0x5a0] sm:$0xff]
        %v7285 = vld [vmem:[%s9 + $0x5a8] sm:$0xff]
        %v7286 = vld [vmem:[%s9 + $0x5b0] sm:$0xff]
        %v7287 = vld [vmem:[%s9 + $0x5b8] sm:$0xff]
        %v7288 = vld [vmem:[%s9 + $0x5c0] sm:$0xff]
        %v7289 = vld [vmem:[%s9 + $0x5c8] sm:$0xff]
        %v7290 = vld [vmem:[%s9 + $0x5d0] sm:$0xff]
        %v7291 = vld [vmem:[%s9 + $0x5d8] sm:$0xff]
        %v7292 = vld [vmem:[%s9 + $0x5e0] sm:$0xff]
        %v7293 = vld [vmem:[%s9 + $0x5e8] sm:$0xff]
        %v7294 = vld [vmem:[%s9 + $0x5f0] sm:$0xff]
        %v7295 = vld [vmem:[%s9 + $0x5f8] sm:$0xff]
        %v7296 = vld [vmem:[%s9 + $0x600] sm:$0xff]
        %v7297 = vld [vmem:[%s9 + $0x608] sm:$0xff]
        %v7298 = vld [vmem:[%s9 + $0x610] sm:$0xff]
        %v7299 = vld [vmem:[%s9 + $0x618] sm:$0xff]
        %v7300 = vld [vmem:[%s9 + $0x620] sm:$0xff]
        %v7301 = vld [vmem:[%s9 + $0x628] sm:$0xff]
        %v7302 = vld [vmem:[%s9 + $0x630] sm:$0xff]
        %v7303 = vld [vmem:[%s9 + $0x638] sm:$0xff]
        %v7304 = vld [vmem:[%s9 + $0x640] sm:$0xff]
        %v7305 = vld [vmem:[%s9 + $0x648] sm:$0xff]
        %v7306 = vld [vmem:[%s9 + $0x650] sm:$0xff]
        %v7307 = vld [vmem:[%s9 + $0x658] sm:$0xff]
        %v7308 = vld [vmem:[%s9 + $0x660] sm:$0xff]
        %v7309 = vld [vmem:[%s9 + $0x668] sm:$0xff]
        %v7310 = vld [vmem:[%s9 + $0x670] sm:$0xff]
        %v7311 = vld [vmem:[%s9 + $0x678] sm:$0xff]
        %v7312 = vld [vmem:[%s9 + $0x680] sm:$0xff]
        %v7313 = vld [vmem:[%s9 + $0x688] sm:$0xff]
        %v7314 = vld [vmem:[%s9 + $0x690] sm:$0xff]
        %v7315 = vld [vmem:[%s9 + $0x698] sm:$0xff]
        %v7316 = vld [vmem:[%s9 + $0x6a0] sm:$0xff]
        %v7317 = vld [vmem:[%s9 + $0x6a8] sm:$0xff]
        %v7318 = vld [vmem:[%s9 + $0x6b0] sm:$0xff]
        %v7319 = vld [vmem:[%s9 + $0x6b8] sm:$0xff]
        %v7320 = vld [vmem:[%s9 + $0x6c0] sm:$0xff]
        %v7321 = vld [vmem:[%s9 + $0x6c8] sm:$0xff]
        %v7322 = vld [vmem:[%s9 + $0x6d0] sm:$0xff]
        %v7323 = vld [vmem:[%s9 + $0x6d8] sm:$0xff]
        %v7324 = vld [vmem:[%s9 + $0x6e0] sm:$0xff]
        %v7325 = vld [vmem:[%s9 + $0x6e8] sm:$0xff]
        %v7326 = vld [vmem:[%s9 + $0x6f0] sm:$0xff]
        %v7327 = vld [vmem:[%s9 + $0x6f8] sm:$0xff]
        %v7328 = vld [vmem:[%s9 + $0x700] sm:$0xff]
        %v7329 = vld [vmem:[%s9 + $0x708] sm:$0xff]
        %v7330 = vld [vmem:[%s9 + $0x710] sm:$0xff]
        %v7331 = vld [vmem:[%s9 + $0x718] sm:$0xff]
        %v7332 = vld [vmem:[%s9 + $0x720] sm:$0xff]
        %v7333 = vld [vmem:[%s9 + $0x728] sm:$0xff]
        %v7334 = vld [vmem:[%s9 + $0x730] sm:$0xff]
        %v7335 = vld [vmem:[%s9 + $0x738] sm:$0xff]
        %v7336 = vld [vmem:[%s9 + $0x740] sm:$0xff]
        %v7337 = vld [vmem:[%s9 + $0x748] sm:$0xff]
        %v7338 = vld [vmem:[%s9 + $0x750] sm:$0xff]
        %v7339 = vld [vmem:[%s9 + $0x758] sm:$0xff]
        %v7340 = vld [vmem:[%s9 + $0x760] sm:$0xff]
        %v7341 = vld [vmem:[%s9 + $0x768] sm:$0xff]
        %v7342 = vld [vmem:[%s9 + $0x770] sm:$0xff]
        %v7343 = vld [vmem:[%s9 + $0x778] sm:$0xff]
        %v7344 = vld [vmem:[%s9 + $0x780] sm:$0xff]
        %v7345 = vld [vmem:[%s9 + $0x788] sm:$0xff]
        %v7346 = vld [vmem:[%s9 + $0x790] sm:$0xff]
        %v7347 = vld [vmem:[%s9 + $0x798] sm:$0xff]
        %v7348 = vld [vmem:[%s9 + $0x7a0] sm:$0xff]
        %v7349 = vld [vmem:[%s9 + $0x7a8] sm:$0xff]
        %v7350 = vld [vmem:[%s9 + $0x7b0] sm:$0xff]
        %v7351 = vld [vmem:[%s9 + $0x7b8] sm:$0xff]
        %v7352 = vld [vmem:[%s9 + $0x7c0] sm:$0xff]
        %v7353 = vld [vmem:[%s9 + $0x7c8] sm:$0xff]
        %v7354 = vld [vmem:[%s9 + $0x7d0] sm:$0xff]
        %v7355 = vld [vmem:[%s9 + $0x7d8] sm:$0xff]
        %v7356 = vld [vmem:[%s9 + $0x7e0] sm:$0xff]
        %v7357 = vld [vmem:[%s9 + $0x7e8] sm:$0xff]
        %v7358 = vld [vmem:[%s9 + $0x7f0] sm:$0xff]
        %v7359 = vld [vmem:[%s9 + $0x7f8] sm:$0xff]
        %v7360 = vld [vmem:[%s10] sm:$0x1]
        %7361 = vmatpush.msra.mxu0 %v7119
        %7362 = vmatpush.msra.mxu0 %v7118
        %7363 = vmatpush.msra.mxu0 %v7117
        %7364 = vmatpush.msra.mxu0 %v7116
        %7365 = vmatpush.msra.mxu0 %v7115
        %7366 = vmatpush.msra.mxu0 %v7114
        %7367 = vmatpush.msra.mxu0 %v7113
        %7368 = vmatpush.msra.mxu0 %v7112
        %7369 = vmatpush.msra.mxu0 %v7111
        %7370 = vmatpush.msra.mxu0 %v7110
        %7371 = vmatpush.msra.mxu0 %v7109
        %7372 = vmatpush.msra.mxu0 %v7108
        %7373 = vmatpush.msra.mxu0 %v7107
        %7374 = vmatpush.msra.mxu0 %v7106
        %7375 = vmatpush.msra.mxu0 %v7105
        %7376 = vmatpush.msra.mxu0 %v7104
        %7377 = vmatmul.f32.gmra.mxu0 %v7088
        %v7378 = vpop.f32.mrf.mxu0
        %v7379 = vadd.f32 %v7360, %v7378
        %7380 = vdwg.mxu0
        %7381 = vmatpush.msra.mxu0 %v7135
        %7382 = vmatpush.msra.mxu0 %v7134
        %7383 = vmatpush.msra.mxu0 %v7133
        %7384 = vmatpush.msra.mxu0 %v7132
        %7385 = vmatpush.msra.mxu0 %v7131
        %7386 = vmatpush.msra.mxu0 %v7130
        %7387 = vmatpush.msra.mxu0 %v7129
        %7388 = vmatpush.msra.mxu0 %v7128
        %7389 = vmatpush.msra.mxu0 %v7127
        %7390 = vmatpush.msra.mxu0 %v7126
        %7391 = vmatpush.msra.mxu0 %v7125
        %7392 = vmatpush.msra.mxu0 %v7124
        %7393 = vmatpush.msra.mxu0 %v7123
        %7394 = vmatpush.msra.mxu0 %v7122
        %7395 = vmatpush.msra.mxu0 %v7121
        %7396 = vmatpush.msra.mxu0 %v7120
        %7397 = vmatmul.f32.gmra.mxu0 %v7089
        %v7398 = vpop.f32.mrf.mxu0
        %v7399 = vadd.f32 %v7379, %v7398
        %7400 = vdwg.mxu0
        %7401 = vmatpush.msra.mxu0 %v7151
        %7402 = vmatpush.msra.mxu0 %v7150
        %7403 = vmatpush.msra.mxu0 %v7149
        %7404 = vmatpush.msra.mxu0 %v7148
        %7405 = vmatpush.msra.mxu0 %v7147
        %7406 = vmatpush.msra.mxu0 %v7146
        %7407 = vmatpush.msra.mxu0 %v7145
        %7408 = vmatpush.msra.mxu0 %v7144
        %7409 = vmatpush.msra.mxu0 %v7143
        %7410 = vmatpush.msra.mxu0 %v7142
        %7411 = vmatpush.msra.mxu0 %v7141
        %7412 = vmatpush.msra.mxu0 %v7140
        %7413 = vmatpush.msra.mxu0 %v7139
        %7414 = vmatpush.msra.mxu0 %v7138
        %7415 = vmatpush.msra.mxu0 %v7137
        %7416 = vmatpush.msra.mxu0 %v7136
        %7417 = vmatmul.f32.gmra.mxu0 %v7090
        %v7418 = vpop.f32.mrf.mxu0
        %v7419 = vadd.f32 %v7399, %v7418
        %7420 = vdwg.mxu0
        %7421 = vmatpush.msra.mxu0 %v7167
        %7422 = vmatpush.msra.mxu0 %v7166
        %7423 = vmatpush.msra.mxu0 %v7165
        %7424 = vmatpush.msra.mxu0 %v7164
        %7425 = vmatpush.msra.mxu0 %v7163
        %7426 = vmatpush.msra.mxu0 %v7162
        %7427 = vmatpush.msra.mxu0 %v7161
        %7428 = vmatpush.msra.mxu0 %v7160
        %7429 = vmatpush.msra.mxu0 %v7159
        %7430 = vmatpush.msra.mxu0 %v7158
        %7431 = vmatpush.msra.mxu0 %v7157
        %7432 = vmatpush.msra.mxu0 %v7156
        %7433 = vmatpush.msra.mxu0 %v7155
        %7434 = vmatpush.msra.mxu0 %v7154
        %7435 = vmatpush.msra.mxu0 %v7153
        %7436 = vmatpush.msra.mxu0 %v7152
        %7437 = vmatmul.f32.gmra.mxu0 %v7091
        %v7438 = vpop.f32.mrf.mxu0
        %v7439 = vadd.f32 %v7419, %v7438
        %7440 = vdwg.mxu0
        %7441 = vmatpush.msra.mxu0 %v7183
        %7442 = vmatpush.msra.mxu0 %v7182
        %7443 = vmatpush.msra.mxu0 %v7181
        %7444 = vmatpush.msra.mxu0 %v7180
        %7445 = vmatpush.msra.mxu0 %v7179
        %7446 = vmatpush.msra.mxu0 %v7178
        %7447 = vmatpush.msra.mxu0 %v7177
        %7448 = vmatpush.msra.mxu0 %v7176
        %7449 = vmatpush.msra.mxu0 %v7175
        %7450 = vmatpush.msra.mxu0 %v7174
        %7451 = vmatpush.msra.mxu0 %v7173
        %7452 = vmatpush.msra.mxu0 %v7172
        %7453 = vmatpush.msra.mxu0 %v7171
        %7454 = vmatpush.msra.mxu0 %v7170
        %7455 = vmatpush.msra.mxu0 %v7169
        %7456 = vmatpush.msra.mxu0 %v7168
        %7457 = vmatmul.f32.gmra.mxu0 %v7092
        %v7458 = vpop.f32.mrf.mxu0
        %v7459 = vadd.f32 %v7439, %v7458
        %7460 = vdwg.mxu0
        %7461 = vmatpush.msra.mxu0 %v7199
        %7462 = vmatpush.msra.mxu0 %v7198
        %7463 = vmatpush.msra.mxu0 %v7197
        %7464 = vmatpush.msra.mxu0 %v7196
        %7465 = vmatpush.msra.mxu0 %v7195
        %7466 = vmatpush.msra.mxu0 %v7194
        %7467 = vmatpush.msra.mxu0 %v7193
        %7468 = vmatpush.msra.mxu0 %v7192
        %7469 = vmatpush.msra.mxu0 %v7191
        %7470 = vmatpush.msra.mxu0 %v7190
        %7471 = vmatpush.msra.mxu0 %v7189
        %7472 = vmatpush.msra.mxu0 %v7188
        %7473 = vmatpush.msra.mxu0 %v7187
        %7474 = vmatpush.msra.mxu0 %v7186
        %7475 = vmatpush.msra.mxu0 %v7185
        %7476 = vmatpush.msra.mxu0 %v7184
        %7477 = vmatmul.f32.gmra.mxu0 %v7093
        %v7478 = vpop.f32.mrf.mxu0
        %v7479 = vadd.f32 %v7459, %v7478
        %7480 = vdwg.mxu0
        %7481 = vmatpush.msra.mxu0 %v7215
        %7482 = vmatpush.msra.mxu0 %v7214
        %7483 = vmatpush.msra.mxu0 %v7213
        %7484 = vmatpush.msra.mxu0 %v7212
        %7485 = vmatpush.msra.mxu0 %v7211
        %7486 = vmatpush.msra.mxu0 %v7210
        %7487 = vmatpush.msra.mxu0 %v7209
        %7488 = vmatpush.msra.mxu0 %v7208
        %7489 = vmatpush.msra.mxu0 %v7207
        %7490 = vmatpush.msra.mxu0 %v7206
        %7491 = vmatpush.msra.mxu0 %v7205
        %7492 = vmatpush.msra.mxu0 %v7204
        %7493 = vmatpush.msra.mxu0 %v7203
        %7494 = vmatpush.msra.mxu0 %v7202
        %7495 = vmatpush.msra.mxu0 %v7201
        %7496 = vmatpush.msra.mxu0 %v7200
        %7497 = vmatmul.f32.gmra.mxu0 %v7094
        %v7498 = vpop.f32.mrf.mxu0
        %v7499 = vadd.f32 %v7479, %v7498
        %7500 = vdwg.mxu0
        %7501 = vmatpush.msra.mxu0 %v7231
        %7502 = vmatpush.msra.mxu0 %v7230
        %7503 = vmatpush.msra.mxu0 %v7229
        %7504 = vmatpush.msra.mxu0 %v7228
        %7505 = vmatpush.msra.mxu0 %v7227
        %7506 = vmatpush.msra.mxu0 %v7226
        %7507 = vmatpush.msra.mxu0 %v7225
        %7508 = vmatpush.msra.mxu0 %v7224
        %7509 = vmatpush.msra.mxu0 %v7223
        %7510 = vmatpush.msra.mxu0 %v7222
        %7511 = vmatpush.msra.mxu0 %v7221
        %7512 = vmatpush.msra.mxu0 %v7220
        %7513 = vmatpush.msra.mxu0 %v7219
        %7514 = vmatpush.msra.mxu0 %v7218
        %7515 = vmatpush.msra.mxu0 %v7217
        %7516 = vmatpush.msra.mxu0 %v7216
        %7517 = vmatmul.f32.gmra.mxu0 %v7095
        %v7518 = vpop.f32.mrf.mxu0
        %v7519 = vadd.f32 %v7499, %v7518
        %7520 = vdwg.mxu0
        %7521 = vmatpush.msra.mxu0 %v7247
        %7522 = vmatpush.msra.mxu0 %v7246
        %7523 = vmatpush.msra.mxu0 %v7245
        %7524 = vmatpush.msra.mxu0 %v7244
        %7525 = vmatpush.msra.mxu0 %v7243
        %7526 = vmatpush.msra.mxu0 %v7242
        %7527 = vmatpush.msra.mxu0 %v7241
        %7528 = vmatpush.msra.mxu0 %v7240
        %7529 = vmatpush.msra.mxu0 %v7239
        %7530 = vmatpush.msra.mxu0 %v7238
        %7531 = vmatpush.msra.mxu0 %v7237
        %7532 = vmatpush.msra.mxu0 %v7236
        %7533 = vmatpush.msra.mxu0 %v7235
        %7534 = vmatpush.msra.mxu0 %v7234
        %7535 = vmatpush.msra.mxu0 %v7233
        %7536 = vmatpush.msra.mxu0 %v7232
        %7537 = vmatmul.f32.gmra.mxu0 %v7096
        %v7538 = vpop.f32.mrf.mxu0
        %v7539 = vadd.f32 %v7519, %v7538
        %7540 = vdwg.mxu0
        %7541 = vmatpush.msra.mxu0 %v7263
        %7542 = vmatpush.msra.mxu0 %v7262
        %7543 = vmatpush.msra.mxu0 %v7261
        %7544 = vmatpush.msra.mxu0 %v7260
        %7545 = vmatpush.msra.mxu0 %v7259
        %7546 = vmatpush.msra.mxu0 %v7258
        %7547 = vmatpush.msra.mxu0 %v7257
        %7548 = vmatpush.msra.mxu0 %v7256
        %7549 = vmatpush.msra.mxu0 %v7255
        %7550 = vmatpush.msra.mxu0 %v7254
        %7551 = vmatpush.msra.mxu0 %v7253
        %7552 = vmatpush.msra.mxu0 %v7252
        %7553 = vmatpush.msra.mxu0 %v7251
        %7554 = vmatpush.msra.mxu0 %v7250
        %7555 = vmatpush.msra.mxu0 %v7249
        %7556 = vmatpush.msra.mxu0 %v7248
        %7557 = vmatmul.f32.gmra.mxu0 %v7097
        %v7558 = vpop.f32.mrf.mxu0
        %v7559 = vadd.f32 %v7539, %v7558
        %7560 = vdwg.mxu0
        %7561 = vmatpush.msra.mxu0 %v7279
        %7562 = vmatpush.msra.mxu0 %v7278
        %7563 = vmatpush.msra.mxu0 %v7277
        %7564 = vmatpush.msra.mxu0 %v7276
        %7565 = vmatpush.msra.mxu0 %v7275
        %7566 = vmatpush.msra.mxu0 %v7274
        %7567 = vmatpush.msra.mxu0 %v7273
        %7568 = vmatpush.msra.mxu0 %v7272
        %7569 = vmatpush.msra.mxu0 %v7271
        %7570 = vmatpush.msra.mxu0 %v7270
        %7571 = vmatpush.msra.mxu0 %v7269
        %7572 = vmatpush.msra.mxu0 %v7268
        %7573 = vmatpush.msra.mxu0 %v7267
        %7574 = vmatpush.msra.mxu0 %v7266
        %7575 = vmatpush.msra.mxu0 %v7265
        %7576 = vmatpush.msra.mxu0 %v7264
        %7577 = vmatmul.f32.gmra.mxu0 %v7098
        %v7578 = vpop.f32.mrf.mxu0
        %v7579 = vadd.f32 %v7559, %v7578
        %7580 = vdwg.mxu0
        %7581 = vmatpush.msra.mxu0 %v7295
        %7582 = vmatpush.msra.mxu0 %v7294
        %7583 = vmatpush.msra.mxu0 %v7293
        %7584 = vmatpush.msra.mxu0 %v7292
        %7585 = vmatpush.msra.mxu0 %v7291
        %7586 = vmatpush.msra.mxu0 %v7290
        %7587 = vmatpush.msra.mxu0 %v7289
        %7588 = vmatpush.msra.mxu0 %v7288
        %7589 = vmatpush.msra.mxu0 %v7287
        %7590 = vmatpush.msra.mxu0 %v7286
        %7591 = vmatpush.msra.mxu0 %v7285
        %7592 = vmatpush.msra.mxu0 %v7284
        %7593 = vmatpush.msra.mxu0 %v7283
        %7594 = vmatpush.msra.mxu0 %v7282
        %7595 = vmatpush.msra.mxu0 %v7281
        %7596 = vmatpush.msra.mxu0 %v7280
        %7597 = vmatmul.f32.gmra.mxu0 %v7099
        %v7598 = vpop.f32.mrf.mxu0
        %v7599 = vadd.f32 %v7579, %v7598
        %7600 = vdwg.mxu0
        %7601 = vmatpush.msra.mxu0 %v7311
        %7602 = vmatpush.msra.mxu0 %v7310
        %7603 = vmatpush.msra.mxu0 %v7309
        %7604 = vmatpush.msra.mxu0 %v7308
        %7605 = vmatpush.msra.mxu0 %v7307
        %7606 = vmatpush.msra.mxu0 %v7306
        %7607 = vmatpush.msra.mxu0 %v7305
        %7608 = vmatpush.msra.mxu0 %v7304
        %7609 = vmatpush.msra.mxu0 %v7303
        %7610 = vmatpush.msra.mxu0 %v7302
        %7611 = vmatpush.msra.mxu0 %v7301
        %7612 = vmatpush.msra.mxu0 %v7300
        %7613 = vmatpush.msra.mxu0 %v7299
        %7614 = vmatpush.msra.mxu0 %v7298
        %7615 = vmatpush.msra.mxu0 %v7297
        %7616 = vmatpush.msra.mxu0 %v7296
        %7617 = vmatmul.f32.gmra.mxu0 %v7100
        %v7618 = vpop.f32.mrf.mxu0
        %v7619 = vadd.f32 %v7599, %v7618
        %7620 = vdwg.mxu0
        %7621 = vmatpush.msra.mxu0 %v7327
        %7622 = vmatpush.msra.mxu0 %v7326
        %7623 = vmatpush.msra.mxu0 %v7325
        %7624 = vmatpush.msra.mxu0 %v7324
        %7625 = vmatpush.msra.mxu0 %v7323
        %7626 = vmatpush.msra.mxu0 %v7322
        %7627 = vmatpush.msra.mxu0 %v7321
        %7628 = vmatpush.msra.mxu0 %v7320
        %7629 = vmatpush.msra.mxu0 %v7319
        %7630 = vmatpush.msra.mxu0 %v7318
        %7631 = vmatpush.msra.mxu0 %v7317
        %7632 = vmatpush.msra.mxu0 %v7316
        %7633 = vmatpush.msra.mxu0 %v7315
        %7634 = vmatpush.msra.mxu0 %v7314
        %7635 = vmatpush.msra.mxu0 %v7313
        %7636 = vmatpush.msra.mxu0 %v7312
        %7637 = vmatmul.f32.gmra.mxu0 %v7101
        %v7638 = vpop.f32.mrf.mxu0
        %v7639 = vadd.f32 %v7619, %v7638
        %7640 = vdwg.mxu0
        %7641 = vmatpush.msra.mxu0 %v7343
        %7642 = vmatpush.msra.mxu0 %v7342
        %7643 = vmatpush.msra.mxu0 %v7341
        %7644 = vmatpush.msra.mxu0 %v7340
        %7645 = vmatpush.msra.mxu0 %v7339
        %7646 = vmatpush.msra.mxu0 %v7338
        %7647 = vmatpush.msra.mxu0 %v7337
        %7648 = vmatpush.msra.mxu0 %v7336
        %7649 = vmatpush.msra.mxu0 %v7335
        %7650 = vmatpush.msra.mxu0 %v7334
        %7651 = vmatpush.msra.mxu0 %v7333
        %7652 = vmatpush.msra.mxu0 %v7332
        %7653 = vmatpush.msra.mxu0 %v7331
        %7654 = vmatpush.msra.mxu0 %v7330
        %7655 = vmatpush.msra.mxu0 %v7329
        %7656 = vmatpush.msra.mxu0 %v7328
        %7657 = vmatmul.f32.gmra.mxu0 %v7102
        %v7658 = vpop.f32.mrf.mxu0
        %v7659 = vadd.f32 %v7639, %v7658
        %7660 = vdwg.mxu0
        %7661 = vmatpush.msra.mxu0 %v7359
        %7662 = vmatpush.msra.mxu0 %v7358
        %7663 = vmatpush.msra.mxu0 %v7357
        %7664 = vmatpush.msra.mxu0 %v7356
        %7665 = vmatpush.msra.mxu0 %v7355
        %7666 = vmatpush.msra.mxu0 %v7354
        %7667 = vmatpush.msra.mxu0 %v7353
        %7668 = vmatpush.msra.mxu0 %v7352
        %7669 = vmatpush.msra.mxu0 %v7351
        %7670 = vmatpush.msra.mxu0 %v7350
        %7671 = vmatpush.msra.mxu0 %v7349
        %7672 = vmatpush.msra.mxu0 %v7348
        %7673 = vmatpush.msra.mxu0 %v7347
        %7674 = vmatpush.msra.mxu0 %v7346
        %7675 = vmatpush.msra.mxu0 %v7345
        %7676 = vmatpush.msra.mxu0 %v7344
        %7677 = vmatmul.f32.gmra.mxu0 %v7103
        %v7678 = vpop.f32.mrf.mxu0
        %v7679 = vadd.f32 %v7659, %v7678
        %7680 = vdwg.mxu0
        %vm7681 = vcmask 57344
        %7682 = vst.msk [vmem:[%s378] sm:$0x1] %vm7681, %v7679
        %s7683 = sand.u32 %s269, 1
        %s7684 = scalar_lea.sflag [#allocation3], %s7683
        %s7685 = sand.u32 %s269, 1
        %s7686 = scalar_lea.vmem [#allocation2], %s7685
        // Predicated region
        $region65: #{testcls_forward.1} parent=63 // pred_check
          %p7687 = pneg %p279
        $region66: #{testcls_forward.1} parent=63 // pred_check_branch
          %7689 = sbr.rel (%p7687) target = $region68
        $region67: #{testcls_forward.1} parent=63 // pred_region
          %7691 = vsyncadd %s7684, 0
          %s7692 = scalar_lea.hbm %s11, %s25
          %s7694 = sshll.u32 %s7686, 4
          %s7695 = int_to_ptr.vmem [resolvable:$true] %s7694
          %s7696 = sshll.u32 %s7692, 4
          %s7697 = int_to_ptr.hbm [resolvable:$true] %s7696
          %7699 = dma.vmem_to_hbm [thread:$0]  %s7695, 16, %s7697, %s7684
        $region68: #{testcls_forward.1} parent=63 // pred_fallthru
          _
      $region64: #{testcls_forward.1} parent=5 // pred_fallthru
        _
      %p7700 = scmp.le.s32.totalorder 2, %s20
      // Predicated region
      $region69: #{testcls_forward.1} parent=5 // pred_check
        %p7701 = pneg %p7700
      $region70: #{testcls_forward.1} parent=5 // pred_check_branch
        %7703 = sbr.rel (%p7701) target = $region72
      $region71: #{testcls_forward.1} parent=5 // pred_region
        %s7704 = ssub.s32 %s20, 2
        // Predicated region
        $region73: #{testcls_forward.1} parent=71 // pred_check
          %p7705 = pneg %p285
        $region74: #{testcls_forward.1} parent=71 // pred_check_branch
          %7707 = sbr.rel (%p7705) target = $region76
        $region75: #{testcls_forward.1} parent=71 // pred_region
          %s7708 = sand.u32 %s270, 1
          %s7709 = scalar_lea.sflag [#allocation3], %s7708
          %s7710 = sand.u32 %s270, 1
          %s7711 = scalar_lea.vmem [#allocation2], %s7710
          %7713 = dma.done %s7709, 16
        $region76: #{testcls_forward.1} parent=71 // pred_fallthru
          _
      $region72: #{testcls_forward.1} parent=5 // pred_fallthru
        _
    $region6: #{testcls_forward.1} parent=1 // loop_footer
      %s24 = sadd.s32 1, %s20
    $region7: #{testcls_forward.1} parent=1 // loop_footer_branch
      %19 = sbr.rel target = $region3
    $region8: #{testcls_forward.1} parent=1 // loop_exit
      _
    %7714 = vsyncpa [#allocation3], 1
    %s7715 = scalar_lea.sflag [#allocation3], 1
    %7716 = vsyncpa %s7715, 1

</llo_original>
